<compile_context>
chip_gen: v6e
topology: v6e:2x2x1
jax: 0.10.0
libtpu: 0.0.40
codegen_flags: <defaults>
</compile_context>

<pallas_src>
import jax
import jax.numpy as jnp
import numpy as np
from jax.experimental import pallas as pl
from jax.experimental.pallas import tpu as pltpu

LANE = 128  # TPU vreg lane width; channel dims are padded to this.


def _round_up(x, m):
    return (x + m - 1) // m * m


def _pick_tile_rows(Ho, Wo, cout_p, m_target=256, acc_budget=128 * 1024):
    """Row-tile height: M = th*Wo ~ 256, f32 accumulator <= ~32 vregs."""
    th = min(max(1, m_target // max(Wo, 1)),
             max(1, acc_budget // max(Wo * cout_p * 4, 1)))
    return max(1, min(th, Ho))


def _make_block_kernel(*, stride, Ho, Wo, Cin_p, Cmid_p, Cout_p,
                       TH1, TH2, proj):
    KH = KW = 3

    def _win(ref, row0, nrows, col0, step):
        """(nrows, Wo, C) window; strided pl.ds when step > 1."""
        if step == 1:
            return ref[pl.ds(row0, nrows), pl.ds(col0, Wo), :]
        return ref[pl.ds(row0, nrows, stride=step),
                   pl.ds(col0, Wo, stride=step), :]

    def _conv3x3_tile(src_ref, w_ref, *, out_row0, nrows, step, k_in):
        """3x3 conv for output rows [out_row0, out_row0+nrows).

        KH fused matmuls: per kh the KW shifted windows are concatenated
        along lanes -> (nrows*Wo, KW*k_in) @ (KW*k_in, Cout), accumulated in
        an f32 value chain (no scratch RMW).
        """
        acc = None
        for kh in range(KH):
            taps = [_win(src_ref, out_row0 * step + kh, nrows, kw, step)
                    for kw in range(KW)]
            lhs = jnp.concatenate(taps, axis=-1).reshape(nrows * Wo, KW * k_in)
            part = jnp.dot(lhs, w_ref[kh], preferred_element_type=jnp.float32)
            acc = part if acc is None else acc + part
        return acc

    def kernel(*refs):
        if proj:
            (x_ref, w1_ref, s1_ref, b1_ref, w2_ref, s2_ref, b2_ref,
             wsc_ref, ssc_ref, bsc_ref, o_ref, mid_ref) = refs
        else:
            (x_ref, w1_ref, s1_ref, b1_ref, w2_ref, s2_ref, b2_ref,
             o_ref, mid_ref) = refs

        # Zero the one-pixel halo of the conv1 staging scratch.  Done every
        # grid step: the batch axis is "parallel", so each core must
        # initialise its own scratch copy.
        zrow = jnp.zeros((1, Wo + 2, Cmid_p), mid_ref.dtype)
        zcol = jnp.zeros((Ho + 2, 1, Cmid_p), mid_ref.dtype)
        mid_ref[0:1, :, :] = zrow
        mid_ref[Ho + 1:Ho + 2, :, :] = zrow
        mid_ref[:, 0:1, :] = zcol
        mid_ref[:, Wo + 1:Wo + 2, :] = zcol

        # ---- conv1 (3x3, stride) + BN1 + ReLU -> VMEM staging (never HBM) --
        for r0 in range(0, Ho, TH1):
            th = min(TH1, Ho - r0)
            acc = _conv3x3_tile(x_ref, w1_ref, out_row0=r0, nrows=th,
                                step=stride, k_in=Cin_p)
            out1 = jnp.maximum(acc * s1_ref[0] + b1_ref[0], 0.0)
            mid_ref[1 + r0:1 + r0 + th, 1:1 + Wo, :] = (
                out1.reshape(th, Wo, Cmid_p).astype(mid_ref.dtype))

        # ---- conv2 (3x3, stride 1) + BN2 + shortcut + ReLU -> output -------
        for r0 in range(0, Ho, TH2):
            th = min(TH2, Ho - r0)
            acc = _conv3x3_tile(mid_ref, w2_ref, out_row0=r0, nrows=th,
                                step=1, k_in=Cmid_p)
            out = acc * s2_ref[0] + b2_ref[0]

            if proj:   # fused 1x1 strided conv + folded BN shortcut
                sp = _win(x_ref, 1 + r0 * stride, th, 1, stride)
                sp = sp.reshape(th * Wo, Cin_p)
                sc = jnp.dot(sp, wsc_ref[...],
                             preferred_element_type=jnp.float32)
                out = out + (sc * ssc_ref[0] + bsc_ref[0])
            else:      # identity shortcut (stride == 1, Cin == Cout)
                res = _win(x_ref, 1 + r0, th, 1, 1)
                out = out + res.reshape(th * Wo, Cout_p).astype(jnp.float32)

            out = jnp.maximum(out, 0.0)
            o_ref[pl.ds(r0, th), :, :] = (
                out.reshape(th, Wo, Cout_p).astype(o_ref.dtype))

    return kernel


def fold_bn(gamma, beta, mean, var, eps=1e-5):
    scale = gamma / jnp.sqrt(var + eps)
    bias = beta - mean * scale
    return scale, bias


def _pad_w(w, cin_p, cout_p):
    """(3,3,Cin,Cout) -> (3, 3*Cin_p, Cout_p) bf16, K index = kw*Cin_p + cin."""
    KH, KW, cin, cout = w.shape
    wp = jnp.pad(w, ((0, 0), (0, 0), (0, cin_p - cin), (0, cout_p - cout)))
    return wp.astype(jnp.bfloat16).reshape(KH, KW * cin_p, cout_p)


def _pad_vec(v, c_p):
    return jnp.pad(v, (0, c_p - v.shape[0])).astype(jnp.float32).reshape(1, c_p)


def basic_block_forward(x_nhwc, params, stride, out_dtype=jnp.float32):
    """Fused BasicBlock forward (NHWC, inference-mode BatchNorm).

    Pass out_dtype=jnp.bfloat16 when the consumer is another bf16 block.
    """
    N, H, W, Cin = x_nhwc.shape
    planes = params["w1"].shape[-1]
    Cin_p = _round_up(Cin, LANE)
    Cmid_p = _round_up(planes, LANE)
    Cout_p = Cmid_p

    Ho = (H - 1) // stride + 1
    Wo = (W - 1) // stride + 1

    s1, b1 = fold_bn(*params["bn1"])
    s2, b2 = fold_bn(*params["bn2"])

    # Single pad+cast of the input: +1 spatial halo for the 3x3 conv, channel
    # pad to the 128-lane boundary, bf16 cast (halves HBM/VMEM traffic).
    xp = jnp.pad(x_nhwc, ((0, 0), (1, 1), (1, 1),
                          (0, Cin_p - Cin))).astype(jnp.bfloat16)

    args = [
        xp,
        _pad_w(params["w1"], Cin_p, Cmid_p),
        _pad_vec(s1, Cmid_p), _pad_vec(b1, Cmid_p),
        _pad_w(params["w2"], Cmid_p, Cout_p),
        _pad_vec(s2, Cout_p), _pad_vec(b2, Cout_p),
    ]

    proj = "w_sc" in params
    if proj:
        ssc, bsc = fold_bn(*params["bn_sc"])
        w_sc = jnp.pad(params["w_sc"][0, 0],
                       ((0, Cin_p - Cin),
                        (0, Cout_p - planes))).astype(jnp.bfloat16)
        args += [w_sc, _pad_vec(ssc, Cout_p), _pad_vec(bsc, Cout_p)]
    else:
        assert stride == 1 and Cin_p == Cout_p, \
            "identity shortcut requires stride == 1 and in_planes == planes"

    TH1 = _pick_tile_rows(Ho, Wo, Cmid_p)
    TH2 = _pick_tile_rows(Ho, Wo, Cout_p)

    kernel = _make_block_kernel(stride=stride, Ho=Ho, Wo=Wo, Cin_p=Cin_p,
                                Cmid_p=Cmid_p, Cout_p=Cout_p,
                                TH1=TH1, TH2=TH2, proj=proj)

    def _const_spec(a):
        nd = a.ndim
        return pl.BlockSpec(a.shape, lambda n, _nd=nd: (0,) * _nd)

    in_specs = [pl.BlockSpec((None,) + xp.shape[1:], lambda n: (n, 0, 0, 0))]
    in_specs += [_const_spec(a) for a in args[1:]]
    out_specs = pl.BlockSpec((None, Ho, Wo, Cout_p), lambda n: (n, 0, 0, 0))

    # Advisory cost estimate with the TRUE (unpadded) channel counts.
    flops = 2 * N * Ho * Wo * 9 * (Cin * planes + planes * planes)
    if proj:
        flops += 2 * N * Ho * Wo * Cin * planes
    bytes_accessed = (sum(int(a.size) * a.dtype.itemsize for a in args)
                      + N * Ho * Wo * Cout_p * np.dtype(out_dtype).itemsize)

    # Explicit VMEM budget from the actual block sizes; only raise the limit
    # when it actually matters (keeps small configs on the default path).
    per_img = (int(np.prod(xp.shape[1:])) * 2
               + Ho * Wo * Cout_p * np.dtype(out_dtype).itemsize)
    const_bytes = sum(int(a.size) * a.dtype.itemsize for a in args[1:])
    mid_bytes = (Ho + 2) * (Wo + 2) * Cmid_p * 2
    vmem_need = 2 * (per_img + const_bytes) + mid_bytes + (2 << 20)
    cp_kwargs = dict(dimension_semantics=("parallel",))
    if vmem_need > 12 * 1024 * 1024:
        cp_kwargs["vmem_limit_bytes"] = int(
            min(64 * 1024 * 1024, _round_up(vmem_need, 1 << 20)))

    out = pl.pallas_call(
        kernel,
        out_shape=jax.ShapeDtypeStruct((N, Ho, Wo, Cout_p), out_dtype),
        grid=(N,),
        in_specs=in_specs,
        out_specs=out_specs,
        scratch_shapes=[pltpu.VMEM((Ho + 2, Wo + 2, Cmid_p), jnp.bfloat16)],
        compiler_params=pltpu.CompilerParams(**cp_kwargs),
        cost_estimate=pl.CostEstimate(flops=int(flops), transcendentals=0,
                                      bytes_accessed=int(bytes_accessed)),
    )(*args)

    return out if planes == Cout_p else out[..., :planes]


# ---------- pure-JAX f32 reference (for correctness check) ----------
def _conv_ref(x, w, stride, padding):
    return jax.lax.conv_general_dilated(
        x, w, (stride, stride), [(padding, padding)] * 2,
        dimension_numbers=("NHWC", "HWIO", "NHWC"))


def basic_block_ref(x, params, stride):
    s1, b1 = fold_bn(*params["bn1"])
    s2, b2 = fold_bn(*params["bn2"])
    out = jnp.maximum(_conv_ref(x, params["w1"], stride, 1) * s1 + b1, 0.0)
    if "w_sc" in params:
        ssc, bsc = fold_bn(*params["bn_sc"])
        shortcut = _conv_ref(x, params["w_sc"], stride, 0) * ssc + bsc
    else:
        shortcut = x
    out = _conv_ref(out, params["w2"], 1, 1) * s2 + b2 + shortcut
    return jnp.maximum(out, 0.0)


def init_params(key, in_planes, planes, stride):
    ks = jax.random.split(key, 12)
    params = {
        "w1": 0.1 * jax.random.normal(ks[0], (3, 3, in_planes, planes), jnp.float32),
        "w2": 0.1 * jax.random.normal(ks[1], (3, 3, planes, planes), jnp.float32),
        "bn1": (
            jax.random.uniform(ks[2], (planes,), minval=0.5, maxval=1.5),
            0.1 * jax.random.normal(ks[3], (planes,)),
            0.1 * jax.random.normal(ks[4], (planes,)),
            jax.random.uniform(ks[5], (planes,), minval=0.5, maxval=1.5),
        ),
        "bn2": (
            jax.random.uniform(ks[6], (planes,), minval=0.5, maxval=1.5),
            0.1 * jax.random.normal(ks[7], (planes,)),
            0.1 * jax.random.normal(ks[8], (planes,)),
            jax.random.uniform(ks[9], (planes,), minval=0.5, maxval=1.5),
        ),
    }
    if stride != 1 or in_planes != planes:
        params["w_sc"] = 0.1 * jax.random.normal(
            ks[10], (1, 1, in_planes, planes), jnp.float32)
        kb = jax.random.split(ks[11], 4)
        params["bn_sc"] = (
            jax.random.uniform(kb[0], (planes,), minval=0.5, maxval=1.5),
            0.1 * jax.random.normal(kb[1], (planes,)),
            0.1 * jax.random.normal(kb[2], (planes,)),
            jax.random.uniform(kb[3], (planes,), minval=0.5, maxval=1.5),
        )
    return params


if __name__ == "__main__":
    key = jax.random.PRNGKey(0)
    k_x, k_p, k_x2, k_p2, k_x3, k_p3 = jax.random.split(key, 6)

    # bf16 matmul inputs -> loosened tolerance vs. the f32 reference.
    TOL = dict(rtol=5e-2, atol=5e-2)

    # Config A: projection shortcut (in_planes != planes), stride=1.
    N, C_in, H, W = 2, 4, 16, 16
    planes, stride = 8, 1
    x_nchw = jax.random.normal(k_x, (N, C_in, H, W), jnp.float32)   # PyTorch NCHW
    x_nhwc = jnp.transpose(x_nchw, (0, 2, 3, 1))                    # kernel layout
    params = init_params(k_p, C_in, planes, stride)

    out_nhwc = jax.block_until_ready(basic_block_forward(x_nhwc, params, stride))
    out_nchw = jnp.transpose(out_nhwc, (0, 3, 1, 2))                # back to NCHW
    ref = basic_block_ref(x_nhwc, params, stride)
    assert out_nhwc.shape == (N, H, W, planes)
    np.testing.assert_allclose(np.asarray(out_nhwc), np.asarray(ref), **TOL)

    # Config B: identity shortcut (in_planes == planes), stride=1.
    params_b = init_params(k_p2, planes, planes, 1)
    x_b = jax.random.normal(k_x2, (N, H, W, planes), jnp.float32)
    out_b = jax.block_until_ready(basic_block_forward(x_b, params_b, 1))
    ref_b = basic_block_ref(x_b, params_b, 1)
    np.testing.assert_allclose(np.asarray(out_b), np.asarray(ref_b), **TOL)

    # Config C: downsampling block (stride=2, projection shortcut) --
    # exercises the strided pl.ds load path for conv1 and the 1x1 shortcut.
    params_c = init_params(k_p3, planes, 2 * planes, 2)
    x_c = jax.random.normal(k_x3, (N, H, W, planes), jnp.float32)
    out_c = jax.block_until_ready(basic_block_forward(x_c, params_c, 2))
    ref_c = basic_block_ref(x_c, params_c, 2)
    assert out_c.shape == (N, H // 2, W // 2, 2 * planes)
    np.testing.assert_allclose(np.asarray(out_c), np.asarray(ref_c), **TOL)

    print("KERNEL_OK")
</pallas_src>

<mosaic_0001>
module attributes {stable_mosaic.version = 11 : i64} {
  func.func @kernel(%arg0: i32, %arg1: memref<1x18x18x128xbf16, #tpu.memory_space<vmem>>, %arg2: memref<3x384x128xbf16, #tpu.memory_space<vmem>>, %arg3: memref<1x128xf32, #tpu.memory_space<vmem>>, %arg4: memref<1x128xf32, #tpu.memory_space<vmem>>, %arg5: memref<3x384x128xbf16, #tpu.memory_space<vmem>>, %arg6: memref<1x128xf32, #tpu.memory_space<vmem>>, %arg7: memref<1x128xf32, #tpu.memory_space<vmem>>, %arg8: memref<128x128xbf16, #tpu.memory_space<vmem>>, %arg9: memref<1x128xf32, #tpu.memory_space<vmem>>, %arg10: memref<1x128xf32, #tpu.memory_space<vmem>>, %arg11: memref<1x16x16x128xf32, #tpu.memory_space<vmem>>, %arg12: memref<18x18x128xbf16, #tpu.memory_space<vmem>>) attributes {dimension_semantics = [#tpu.dimension_semantics<parallel>], iteration_bounds = array<i64: 2>, scalar_prefetch = 0 : i64, scratch_operands = 1 : i64, tpu.core_type = #tpu.core_type<tc>, window_params = [{transform_indices = @transform_0, window_bounds = array<i64: 1, 18, 18, 128>}, {pipeline_mode = #tpu.pipeline_mode<synchronous>, transform_indices = @transform_1, window_bounds = array<i64: 3, 384, 128>}, {pipeline_mode = #tpu.pipeline_mode<synchronous>, transform_indices = @transform_2, window_bounds = array<i64: 1, 128>}, {pipeline_mode = #tpu.pipeline_mode<synchronous>, transform_indices = @transform_3, window_bounds = array<i64: 1, 128>}, {pipeline_mode = #tpu.pipeline_mode<synchronous>, transform_indices = @transform_4, window_bounds = array<i64: 3, 384, 128>}, {pipeline_mode = #tpu.pipeline_mode<synchronous>, transform_indices = @transform_5, window_bounds = array<i64: 1, 128>}, {pipeline_mode = #tpu.pipeline_mode<synchronous>, transform_indices = @transform_6, window_bounds = array<i64: 1, 128>}, {pipeline_mode = #tpu.pipeline_mode<synchronous>, transform_indices = @transform_7, window_bounds = array<i64: 128, 128>}, {pipeline_mode = #tpu.pipeline_mode<synchronous>, transform_indices = @transform_8, window_bounds = array<i64: 1, 128>}, {pipeline_mode = #tpu.pipeline_mode<synchronous>, transform_indices = @transform_9, window_bounds = array<i64: 1, 128>}, {transform_indices = @transform_10, window_bounds = array<i64: 1, 16, 16, 128>}]} {
    %cst = arith.constant 0.000000e+00 : bf16
    %0 = vector.broadcast %cst : bf16 to vector<1x18x128xbf16>
    %cst_0 = arith.constant 0.000000e+00 : bf16
    %1 = vector.broadcast %cst_0 : bf16 to vector<18x1x128xbf16>
    %c0 = arith.constant 0 : index
    %c0_1 = arith.constant 0 : index
    %c0_2 = arith.constant 0 : index
    %2 = vector.load %arg12[%c0, %c0_1, %c0_2] : memref<18x18x128xbf16, #tpu.memory_space<vmem>>, vector<1x18x128xbf16>
    tpu.vector_store %arg12[%c0, %c0_1, %c0_2], %0 {strides = array<i32>} : memref<18x18x128xbf16, #tpu.memory_space<vmem>>, vector<1x18x128xbf16>,
    %c17 = arith.constant 17 : index
    %c0_3 = arith.constant 0 : index
    %c0_4 = arith.constant 0 : index
    %3 = vector.load %arg12[%c17, %c0_3, %c0_4] : memref<18x18x128xbf16, #tpu.memory_space<vmem>>, vector<1x18x128xbf16>
    tpu.vector_store %arg12[%c17, %c0_3, %c0_4], %0 {strides = array<i32>} : memref<18x18x128xbf16, #tpu.memory_space<vmem>>, vector<1x18x128xbf16>,
    %c0_5 = arith.constant 0 : index
    %c0_6 = arith.constant 0 : index
    %c0_7 = arith.constant 0 : index
    %4 = vector.load %arg12[%c0_5, %c0_6, %c0_7] : memref<18x18x128xbf16, #tpu.memory_space<vmem>>, vector<18x1x128xbf16>
    tpu.vector_store %arg12[%c0_5, %c0_6, %c0_7], %1 {strides = array<i32>} : memref<18x18x128xbf16, #tpu.memory_space<vmem>>, vector<18x1x128xbf16>,
    %c0_8 = arith.constant 0 : index
    %c17_9 = arith.constant 17 : index
    %c0_10 = arith.constant 0 : index
    %5 = vector.load %arg12[%c0_8, %c17_9, %c0_10] : memref<18x18x128xbf16, #tpu.memory_space<vmem>>, vector<18x1x128xbf16>
    tpu.vector_store %arg12[%c0_8, %c17_9, %c0_10], %1 {strides = array<i32>} : memref<18x18x128xbf16, #tpu.memory_space<vmem>>, vector<18x1x128xbf16>,
    %c0_11 = arith.constant 0 : index
    %c0_12 = arith.constant 0 : index
    %c0_13 = arith.constant 0 : index
    %c0_14 = arith.constant 0 : index
    %6 = vector.load %arg1[%c0_11, %c0_12, %c0_13, %c0_14] : memref<1x18x18x128xbf16, #tpu.memory_space<vmem>>, vector<1x16x16x128xbf16>
    %7 = vector.shape_cast %6 : vector<1x16x16x128xbf16> to vector<16x16x128xbf16>
    %c0_15 = arith.constant 0 : index
    %c0_16 = arith.constant 0 : index
    %c1 = arith.constant 1 : index
    %c0_17 = arith.constant 0 : index
    %8 = vector.load %arg1[%c0_15, %c0_16, %c1, %c0_17] : memref<1x18x18x128xbf16, #tpu.memory_space<vmem>>, vector<1x16x16x128xbf16>
    %9 = vector.shape_cast %8 : vector<1x16x16x128xbf16> to vector<16x16x128xbf16>
    %c0_18 = arith.constant 0 : index
    %c0_19 = arith.constant 0 : index
    %c2 = arith.constant 2 : index
    %c0_20 = arith.constant 0 : index
    %10 = vector.load %arg1[%c0_18, %c0_19, %c2, %c0_20] : memref<1x18x18x128xbf16, #tpu.memory_space<vmem>>, vector<1x16x16x128xbf16>
    %11 = vector.shape_cast %10 : vector<1x16x16x128xbf16> to vector<16x16x128xbf16>
    %12 = tpu.concatenate %7, %9, %11 in 2 : vector<16x16x128xbf16>, vector<16x16x128xbf16>, vector<16x16x128xbf16> -> vector<16x16x384xbf16>
    %13 = vector.shape_cast %12 : vector<16x16x384xbf16> to vector<256x384xbf16>
    %c0_21 = arith.constant 0 : index
    %c0_22 = arith.constant 0 : index
    %c0_23 = arith.constant 0 : index
    %14 = vector.load %arg2[%c0_21, %c0_22, %c0_23] : memref<3x384x128xbf16, #tpu.memory_space<vmem>>, vector<1x384x128xbf16>
    %15 = vector.shape_cast %14 : vector<1x384x128xbf16> to vector<384x128xbf16>
    %cst_24 = arith.constant dense<0.000000e+00> : vector<256x128xf32>
    %16 = tpu.matmul %13, %15, %cst_24 {dimension_numbers = #tpu.dot_dimension_numbers<[1], [0], [0], [1], [0, 0, 1, 1], [], []>} : vector<256x384xbf16>, vector<384x128xbf16>, vector<256x128xf32> -> vector<256x128xf32>
    %c0_25 = arith.constant 0 : index
    %c1_26 = arith.constant 1 : index
    %c0_27 = arith.constant 0 : index
    %c0_28 = arith.constant 0 : index
    %17 = vector.load %arg1[%c0_25, %c1_26, %c0_27, %c0_28] : memref<1x18x18x128xbf16, #tpu.memory_space<vmem>>, vector<1x16x16x128xbf16>
    %18 = vector.shape_cast %17 : vector<1x16x16x128xbf16> to vector<16x16x128xbf16>
    %c0_29 = arith.constant 0 : index
    %c1_30 = arith.constant 1 : index
    %c1_31 = arith.constant 1 : index
    %c0_32 = arith.constant 0 : index
    %19 = vector.load %arg1[%c0_29, %c1_30, %c1_31, %c0_32] : memref<1x18x18x128xbf16, #tpu.memory_space<vmem>>, vector<1x16x16x128xbf16>
    %20 = vector.shape_cast %19 : vector<1x16x16x128xbf16> to vector<16x16x128xbf16>
    %c0_33 = arith.constant 0 : index
    %c1_34 = arith.constant 1 : index
    %c2_35 = arith.constant 2 : index
    %c0_36 = arith.constant 0 : index
    %21 = vector.load %arg1[%c0_33, %c1_34, %c2_35, %c0_36] : memref<1x18x18x128xbf16, #tpu.memory_space<vmem>>, vector<1x16x16x128xbf16>
    %22 = vector.shape_cast %21 : vector<1x16x16x128xbf16> to vector<16x16x128xbf16>
    %23 = tpu.concatenate %18, %20, %22 in 2 : vector<16x16x128xbf16>, vector<16x16x128xbf16>, vector<16x16x128xbf16> -> vector<16x16x384xbf16>
    %24 = vector.shape_cast %23 : vector<16x16x384xbf16> to vector<256x384xbf16>
    %c1_37 = arith.constant 1 : index
    %c0_38 = arith.constant 0 : index
    %c0_39 = arith.constant 0 : index
    %25 = vector.load %arg2[%c1_37, %c0_38, %c0_39] : memref<3x384x128xbf16, #tpu.memory_space<vmem>>, vector<1x384x128xbf16>
    %26 = vector.shape_cast %25 : vector<1x384x128xbf16> to vector<384x128xbf16>
    %cst_40 = arith.constant dense<0.000000e+00> : vector<256x128xf32>
    %27 = tpu.matmul %24, %26, %cst_40 {dimension_numbers = #tpu.dot_dimension_numbers<[1], [0], [0], [1], [0, 0, 1, 1], [], []>} : vector<256x384xbf16>, vector<384x128xbf16>, vector<256x128xf32> -> vector<256x128xf32>
    %28 = arith.addf %16, %27 : vector<256x128xf32>
    %c0_41 = arith.constant 0 : index
    %c2_42 = arith.constant 2 : index
    %c0_43 = arith.constant 0 : index
    %c0_44 = arith.constant 0 : index
    %29 = vector.load %arg1[%c0_41, %c2_42, %c0_43, %c0_44] : memref<1x18x18x128xbf16, #tpu.memory_space<vmem>>, vector<1x16x16x128xbf16>
    %30 = vector.shape_cast %29 : vector<1x16x16x128xbf16> to vector<16x16x128xbf16>
    %c0_45 = arith.constant 0 : index
    %c2_46 = arith.constant 2 : index
    %c1_47 = arith.constant 1 : index
    %c0_48 = arith.constant 0 : index
    %31 = vector.load %arg1[%c0_45, %c2_46, %c1_47, %c0_48] : memref<1x18x18x128xbf16, #tpu.memory_space<vmem>>, vector<1x16x16x128xbf16>
    %32 = vector.shape_cast %31 : vector<1x16x16x128xbf16> to vector<16x16x128xbf16>
    %c0_49 = arith.constant 0 : index
    %c2_50 = arith.constant 2 : index
    %c2_51 = arith.constant 2 : index
    %c0_52 = arith.constant 0 : index
    %33 = vector.load %arg1[%c0_49, %c2_50, %c2_51, %c0_52] : memref<1x18x18x128xbf16, #tpu.memory_space<vmem>>, vector<1x16x16x128xbf16>
    %34 = vector.shape_cast %33 : vector<1x16x16x128xbf16> to vector<16x16x128xbf16>
    %35 = tpu.concatenate %30, %32, %34 in 2 : vector<16x16x128xbf16>, vector<16x16x128xbf16>, vector<16x16x128xbf16> -> vector<16x16x384xbf16>
    %36 = vector.shape_cast %35 : vector<16x16x384xbf16> to vector<256x384xbf16>
    %c2_53 = arith.constant 2 : index
    %c0_54 = arith.constant 0 : index
    %c0_55 = arith.constant 0 : index
    %37 = vector.load %arg2[%c2_53, %c0_54, %c0_55] : memref<3x384x128xbf16, #tpu.memory_space<vmem>>, vector<1x384x128xbf16>
    %38 = vector.shape_cast %37 : vector<1x384x128xbf16> to vector<384x128xbf16>
    %cst_56 = arith.constant dense<0.000000e+00> : vector<256x128xf32>
    %39 = tpu.matmul %36, %38, %cst_56 {dimension_numbers = #tpu.dot_dimension_numbers<[1], [0], [0], [1], [0, 0, 1, 1], [], []>} : vector<256x384xbf16>, vector<384x128xbf16>, vector<256x128xf32> -> vector<256x128xf32>
    %40 = arith.addf %28, %39 : vector<256x128xf32>
    %c0_57 = arith.constant 0 : index
    %c0_58 = arith.constant 0 : index
    %41 = vector.load %arg3[%c0_57, %c0_58] : memref<1x128xf32, #tpu.memory_space<vmem>>, vector<1x128xf32>
    %42 = vector.shape_cast %41 : vector<1x128xf32> to vector<128xf32>
    %43 = vector.shape_cast %42 : vector<128xf32> to vector<1x128xf32>
    %44 = vector.broadcast %43 : vector<1x128xf32> to vector<256x128xf32>
    %45 = arith.mulf %40, %44 : vector<256x128xf32>
    %c0_59 = arith.constant 0 : index
    %c0_60 = arith.constant 0 : index
    %46 = vector.load %arg4[%c0_59, %c0_60] : memref<1x128xf32, #tpu.memory_space<vmem>>, vector<1x128xf32>
    %47 = vector.shape_cast %46 : vector<1x128xf32> to vector<128xf32>
    %48 = vector.shape_cast %47 : vector<128xf32> to vector<1x128xf32>
    %49 = vector.broadcast %48 : vector<1x128xf32> to vector<256x128xf32>
    %50 = arith.addf %45, %49 : vector<256x128xf32>
    %cst_61 = arith.constant 0.000000e+00 : f32
    %51 = vector.broadcast %cst_61 : f32 to vector<256x128xf32>
    %52 = arith.maximumf %50, %51 : vector<256x128xf32>
    %53 = vector.shape_cast %52 : vector<256x128xf32> to vector<16x16x128xf32>
    %54 = arith.truncf %53 : vector<16x16x128xf32> to vector<16x16x128xbf16>
    %c1_62 = arith.constant 1 : index
    %c1_63 = arith.constant 1 : index
    %c0_64 = arith.constant 0 : index
    %55 = vector.load %arg12[%c1_62, %c1_63, %c0_64] : memref<18x18x128xbf16, #tpu.memory_space<vmem>>, vector<16x16x128xbf16>
    tpu.vector_store %arg12[%c1_62, %c1_63, %c0_64], %54 {strides = array<i32>} : memref<18x18x128xbf16, #tpu.memory_space<vmem>>, vector<16x16x128xbf16>,
    %c0_65 = arith.constant 0 : index
    %c0_66 = arith.constant 0 : index
    %c0_67 = arith.constant 0 : index
    %56 = vector.load %arg12[%c0_65, %c0_66, %c0_67] : memref<18x18x128xbf16, #tpu.memory_space<vmem>>, vector<16x16x128xbf16>
    %c0_68 = arith.constant 0 : index
    %c1_69 = arith.constant 1 : index
    %c0_70 = arith.constant 0 : index
    %57 = vector.load %arg12[%c0_68, %c1_69, %c0_70] : memref<18x18x128xbf16, #tpu.memory_space<vmem>>, vector<16x16x128xbf16>
    %c0_71 = arith.constant 0 : index
    %c2_72 = arith.constant 2 : index
    %c0_73 = arith.constant 0 : index
    %58 = vector.load %arg12[%c0_71, %c2_72, %c0_73] : memref<18x18x128xbf16, #tpu.memory_space<vmem>>, vector<16x16x128xbf16>
    %59 = tpu.concatenate %56, %57, %58 in 2 : vector<16x16x128xbf16>, vector<16x16x128xbf16>, vector<16x16x128xbf16> -> vector<16x16x384xbf16>
    %60 = vector.shape_cast %59 : vector<16x16x384xbf16> to vector<256x384xbf16>
    %c0_74 = arith.constant 0 : index
    %c0_75 = arith.constant 0 : index
    %c0_76 = arith.constant 0 : index
    %61 = vector.load %arg5[%c0_74, %c0_75, %c0_76] : memref<3x384x128xbf16, #tpu.memory_space<vmem>>, vector<1x384x128xbf16>
    %62 = vector.shape_cast %61 : vector<1x384x128xbf16> to vector<384x128xbf16>
    %cst_77 = arith.constant dense<0.000000e+00> : vector<256x128xf32>
    %63 = tpu.matmul %60, %62, %cst_77 {dimension_numbers = #tpu.dot_dimension_numbers<[1], [0], [0], [1], [0, 0, 1, 1], [], []>} : vector<256x384xbf16>, vector<384x128xbf16>, vector<256x128xf32> -> vector<256x128xf32>
    %c1_78 = arith.constant 1 : index
    %c0_79 = arith.constant 0 : index
    %c0_80 = arith.constant 0 : index
    %64 = vector.load %arg12[%c1_78, %c0_79, %c0_80] : memref<18x18x128xbf16, #tpu.memory_space<vmem>>, vector<16x16x128xbf16>
    %c1_81 = arith.constant 1 : index
    %c1_82 = arith.constant 1 : index
    %c0_83 = arith.constant 0 : index
    %65 = vector.load %arg12[%c1_81, %c1_82, %c0_83] : memref<18x18x128xbf16, #tpu.memory_space<vmem>>, vector<16x16x128xbf16>
    %c1_84 = arith.constant 1 : index
    %c2_85 = arith.constant 2 : index
    %c0_86 = arith.constant 0 : index
    %66 = vector.load %arg12[%c1_84, %c2_85, %c0_86] : memref<18x18x128xbf16, #tpu.memory_space<vmem>>, vector<16x16x128xbf16>
    %67 = tpu.concatenate %64, %65, %66 in 2 : vector<16x16x128xbf16>, vector<16x16x128xbf16>, vector<16x16x128xbf16> -> vector<16x16x384xbf16>
    %68 = vector.shape_cast %67 : vector<16x16x384xbf16> to vector<256x384xbf16>
    %c1_87 = arith.constant 1 : index
    %c0_88 = arith.constant 0 : index
    %c0_89 = arith.constant 0 : index
    %69 = vector.load %arg5[%c1_87, %c0_88, %c0_89] : memref<3x384x128xbf16, #tpu.memory_space<vmem>>, vector<1x384x128xbf16>
    %70 = vector.shape_cast %69 : vector<1x384x128xbf16> to vector<384x128xbf16>
    %cst_90 = arith.constant dense<0.000000e+00> : vector<256x128xf32>
    %71 = tpu.matmul %68, %70, %cst_90 {dimension_numbers = #tpu.dot_dimension_numbers<[1], [0], [0], [1], [0, 0, 1, 1], [], []>} : vector<256x384xbf16>, vector<384x128xbf16>, vector<256x128xf32> -> vector<256x128xf32>
    %72 = arith.addf %63, %71 : vector<256x128xf32>
    %c2_91 = arith.constant 2 : index
    %c0_92 = arith.constant 0 : index
    %c0_93 = arith.constant 0 : index
    %73 = vector.load %arg12[%c2_91, %c0_92, %c0_93] : memref<18x18x128xbf16, #tpu.memory_space<vmem>>, vector<16x16x128xbf16>
    %c2_94 = arith.constant 2 : index
    %c1_95 = arith.constant 1 : index
    %c0_96 = arith.constant 0 : index
    %74 = vector.load %arg12[%c2_94, %c1_95, %c0_96] : memref<18x18x128xbf16, #tpu.memory_space<vmem>>, vector<16x16x128xbf16>
    %c2_97 = arith.constant 2 : index
    %c2_98 = arith.constant 2 : index
    %c0_99 = arith.constant 0 : index
    %75 = vector.load %arg12[%c2_97, %c2_98, %c0_99] : memref<18x18x128xbf16, #tpu.memory_space<vmem>>, vector<16x16x128xbf16>
    %76 = tpu.concatenate %73, %74, %75 in 2 : vector<16x16x128xbf16>, vector<16x16x128xbf16>, vector<16x16x128xbf16> -> vector<16x16x384xbf16>
    %77 = vector.shape_cast %76 : vector<16x16x384xbf16> to vector<256x384xbf16>
    %c2_100 = arith.constant 2 : index
    %c0_101 = arith.constant 0 : index
    %c0_102 = arith.constant 0 : index
    %78 = vector.load %arg5[%c2_100, %c0_101, %c0_102] : memref<3x384x128xbf16, #tpu.memory_space<vmem>>, vector<1x384x128xbf16>
    %79 = vector.shape_cast %78 : vector<1x384x128xbf16> to vector<384x128xbf16>
    %cst_103 = arith.constant dense<0.000000e+00> : vector<256x128xf32>
    %80 = tpu.matmul %77, %79, %cst_103 {dimension_numbers = #tpu.dot_dimension_numbers<[1], [0], [0], [1], [0, 0, 1, 1], [], []>} : vector<256x384xbf16>, vector<384x128xbf16>, vector<256x128xf32> -> vector<256x128xf32>
    %81 = arith.addf %72, %80 : vector<256x128xf32>
    %c0_104 = arith.constant 0 : index
    %c0_105 = arith.constant 0 : index
    %82 = vector.load %arg6[%c0_104, %c0_105] : memref<1x128xf32, #tpu.memory_space<vmem>>, vector<1x128xf32>
    %83 = vector.shape_cast %82 : vector<1x128xf32> to vector<128xf32>
    %84 = vector.shape_cast %83 : vector<128xf32> to vector<1x128xf32>
    %85 = vector.broadcast %84 : vector<1x128xf32> to vector<256x128xf32>
    %86 = arith.mulf %81, %85 : vector<256x128xf32>
    %c0_106 = arith.constant 0 : index
    %c0_107 = arith.constant 0 : index
    %87 = vector.load %arg7[%c0_106, %c0_107] : memref<1x128xf32, #tpu.memory_space<vmem>>, vector<1x128xf32>
    %88 = vector.shape_cast %87 : vector<1x128xf32> to vector<128xf32>
    %89 = vector.shape_cast %88 : vector<128xf32> to vector<1x128xf32>
    %90 = vector.broadcast %89 : vector<1x128xf32> to vector<256x128xf32>
    %91 = arith.addf %86, %90 : vector<256x128xf32>
    %c0_108 = arith.constant 0 : index
    %c1_109 = arith.constant 1 : index
    %c1_110 = arith.constant 1 : index
    %c0_111 = arith.constant 0 : index
    %92 = vector.load %arg1[%c0_108, %c1_109, %c1_110, %c0_111] : memref<1x18x18x128xbf16, #tpu.memory_space<vmem>>, vector<1x16x16x128xbf16>
    %93 = vector.shape_cast %92 : vector<1x16x16x128xbf16> to vector<16x16x128xbf16>
    %94 = vector.shape_cast %93 : vector<16x16x128xbf16> to vector<256x128xbf16>
    %c0_112 = arith.constant 0 : index
    %c0_113 = arith.constant 0 : index
    %95 = vector.load %arg8[%c0_112, %c0_113] : memref<128x128xbf16, #tpu.memory_space<vmem>>, vector<128x128xbf16>
    %cst_114 = arith.constant dense<0.000000e+00> : vector<256x128xf32>
    %96 = tpu.matmul %94, %95, %cst_114 {dimension_numbers = #tpu.dot_dimension_numbers<[1], [0], [0], [1], [0, 0, 1, 1], [], []>} : vector<256x128xbf16>, vector<128x128xbf16>, vector<256x128xf32> -> vector<256x128xf32>
    %c0_115 = arith.constant 0 : index
    %c0_116 = arith.constant 0 : index
    %97 = vector.load %arg9[%c0_115, %c0_116] : memref<1x128xf32, #tpu.memory_space<vmem>>, vector<1x128xf32>
    %98 = vector.shape_cast %97 : vector<1x128xf32> to vector<128xf32>
    %99 = vector.shape_cast %98 : vector<128xf32> to vector<1x128xf32>
    %100 = vector.broadcast %99 : vector<1x128xf32> to vector<256x128xf32>
    %101 = arith.mulf %96, %100 : vector<256x128xf32>
    %c0_117 = arith.constant 0 : index
    %c0_118 = arith.constant 0 : index
    %102 = vector.load %arg10[%c0_117, %c0_118] : memref<1x128xf32, #tpu.memory_space<vmem>>, vector<1x128xf32>
    %103 = vector.shape_cast %102 : vector<1x128xf32> to vector<128xf32>
    %104 = vector.shape_cast %103 : vector<128xf32> to vector<1x128xf32>
    %105 = vector.broadcast %104 : vector<1x128xf32> to vector<256x128xf32>
    %106 = arith.addf %101, %105 : vector<256x128xf32>
    %107 = arith.addf %91, %106 : vector<256x128xf32>
    %cst_119 = arith.constant 0.000000e+00 : f32
    %108 = vector.broadcast %cst_119 : f32 to vector<256x128xf32>
    %109 = arith.maximumf %107, %108 : vector<256x128xf32>
    %110 = vector.shape_cast %109 : vector<256x128xf32> to vector<16x16x128xf32>
    %c0_120 = arith.constant 0 : index
    %c0_121 = arith.constant 0 : index
    %c0_122 = arith.constant 0 : index
    %c0_123 = arith.constant 0 : index
    %111 = vector.load %arg11[%c0_120, %c0_121, %c0_122, %c0_123] : memref<1x16x16x128xf32, #tpu.memory_space<vmem>>, vector<1x16x16x128xf32>
    %112 = vector.shape_cast %111 : vector<1x16x16x128xf32> to vector<16x16x128xf32>
    %113 = vector.shape_cast %110 : vector<16x16x128xf32> to vector<1x16x16x128xf32>
    tpu.vector_store %arg11[%c0_120, %c0_121, %c0_122, %c0_123], %113 {strides = array<i32>} : memref<1x16x16x128xf32, #tpu.memory_space<vmem>>, vector<1x16x16x128xf32>,
    return
  }
  func.func @transform_0(%arg0: i32) -> (i32, i32, i32, i32) {
    %c0_i32 = arith.constant 0 : i32
    %c0_i32_0 = arith.constant 0 : i32
    %c0_i32_1 = arith.constant 0 : i32
    %c0_i32_2 = arith.constant 0 : i32
    return %arg0, %c0_i32, %c0_i32_0, %c0_i32_1 : i32, i32, i32, i32
  }
  func.func @transform_1(%arg0: i32) -> (i32, i32, i32) {
    %c0_i32 = arith.constant 0 : i32
    %c0_i32_0 = arith.constant 0 : i32
    %c0_i32_1 = arith.constant 0 : i32
    %c0_i32_2 = arith.constant 0 : i32
    return %c0_i32, %c0_i32_0, %c0_i32_1 : i32, i32, i32
  }
  func.func @transform_2(%arg0: i32) -> (i32, i32) {
    %c0_i32 = arith.constant 0 : i32
    %c0_i32_0 = arith.constant 0 : i32
    %c0_i32_1 = arith.constant 0 : i32
    return %c0_i32, %c0_i32_0 : i32, i32
  }
  func.func @transform_3(%arg0: i32) -> (i32, i32) {
    %c0_i32 = arith.constant 0 : i32
    %c0_i32_0 = arith.constant 0 : i32
    %c0_i32_1 = arith.constant 0 : i32
    return %c0_i32, %c0_i32_0 : i32, i32
  }
  func.func @transform_4(%arg0: i32) -> (i32, i32, i32) {
    %c0_i32 = arith.constant 0 : i32
    %c0_i32_0 = arith.constant 0 : i32
    %c0_i32_1 = arith.constant 0 : i32
    %c0_i32_2 = arith.constant 0 : i32
    return %c0_i32, %c0_i32_0, %c0_i32_1 : i32, i32, i32
  }
  func.func @transform_5(%arg0: i32) -> (i32, i32) {
    %c0_i32 = arith.constant 0 : i32
    %c0_i32_0 = arith.constant 0 : i32
    %c0_i32_1 = arith.constant 0 : i32
    return %c0_i32, %c0_i32_0 : i32, i32
  }
  func.func @transform_6(%arg0: i32) -> (i32, i32) {
    %c0_i32 = arith.constant 0 : i32
    %c0_i32_0 = arith.constant 0 : i32
    %c0_i32_1 = arith.constant 0 : i32
    return %c0_i32, %c0_i32_0 : i32, i32
  }
  func.func @transform_7(%arg0: i32) -> (i32, i32) {
    %c0_i32 = arith.constant 0 : i32
    %c0_i32_0 = arith.constant 0 : i32
    %c0_i32_1 = arith.constant 0 : i32
    return %c0_i32, %c0_i32_0 : i32, i32
  }
  func.func @transform_8(%arg0: i32) -> (i32, i32) {
    %c0_i32 = arith.constant 0 : i32
    %c0_i32_0 = arith.constant 0 : i32
    %c0_i32_1 = arith.constant 0 : i32
    return %c0_i32, %c0_i32_0 : i32, i32
  }
  func.func @transform_9(%arg0: i32) -> (i32, i32) {
    %c0_i32 = arith.constant 0 : i32
    %c0_i32_0 = arith.constant 0 : i32
    %c0_i32_1 = arith.constant 0 : i32
    return %c0_i32, %c0_i32_0 : i32, i32
  }
  func.func @transform_10(%arg0: i32) -> (i32, i32, i32, i32) {
    %c0_i32 = arith.constant 0 : i32
    %c0_i32_0 = arith.constant 0 : i32
    %c0_i32_1 = arith.constant 0 : i32
    %c0_i32_2 = arith.constant 0 : i32
    return %arg0, %c0_i32, %c0_i32_0, %c0_i32_1 : i32, i32, i32, i32
  }
}

</mosaic_0001>

<llo_original>
// kernel: tpu_custom_call.1
$region0: #{tpu_custom_call.1}
  #allocation0 [shape = 'u32[]', space=smem, size = 0x4, offset = 0x4, fixed_abs, tag = 'smem constant byte address 0x4 - core index']
  #allocation1 [shape = 'u32[144,128]{1,0:T(1,128)}', space=vmem, size = 0x12000, scoped, tag = 'internal scratch']
  #allocation2 [shape = 'bf16[18,18,128]{2,1,0:T(8,128)(2,1)}', space=vmem, size = 0x1b000, scoped, tag = 'scratch operand']
  %s0 = inlined_call_operand.vmem [shape: bf16[2,18,18,128], index: 0, kind: input, shape index: {}]
  %s1 = inlined_call_operand.vmem [shape: bf16[3,384,128], index: 1, kind: input, shape index: {}]
  %s2 = inlined_call_operand.vmem [shape: f32[1,128], index: 2, kind: input, shape index: {}]
  %s3 = inlined_call_operand.vmem [shape: f32[1,128], index: 3, kind: input, shape index: {}]
  %s4 = inlined_call_operand.hbm [shape: bf16[3,384,128], index: 4, kind: input, shape index: {}]
  %s5 = inlined_call_operand.vmem [shape: f32[1,128], index: 5, kind: input, shape index: {}]
  %s6 = inlined_call_operand.vmem [shape: f32[1,128], index: 6, kind: input, shape index: {}]
  %s7 = inlined_call_operand.vmem [shape: bf16[128,128], index: 7, kind: input, shape index: {}]
  %s8 = inlined_call_operand.vmem [shape: f32[1,128], index: 8, kind: input, shape index: {}]
  %s9 = inlined_call_operand.vmem [shape: f32[1,128], index: 9, kind: input, shape index: {}]
  %s10 = inlined_call_operand.hbm [shape: f32[2,16,16,128], index: 10, kind: output, shape index: {}]
  %s11 = sld [smem:[#allocation0]]
  $region77: #{tpu_custom_call.1} parent=0
    _
  %s13 = ssub.s32 1, %s11
  %s14 = scalar_select 0, %s13, %s11
  $region1: #{tpu_custom_call.1} parent=0
    #allocation3 [shape = 'u8[294912]{0}', space=vmem, size = 0x48000, scoped, tag = 'input window, operand 4, single buffered']
    #allocation4 [shape = 's32[2]{0}', space=sflag, size = 0x8, scoped, tag = 'scoped memory for tpu_custom_call.1']
    #allocation5 [shape = 's32[2]{0}', space=sflag, size = 0x8, scoped, tag = 'scoped memory for tpu_custom_call.1']
    #allocation6 [shape = 'u8[262144]{0}', space=vmem, size = 0x40000, scoped, tag = 'output window, operand 0']
    %15 = vsyncpa [#allocation4], 0
    %16 = vsyncpa [#allocation5], 0
    %s17 = scalar_lea.sflag [#allocation5], 1
    %18 = vsyncpa %s17, 0
    loop: start=0, step=1, limit=4
    $region2: #{tpu_custom_call.1} parent=1 // loop_pre_header
      _
    $region3: #{tpu_custom_call.1} parent=1 // loop_header
      %s20 = sphi 0, %s24
      %p21 = scmp.ge.s32.totalorder %s20, 4
      %s30 = sphi 0, %s32
      %s33 = sphi 0, %s30
      %s34 = sphi 0, %s33
      %s50 = sphi 0, %s34
      %s54 = sphi 0, %s54
      %s56 = sphi 0, %s54
      %s57 = sphi 0, %s56
      %s71 = sphi 0, %s57
      %s75 = sphi 0, %s75
      %s77 = sphi 0, %s75
      %s78 = sphi 0, %s77
      %s92 = sphi 0, %s78
      %s96 = sphi 0, %s96
      %s98 = sphi 0, %s96
      %s99 = sphi 0, %s98
      %s113 = sphi 0, %s99
      %s117 = sphi 0, %s117
      %s119 = sphi 0, %s117
      %s120 = sphi 0, %s119
      %s134 = sphi 0, %s120
      %s138 = sphi 0, %s138
      %s140 = sphi 0, %s138
      %s141 = sphi 0, %s140
      %s155 = sphi 0, %s141
      %s159 = sphi 0, %s159
      %s161 = sphi 0, %s159
      %s162 = sphi 0, %s161
      %s176 = sphi 0, %s162
      %s180 = sphi 0, %s180
      %s182 = sphi 0, %s180
      %s183 = sphi 0, %s182
      %s197 = sphi 0, %s183
      %s201 = sphi 0, %s201
      %s203 = sphi 0, %s201
      %s204 = sphi 0, %s203
      %s218 = sphi 0, %s204
      %s222 = sphi 0, %s222
      %s224 = sphi 0, %s222
      %s225 = sphi 0, %s224
      %s239 = sphi 0, %s225
      %s245 = sphi 0, %s247
      %s248 = sphi 0, %s245
      %s249 = sphi 0, %s248
      %s265 = sphi 0, %s249
    $region4: #{tpu_custom_call.1} parent=1 // loop_header_branch
      %23 = sbr.rel (%p21) target = $region8
    $region5: #{tpu_custom_call.1} parent=1 // loop_body
      %s25 = ssub.s32 %s20, 1
      %s26 = ssub.s32 %s20, 2
      %s27 = sadd.s32 %s20, 1
      %s28 = ssub.s32 %s20, %s27
      %p29 = scmp.eq.s32.totalorder %s28, 0
      %s31 = sadd.s32 %s30, 1
      %s32 = scalar_select %p29, %s30, %s31
      %p35 = pneg %p29
      %p36 = scmp.eq.s32.totalorder %s20, 1
      %p37 = por %p35, %p36
      %p38 = scmp.ne.s32.totalorder %s30, %s33
      %p39 = scmp.eq.s32.totalorder %s20, 0
      %p40 = por %p38, %p39
      %p41 = scmp.ne.s32.totalorder %s30, %s33
      %p42 = scmp.eq.s32.totalorder %s25, 1
      %p43 = por %p41, %p42
      %p44 = scmp.ne.s32.totalorder %s33, %s34
      %p45 = scmp.eq.s32.totalorder %s25, 0
      %p46 = por %p44, %p45
      %p47 = scmp.ne.s32.totalorder %s33, %s34
      %p48 = scmp.eq.s32.totalorder %s26, 1
      %p49 = por %p47, %p48
      %p51 = scmp.ne.s32.totalorder %s34, %s50
      %p52 = scmp.eq.s32.totalorder %s26, 0
      %p53 = por %p51, %p52
      %s55 = sadd.s32 %s54, 1
      %p58 = scmp.eq.s32.totalorder %s20, 1
      %p59 = scmp.ne.s32.totalorder %s54, %s56
      %p60 = scmp.eq.s32.totalorder %s20, 0
      %p61 = por %p59, %p60
      %p62 = scmp.ne.s32.totalorder %s54, %s56
      %p63 = scmp.eq.s32.totalorder %s25, 1
      %p64 = por %p62, %p63
      %p65 = scmp.ne.s32.totalorder %s56, %s57
      %p66 = scmp.eq.s32.totalorder %s25, 0
      %p67 = por %p65, %p66
      %p68 = scmp.ne.s32.totalorder %s56, %s57
      %p69 = scmp.eq.s32.totalorder %s26, 1
      %p70 = por %p68, %p69
      %p72 = scmp.ne.s32.totalorder %s57, %s71
      %p73 = scmp.eq.s32.totalorder %s26, 0
      %p74 = por %p72, %p73
      %s76 = sadd.s32 %s75, 1
      %p79 = scmp.eq.s32.totalorder %s20, 1
      %p80 = scmp.ne.s32.totalorder %s75, %s77
      %p81 = scmp.eq.s32.totalorder %s20, 0
      %p82 = por %p80, %p81
      %p83 = scmp.ne.s32.totalorder %s75, %s77
      %p84 = scmp.eq.s32.totalorder %s25, 1
      %p85 = por %p83, %p84
      %p86 = scmp.ne.s32.totalorder %s77, %s78
      %p87 = scmp.eq.s32.totalorder %s25, 0
      %p88 = por %p86, %p87
      %p89 = scmp.ne.s32.totalorder %s77, %s78
      %p90 = scmp.eq.s32.totalorder %s26, 1
      %p91 = por %p89, %p90
      %p93 = scmp.ne.s32.totalorder %s78, %s92
      %p94 = scmp.eq.s32.totalorder %s26, 0
      %p95 = por %p93, %p94
      %s97 = sadd.s32 %s96, 1
      %p100 = scmp.eq.s32.totalorder %s20, 1
      %p101 = scmp.ne.s32.totalorder %s96, %s98
      %p102 = scmp.eq.s32.totalorder %s20, 0
      %p103 = por %p101, %p102
      %p104 = scmp.ne.s32.totalorder %s96, %s98
      %p105 = scmp.eq.s32.totalorder %s25, 1
      %p106 = por %p104, %p105
      %p107 = scmp.ne.s32.totalorder %s98, %s99
      %p108 = scmp.eq.s32.totalorder %s25, 0
      %p109 = por %p107, %p108
      %p110 = scmp.ne.s32.totalorder %s98, %s99
      %p111 = scmp.eq.s32.totalorder %s26, 1
      %p112 = por %p110, %p111
      %p114 = scmp.ne.s32.totalorder %s99, %s113
      %p115 = scmp.eq.s32.totalorder %s26, 0
      %p116 = por %p114, %p115
      %s118 = sadd.s32 %s117, 1
      %p121 = scmp.eq.s32.totalorder %s20, 1
      %p122 = scmp.ne.s32.totalorder %s117, %s119
      %p123 = scmp.eq.s32.totalorder %s20, 0
      %p124 = por %p122, %p123
      %p125 = scmp.ne.s32.totalorder %s117, %s119
      %p126 = scmp.eq.s32.totalorder %s25, 1
      %p127 = por %p125, %p126
      %p128 = scmp.ne.s32.totalorder %s119, %s120
      %p129 = scmp.eq.s32.totalorder %s25, 0
      %p130 = por %p128, %p129
      %p131 = scmp.ne.s32.totalorder %s119, %s120
      %p132 = scmp.eq.s32.totalorder %s26, 1
      %p133 = por %p131, %p132
      %p135 = scmp.ne.s32.totalorder %s120, %s134
      %p136 = scmp.eq.s32.totalorder %s26, 0
      %p137 = por %p135, %p136
      %s139 = sadd.s32 %s138, 1
      %p142 = scmp.eq.s32.totalorder %s20, 1
      %p143 = scmp.ne.s32.totalorder %s138, %s140
      %p144 = scmp.eq.s32.totalorder %s20, 0
      %p145 = por %p143, %p144
      %p146 = scmp.ne.s32.totalorder %s138, %s140
      %p147 = scmp.eq.s32.totalorder %s25, 1
      %p148 = por %p146, %p147
      %p149 = scmp.ne.s32.totalorder %s140, %s141
      %p150 = scmp.eq.s32.totalorder %s25, 0
      %p151 = por %p149, %p150
      %p152 = scmp.ne.s32.totalorder %s140, %s141
      %p153 = scmp.eq.s32.totalorder %s26, 1
      %p154 = por %p152, %p153
      %p156 = scmp.ne.s32.totalorder %s141, %s155
      %p157 = scmp.eq.s32.totalorder %s26, 0
      %p158 = por %p156, %p157
      %s160 = sadd.s32 %s159, 1
      %p163 = scmp.eq.s32.totalorder %s20, 1
      %p164 = scmp.ne.s32.totalorder %s159, %s161
      %p165 = scmp.eq.s32.totalorder %s20, 0
      %p166 = por %p164, %p165
      %p167 = scmp.ne.s32.totalorder %s159, %s161
      %p168 = scmp.eq.s32.totalorder %s25, 1
      %p169 = por %p167, %p168
      %p170 = scmp.ne.s32.totalorder %s161, %s162
      %p171 = scmp.eq.s32.totalorder %s25, 0
      %p172 = por %p170, %p171
      %p173 = scmp.ne.s32.totalorder %s161, %s162
      %p174 = scmp.eq.s32.totalorder %s26, 1
      %p175 = por %p173, %p174
      %p177 = scmp.ne.s32.totalorder %s162, %s176
      %p178 = scmp.eq.s32.totalorder %s26, 0
      %p179 = por %p177, %p178
      %s181 = sadd.s32 %s180, 1
      %p184 = scmp.eq.s32.totalorder %s20, 1
      %p185 = scmp.ne.s32.totalorder %s180, %s182
      %p186 = scmp.eq.s32.totalorder %s20, 0
      %p187 = por %p185, %p186
      %p188 = scmp.ne.s32.totalorder %s180, %s182
      %p189 = scmp.eq.s32.totalorder %s25, 1
      %p190 = por %p188, %p189
      %p191 = scmp.ne.s32.totalorder %s182, %s183
      %p192 = scmp.eq.s32.totalorder %s25, 0
      %p193 = por %p191, %p192
      %p194 = scmp.ne.s32.totalorder %s182, %s183
      %p195 = scmp.eq.s32.totalorder %s26, 1
      %p196 = por %p194, %p195
      %p198 = scmp.ne.s32.totalorder %s183, %s197
      %p199 = scmp.eq.s32.totalorder %s26, 0
      %p200 = por %p198, %p199
      %s202 = sadd.s32 %s201, 1
      %p205 = scmp.eq.s32.totalorder %s20, 1
      %p206 = scmp.ne.s32.totalorder %s201, %s203
      %p207 = scmp.eq.s32.totalorder %s20, 0
      %p208 = por %p206, %p207
      %p209 = scmp.ne.s32.totalorder %s201, %s203
      %p210 = scmp.eq.s32.totalorder %s25, 1
      %p211 = por %p209, %p210
      %p212 = scmp.ne.s32.totalorder %s203, %s204
      %p213 = scmp.eq.s32.totalorder %s25, 0
      %p214 = por %p212, %p213
      %p215 = scmp.ne.s32.totalorder %s203, %s204
      %p216 = scmp.eq.s32.totalorder %s26, 1
      %p217 = por %p215, %p216
      %p219 = scmp.ne.s32.totalorder %s204, %s218
      %p220 = scmp.eq.s32.totalorder %s26, 0
      %p221 = por %p219, %p220
      %s223 = sadd.s32 %s222, 1
      %p226 = scmp.eq.s32.totalorder %s20, 1
      %p227 = scmp.ne.s32.totalorder %s222, %s224
      %p228 = scmp.eq.s32.totalorder %s20, 0
      %p229 = por %p227, %p228
      %p230 = scmp.ne.s32.totalorder %s222, %s224
      %p231 = scmp.eq.s32.totalorder %s25, 1
      %p232 = por %p230, %p231
      %p233 = scmp.ne.s32.totalorder %s224, %s225
      %p234 = scmp.eq.s32.totalorder %s25, 0
      %p235 = por %p233, %p234
      %p236 = scmp.ne.s32.totalorder %s224, %s225
      %p237 = scmp.eq.s32.totalorder %s26, 1
      %p238 = por %p236, %p237
      %p240 = scmp.ne.s32.totalorder %s225, %s239
      %p241 = scmp.eq.s32.totalorder %s26, 0
      %p242 = por %p240, %p241
      %s243 = ssub.s32 %s20, %s27
      %p244 = scmp.eq.s32.totalorder %s243, 0
      %s246 = sadd.s32 %s245, 1
      %s247 = scalar_select %p244, %s245, %s246
      %p250 = pneg %p244
      %p251 = scmp.eq.s32.totalorder %s20, 1
      %p252 = por %p250, %p251
      %p253 = scmp.ne.s32.totalorder %s245, %s248
      %p254 = scmp.eq.s32.totalorder %s20, 0
      %p255 = por %p253, %p254
      %p256 = scmp.ne.s32.totalorder %s245, %s248
      %p257 = scmp.eq.s32.totalorder %s25, 1
      %p258 = por %p256, %p257
      %p259 = scmp.ne.s32.totalorder %s248, %s249
      %p260 = scmp.eq.s32.totalorder %s25, 0
      %p261 = por %p259, %p260
      %p262 = scmp.ne.s32.totalorder %s248, %s249
      %p263 = scmp.eq.s32.totalorder %s26, 1
      %p264 = por %p262, %p263
      %p266 = scmp.ne.s32.totalorder %s249, %s265
      %p267 = scmp.eq.s32.totalorder %s26, 0
      %p268 = por %p266, %p267
      %p269 = scmp.le.s32.totalorder 1, %s20
      %p270 = scmp.lt.s32.totalorder %s20, 3
      %p271 = pnand %p269, %p270
      %p272 = pneg %p271
      // Predicated region
      $region9: #{tpu_custom_call.1} parent=5 // pred_check
        _
      $region10: #{tpu_custom_call.1} parent=5 // pred_check_branch
        %274 = sbr.rel (%p271) target = $region12
      $region11: #{tpu_custom_call.1} parent=5 // pred_region
        %s275 = ssub.s32 %s20, 1
        // Predicated region
        $region13: #{tpu_custom_call.1} parent=11 // pred_check
          %p276 = pneg %p67
        $region14: #{tpu_custom_call.1} parent=11 // pred_check_branch
          %278 = sbr.rel (%p276) target = $region16
        $region15: #{tpu_custom_call.1} parent=11 // pred_region
          _
        $region16: #{tpu_custom_call.1} parent=11 // pred_fallthru
          _
        // Predicated region
        $region17: #{tpu_custom_call.1} parent=11 // pred_check
          %p279 = pneg %p88
        $region18: #{tpu_custom_call.1} parent=11 // pred_check_branch
          %281 = sbr.rel (%p279) target = $region20
        $region19: #{tpu_custom_call.1} parent=11 // pred_region
          _
        $region20: #{tpu_custom_call.1} parent=11 // pred_fallthru
          _
        // Predicated region
        $region21: #{tpu_custom_call.1} parent=11 // pred_check
          %p282 = pneg %p109
        $region22: #{tpu_custom_call.1} parent=11 // pred_check_branch
          %284 = sbr.rel (%p282) target = $region24
        $region23: #{tpu_custom_call.1} parent=11 // pred_region
          _
        $region24: #{tpu_custom_call.1} parent=11 // pred_fallthru
          _
        // Predicated region
        $region25: #{tpu_custom_call.1} parent=11 // pred_check
          %p285 = pneg %p130
        $region26: #{tpu_custom_call.1} parent=11 // pred_check_branch
          %287 = sbr.rel (%p285) target = $region28
        $region27: #{tpu_custom_call.1} parent=11 // pred_region
          %s289 = ssub.s32 9216, 9216
          %290 = vsyncadd [#allocation4], %s289
          %s291 = sshll.u32 [#allocation3], 4
          %s292 = int_to_ptr.vmem [resolvable:$true] %s291
          %297 = dma.hbm_to_vmem [thread:$0]  %s4, 9216, %s292, [#allocation4], 64, 64, 4
        $region28: #{tpu_custom_call.1} parent=11 // pred_fallthru
          _
        // Predicated region
        $region29: #{tpu_custom_call.1} parent=11 // pred_check
          %p298 = pneg %p151
        $region30: #{tpu_custom_call.1} parent=11 // pred_check_branch
          %300 = sbr.rel (%p298) target = $region32
        $region31: #{tpu_custom_call.1} parent=11 // pred_region
          _
        $region32: #{tpu_custom_call.1} parent=11 // pred_fallthru
          _
        // Predicated region
        $region33: #{tpu_custom_call.1} parent=11 // pred_check
          %p301 = pneg %p172
        $region34: #{tpu_custom_call.1} parent=11 // pred_check_branch
          %303 = sbr.rel (%p301) target = $region36
        $region35: #{tpu_custom_call.1} parent=11 // pred_region
          _
        $region36: #{tpu_custom_call.1} parent=11 // pred_fallthru
          _
        // Predicated region
        $region37: #{tpu_custom_call.1} parent=11 // pred_check
          %p304 = pneg %p193
        $region38: #{tpu_custom_call.1} parent=11 // pred_check_branch
          %306 = sbr.rel (%p304) target = $region40
        $region39: #{tpu_custom_call.1} parent=11 // pred_region
          _
        $region40: #{tpu_custom_call.1} parent=11 // pred_fallthru
          _
        // Predicated region
        $region41: #{tpu_custom_call.1} parent=11 // pred_check
          %p307 = pneg %p214
        $region42: #{tpu_custom_call.1} parent=11 // pred_check_branch
          %309 = sbr.rel (%p307) target = $region44
        $region43: #{tpu_custom_call.1} parent=11 // pred_region
          _
        $region44: #{tpu_custom_call.1} parent=11 // pred_fallthru
          _
        // Predicated region
        $region45: #{tpu_custom_call.1} parent=11 // pred_check
          %p310 = pneg %p235
        $region46: #{tpu_custom_call.1} parent=11 // pred_check_branch
          %312 = sbr.rel (%p310) target = $region48
        $region47: #{tpu_custom_call.1} parent=11 // pred_region
          _
        $region48: #{tpu_custom_call.1} parent=11 // pred_fallthru
          _
      $region12: #{tpu_custom_call.1} parent=5 // pred_fallthru
        _
      %p313 = scmp.lt.s32.totalorder %s20, 2
      // Predicated region
      $region49: #{tpu_custom_call.1} parent=5 // pred_check
        %p314 = pneg %p313
      $region50: #{tpu_custom_call.1} parent=5 // pred_check_branch
        %316 = sbr.rel (%p314) target = $region52
      $region51: #{tpu_custom_call.1} parent=5 // pred_region
        // Predicated region
        $region53: #{tpu_custom_call.1} parent=51 // pred_check
          %p317 = pneg %p40
        $region54: #{tpu_custom_call.1} parent=51 // pred_check_branch
          %319 = sbr.rel (%p317) target = $region56
        $region55: #{tpu_custom_call.1} parent=51 // pred_region
          %p320 = scmp.lt.s32.totalorder %s20, 1
          %s321 = scalar_select %p320, %s20, 1
          %s322 = smul.addr %s321, 54
          %s323 = smul.addr %s322, 4
          %s324 = scalar_lea.vmem %s0, %s323
        $region56: #{tpu_custom_call.1} parent=51 // pred_fallthru
          _
      $region52: #{tpu_custom_call.1} parent=5 // pred_fallthru
        _
      %p325 = scmp.le.s32.totalorder 1, %s20
      %p326 = scmp.lt.s32.totalorder %s20, 3
      %p327 = pnand %p325, %p326
      %p328 = pneg %p327
      // Predicated region
      $region57: #{tpu_custom_call.1} parent=5 // pred_check
        _
      $region58: #{tpu_custom_call.1} parent=5 // pred_check_branch
        %330 = sbr.rel (%p327) target = $region60
      $region59: #{tpu_custom_call.1} parent=5 // pred_region
        %s331 = ssub.s32 %s20, 1
        // Predicated region
        $region61: #{tpu_custom_call.1} parent=59 // pred_check
          %p332 = pneg %p130
        $region62: #{tpu_custom_call.1} parent=59 // pred_check_branch
          %334 = sbr.rel (%p332) target = $region64
        $region63: #{tpu_custom_call.1} parent=59 // pred_region
          %335 = dma.done [#allocation4], 9216
        $region64: #{tpu_custom_call.1} parent=59 // pred_fallthru
          _
        %p336 = scmp.lt.s32.totalorder %s25, 1
        %s337 = scalar_select %p336, %s25, 1
        %s338 = smul.addr %s337, 54
        %s339 = smul.addr %s338, 4
        %s340 = scalar_lea.vmem %s0, %s339
        %p341 = pneg %p46
        %p342 = pneg %p43
        %p343 = pneg %p67
        %p344 = pneg %p64
        %p345 = pneg %p88
        %p346 = pneg %p85
        %p347 = pneg %p109
        %p348 = pneg %p106
        %p349 = pneg %p130
        %p350 = pneg %p127
        %p351 = pneg %p151
        %p352 = pneg %p148
        %p353 = pneg %p172
        %p354 = pneg %p169
        %p355 = pneg %p193
        %p356 = pneg %p190
        %p357 = pneg %p214
        %p358 = pneg %p211
        %p359 = pneg %p235
        %p360 = pneg %p232
        %p361 = pneg %p261
        %p362 = pneg %p258
        %s363 = sand.u32 %s248, 1
        %s364 = scalar_lea.sflag [#allocation5], %s363
        %s365 = sand.u32 %s248, 1
        %s366 = smul.addr %s365, 256
        %s367 = scalar_lea.vmem [#allocation6], %s366
        %p368 = scmp.lt.s32.totalorder %s25, 1
        %s369 = scalar_select %p368, %s25, 1
        %s370 = smul.addr %s369, 54
        %s371 = smul.addr %s370, 4
        %s372 = scalar_lea.vmem %s0, %s371
        %374 = vst [vmem:[#allocation2] sm:$0xf] 0
        %375 = vst [vmem:[#allocation2 + $0x4] sm:$0xf] 0
        %376 = vst [vmem:[#allocation2 + $0x8] sm:$0x1] 0
        %s377 = scalar_lea.vmem [#allocation2], 204
        %378 = vst [vmem:[%s377] sm:$0xf] 0
        %379 = vst [vmem:[%s377 + $0x4] sm:$0xf] 0
        %380 = vst [vmem:[%s377 + $0x8] sm:$0x1] 0
        %vm381 = vcmask 1040384
        %vm382 = vsmask.f32 256
        %vm383 = vmand %vm381, %vm382
        %v384 = vld [vmem:[#allocation2] sm:$0x1]
        %v385 = vsel %vm383, 0, %v384
        %386 = vst [vmem:[#allocation2] sm:$0x1] %v385
        %v387 = vld [vmem:[#allocation2 + $0xc] sm:$0x1]
        %v388 = vsel %vm383, 0, %v387
        %389 = vst [vmem:[#allocation2 + $0xc] sm:$0x1] %v388
        %v390 = vld [vmem:[#allocation2 + $0x18] sm:$0x1]
        %v391 = vsel %vm383, 0, %v390
        %392 = vst [vmem:[#allocation2 + $0x18] sm:$0x1] %v391
        %v393 = vld [vmem:[#allocation2 + $0x24] sm:$0x1]
        %v394 = vsel %vm383, 0, %v393
        %395 = vst [vmem:[#allocation2 + $0x24] sm:$0x1] %v394
        %v396 = vld [vmem:[#allocation2 + $0x30] sm:$0x1]
        %v397 = vsel %vm383, 0, %v396
        %398 = vst [vmem:[#allocation2 + $0x30] sm:$0x1] %v397
        %v399 = vld [vmem:[#allocation2 + $0x3c] sm:$0x1]
        %v400 = vsel %vm383, 0, %v399
        %401 = vst [vmem:[#allocation2 + $0x3c] sm:$0x1] %v400
        %v402 = vld [vmem:[#allocation2 + $0x48] sm:$0x1]
        %v403 = vsel %vm383, 0, %v402
        %404 = vst [vmem:[#allocation2 + $0x48] sm:$0x1] %v403
        %v405 = vld [vmem:[#allocation2 + $0x54] sm:$0x1]
        %v406 = vsel %vm383, 0, %v405
        %407 = vst [vmem:[#allocation2 + $0x54] sm:$0x1] %v406
        %v408 = vld [vmem:[#allocation2 + $0x60] sm:$0x1]
        %v409 = vsel %vm383, 0, %v408
        %410 = vst [vmem:[#allocation2 + $0x60] sm:$0x1] %v409
        %v411 = vld [vmem:[#allocation2 + $0x6c] sm:$0x1]
        %v412 = vsel %vm383, 0, %v411
        %413 = vst [vmem:[#allocation2 + $0x6c] sm:$0x1] %v412
        %v414 = vld [vmem:[#allocation2 + $0x78] sm:$0x1]
        %v415 = vsel %vm383, 0, %v414
        %416 = vst [vmem:[#allocation2 + $0x78] sm:$0x1] %v415
        %v417 = vld [vmem:[#allocation2 + $0x84] sm:$0x1]
        %v418 = vsel %vm383, 0, %v417
        %419 = vst [vmem:[#allocation2 + $0x84] sm:$0x1] %v418
        %v420 = vld [vmem:[#allocation2 + $0x90] sm:$0x1]
        %v421 = vsel %vm383, 0, %v420
        %422 = vst [vmem:[#allocation2 + $0x90] sm:$0x1] %v421
        %v423 = vld [vmem:[#allocation2 + $0x9c] sm:$0x1]
        %v424 = vsel %vm383, 0, %v423
        %425 = vst [vmem:[#allocation2 + $0x9c] sm:$0x1] %v424
        %v426 = vld [vmem:[#allocation2 + $0xa8] sm:$0x1]
        %v427 = vsel %vm383, 0, %v426
        %428 = vst [vmem:[#allocation2 + $0xa8] sm:$0x1] %v427
        %v429 = vld [vmem:[#allocation2 + $0xb4] sm:$0x1]
        %v430 = vsel %vm383, 0, %v429
        %431 = vst [vmem:[#allocation2 + $0xb4] sm:$0x1] %v430
        %v432 = vld [vmem:[#allocation2 + $0xc0] sm:$0x1]
        %v433 = vsel %vm383, 0, %v432
        %434 = vst [vmem:[#allocation2 + $0xc0] sm:$0x1] %v433
        %v435 = vld [vmem:[#allocation2 + $0xcc] sm:$0x1]
        %v436 = vsel %vm383, 0, %v435
        %437 = vst [vmem:[#allocation2 + $0xcc] sm:$0x1] %v436
        %vm438 = vsmask.f32 7938
        %vm439 = vmand %vm381, %vm438
        %v440 = vld [vmem:[#allocation2 + $0x8] sm:$0x1]
        %v441 = vsel %vm439, 0, %v440
        %442 = vst [vmem:[#allocation2 + $0x8] sm:$0x1] %v441
        %v443 = vld [vmem:[#allocation2 + $0x14] sm:$0x1]
        %v444 = vsel %vm439, 0, %v443
        %445 = vst [vmem:[#allocation2 + $0x14] sm:$0x1] %v444
        %v446 = vld [vmem:[#allocation2 + $0x20] sm:$0x1]
        %v447 = vsel %vm439, 0, %v446
        %448 = vst [vmem:[#allocation2 + $0x20] sm:$0x1] %v447
        %v449 = vld [vmem:[#allocation2 + $0x2c] sm:$0x1]
        %v450 = vsel %vm439, 0, %v449
        %451 = vst [vmem:[#allocation2 + $0x2c] sm:$0x1] %v450
        %v452 = vld [vmem:[#allocation2 + $0x38] sm:$0x1]
        %v453 = vsel %vm439, 0, %v452
        %454 = vst [vmem:[#allocation2 + $0x38] sm:$0x1] %v453
        %v455 = vld [vmem:[#allocation2 + $0x44] sm:$0x1]
        %v456 = vsel %vm439, 0, %v455
        %457 = vst [vmem:[#allocation2 + $0x44] sm:$0x1] %v456
        %v458 = vld [vmem:[#allocation2 + $0x50] sm:$0x1]
        %v459 = vsel %vm439, 0, %v458
        %460 = vst [vmem:[#allocation2 + $0x50] sm:$0x1] %v459
        %v461 = vld [vmem:[#allocation2 + $0x5c] sm:$0x1]
        %v462 = vsel %vm439, 0, %v461
        %463 = vst [vmem:[#allocation2 + $0x5c] sm:$0x1] %v462
        %v464 = vld [vmem:[#allocation2 + $0x68] sm:$0x1]
        %v465 = vsel %vm439, 0, %v464
        %466 = vst [vmem:[#allocation2 + $0x68] sm:$0x1] %v465
        %v467 = vld [vmem:[#allocation2 + $0x74] sm:$0x1]
        %v468 = vsel %vm439, 0, %v467
        %469 = vst [vmem:[#allocation2 + $0x74] sm:$0x1] %v468
        %v470 = vld [vmem:[#allocation2 + $0x80] sm:$0x1]
        %v471 = vsel %vm439, 0, %v470
        %472 = vst [vmem:[#allocation2 + $0x80] sm:$0x1] %v471
        %v473 = vld [vmem:[#allocation2 + $0x8c] sm:$0x1]
        %v474 = vsel %vm439, 0, %v473
        %475 = vst [vmem:[#allocation2 + $0x8c] sm:$0x1] %v474
        %v476 = vld [vmem:[#allocation2 + $0x98] sm:$0x1]
        %v477 = vsel %vm439, 0, %v476
        %478 = vst [vmem:[#allocation2 + $0x98] sm:$0x1] %v477
        %v479 = vld [vmem:[#allocation2 + $0xa4] sm:$0x1]
        %v480 = vsel %vm439, 0, %v479
        %481 = vst [vmem:[#allocation2 + $0xa4] sm:$0x1] %v480
        %v482 = vld [vmem:[#allocation2 + $0xb0] sm:$0x1]
        %v483 = vsel %vm439, 0, %v482
        %484 = vst [vmem:[#allocation2 + $0xb0] sm:$0x1] %v483
        %v485 = vld [vmem:[#allocation2 + $0xbc] sm:$0x1]
        %v486 = vsel %vm439, 0, %v485
        %487 = vst [vmem:[#allocation2 + $0xbc] sm:$0x1] %v486
        %v488 = vld [vmem:[#allocation2 + $0xc8] sm:$0x1]
        %v489 = vsel %vm439, 0, %v488
        %490 = vst [vmem:[#allocation2 + $0xc8] sm:$0x1] %v489
        %v491 = vld [vmem:[#allocation2 + $0xd4] sm:$0x1]
        %v492 = vsel %vm439, 0, %v491
        %493 = vst [vmem:[#allocation2 + $0xd4] sm:$0x1] %v492
        %v494 = vld [vmem:[%s372] sm:$0xf]
        %v495 = vld [vmem:[%s372 + $0x4] sm:$0xf]
        %v496 = vld [vmem:[%s372 + $0xc] sm:$0xf]
        %v497 = vld [vmem:[%s372 + $0x10] sm:$0xf]
        %v498 = vld [vmem:[%s372 + $0x18] sm:$0xf]
        %v499 = vld [vmem:[%s372 + $0x1c] sm:$0xf]
        %v500 = vld [vmem:[%s372 + $0x24] sm:$0xf]
        %v501 = vld [vmem:[%s372 + $0x28] sm:$0xf]
        %v502 = vld [vmem:[%s372 + $0x30] sm:$0xf]
        %v503 = vld [vmem:[%s372 + $0x34] sm:$0xf]
        %v504 = vld [vmem:[%s372 + $0x3c] sm:$0xf]
        %v505 = vld [vmem:[%s372 + $0x40] sm:$0xf]
        %v506 = vld [vmem:[%s372 + $0x48] sm:$0xf]
        %v507 = vld [vmem:[%s372 + $0x4c] sm:$0xf]
        %v508 = vld [vmem:[%s372 + $0x54] sm:$0xf]
        %v509 = vld [vmem:[%s372 + $0x58] sm:$0xf]
        %v510 = vld [vmem:[%s372 + $0x60] sm:$0xf]
        %v511 = vld [vmem:[%s372 + $0x64] sm:$0xf]
        %v512 = vld [vmem:[%s372 + $0x6c] sm:$0xf]
        %v513 = vld [vmem:[%s372 + $0x70] sm:$0xf]
        %v514 = vld [vmem:[%s372 + $0x78] sm:$0xf]
        %v515 = vld [vmem:[%s372 + $0x7c] sm:$0xf]
        %v516 = vld [vmem:[%s372 + $0x84] sm:$0xf]
        %v517 = vld [vmem:[%s372 + $0x88] sm:$0xf]
        %v518 = vld [vmem:[%s372 + $0x90] sm:$0xf]
        %v519 = vld [vmem:[%s372 + $0x94] sm:$0xf]
        %v520 = vld [vmem:[%s372 + $0x9c] sm:$0xf]
        %v521 = vld [vmem:[%s372 + $0xa0] sm:$0xf]
        %v522 = vld [vmem:[%s372 + $0xa8] sm:$0xf]
        %v523 = vld [vmem:[%s372 + $0xac] sm:$0xf]
        %v524 = vld [vmem:[%s372 + $0xb4] sm:$0xf]
        %v525 = vld [vmem:[%s372 + $0xb8] sm:$0xf]
        %v526 = vld [vmem:[%s372 + $0x8] sm:$0x1]
        %v527 = vld [vmem:[%s372 + $0x14] sm:$0x1]
        %v528 = vld [vmem:[%s372 + $0x20] sm:$0x1]
        %v529 = vld [vmem:[%s372 + $0x2c] sm:$0x1]
        %v530 = vld [vmem:[%s372 + $0x38] sm:$0x1]
        %v531 = vld [vmem:[%s372 + $0x44] sm:$0x1]
        %v532 = vld [vmem:[%s372 + $0x50] sm:$0x1]
        %v533 = vld [vmem:[%s372 + $0x5c] sm:$0x1]
        %v534 = vld [vmem:[%s372 + $0x68] sm:$0x1]
        %v535 = vld [vmem:[%s372 + $0x74] sm:$0x1]
        %v536 = vld [vmem:[%s372 + $0x80] sm:$0x1]
        %v537 = vld [vmem:[%s372 + $0x8c] sm:$0x1]
        %v538 = vld [vmem:[%s372 + $0x98] sm:$0x1]
        %v539 = vld [vmem:[%s372 + $0xa4] sm:$0x1]
        %v540 = vld [vmem:[%s372 + $0xb0] sm:$0x1]
        %v541 = vld [vmem:[%s372 + $0xbc] sm:$0x1]
        %v542 = vld [vmem:[%s372] sm:$0xe]
        %v543 = vld [vmem:[%s372 + $0xc] sm:$0xe]
        %v544 = vld [vmem:[%s372 + $0x18] sm:$0xe]
        %v545 = vld [vmem:[%s372 + $0x24] sm:$0xe]
        %v546 = vld [vmem:[%s372 + $0x30] sm:$0xe]
        %v547 = vld [vmem:[%s372 + $0x3c] sm:$0xe]
        %v548 = vld [vmem:[%s372 + $0x48] sm:$0xe]
        %v549 = vld [vmem:[%s372 + $0x54] sm:$0xe]
        %v550 = vld [vmem:[%s372 + $0x60] sm:$0xe]
        %v551 = vld [vmem:[%s372 + $0x6c] sm:$0xe]
        %v552 = vld [vmem:[%s372 + $0x78] sm:$0xe]
        %v553 = vld [vmem:[%s372 + $0x84] sm:$0xe]
        %v554 = vld [vmem:[%s372 + $0x90] sm:$0xe]
        %v555 = vld [vmem:[%s372 + $0x9c] sm:$0xe]
        %v556 = vld [vmem:[%s372 + $0xa8] sm:$0xe]
        %v557 = vld [vmem:[%s372 + $0xb4] sm:$0xe]
        %v590 = vunpack.c.l.b16 %v494
        %v591 = vunpack.c.l.b16 %v495
        %v592 = vunpack.c.l.b16 %v496
        %v593 = vunpack.c.l.b16 %v497
        %v594 = vunpack.c.l.b16 %v498
        %v595 = vunpack.c.l.b16 %v499
        %v596 = vunpack.c.l.b16 %v500
        %v597 = vunpack.c.l.b16 %v501
        %v598 = vunpack.c.l.b16 %v502
        %v599 = vunpack.c.l.b16 %v503
        %v600 = vunpack.c.l.b16 %v504
        %v601 = vunpack.c.l.b16 %v505
        %v602 = vunpack.c.l.b16 %v506
        %v603 = vunpack.c.l.b16 %v507
        %v604 = vunpack.c.l.b16 %v508
        %v605 = vunpack.c.l.b16 %v509
        %v606 = vunpack.c.l.b16 %v510
        %v607 = vunpack.c.l.b16 %v511
        %v608 = vunpack.c.l.b16 %v512
        %v609 = vunpack.c.l.b16 %v513
        %v610 = vunpack.c.l.b16 %v514
        %v611 = vunpack.c.l.b16 %v515
        %v612 = vunpack.c.l.b16 %v516
        %v613 = vunpack.c.l.b16 %v517
        %v614 = vunpack.c.l.b16 %v518
        %v615 = vunpack.c.l.b16 %v519
        %v616 = vunpack.c.l.b16 %v520
        %v617 = vunpack.c.l.b16 %v521
        %v618 = vunpack.c.l.b16 %v522
        %v619 = vunpack.c.l.b16 %v523
        %v620 = vunpack.c.l.b16 %v524
        %v621 = vunpack.c.l.b16 %v525
        %v622 = vpack.c.b16 %v591, %v590
        %v623 = vpack.c.b16 %v593, %v592
        %v624 = vpack.c.b16 %v595, %v594
        %v625 = vpack.c.b16 %v597, %v596
        %v626 = vpack.c.b16 %v599, %v598
        %v627 = vpack.c.b16 %v601, %v600
        %v628 = vpack.c.b16 %v603, %v602
        %v629 = vpack.c.b16 %v605, %v604
        %v630 = vpack.c.b16 %v607, %v606
        %v631 = vpack.c.b16 %v609, %v608
        %v632 = vpack.c.b16 %v611, %v610
        %v633 = vpack.c.b16 %v613, %v612
        %v634 = vpack.c.b16 %v615, %v614
        %v635 = vpack.c.b16 %v617, %v616
        %v636 = vpack.c.b16 %v619, %v618
        %v637 = vpack.c.b16 %v621, %v620
        %v670 = vunpack.c.l.b16 %v526
        %v671 = vunpack.c.l.b16 %v527
        %v672 = vunpack.c.l.b16 %v528
        %v673 = vunpack.c.l.b16 %v529
        %v674 = vunpack.c.l.b16 %v530
        %v675 = vunpack.c.l.b16 %v531
        %v676 = vunpack.c.l.b16 %v532
        %v677 = vunpack.c.l.b16 %v533
        %v678 = vunpack.c.l.b16 %v534
        %v679 = vunpack.c.l.b16 %v535
        %v680 = vunpack.c.l.b16 %v536
        %v681 = vunpack.c.l.b16 %v537
        %v682 = vunpack.c.l.b16 %v538
        %v683 = vunpack.c.l.b16 %v539
        %v684 = vunpack.c.l.b16 %v540
        %v685 = vunpack.c.l.b16 %v541
        %v686 = vpack.c.b16 %v670, %v670
        %v687 = vpack.c.b16 %v671, %v671
        %v688 = vpack.c.b16 %v672, %v672
        %v689 = vpack.c.b16 %v673, %v673
        %v690 = vpack.c.b16 %v674, %v674
        %v691 = vpack.c.b16 %v675, %v675
        %v692 = vpack.c.b16 %v676, %v676
        %v693 = vpack.c.b16 %v677, %v677
        %v694 = vpack.c.b16 %v678, %v678
        %v695 = vpack.c.b16 %v679, %v679
        %v696 = vpack.c.b16 %v680, %v680
        %v697 = vpack.c.b16 %v681, %v681
        %v698 = vpack.c.b16 %v682, %v682
        %v699 = vpack.c.b16 %v683, %v683
        %v700 = vpack.c.b16 %v684, %v684
        %v701 = vpack.c.b16 %v685, %v685
        %vm702 = vsmask.f32 7424
        %v704 = vshrl.u32 %v622, 16
        %v706 = vshll.u32 %v622, 16
        %v708 = vrot.slane %v706, 1
        %v709 = vor.u32 %v704, %v708
        %v711 = vshll.u32 %v686, 16
        %v713 = vrot.slane %v711, 1
        %v714 = vsel %vm702, %v709, %v713
        %v716 = vshrl.u32 %v623, 16
        %v718 = vshll.u32 %v623, 16
        %v720 = vrot.slane %v718, 1
        %v721 = vor.u32 %v716, %v720
        %v723 = vshll.u32 %v687, 16
        %v725 = vrot.slane %v723, 1
        %v726 = vsel %vm702, %v721, %v725
        %v728 = vshrl.u32 %v624, 16
        %v730 = vshll.u32 %v624, 16
        %v732 = vrot.slane %v730, 1
        %v733 = vor.u32 %v728, %v732
        %v735 = vshll.u32 %v688, 16
        %v737 = vrot.slane %v735, 1
        %v738 = vsel %vm702, %v733, %v737
        %v740 = vshrl.u32 %v625, 16
        %v742 = vshll.u32 %v625, 16
        %v744 = vrot.slane %v742, 1
        %v745 = vor.u32 %v740, %v744
        %v747 = vshll.u32 %v689, 16
        %v749 = vrot.slane %v747, 1
        %v750 = vsel %vm702, %v745, %v749
        %v752 = vshrl.u32 %v626, 16
        %v754 = vshll.u32 %v626, 16
        %v756 = vrot.slane %v754, 1
        %v757 = vor.u32 %v752, %v756
        %v759 = vshll.u32 %v690, 16
        %v761 = vrot.slane %v759, 1
        %v762 = vsel %vm702, %v757, %v761
        %v764 = vshrl.u32 %v627, 16
        %v766 = vshll.u32 %v627, 16
        %v768 = vrot.slane %v766, 1
        %v769 = vor.u32 %v764, %v768
        %v771 = vshll.u32 %v691, 16
        %v773 = vrot.slane %v771, 1
        %v774 = vsel %vm702, %v769, %v773
        %v776 = vshrl.u32 %v628, 16
        %v778 = vshll.u32 %v628, 16
        %v780 = vrot.slane %v778, 1
        %v781 = vor.u32 %v776, %v780
        %v783 = vshll.u32 %v692, 16
        %v785 = vrot.slane %v783, 1
        %v786 = vsel %vm702, %v781, %v785
        %v788 = vshrl.u32 %v629, 16
        %v790 = vshll.u32 %v629, 16
        %v792 = vrot.slane %v790, 1
        %v793 = vor.u32 %v788, %v792
        %v795 = vshll.u32 %v693, 16
        %v797 = vrot.slane %v795, 1
        %v798 = vsel %vm702, %v793, %v797
        %v800 = vshrl.u32 %v630, 16
        %v802 = vshll.u32 %v630, 16
        %v804 = vrot.slane %v802, 1
        %v805 = vor.u32 %v800, %v804
        %v807 = vshll.u32 %v694, 16
        %v809 = vrot.slane %v807, 1
        %v810 = vsel %vm702, %v805, %v809
        %v812 = vshrl.u32 %v631, 16
        %v814 = vshll.u32 %v631, 16
        %v816 = vrot.slane %v814, 1
        %v817 = vor.u32 %v812, %v816
        %v819 = vshll.u32 %v695, 16
        %v821 = vrot.slane %v819, 1
        %v822 = vsel %vm702, %v817, %v821
        %v824 = vshrl.u32 %v632, 16
        %v826 = vshll.u32 %v632, 16
        %v828 = vrot.slane %v826, 1
        %v829 = vor.u32 %v824, %v828
        %v831 = vshll.u32 %v696, 16
        %v833 = vrot.slane %v831, 1
        %v834 = vsel %vm702, %v829, %v833
        %v836 = vshrl.u32 %v633, 16
        %v838 = vshll.u32 %v633, 16
        %v840 = vrot.slane %v838, 1
        %v841 = vor.u32 %v836, %v840
        %v843 = vshll.u32 %v697, 16
        %v845 = vrot.slane %v843, 1
        %v846 = vsel %vm702, %v841, %v845
        %v848 = vshrl.u32 %v634, 16
        %v850 = vshll.u32 %v634, 16
        %v852 = vrot.slane %v850, 1
        %v853 = vor.u32 %v848, %v852
        %v855 = vshll.u32 %v698, 16
        %v857 = vrot.slane %v855, 1
        %v858 = vsel %vm702, %v853, %v857
        %v860 = vshrl.u32 %v635, 16
        %v862 = vshll.u32 %v635, 16
        %v864 = vrot.slane %v862, 1
        %v865 = vor.u32 %v860, %v864
        %v867 = vshll.u32 %v699, 16
        %v869 = vrot.slane %v867, 1
        %v870 = vsel %vm702, %v865, %v869
        %v872 = vshrl.u32 %v636, 16
        %v874 = vshll.u32 %v636, 16
        %v876 = vrot.slane %v874, 1
        %v877 = vor.u32 %v872, %v876
        %v879 = vshll.u32 %v700, 16
        %v881 = vrot.slane %v879, 1
        %v882 = vsel %vm702, %v877, %v881
        %v884 = vshrl.u32 %v637, 16
        %v886 = vshll.u32 %v637, 16
        %v888 = vrot.slane %v886, 1
        %v889 = vor.u32 %v884, %v888
        %v891 = vshll.u32 %v701, 16
        %v893 = vrot.slane %v891, 1
        %v894 = vsel %vm702, %v889, %v893
        %v927 = vunpack.c.l.b16 %v542
        %v928 = vunpack.c.l.b16 %v543
        %v929 = vunpack.c.l.b16 %v544
        %v930 = vunpack.c.l.b16 %v545
        %v931 = vunpack.c.l.b16 %v546
        %v932 = vunpack.c.l.b16 %v547
        %v933 = vunpack.c.l.b16 %v548
        %v934 = vunpack.c.l.b16 %v549
        %v935 = vunpack.c.l.b16 %v550
        %v936 = vunpack.c.l.b16 %v551
        %v937 = vunpack.c.l.b16 %v552
        %v938 = vunpack.c.l.b16 %v553
        %v939 = vunpack.c.l.b16 %v554
        %v940 = vunpack.c.l.b16 %v555
        %v941 = vunpack.c.l.b16 %v556
        %v942 = vunpack.c.l.b16 %v557
        %v943 = vpack.c.b16 %v591, %v927
        %v944 = vpack.c.b16 %v593, %v928
        %v945 = vpack.c.b16 %v595, %v929
        %v946 = vpack.c.b16 %v597, %v930
        %v947 = vpack.c.b16 %v599, %v931
        %v948 = vpack.c.b16 %v601, %v932
        %v949 = vpack.c.b16 %v603, %v933
        %v950 = vpack.c.b16 %v605, %v934
        %v951 = vpack.c.b16 %v607, %v935
        %v952 = vpack.c.b16 %v609, %v936
        %v953 = vpack.c.b16 %v611, %v937
        %v954 = vpack.c.b16 %v613, %v938
        %v955 = vpack.c.b16 %v615, %v939
        %v956 = vpack.c.b16 %v617, %v940
        %v957 = vpack.c.b16 %v619, %v941
        %v958 = vpack.c.b16 %v621, %v942
        %vm959 = vcmask 1046528
        %v960 = vrot.slane %v943, 1
        %v961 = vrot.slane %v686, 1
        %v962 = vsel %vm959, %v960, %v961
        %v963 = vrot.slane %v944, 1
        %v964 = vrot.slane %v687, 1
        %v965 = vsel %vm959, %v963, %v964
        %v966 = vrot.slane %v945, 1
        %v967 = vrot.slane %v688, 1
        %v968 = vsel %vm959, %v966, %v967
        %v969 = vrot.slane %v946, 1
        %v970 = vrot.slane %v689, 1
        %v971 = vsel %vm959, %v969, %v970
        %v972 = vrot.slane %v947, 1
        %v973 = vrot.slane %v690, 1
        %v974 = vsel %vm959, %v972, %v973
        %v975 = vrot.slane %v948, 1
        %v976 = vrot.slane %v691, 1
        %v977 = vsel %vm959, %v975, %v976
        %v978 = vrot.slane %v949, 1
        %v979 = vrot.slane %v692, 1
        %v980 = vsel %vm959, %v978, %v979
        %v981 = vrot.slane %v950, 1
        %v982 = vrot.slane %v693, 1
        %v983 = vsel %vm959, %v981, %v982
        %v984 = vrot.slane %v951, 1
        %v985 = vrot.slane %v694, 1
        %v986 = vsel %vm959, %v984, %v985
        %v987 = vrot.slane %v952, 1
        %v988 = vrot.slane %v695, 1
        %v989 = vsel %vm959, %v987, %v988
        %v990 = vrot.slane %v953, 1
        %v991 = vrot.slane %v696, 1
        %v992 = vsel %vm959, %v990, %v991
        %v993 = vrot.slane %v954, 1
        %v994 = vrot.slane %v697, 1
        %v995 = vsel %vm959, %v993, %v994
        %v996 = vrot.slane %v955, 1
        %v997 = vrot.slane %v698, 1
        %v998 = vsel %vm959, %v996, %v997
        %v999 = vrot.slane %v956, 1
        %v1000 = vrot.slane %v699, 1
        %v1001 = vsel %vm959, %v999, %v1000
        %v1002 = vrot.slane %v957, 1
        %v1003 = vrot.slane %v700, 1
        %v1004 = vsel %vm959, %v1002, %v1003
        %v1005 = vrot.slane %v958, 1
        %v1006 = vrot.slane %v701, 1
        %v1007 = vsel %vm959, %v1005, %v1006
        %v1024 = vld [vmem:[%s1] sm:$0xf]
        %v1025 = vld [vmem:[%s1 + $0x4] sm:$0xf]
        %v1026 = vld [vmem:[%s1 + $0x8] sm:$0xf]
        %v1027 = vld [vmem:[%s1 + $0xc] sm:$0xf]
        %v1028 = vld [vmem:[%s1 + $0x10] sm:$0xf]
        %v1029 = vld [vmem:[%s1 + $0x14] sm:$0xf]
        %v1030 = vld [vmem:[%s1 + $0x18] sm:$0xf]
        %v1031 = vld [vmem:[%s1 + $0x1c] sm:$0xf]
        %v1032 = vld [vmem:[%s1 + $0x20] sm:$0xf]
        %v1033 = vld [vmem:[%s1 + $0x24] sm:$0xf]
        %v1034 = vld [vmem:[%s1 + $0x28] sm:$0xf]
        %v1035 = vld [vmem:[%s1 + $0x2c] sm:$0xf]
        %v1036 = vld [vmem:[%s1 + $0x30] sm:$0xf]
        %v1037 = vld [vmem:[%s1 + $0x34] sm:$0xf]
        %v1038 = vld [vmem:[%s1 + $0x38] sm:$0xf]
        %v1039 = vld [vmem:[%s1 + $0x3c] sm:$0xf]
        %v1040 = vld [vmem:[%s1 + $0x40] sm:$0xf]
        %v1041 = vld [vmem:[%s1 + $0x44] sm:$0xf]
        %v1042 = vld [vmem:[%s1 + $0x48] sm:$0xf]
        %v1043 = vld [vmem:[%s1 + $0x4c] sm:$0xf]
        %v1044 = vld [vmem:[%s1 + $0x50] sm:$0xf]
        %v1045 = vld [vmem:[%s1 + $0x54] sm:$0xf]
        %v1046 = vld [vmem:[%s1 + $0x58] sm:$0xf]
        %v1047 = vld [vmem:[%s1 + $0x5c] sm:$0xf]
        %v1048 = vld [vmem:[%s1 + $0x60] sm:$0xf]
        %v1049 = vld [vmem:[%s1 + $0x64] sm:$0xf]
        %v1050 = vld [vmem:[%s1 + $0x68] sm:$0xf]
        %v1051 = vld [vmem:[%s1 + $0x6c] sm:$0xf]
        %v1052 = vld [vmem:[%s1 + $0x70] sm:$0xf]
        %v1053 = vld [vmem:[%s1 + $0x74] sm:$0xf]
        %v1054 = vld [vmem:[%s1 + $0x78] sm:$0xf]
        %v1055 = vld [vmem:[%s1 + $0x7c] sm:$0xf]
        %v1056 = vld [vmem:[%s1 + $0x80] sm:$0xf]
        %v1057 = vld [vmem:[%s1 + $0x84] sm:$0xf]
        %v1058 = vld [vmem:[%s1 + $0x88] sm:$0xf]
        %v1059 = vld [vmem:[%s1 + $0x8c] sm:$0xf]
        %v1060 = vld [vmem:[%s1 + $0x90] sm:$0xf]
        %v1061 = vld [vmem:[%s1 + $0x94] sm:$0xf]
        %v1062 = vld [vmem:[%s1 + $0x98] sm:$0xf]
        %v1063 = vld [vmem:[%s1 + $0x9c] sm:$0xf]
        %v1064 = vld [vmem:[%s1 + $0xa0] sm:$0xf]
        %v1065 = vld [vmem:[%s1 + $0xa4] sm:$0xf]
        %v1066 = vld [vmem:[%s1 + $0xa8] sm:$0xf]
        %v1067 = vld [vmem:[%s1 + $0xac] sm:$0xf]
        %v1068 = vld [vmem:[%s1 + $0xb0] sm:$0xf]
        %v1069 = vld [vmem:[%s1 + $0xb4] sm:$0xf]
        %v1070 = vld [vmem:[%s1 + $0xb8] sm:$0xf]
        %v1071 = vld [vmem:[%s1 + $0xbc] sm:$0xf]
        %s1072 = scalar_lea.vmem %s372, 12
        %v1073 = vld [vmem:[%s1072] sm:$0xf]
        %v1074 = vld [vmem:[%s1072 + $0x4] sm:$0xf]
        %v1075 = vld [vmem:[%s1072 + $0xc] sm:$0xf]
        %v1076 = vld [vmem:[%s1072 + $0x10] sm:$0xf]
        %v1077 = vld [vmem:[%s1072 + $0x18] sm:$0xf]
        %v1078 = vld [vmem:[%s1072 + $0x1c] sm:$0xf]
        %v1079 = vld [vmem:[%s1072 + $0x24] sm:$0xf]
        %v1080 = vld [vmem:[%s1072 + $0x28] sm:$0xf]
        %v1081 = vld [vmem:[%s1072 + $0x30] sm:$0xf]
        %v1082 = vld [vmem:[%s1072 + $0x34] sm:$0xf]
        %v1083 = vld [vmem:[%s1072 + $0x3c] sm:$0xf]
        %v1084 = vld [vmem:[%s1072 + $0x40] sm:$0xf]
        %v1085 = vld [vmem:[%s1072 + $0x48] sm:$0xf]
        %v1086 = vld [vmem:[%s1072 + $0x4c] sm:$0xf]
        %v1087 = vld [vmem:[%s1072 + $0x54] sm:$0xf]
        %v1088 = vld [vmem:[%s1072 + $0x58] sm:$0xf]
        %v1089 = vld [vmem:[%s1072 + $0x60] sm:$0xf]
        %v1090 = vld [vmem:[%s1072 + $0x64] sm:$0xf]
        %v1091 = vld [vmem:[%s1072 + $0x6c] sm:$0xf]
        %v1092 = vld [vmem:[%s1072 + $0x70] sm:$0xf]
        %v1093 = vld [vmem:[%s1072 + $0x78] sm:$0xf]
        %v1094 = vld [vmem:[%s1072 + $0x7c] sm:$0xf]
        %v1095 = vld [vmem:[%s1072 + $0x84] sm:$0xf]
        %v1096 = vld [vmem:[%s1072 + $0x88] sm:$0xf]
        %v1097 = vld [vmem:[%s1072 + $0x90] sm:$0xf]
        %v1098 = vld [vmem:[%s1072 + $0x94] sm:$0xf]
        %v1099 = vld [vmem:[%s1072 + $0x9c] sm:$0xf]
        %v1100 = vld [vmem:[%s1072 + $0xa0] sm:$0xf]
        %v1101 = vld [vmem:[%s1072 + $0xa8] sm:$0xf]
        %v1102 = vld [vmem:[%s1072 + $0xac] sm:$0xf]
        %v1103 = vld [vmem:[%s1072 + $0xb4] sm:$0xf]
        %v1104 = vld [vmem:[%s1072 + $0xb8] sm:$0xf]
        %v1105 = vld [vmem:[%s1072 + $0x8] sm:$0x1]
        %v1106 = vld [vmem:[%s1072 + $0x14] sm:$0x1]
        %v1107 = vld [vmem:[%s1072 + $0x20] sm:$0x1]
        %v1108 = vld [vmem:[%s1072 + $0x2c] sm:$0x1]
        %v1109 = vld [vmem:[%s1072 + $0x38] sm:$0x1]
        %v1110 = vld [vmem:[%s1072 + $0x44] sm:$0x1]
        %v1111 = vld [vmem:[%s1072 + $0x50] sm:$0x1]
        %v1112 = vld [vmem:[%s1072 + $0x5c] sm:$0x1]
        %v1113 = vld [vmem:[%s1072 + $0x68] sm:$0x1]
        %v1114 = vld [vmem:[%s1072 + $0x74] sm:$0x1]
        %v1115 = vld [vmem:[%s1072 + $0x80] sm:$0x1]
        %v1116 = vld [vmem:[%s1072 + $0x8c] sm:$0x1]
        %v1117 = vld [vmem:[%s1072 + $0x98] sm:$0x1]
        %v1118 = vld [vmem:[%s1072 + $0xa4] sm:$0x1]
        %v1119 = vld [vmem:[%s1072 + $0xb0] sm:$0x1]
        %v1120 = vld [vmem:[%s1072 + $0xbc] sm:$0x1]
        %v1121 = vld [vmem:[%s1072] sm:$0xe]
        %v1122 = vld [vmem:[%s1072 + $0xc] sm:$0xe]
        %v1123 = vld [vmem:[%s1072 + $0x18] sm:$0xe]
        %v1124 = vld [vmem:[%s1072 + $0x24] sm:$0xe]
        %v1125 = vld [vmem:[%s1072 + $0x30] sm:$0xe]
        %v1126 = vld [vmem:[%s1072 + $0x3c] sm:$0xe]
        %v1127 = vld [vmem:[%s1072 + $0x48] sm:$0xe]
        %v1128 = vld [vmem:[%s1072 + $0x54] sm:$0xe]
        %v1129 = vld [vmem:[%s1072 + $0x60] sm:$0xe]
        %v1130 = vld [vmem:[%s1072 + $0x6c] sm:$0xe]
        %v1131 = vld [vmem:[%s1072 + $0x78] sm:$0xe]
        %v1132 = vld [vmem:[%s1072 + $0x84] sm:$0xe]
        %v1133 = vld [vmem:[%s1072 + $0x90] sm:$0xe]
        %v1134 = vld [vmem:[%s1072 + $0x9c] sm:$0xe]
        %v1135 = vld [vmem:[%s1072 + $0xa8] sm:$0xe]
        %v1136 = vld [vmem:[%s1072 + $0xb4] sm:$0xe]
        %v1169 = vunpack.c.l.b16 %v1073
        %v1170 = vunpack.c.l.b16 %v1074
        %v1171 = vunpack.c.l.b16 %v1075
        %v1172 = vunpack.c.l.b16 %v1076
        %v1173 = vunpack.c.l.b16 %v1077
        %v1174 = vunpack.c.l.b16 %v1078
        %v1175 = vunpack.c.l.b16 %v1079
        %v1176 = vunpack.c.l.b16 %v1080
        %v1177 = vunpack.c.l.b16 %v1081
        %v1178 = vunpack.c.l.b16 %v1082
        %v1179 = vunpack.c.l.b16 %v1083
        %v1180 = vunpack.c.l.b16 %v1084
        %v1181 = vunpack.c.l.b16 %v1085
        %v1182 = vunpack.c.l.b16 %v1086
        %v1183 = vunpack.c.l.b16 %v1087
        %v1184 = vunpack.c.l.b16 %v1088
        %v1185 = vunpack.c.l.b16 %v1089
        %v1186 = vunpack.c.l.b16 %v1090
        %v1187 = vunpack.c.l.b16 %v1091
        %v1188 = vunpack.c.l.b16 %v1092
        %v1189 = vunpack.c.l.b16 %v1093
        %v1190 = vunpack.c.l.b16 %v1094
        %v1191 = vunpack.c.l.b16 %v1095
        %v1192 = vunpack.c.l.b16 %v1096
        %v1193 = vunpack.c.l.b16 %v1097
        %v1194 = vunpack.c.l.b16 %v1098
        %v1195 = vunpack.c.l.b16 %v1099
        %v1196 = vunpack.c.l.b16 %v1100
        %v1197 = vunpack.c.l.b16 %v1101
        %v1198 = vunpack.c.l.b16 %v1102
        %v1199 = vunpack.c.l.b16 %v1103
        %v1200 = vunpack.c.l.b16 %v1104
        %v1201 = vpack.c.b16 %v1170, %v1169
        %v1202 = vpack.c.b16 %v1172, %v1171
        %v1203 = vpack.c.b16 %v1174, %v1173
        %v1204 = vpack.c.b16 %v1176, %v1175
        %v1205 = vpack.c.b16 %v1178, %v1177
        %v1206 = vpack.c.b16 %v1180, %v1179
        %v1207 = vpack.c.b16 %v1182, %v1181
        %v1208 = vpack.c.b16 %v1184, %v1183
        %v1209 = vpack.c.b16 %v1186, %v1185
        %v1210 = vpack.c.b16 %v1188, %v1187
        %v1211 = vpack.c.b16 %v1190, %v1189
        %v1212 = vpack.c.b16 %v1192, %v1191
        %v1213 = vpack.c.b16 %v1194, %v1193
        %v1214 = vpack.c.b16 %v1196, %v1195
        %v1215 = vpack.c.b16 %v1198, %v1197
        %v1216 = vpack.c.b16 %v1200, %v1199
        %v1249 = vunpack.c.l.b16 %v1105
        %v1250 = vunpack.c.l.b16 %v1106
        %v1251 = vunpack.c.l.b16 %v1107
        %v1252 = vunpack.c.l.b16 %v1108
        %v1253 = vunpack.c.l.b16 %v1109
        %v1254 = vunpack.c.l.b16 %v1110
        %v1255 = vunpack.c.l.b16 %v1111
        %v1256 = vunpack.c.l.b16 %v1112
        %v1257 = vunpack.c.l.b16 %v1113
        %v1258 = vunpack.c.l.b16 %v1114
        %v1259 = vunpack.c.l.b16 %v1115
        %v1260 = vunpack.c.l.b16 %v1116
        %v1261 = vunpack.c.l.b16 %v1117
        %v1262 = vunpack.c.l.b16 %v1118
        %v1263 = vunpack.c.l.b16 %v1119
        %v1264 = vunpack.c.l.b16 %v1120
        %v1265 = vpack.c.b16 %v1249, %v1249
        %v1266 = vpack.c.b16 %v1250, %v1250
        %v1267 = vpack.c.b16 %v1251, %v1251
        %v1268 = vpack.c.b16 %v1252, %v1252
        %v1269 = vpack.c.b16 %v1253, %v1253
        %v1270 = vpack.c.b16 %v1254, %v1254
        %v1271 = vpack.c.b16 %v1255, %v1255
        %v1272 = vpack.c.b16 %v1256, %v1256
        %v1273 = vpack.c.b16 %v1257, %v1257
        %v1274 = vpack.c.b16 %v1258, %v1258
        %v1275 = vpack.c.b16 %v1259, %v1259
        %v1276 = vpack.c.b16 %v1260, %v1260
        %v1277 = vpack.c.b16 %v1261, %v1261
        %v1278 = vpack.c.b16 %v1262, %v1262
        %v1279 = vpack.c.b16 %v1263, %v1263
        %v1280 = vpack.c.b16 %v1264, %v1264
        %v1282 = vshrl.u32 %v1201, 16
        %v1284 = vshll.u32 %v1201, 16
        %v1286 = vrot.slane %v1284, 1
        %v1287 = vor.u32 %v1282, %v1286
        %v1289 = vshll.u32 %v1265, 16
        %v1291 = vrot.slane %v1289, 1
        %v1292 = vsel %vm702, %v1287, %v1291
        %v1294 = vshrl.u32 %v1202, 16
        %v1296 = vshll.u32 %v1202, 16
        %v1298 = vrot.slane %v1296, 1
        %v1299 = vor.u32 %v1294, %v1298
        %v1301 = vshll.u32 %v1266, 16
        %v1303 = vrot.slane %v1301, 1
        %v1304 = vsel %vm702, %v1299, %v1303
        %v1306 = vshrl.u32 %v1203, 16
        %v1308 = vshll.u32 %v1203, 16
        %v1310 = vrot.slane %v1308, 1
        %v1311 = vor.u32 %v1306, %v1310
        %v1313 = vshll.u32 %v1267, 16
        %v1315 = vrot.slane %v1313, 1
        %v1316 = vsel %vm702, %v1311, %v1315
        %v1318 = vshrl.u32 %v1204, 16
        %v1320 = vshll.u32 %v1204, 16
        %v1322 = vrot.slane %v1320, 1
        %v1323 = vor.u32 %v1318, %v1322
        %v1325 = vshll.u32 %v1268, 16
        %v1327 = vrot.slane %v1325, 1
        %v1328 = vsel %vm702, %v1323, %v1327
        %v1330 = vshrl.u32 %v1205, 16
        %v1332 = vshll.u32 %v1205, 16
        %v1334 = vrot.slane %v1332, 1
        %v1335 = vor.u32 %v1330, %v1334
        %v1337 = vshll.u32 %v1269, 16
        %v1339 = vrot.slane %v1337, 1
        %v1340 = vsel %vm702, %v1335, %v1339
        %v1342 = vshrl.u32 %v1206, 16
        %v1344 = vshll.u32 %v1206, 16
        %v1346 = vrot.slane %v1344, 1
        %v1347 = vor.u32 %v1342, %v1346
        %v1349 = vshll.u32 %v1270, 16
        %v1351 = vrot.slane %v1349, 1
        %v1352 = vsel %vm702, %v1347, %v1351
        %v1354 = vshrl.u32 %v1207, 16
        %v1356 = vshll.u32 %v1207, 16
        %v1358 = vrot.slane %v1356, 1
        %v1359 = vor.u32 %v1354, %v1358
        %v1361 = vshll.u32 %v1271, 16
        %v1363 = vrot.slane %v1361, 1
        %v1364 = vsel %vm702, %v1359, %v1363
        %v1366 = vshrl.u32 %v1208, 16
        %v1368 = vshll.u32 %v1208, 16
        %v1370 = vrot.slane %v1368, 1
        %v1371 = vor.u32 %v1366, %v1370
        %v1373 = vshll.u32 %v1272, 16
        %v1375 = vrot.slane %v1373, 1
        %v1376 = vsel %vm702, %v1371, %v1375
        %v1378 = vshrl.u32 %v1209, 16
        %v1380 = vshll.u32 %v1209, 16
        %v1382 = vrot.slane %v1380, 1
        %v1383 = vor.u32 %v1378, %v1382
        %v1385 = vshll.u32 %v1273, 16
        %v1387 = vrot.slane %v1385, 1
        %v1388 = vsel %vm702, %v1383, %v1387
        %v1390 = vshrl.u32 %v1210, 16
        %v1392 = vshll.u32 %v1210, 16
        %v1394 = vrot.slane %v1392, 1
        %v1395 = vor.u32 %v1390, %v1394
        %v1397 = vshll.u32 %v1274, 16
        %v1399 = vrot.slane %v1397, 1
        %v1400 = vsel %vm702, %v1395, %v1399
        %v1402 = vshrl.u32 %v1211, 16
        %v1404 = vshll.u32 %v1211, 16
        %v1406 = vrot.slane %v1404, 1
        %v1407 = vor.u32 %v1402, %v1406
        %v1409 = vshll.u32 %v1275, 16
        %v1411 = vrot.slane %v1409, 1
        %v1412 = vsel %vm702, %v1407, %v1411
        %v1414 = vshrl.u32 %v1212, 16
        %v1416 = vshll.u32 %v1212, 16
        %v1418 = vrot.slane %v1416, 1
        %v1419 = vor.u32 %v1414, %v1418
        %v1421 = vshll.u32 %v1276, 16
        %v1423 = vrot.slane %v1421, 1
        %v1424 = vsel %vm702, %v1419, %v1423
        %v1426 = vshrl.u32 %v1213, 16
        %v1428 = vshll.u32 %v1213, 16
        %v1430 = vrot.slane %v1428, 1
        %v1431 = vor.u32 %v1426, %v1430
        %v1433 = vshll.u32 %v1277, 16
        %v1435 = vrot.slane %v1433, 1
        %v1436 = vsel %vm702, %v1431, %v1435
        %v1438 = vshrl.u32 %v1214, 16
        %v1440 = vshll.u32 %v1214, 16
        %v1442 = vrot.slane %v1440, 1
        %v1443 = vor.u32 %v1438, %v1442
        %v1445 = vshll.u32 %v1278, 16
        %v1447 = vrot.slane %v1445, 1
        %v1448 = vsel %vm702, %v1443, %v1447
        %v1450 = vshrl.u32 %v1215, 16
        %v1452 = vshll.u32 %v1215, 16
        %v1454 = vrot.slane %v1452, 1
        %v1455 = vor.u32 %v1450, %v1454
        %v1457 = vshll.u32 %v1279, 16
        %v1459 = vrot.slane %v1457, 1
        %v1460 = vsel %vm702, %v1455, %v1459
        %v1462 = vshrl.u32 %v1216, 16
        %v1464 = vshll.u32 %v1216, 16
        %v1466 = vrot.slane %v1464, 1
        %v1467 = vor.u32 %v1462, %v1466
        %v1469 = vshll.u32 %v1280, 16
        %v1471 = vrot.slane %v1469, 1
        %v1472 = vsel %vm702, %v1467, %v1471
        %v1505 = vunpack.c.l.b16 %v1121
        %v1506 = vunpack.c.l.b16 %v1122
        %v1507 = vunpack.c.l.b16 %v1123
        %v1508 = vunpack.c.l.b16 %v1124
        %v1509 = vunpack.c.l.b16 %v1125
        %v1510 = vunpack.c.l.b16 %v1126
        %v1511 = vunpack.c.l.b16 %v1127
        %v1512 = vunpack.c.l.b16 %v1128
        %v1513 = vunpack.c.l.b16 %v1129
        %v1514 = vunpack.c.l.b16 %v1130
        %v1515 = vunpack.c.l.b16 %v1131
        %v1516 = vunpack.c.l.b16 %v1132
        %v1517 = vunpack.c.l.b16 %v1133
        %v1518 = vunpack.c.l.b16 %v1134
        %v1519 = vunpack.c.l.b16 %v1135
        %v1520 = vunpack.c.l.b16 %v1136
        %v1521 = vpack.c.b16 %v1170, %v1505
        %v1522 = vpack.c.b16 %v1172, %v1506
        %v1523 = vpack.c.b16 %v1174, %v1507
        %v1524 = vpack.c.b16 %v1176, %v1508
        %v1525 = vpack.c.b16 %v1178, %v1509
        %v1526 = vpack.c.b16 %v1180, %v1510
        %v1527 = vpack.c.b16 %v1182, %v1511
        %v1528 = vpack.c.b16 %v1184, %v1512
        %v1529 = vpack.c.b16 %v1186, %v1513
        %v1530 = vpack.c.b16 %v1188, %v1514
        %v1531 = vpack.c.b16 %v1190, %v1515
        %v1532 = vpack.c.b16 %v1192, %v1516
        %v1533 = vpack.c.b16 %v1194, %v1517
        %v1534 = vpack.c.b16 %v1196, %v1518
        %v1535 = vpack.c.b16 %v1198, %v1519
        %v1536 = vpack.c.b16 %v1200, %v1520
        %v1537 = vrot.slane %v1521, 1
        %v1538 = vrot.slane %v1265, 1
        %v1539 = vsel %vm959, %v1537, %v1538
        %v1540 = vrot.slane %v1522, 1
        %v1541 = vrot.slane %v1266, 1
        %v1542 = vsel %vm959, %v1540, %v1541
        %v1543 = vrot.slane %v1523, 1
        %v1544 = vrot.slane %v1267, 1
        %v1545 = vsel %vm959, %v1543, %v1544
        %v1546 = vrot.slane %v1524, 1
        %v1547 = vrot.slane %v1268, 1
        %v1548 = vsel %vm959, %v1546, %v1547
        %v1549 = vrot.slane %v1525, 1
        %v1550 = vrot.slane %v1269, 1
        %v1551 = vsel %vm959, %v1549, %v1550
        %v1552 = vrot.slane %v1526, 1
        %v1553 = vrot.slane %v1270, 1
        %v1554 = vsel %vm959, %v1552, %v1553
        %v1555 = vrot.slane %v1527, 1
        %v1556 = vrot.slane %v1271, 1
        %v1557 = vsel %vm959, %v1555, %v1556
        %v1558 = vrot.slane %v1528, 1
        %v1559 = vrot.slane %v1272, 1
        %v1560 = vsel %vm959, %v1558, %v1559
        %v1561 = vrot.slane %v1529, 1
        %v1562 = vrot.slane %v1273, 1
        %v1563 = vsel %vm959, %v1561, %v1562
        %v1564 = vrot.slane %v1530, 1
        %v1565 = vrot.slane %v1274, 1
        %v1566 = vsel %vm959, %v1564, %v1565
        %v1567 = vrot.slane %v1531, 1
        %v1568 = vrot.slane %v1275, 1
        %v1569 = vsel %vm959, %v1567, %v1568
        %v1570 = vrot.slane %v1532, 1
        %v1571 = vrot.slane %v1276, 1
        %v1572 = vsel %vm959, %v1570, %v1571
        %v1573 = vrot.slane %v1533, 1
        %v1574 = vrot.slane %v1277, 1
        %v1575 = vsel %vm959, %v1573, %v1574
        %v1576 = vrot.slane %v1534, 1
        %v1577 = vrot.slane %v1278, 1
        %v1578 = vsel %vm959, %v1576, %v1577
        %v1579 = vrot.slane %v1535, 1
        %v1580 = vrot.slane %v1279, 1
        %v1581 = vsel %vm959, %v1579, %v1580
        %v1582 = vrot.slane %v1536, 1
        %v1583 = vrot.slane %v1280, 1
        %v1584 = vsel %vm959, %v1582, %v1583
        %s1601 = scalar_lea.vmem %s1, 192
        %v1602 = vld [vmem:[%s1601] sm:$0xf]
        %v1603 = vld [vmem:[%s1601 + $0x4] sm:$0xf]
        %v1604 = vld [vmem:[%s1601 + $0x8] sm:$0xf]
        %v1605 = vld [vmem:[%s1601 + $0xc] sm:$0xf]
        %v1606 = vld [vmem:[%s1601 + $0x10] sm:$0xf]
        %v1607 = vld [vmem:[%s1601 + $0x14] sm:$0xf]
        %v1608 = vld [vmem:[%s1601 + $0x18] sm:$0xf]
        %v1609 = vld [vmem:[%s1601 + $0x1c] sm:$0xf]
        %v1610 = vld [vmem:[%s1601 + $0x20] sm:$0xf]
        %v1611 = vld [vmem:[%s1601 + $0x24] sm:$0xf]
        %v1612 = vld [vmem:[%s1601 + $0x28] sm:$0xf]
        %v1613 = vld [vmem:[%s1601 + $0x2c] sm:$0xf]
        %v1614 = vld [vmem:[%s1601 + $0x30] sm:$0xf]
        %v1615 = vld [vmem:[%s1601 + $0x34] sm:$0xf]
        %v1616 = vld [vmem:[%s1601 + $0x38] sm:$0xf]
        %v1617 = vld [vmem:[%s1601 + $0x3c] sm:$0xf]
        %v1618 = vld [vmem:[%s1601 + $0x40] sm:$0xf]
        %v1619 = vld [vmem:[%s1601 + $0x44] sm:$0xf]
        %v1620 = vld [vmem:[%s1601 + $0x48] sm:$0xf]
        %v1621 = vld [vmem:[%s1601 + $0x4c] sm:$0xf]
        %v1622 = vld [vmem:[%s1601 + $0x50] sm:$0xf]
        %v1623 = vld [vmem:[%s1601 + $0x54] sm:$0xf]
        %v1624 = vld [vmem:[%s1601 + $0x58] sm:$0xf]
        %v1625 = vld [vmem:[%s1601 + $0x5c] sm:$0xf]
        %v1626 = vld [vmem:[%s1601 + $0x60] sm:$0xf]
        %v1627 = vld [vmem:[%s1601 + $0x64] sm:$0xf]
        %v1628 = vld [vmem:[%s1601 + $0x68] sm:$0xf]
        %v1629 = vld [vmem:[%s1601 + $0x6c] sm:$0xf]
        %v1630 = vld [vmem:[%s1601 + $0x70] sm:$0xf]
        %v1631 = vld [vmem:[%s1601 + $0x74] sm:$0xf]
        %v1632 = vld [vmem:[%s1601 + $0x78] sm:$0xf]
        %v1633 = vld [vmem:[%s1601 + $0x7c] sm:$0xf]
        %v1634 = vld [vmem:[%s1601 + $0x80] sm:$0xf]
        %v1635 = vld [vmem:[%s1601 + $0x84] sm:$0xf]
        %v1636 = vld [vmem:[%s1601 + $0x88] sm:$0xf]
        %v1637 = vld [vmem:[%s1601 + $0x8c] sm:$0xf]
        %v1638 = vld [vmem:[%s1601 + $0x90] sm:$0xf]
        %v1639 = vld [vmem:[%s1601 + $0x94] sm:$0xf]
        %v1640 = vld [vmem:[%s1601 + $0x98] sm:$0xf]
        %v1641 = vld [vmem:[%s1601 + $0x9c] sm:$0xf]
        %v1642 = vld [vmem:[%s1601 + $0xa0] sm:$0xf]
        %v1643 = vld [vmem:[%s1601 + $0xa4] sm:$0xf]
        %v1644 = vld [vmem:[%s1601 + $0xa8] sm:$0xf]
        %v1645 = vld [vmem:[%s1601 + $0xac] sm:$0xf]
        %v1646 = vld [vmem:[%s1601 + $0xb0] sm:$0xf]
        %v1647 = vld [vmem:[%s1601 + $0xb4] sm:$0xf]
        %v1648 = vld [vmem:[%s1601 + $0xb8] sm:$0xf]
        %v1649 = vld [vmem:[%s1601 + $0xbc] sm:$0xf]
        %v1698 = vunpack.c.l.b16 %v1602
        %v1699 = vunpack.c.l.b16 %v1603
        %v1700 = vunpack.c.l.b16 %v1604
        %v1701 = vunpack.c.l.b16 %v1605
        %v1702 = vunpack.c.l.b16 %v1606
        %v1703 = vunpack.c.l.b16 %v1607
        %v1704 = vunpack.c.l.b16 %v1608
        %v1705 = vunpack.c.l.b16 %v1609
        %v1706 = vunpack.c.l.b16 %v1610
        %v1707 = vunpack.c.l.b16 %v1611
        %v1708 = vunpack.c.l.b16 %v1612
        %v1709 = vunpack.c.l.b16 %v1613
        %v1710 = vunpack.c.l.b16 %v1614
        %v1711 = vunpack.c.l.b16 %v1615
        %v1712 = vunpack.c.l.b16 %v1616
        %v1713 = vunpack.c.l.b16 %v1617
        %v1714 = vunpack.c.l.b16 %v1618
        %v1715 = vunpack.c.l.b16 %v1619
        %v1716 = vunpack.c.l.b16 %v1620
        %v1717 = vunpack.c.l.b16 %v1621
        %v1718 = vunpack.c.l.b16 %v1622
        %v1719 = vunpack.c.l.b16 %v1623
        %v1720 = vunpack.c.l.b16 %v1624
        %v1721 = vunpack.c.l.b16 %v1625
        %v1722 = vunpack.c.l.b16 %v1626
        %v1723 = vunpack.c.l.b16 %v1627
        %v1724 = vunpack.c.l.b16 %v1628
        %v1725 = vunpack.c.l.b16 %v1629
        %v1726 = vunpack.c.l.b16 %v1630
        %v1727 = vunpack.c.l.b16 %v1631
        %v1728 = vunpack.c.l.b16 %v1632
        %v1729 = vunpack.c.l.b16 %v1633
        %v1730 = vunpack.c.l.b16 %v1634
        %v1731 = vunpack.c.l.b16 %v1635
        %v1732 = vunpack.c.l.b16 %v1636
        %v1733 = vunpack.c.l.b16 %v1637
        %v1734 = vunpack.c.l.b16 %v1638
        %v1735 = vunpack.c.l.b16 %v1639
        %v1736 = vunpack.c.l.b16 %v1640
        %v1737 = vunpack.c.l.b16 %v1641
        %v1738 = vunpack.c.l.b16 %v1642
        %v1739 = vunpack.c.l.b16 %v1643
        %v1740 = vunpack.c.l.b16 %v1644
        %v1741 = vunpack.c.l.b16 %v1645
        %v1742 = vunpack.c.l.b16 %v1646
        %v1743 = vunpack.c.l.b16 %v1647
        %v1744 = vunpack.c.l.b16 %v1648
        %v1745 = vunpack.c.l.b16 %v1649
        %v1746 = vpack.c.b16 %v1699, %v1698
        %v1747 = vpack.c.b16 %v1701, %v1700
        %v1748 = vpack.c.b16 %v1703, %v1702
        %v1749 = vpack.c.b16 %v1705, %v1704
        %v1750 = vpack.c.b16 %v1707, %v1706
        %v1751 = vpack.c.b16 %v1709, %v1708
        %v1752 = vpack.c.b16 %v1711, %v1710
        %v1753 = vpack.c.b16 %v1713, %v1712
        %v1754 = vpack.c.b16 %v1715, %v1714
        %v1755 = vpack.c.b16 %v1717, %v1716
        %v1756 = vpack.c.b16 %v1719, %v1718
        %v1757 = vpack.c.b16 %v1721, %v1720
        %v1758 = vpack.c.b16 %v1723, %v1722
        %v1759 = vpack.c.b16 %v1725, %v1724
        %v1760 = vpack.c.b16 %v1727, %v1726
        %v1761 = vpack.c.b16 %v1729, %v1728
        %v1762 = vpack.c.b16 %v1731, %v1730
        %v1763 = vpack.c.b16 %v1733, %v1732
        %v1764 = vpack.c.b16 %v1735, %v1734
        %v1765 = vpack.c.b16 %v1737, %v1736
        %v1766 = vpack.c.b16 %v1739, %v1738
        %v1767 = vpack.c.b16 %v1741, %v1740
        %v1768 = vpack.c.b16 %v1743, %v1742
        %v1769 = vpack.c.b16 %v1745, %v1744
        %1794 = vmatprep.subr.bf16.mxu0 0
        %1795 = vmatpush1.bf16.msra.mxu0 %v1753
        %1796 = vmatprep.subr.bf16.mxu0 0
        %1797 = vmatpush1.bf16.msra.mxu0 %v1752
        %1798 = vmatprep.subr.bf16.mxu0 0
        %1799 = vmatpush1.bf16.msra.mxu0 %v1751
        %1800 = vmatprep.subr.bf16.mxu0 0
        %1801 = vmatpush1.bf16.msra.mxu0 %v1750
        %1802 = vmatprep.subr.bf16.mxu0 0
        %1803 = vmatpush1.bf16.msra.mxu0 %v1749
        %1804 = vmatprep.subr.bf16.mxu0 0
        %1805 = vmatpush1.bf16.msra.mxu0 %v1748
        %1806 = vmatprep.subr.bf16.mxu0 0
        %1807 = vmatpush1.bf16.msra.mxu0 %v1747
        %1808 = vmatprep.subr.bf16.mxu0 0
        %1809 = vmatpush1.bf16.msra.mxu0 %v1746
        %1810 = vmatprep.subr.bf16.mxu0 0
        %1811 = vmatpush2.bf16.msra.mxu0 %v1761
        %1812 = vmatprep.subr.bf16.mxu0 0
        %1813 = vmatpush2.bf16.msra.mxu0 %v1760
        %1814 = vmatprep.subr.bf16.mxu0 0
        %1815 = vmatpush2.bf16.msra.mxu0 %v1759
        %1816 = vmatprep.subr.bf16.mxu0 0
        %1817 = vmatpush2.bf16.msra.mxu0 %v1758
        %1818 = vmatprep.subr.bf16.mxu0 0
        %1819 = vmatpush2.bf16.msra.mxu0 %v1757
        %1820 = vmatprep.subr.bf16.mxu0 0
        %1821 = vmatpush2.bf16.msra.mxu0 %v1756
        %1822 = vmatprep.subr.bf16.mxu0 0
        %1823 = vmatpush2.bf16.msra.mxu0 %v1755
        %1824 = vmatprep.subr.bf16.mxu0 0
        %1825 = vmatpush2.bf16.msra.mxu0 %v1754
        %1826 = vmatprep.mubr.bf16.mxu0 %v1292
        %1827 = vmatmul.mubr.bf16.gmra.mxu0 %v1201
        %v1828 = vpop.f32.mrf.mxu0
        %v1829 = vadd.f32 0.0, %v1828
        %v1830 = vpop.f32.mrf.mxu0
        %v1831 = vpop.f32.mrf.mxu0
        %v1832 = vadd.f32 0.0, %v1831
        %v1833 = vpop.f32.mrf.mxu0
        %1834 = vmatprep.mubr.bf16.mxu0 %v1304
        %1835 = vmatmul.mubr.bf16.gmra.mxu0 %v1202
        %v1836 = vpop.f32.mrf.mxu0
        %v1837 = vadd.f32 0.0, %v1836
        %v1838 = vpop.f32.mrf.mxu0
        %v1839 = vpop.f32.mrf.mxu0
        %v1840 = vadd.f32 0.0, %v1839
        %v1841 = vpop.f32.mrf.mxu0
        %1842 = vmatprep.mubr.bf16.mxu0 %v1316
        %1843 = vmatmul.mubr.bf16.gmra.mxu0 %v1203
        %v1844 = vpop.f32.mrf.mxu0
        %v1845 = vadd.f32 0.0, %v1844
        %v1846 = vpop.f32.mrf.mxu0
        %v1847 = vpop.f32.mrf.mxu0
        %v1848 = vadd.f32 0.0, %v1847
        %v1849 = vpop.f32.mrf.mxu0
        %1850 = vmatprep.mubr.bf16.mxu0 %v1328
        %1851 = vmatmul.mubr.bf16.gmra.mxu0 %v1204
        %v1852 = vpop.f32.mrf.mxu0
        %v1853 = vadd.f32 0.0, %v1852
        %v1854 = vpop.f32.mrf.mxu0
        %v1855 = vpop.f32.mrf.mxu0
        %v1856 = vadd.f32 0.0, %v1855
        %v1857 = vpop.f32.mrf.mxu0
        %1858 = vmatprep.mubr.bf16.mxu0 %v1340
        %1859 = vmatmul.mubr.bf16.gmra.mxu0 %v1205
        %v1860 = vpop.f32.mrf.mxu0
        %v1861 = vadd.f32 0.0, %v1860
        %v1862 = vpop.f32.mrf.mxu0
        %v1863 = vpop.f32.mrf.mxu0
        %v1864 = vadd.f32 0.0, %v1863
        %v1865 = vpop.f32.mrf.mxu0
        %1866 = vmatprep.mubr.bf16.mxu0 %v1352
        %1867 = vmatmul.mubr.bf16.gmra.mxu0 %v1206
        %v1868 = vpop.f32.mrf.mxu0
        %v1869 = vadd.f32 0.0, %v1868
        %v1870 = vpop.f32.mrf.mxu0
        %v1871 = vpop.f32.mrf.mxu0
        %v1872 = vadd.f32 0.0, %v1871
        %v1873 = vpop.f32.mrf.mxu0
        %1874 = vmatprep.mubr.bf16.mxu0 %v1364
        %1875 = vmatmul.mubr.bf16.gmra.mxu0 %v1207
        %v1876 = vpop.f32.mrf.mxu0
        %v1877 = vadd.f32 0.0, %v1876
        %v1878 = vpop.f32.mrf.mxu0
        %v1879 = vpop.f32.mrf.mxu0
        %v1880 = vadd.f32 0.0, %v1879
        %v1881 = vpop.f32.mrf.mxu0
        %1882 = vmatprep.mubr.bf16.mxu0 %v1376
        %1883 = vmatmul.mubr.bf16.gmra.mxu0 %v1208
        %v1884 = vpop.f32.mrf.mxu0
        %v1885 = vadd.f32 0.0, %v1884
        %v1886 = vpop.f32.mrf.mxu0
        %v1887 = vpop.f32.mrf.mxu0
        %v1888 = vadd.f32 0.0, %v1887
        %v1889 = vpop.f32.mrf.mxu0
        %1890 = vmatprep.mubr.bf16.mxu0 %v1388
        %1891 = vmatmul.mubr.bf16.gmra.mxu0 %v1209
        %v1892 = vpop.f32.mrf.mxu0
        %v1893 = vadd.f32 0.0, %v1892
        %v1894 = vpop.f32.mrf.mxu0
        %v1895 = vpop.f32.mrf.mxu0
        %v1896 = vadd.f32 0.0, %v1895
        %v1897 = vpop.f32.mrf.mxu0
        %1898 = vmatprep.mubr.bf16.mxu0 %v1400
        %1899 = vmatmul.mubr.bf16.gmra.mxu0 %v1210
        %v1900 = vpop.f32.mrf.mxu0
        %v1901 = vadd.f32 0.0, %v1900
        %v1902 = vpop.f32.mrf.mxu0
        %v1903 = vpop.f32.mrf.mxu0
        %v1904 = vadd.f32 0.0, %v1903
        %v1905 = vpop.f32.mrf.mxu0
        %1906 = vmatprep.mubr.bf16.mxu0 %v1412
        %1907 = vmatmul.mubr.bf16.gmra.mxu0 %v1211
        %v1908 = vpop.f32.mrf.mxu0
        %v1909 = vadd.f32 0.0, %v1908
        %v1910 = vpop.f32.mrf.mxu0
        %v1911 = vpop.f32.mrf.mxu0
        %v1912 = vadd.f32 0.0, %v1911
        %v1913 = vpop.f32.mrf.mxu0
        %1914 = vmatprep.mubr.bf16.mxu0 %v1424
        %1915 = vmatmul.mubr.bf16.gmra.mxu0 %v1212
        %v1916 = vpop.f32.mrf.mxu0
        %v1917 = vadd.f32 0.0, %v1916
        %v1918 = vpop.f32.mrf.mxu0
        %v1919 = vpop.f32.mrf.mxu0
        %v1920 = vadd.f32 0.0, %v1919
        %v1921 = vpop.f32.mrf.mxu0
        %1922 = vmatprep.mubr.bf16.mxu0 %v1436
        %1923 = vmatmul.mubr.bf16.gmra.mxu0 %v1213
        %v1924 = vpop.f32.mrf.mxu0
        %v1925 = vadd.f32 0.0, %v1924
        %v1926 = vpop.f32.mrf.mxu0
        %v1927 = vpop.f32.mrf.mxu0
        %v1928 = vadd.f32 0.0, %v1927
        %v1929 = vpop.f32.mrf.mxu0
        %1930 = vmatprep.mubr.bf16.mxu0 %v1448
        %1931 = vmatmul.mubr.bf16.gmra.mxu0 %v1214
        %v1932 = vpop.f32.mrf.mxu0
        %v1933 = vadd.f32 0.0, %v1932
        %v1934 = vpop.f32.mrf.mxu0
        %v1935 = vpop.f32.mrf.mxu0
        %v1936 = vadd.f32 0.0, %v1935
        %v1937 = vpop.f32.mrf.mxu0
        %1938 = vmatprep.mubr.bf16.mxu0 %v1460
        %1939 = vmatmul.mubr.bf16.gmra.mxu0 %v1215
        %v1940 = vpop.f32.mrf.mxu0
        %v1941 = vadd.f32 0.0, %v1940
        %v1942 = vpop.f32.mrf.mxu0
        %v1943 = vpop.f32.mrf.mxu0
        %v1944 = vadd.f32 0.0, %v1943
        %v1945 = vpop.f32.mrf.mxu0
        %1946 = vmatprep.mubr.bf16.mxu0 %v1472
        %1947 = vmatmul.mubr.bf16.gmra.mxu0 %v1216
        %v1948 = vpop.f32.mrf.mxu0
        %v1949 = vadd.f32 0.0, %v1948
        %v1950 = vpop.f32.mrf.mxu0
        %v1951 = vpop.f32.mrf.mxu0
        %v1952 = vadd.f32 0.0, %v1951
        %v1953 = vpop.f32.mrf.mxu0
        %1954 = vdwg.mxu0
        %1955 = vmatprep.subr.bf16.mxu0 0
        %1956 = vmatpush1.bf16.msra.mxu0 %v1769
        %1957 = vmatprep.subr.bf16.mxu0 0
        %1958 = vmatpush1.bf16.msra.mxu0 %v1768
        %1959 = vmatprep.subr.bf16.mxu0 0
        %1960 = vmatpush1.bf16.msra.mxu0 %v1767
        %1961 = vmatprep.subr.bf16.mxu0 0
        %1962 = vmatpush1.bf16.msra.mxu0 %v1766
        %1963 = vmatprep.subr.bf16.mxu0 0
        %1964 = vmatpush1.bf16.msra.mxu0 %v1765
        %1965 = vmatprep.subr.bf16.mxu0 0
        %1966 = vmatpush1.bf16.msra.mxu0 %v1764
        %1967 = vmatprep.subr.bf16.mxu0 0
        %1968 = vmatpush1.bf16.msra.mxu0 %v1763
        %1969 = vmatprep.subr.bf16.mxu0 0
        %1970 = vmatpush1.bf16.msra.mxu0 %v1762
        %1971 = vmatprep.subr.bf16.mxu0 0
        %1972 = vmatpush2.bf16.msra.mxu0 0
        %1973 = vmatprep.subr.bf16.mxu0 0
        %1974 = vmatpush2.bf16.msra.mxu0 0
        %1975 = vmatprep.subr.bf16.mxu0 0
        %1976 = vmatpush2.bf16.msra.mxu0 0
        %1977 = vmatprep.subr.bf16.mxu0 0
        %1978 = vmatpush2.bf16.msra.mxu0 0
        %1979 = vmatprep.subr.bf16.mxu0 0
        %1980 = vmatpush2.bf16.msra.mxu0 0
        %1981 = vmatprep.subr.bf16.mxu0 0
        %1982 = vmatpush2.bf16.msra.mxu0 0
        %1983 = vmatprep.subr.bf16.mxu0 0
        %1984 = vmatpush2.bf16.msra.mxu0 0
        %1985 = vmatprep.subr.bf16.mxu0 0
        %1986 = vmatpush2.bf16.msra.mxu0 0
        %1987 = vmatprep.mubr.bf16.mxu0 0
        %1988 = vmatmul.mubr.bf16.gmra.mxu0 %v1539
        %v1989 = vpop.f32.mrf.mxu0
        %v1990 = vadd.f32 %v1829, %v1989
        %v1991 = vpop.f32.mrf.mxu0
        %v1992 = vpop.f32.mrf.mxu0
        %v1993 = vadd.f32 %v1832, %v1992
        %v1994 = vpop.f32.mrf.mxu0
        %1995 = vmatprep.mubr.bf16.mxu0 0
        %1996 = vmatmul.mubr.bf16.gmra.mxu0 %v1542
        %v1997 = vpop.f32.mrf.mxu0
        %v1998 = vadd.f32 %v1837, %v1997
        %v1999 = vpop.f32.mrf.mxu0
        %v2000 = vpop.f32.mrf.mxu0
        %v2001 = vadd.f32 %v1840, %v2000
        %v2002 = vpop.f32.mrf.mxu0
        %2003 = vmatprep.mubr.bf16.mxu0 0
        %2004 = vmatmul.mubr.bf16.gmra.mxu0 %v1545
        %v2005 = vpop.f32.mrf.mxu0
        %v2006 = vadd.f32 %v1845, %v2005
        %v2007 = vpop.f32.mrf.mxu0
        %v2008 = vpop.f32.mrf.mxu0
        %v2009 = vadd.f32 %v1848, %v2008
        %v2010 = vpop.f32.mrf.mxu0
        %2011 = vmatprep.mubr.bf16.mxu0 0
        %2012 = vmatmul.mubr.bf16.gmra.mxu0 %v1548
        %v2013 = vpop.f32.mrf.mxu0
        %v2014 = vadd.f32 %v1853, %v2013
        %v2015 = vpop.f32.mrf.mxu0
        %v2016 = vpop.f32.mrf.mxu0
        %v2017 = vadd.f32 %v1856, %v2016
        %v2018 = vpop.f32.mrf.mxu0
        %2019 = vmatprep.mubr.bf16.mxu0 0
        %2020 = vmatmul.mubr.bf16.gmra.mxu0 %v1551
        %v2021 = vpop.f32.mrf.mxu0
        %v2022 = vadd.f32 %v1861, %v2021
        %v2023 = vpop.f32.mrf.mxu0
        %v2024 = vpop.f32.mrf.mxu0
        %v2025 = vadd.f32 %v1864, %v2024
        %v2026 = vpop.f32.mrf.mxu0
        %2027 = vmatprep.mubr.bf16.mxu0 0
        %2028 = vmatmul.mubr.bf16.gmra.mxu0 %v1554
        %v2029 = vpop.f32.mrf.mxu0
        %v2030 = vadd.f32 %v1869, %v2029
        %v2031 = vpop.f32.mrf.mxu0
        %v2032 = vpop.f32.mrf.mxu0
        %v2033 = vadd.f32 %v1872, %v2032
        %v2034 = vpop.f32.mrf.mxu0
        %2035 = vmatprep.mubr.bf16.mxu0 0
        %2036 = vmatmul.mubr.bf16.gmra.mxu0 %v1557
        %v2037 = vpop.f32.mrf.mxu0
        %v2038 = vadd.f32 %v1877, %v2037
        %v2039 = vpop.f32.mrf.mxu0
        %v2040 = vpop.f32.mrf.mxu0
        %v2041 = vadd.f32 %v1880, %v2040
        %v2042 = vpop.f32.mrf.mxu0
        %2043 = vmatprep.mubr.bf16.mxu0 0
        %2044 = vmatmul.mubr.bf16.gmra.mxu0 %v1560
        %v2045 = vpop.f32.mrf.mxu0
        %v2046 = vadd.f32 %v1885, %v2045
        %v2047 = vpop.f32.mrf.mxu0
        %v2048 = vpop.f32.mrf.mxu0
        %v2049 = vadd.f32 %v1888, %v2048
        %v2050 = vpop.f32.mrf.mxu0
        %2051 = vmatprep.mubr.bf16.mxu0 0
        %2052 = vmatmul.mubr.bf16.gmra.mxu0 %v1563
        %v2053 = vpop.f32.mrf.mxu0
        %v2054 = vadd.f32 %v1893, %v2053
        %v2055 = vpop.f32.mrf.mxu0
        %v2056 = vpop.f32.mrf.mxu0
        %v2057 = vadd.f32 %v1896, %v2056
        %v2058 = vpop.f32.mrf.mxu0
        %2059 = vmatprep.mubr.bf16.mxu0 0
        %2060 = vmatmul.mubr.bf16.gmra.mxu0 %v1566
        %v2061 = vpop.f32.mrf.mxu0
        %v2062 = vadd.f32 %v1901, %v2061
        %v2063 = vpop.f32.mrf.mxu0
        %v2064 = vpop.f32.mrf.mxu0
        %v2065 = vadd.f32 %v1904, %v2064
        %v2066 = vpop.f32.mrf.mxu0
        %2067 = vmatprep.mubr.bf16.mxu0 0
        %2068 = vmatmul.mubr.bf16.gmra.mxu0 %v1569
        %v2069 = vpop.f32.mrf.mxu0
        %v2070 = vadd.f32 %v1909, %v2069
        %v2071 = vpop.f32.mrf.mxu0
        %v2072 = vpop.f32.mrf.mxu0
        %v2073 = vadd.f32 %v1912, %v2072
        %v2074 = vpop.f32.mrf.mxu0
        %2075 = vmatprep.mubr.bf16.mxu0 0
        %2076 = vmatmul.mubr.bf16.gmra.mxu0 %v1572
        %v2077 = vpop.f32.mrf.mxu0
        %v2078 = vadd.f32 %v1917, %v2077
        %v2079 = vpop.f32.mrf.mxu0
        %v2080 = vpop.f32.mrf.mxu0
        %v2081 = vadd.f32 %v1920, %v2080
        %v2082 = vpop.f32.mrf.mxu0
        %2083 = vmatprep.mubr.bf16.mxu0 0
        %2084 = vmatmul.mubr.bf16.gmra.mxu0 %v1575
        %v2085 = vpop.f32.mrf.mxu0
        %v2086 = vadd.f32 %v1925, %v2085
        %v2087 = vpop.f32.mrf.mxu0
        %v2088 = vpop.f32.mrf.mxu0
        %v2089 = vadd.f32 %v1928, %v2088
        %v2090 = vpop.f32.mrf.mxu0
        %2091 = vmatprep.mubr.bf16.mxu0 0
        %2092 = vmatmul.mubr.bf16.gmra.mxu0 %v1578
        %v2093 = vpop.f32.mrf.mxu0
        %v2094 = vadd.f32 %v1933, %v2093
        %v2095 = vpop.f32.mrf.mxu0
        %v2096 = vpop.f32.mrf.mxu0
        %v2097 = vadd.f32 %v1936, %v2096
        %v2098 = vpop.f32.mrf.mxu0
        %2099 = vmatprep.mubr.bf16.mxu0 0
        %2100 = vmatmul.mubr.bf16.gmra.mxu0 %v1581
        %v2101 = vpop.f32.mrf.mxu0
        %v2102 = vadd.f32 %v1941, %v2101
        %v2103 = vpop.f32.mrf.mxu0
        %v2104 = vpop.f32.mrf.mxu0
        %v2105 = vadd.f32 %v1944, %v2104
        %v2106 = vpop.f32.mrf.mxu0
        %2107 = vmatprep.mubr.bf16.mxu0 0
        %2108 = vmatmul.mubr.bf16.gmra.mxu0 %v1584
        %v2109 = vpop.f32.mrf.mxu0
        %v2110 = vadd.f32 %v1949, %v2109
        %v2111 = vpop.f32.mrf.mxu0
        %v2112 = vpop.f32.mrf.mxu0
        %v2113 = vadd.f32 %v1952, %v2112
        %v2114 = vpop.f32.mrf.mxu0
        %2115 = vdwg.mxu0
        %v2164 = vunpack.c.l.b16 %v1024
        %v2165 = vunpack.c.l.b16 %v1025
        %v2166 = vunpack.c.l.b16 %v1026
        %v2167 = vunpack.c.l.b16 %v1027
        %v2168 = vunpack.c.l.b16 %v1028
        %v2169 = vunpack.c.l.b16 %v1029
        %v2170 = vunpack.c.l.b16 %v1030
        %v2171 = vunpack.c.l.b16 %v1031
        %v2172 = vunpack.c.l.b16 %v1032
        %v2173 = vunpack.c.l.b16 %v1033
        %v2174 = vunpack.c.l.b16 %v1034
        %v2175 = vunpack.c.l.b16 %v1035
        %v2176 = vunpack.c.l.b16 %v1036
        %v2177 = vunpack.c.l.b16 %v1037
        %v2178 = vunpack.c.l.b16 %v1038
        %v2179 = vunpack.c.l.b16 %v1039
        %v2180 = vunpack.c.l.b16 %v1040
        %v2181 = vunpack.c.l.b16 %v1041
        %v2182 = vunpack.c.l.b16 %v1042
        %v2183 = vunpack.c.l.b16 %v1043
        %v2184 = vunpack.c.l.b16 %v1044
        %v2185 = vunpack.c.l.b16 %v1045
        %v2186 = vunpack.c.l.b16 %v1046
        %v2187 = vunpack.c.l.b16 %v1047
        %v2188 = vunpack.c.l.b16 %v1048
        %v2189 = vunpack.c.l.b16 %v1049
        %v2190 = vunpack.c.l.b16 %v1050
        %v2191 = vunpack.c.l.b16 %v1051
        %v2192 = vunpack.c.l.b16 %v1052
        %v2193 = vunpack.c.l.b16 %v1053
        %v2194 = vunpack.c.l.b16 %v1054
        %v2195 = vunpack.c.l.b16 %v1055
        %v2196 = vunpack.c.l.b16 %v1056
        %v2197 = vunpack.c.l.b16 %v1057
        %v2198 = vunpack.c.l.b16 %v1058
        %v2199 = vunpack.c.l.b16 %v1059
        %v2200 = vunpack.c.l.b16 %v1060
        %v2201 = vunpack.c.l.b16 %v1061
        %v2202 = vunpack.c.l.b16 %v1062
        %v2203 = vunpack.c.l.b16 %v1063
        %v2204 = vunpack.c.l.b16 %v1064
        %v2205 = vunpack.c.l.b16 %v1065
        %v2206 = vunpack.c.l.b16 %v1066
        %v2207 = vunpack.c.l.b16 %v1067
        %v2208 = vunpack.c.l.b16 %v1068
        %v2209 = vunpack.c.l.b16 %v1069
        %v2210 = vunpack.c.l.b16 %v1070
        %v2211 = vunpack.c.l.b16 %v1071
        %v2212 = vpack.c.b16 %v2165, %v2164
        %v2213 = vpack.c.b16 %v2167, %v2166
        %v2214 = vpack.c.b16 %v2169, %v2168
        %v2215 = vpack.c.b16 %v2171, %v2170
        %v2216 = vpack.c.b16 %v2173, %v2172
        %v2217 = vpack.c.b16 %v2175, %v2174
        %v2218 = vpack.c.b16 %v2177, %v2176
        %v2219 = vpack.c.b16 %v2179, %v2178
        %v2220 = vpack.c.b16 %v2181, %v2180
        %v2221 = vpack.c.b16 %v2183, %v2182
        %v2222 = vpack.c.b16 %v2185, %v2184
        %v2223 = vpack.c.b16 %v2187, %v2186
        %v2224 = vpack.c.b16 %v2189, %v2188
        %v2225 = vpack.c.b16 %v2191, %v2190
        %v2226 = vpack.c.b16 %v2193, %v2192
        %v2227 = vpack.c.b16 %v2195, %v2194
        %v2228 = vpack.c.b16 %v2197, %v2196
        %v2229 = vpack.c.b16 %v2199, %v2198
        %v2230 = vpack.c.b16 %v2201, %v2200
        %v2231 = vpack.c.b16 %v2203, %v2202
        %v2232 = vpack.c.b16 %v2205, %v2204
        %v2233 = vpack.c.b16 %v2207, %v2206
        %v2234 = vpack.c.b16 %v2209, %v2208
        %v2235 = vpack.c.b16 %v2211, %v2210
        %2260 = vmatprep.subr.bf16.mxu0 0
        %2261 = vmatpush1.bf16.msra.mxu0 %v2219
        %2262 = vmatprep.subr.bf16.mxu0 0
        %2263 = vmatpush1.bf16.msra.mxu0 %v2218
        %2264 = vmatprep.subr.bf16.mxu0 0
        %2265 = vmatpush1.bf16.msra.mxu0 %v2217
        %2266 = vmatprep.subr.bf16.mxu0 0
        %2267 = vmatpush1.bf16.msra.mxu0 %v2216
        %2268 = vmatprep.subr.bf16.mxu0 0
        %2269 = vmatpush1.bf16.msra.mxu0 %v2215
        %2270 = vmatprep.subr.bf16.mxu0 0
        %2271 = vmatpush1.bf16.msra.mxu0 %v2214
        %2272 = vmatprep.subr.bf16.mxu0 0
        %2273 = vmatpush1.bf16.msra.mxu0 %v2213
        %2274 = vmatprep.subr.bf16.mxu0 0
        %2275 = vmatpush1.bf16.msra.mxu0 %v2212
        %2276 = vmatprep.subr.bf16.mxu0 0
        %2277 = vmatpush2.bf16.msra.mxu0 %v2227
        %2278 = vmatprep.subr.bf16.mxu0 0
        %2279 = vmatpush2.bf16.msra.mxu0 %v2226
        %2280 = vmatprep.subr.bf16.mxu0 0
        %2281 = vmatpush2.bf16.msra.mxu0 %v2225
        %2282 = vmatprep.subr.bf16.mxu0 0
        %2283 = vmatpush2.bf16.msra.mxu0 %v2224
        %2284 = vmatprep.subr.bf16.mxu0 0
        %2285 = vmatpush2.bf16.msra.mxu0 %v2223
        %2286 = vmatprep.subr.bf16.mxu0 0
        %2287 = vmatpush2.bf16.msra.mxu0 %v2222
        %2288 = vmatprep.subr.bf16.mxu0 0
        %2289 = vmatpush2.bf16.msra.mxu0 %v2221
        %2290 = vmatprep.subr.bf16.mxu0 0
        %2291 = vmatpush2.bf16.msra.mxu0 %v2220
        %2292 = vmatprep.mubr.bf16.mxu0 %v714
        %2293 = vmatmul.mubr.bf16.gmra.mxu0 %v622
        %v2294 = vpop.f32.mrf.mxu0
        %v2295 = vadd.f32 %v1990, %v2294
        %v2296 = vpop.f32.mrf.mxu0
        %v2297 = vpop.f32.mrf.mxu0
        %v2298 = vadd.f32 %v1993, %v2297
        %v2299 = vpop.f32.mrf.mxu0
        %2300 = vmatprep.mubr.bf16.mxu0 %v726
        %2301 = vmatmul.mubr.bf16.gmra.mxu0 %v623
        %v2302 = vpop.f32.mrf.mxu0
        %v2303 = vadd.f32 %v1998, %v2302
        %v2304 = vpop.f32.mrf.mxu0
        %v2305 = vpop.f32.mrf.mxu0
        %v2306 = vadd.f32 %v2001, %v2305
        %v2307 = vpop.f32.mrf.mxu0
        %2308 = vmatprep.mubr.bf16.mxu0 %v738
        %2309 = vmatmul.mubr.bf16.gmra.mxu0 %v624
        %v2310 = vpop.f32.mrf.mxu0
        %v2311 = vadd.f32 %v2006, %v2310
        %v2312 = vpop.f32.mrf.mxu0
        %v2313 = vpop.f32.mrf.mxu0
        %v2314 = vadd.f32 %v2009, %v2313
        %v2315 = vpop.f32.mrf.mxu0
        %2316 = vmatprep.mubr.bf16.mxu0 %v750
        %2317 = vmatmul.mubr.bf16.gmra.mxu0 %v625
        %v2318 = vpop.f32.mrf.mxu0
        %v2319 = vadd.f32 %v2014, %v2318
        %v2320 = vpop.f32.mrf.mxu0
        %v2321 = vpop.f32.mrf.mxu0
        %v2322 = vadd.f32 %v2017, %v2321
        %v2323 = vpop.f32.mrf.mxu0
        %2324 = vmatprep.mubr.bf16.mxu0 %v762
        %2325 = vmatmul.mubr.bf16.gmra.mxu0 %v626
        %v2326 = vpop.f32.mrf.mxu0
        %v2327 = vadd.f32 %v2022, %v2326
        %v2328 = vpop.f32.mrf.mxu0
        %v2329 = vpop.f32.mrf.mxu0
        %v2330 = vadd.f32 %v2025, %v2329
        %v2331 = vpop.f32.mrf.mxu0
        %2332 = vmatprep.mubr.bf16.mxu0 %v774
        %2333 = vmatmul.mubr.bf16.gmra.mxu0 %v627
        %v2334 = vpop.f32.mrf.mxu0
        %v2335 = vadd.f32 %v2030, %v2334
        %v2336 = vpop.f32.mrf.mxu0
        %v2337 = vpop.f32.mrf.mxu0
        %v2338 = vadd.f32 %v2033, %v2337
        %v2339 = vpop.f32.mrf.mxu0
        %2340 = vmatprep.mubr.bf16.mxu0 %v786
        %2341 = vmatmul.mubr.bf16.gmra.mxu0 %v628
        %v2342 = vpop.f32.mrf.mxu0
        %v2343 = vadd.f32 %v2038, %v2342
        %v2344 = vpop.f32.mrf.mxu0
        %v2345 = vpop.f32.mrf.mxu0
        %v2346 = vadd.f32 %v2041, %v2345
        %v2347 = vpop.f32.mrf.mxu0
        %2348 = vmatprep.mubr.bf16.mxu0 %v798
        %2349 = vmatmul.mubr.bf16.gmra.mxu0 %v629
        %v2350 = vpop.f32.mrf.mxu0
        %v2351 = vadd.f32 %v2046, %v2350
        %v2352 = vpop.f32.mrf.mxu0
        %v2353 = vpop.f32.mrf.mxu0
        %v2354 = vadd.f32 %v2049, %v2353
        %v2355 = vpop.f32.mrf.mxu0
        %2356 = vmatprep.mubr.bf16.mxu0 %v810
        %2357 = vmatmul.mubr.bf16.gmra.mxu0 %v630
        %v2358 = vpop.f32.mrf.mxu0
        %v2359 = vadd.f32 %v2054, %v2358
        %v2360 = vpop.f32.mrf.mxu0
        %v2361 = vpop.f32.mrf.mxu0
        %v2362 = vadd.f32 %v2057, %v2361
        %v2363 = vpop.f32.mrf.mxu0
        %2364 = vmatprep.mubr.bf16.mxu0 %v822
        %2365 = vmatmul.mubr.bf16.gmra.mxu0 %v631
        %v2366 = vpop.f32.mrf.mxu0
        %v2367 = vadd.f32 %v2062, %v2366
        %v2368 = vpop.f32.mrf.mxu0
        %v2369 = vpop.f32.mrf.mxu0
        %v2370 = vadd.f32 %v2065, %v2369
        %v2371 = vpop.f32.mrf.mxu0
        %2372 = vmatprep.mubr.bf16.mxu0 %v834
        %2373 = vmatmul.mubr.bf16.gmra.mxu0 %v632
        %v2374 = vpop.f32.mrf.mxu0
        %v2375 = vadd.f32 %v2070, %v2374
        %v2376 = vpop.f32.mrf.mxu0
        %v2377 = vpop.f32.mrf.mxu0
        %v2378 = vadd.f32 %v2073, %v2377
        %v2379 = vpop.f32.mrf.mxu0
        %2380 = vmatprep.mubr.bf16.mxu0 %v846
        %2381 = vmatmul.mubr.bf16.gmra.mxu0 %v633
        %v2382 = vpop.f32.mrf.mxu0
        %v2383 = vadd.f32 %v2078, %v2382
        %v2384 = vpop.f32.mrf.mxu0
        %v2385 = vpop.f32.mrf.mxu0
        %v2386 = vadd.f32 %v2081, %v2385
        %v2387 = vpop.f32.mrf.mxu0
        %2388 = vmatprep.mubr.bf16.mxu0 %v858
        %2389 = vmatmul.mubr.bf16.gmra.mxu0 %v634
        %v2390 = vpop.f32.mrf.mxu0
        %v2391 = vadd.f32 %v2086, %v2390
        %v2392 = vpop.f32.mrf.mxu0
        %v2393 = vpop.f32.mrf.mxu0
        %v2394 = vadd.f32 %v2089, %v2393
        %v2395 = vpop.f32.mrf.mxu0
        %2396 = vmatprep.mubr.bf16.mxu0 %v870
        %2397 = vmatmul.mubr.bf16.gmra.mxu0 %v635
        %v2398 = vpop.f32.mrf.mxu0
        %v2399 = vadd.f32 %v2094, %v2398
        %v2400 = vpop.f32.mrf.mxu0
        %v2401 = vpop.f32.mrf.mxu0
        %v2402 = vadd.f32 %v2097, %v2401
        %v2403 = vpop.f32.mrf.mxu0
        %2404 = vmatprep.mubr.bf16.mxu0 %v882
        %2405 = vmatmul.mubr.bf16.gmra.mxu0 %v636
        %v2406 = vpop.f32.mrf.mxu0
        %v2407 = vadd.f32 %v2102, %v2406
        %v2408 = vpop.f32.mrf.mxu0
        %v2409 = vpop.f32.mrf.mxu0
        %v2410 = vadd.f32 %v2105, %v2409
        %v2411 = vpop.f32.mrf.mxu0
        %2412 = vmatprep.mubr.bf16.mxu0 %v894
        %2413 = vmatmul.mubr.bf16.gmra.mxu0 %v637
        %v2414 = vpop.f32.mrf.mxu0
        %v2415 = vadd.f32 %v2110, %v2414
        %v2416 = vpop.f32.mrf.mxu0
        %v2417 = vpop.f32.mrf.mxu0
        %v2418 = vadd.f32 %v2113, %v2417
        %v2419 = vpop.f32.mrf.mxu0
        %2420 = vdwg.mxu0
        %2421 = vmatprep.subr.bf16.mxu0 0
        %2422 = vmatpush1.bf16.msra.mxu0 %v2235
        %2423 = vmatprep.subr.bf16.mxu0 0
        %2424 = vmatpush1.bf16.msra.mxu0 %v2234
        %2425 = vmatprep.subr.bf16.mxu0 0
        %2426 = vmatpush1.bf16.msra.mxu0 %v2233
        %2427 = vmatprep.subr.bf16.mxu0 0
        %2428 = vmatpush1.bf16.msra.mxu0 %v2232
        %2429 = vmatprep.subr.bf16.mxu0 0
        %2430 = vmatpush1.bf16.msra.mxu0 %v2231
        %2431 = vmatprep.subr.bf16.mxu0 0
        %2432 = vmatpush1.bf16.msra.mxu0 %v2230
        %2433 = vmatprep.subr.bf16.mxu0 0
        %2434 = vmatpush1.bf16.msra.mxu0 %v2229
        %2435 = vmatprep.subr.bf16.mxu0 0
        %2436 = vmatpush1.bf16.msra.mxu0 %v2228
        %2437 = vmatprep.subr.bf16.mxu0 0
        %2438 = vmatpush2.bf16.msra.mxu0 0
        %2439 = vmatprep.subr.bf16.mxu0 0
        %2440 = vmatpush2.bf16.msra.mxu0 0
        %2441 = vmatprep.subr.bf16.mxu0 0
        %2442 = vmatpush2.bf16.msra.mxu0 0
        %2443 = vmatprep.subr.bf16.mxu0 0
        %2444 = vmatpush2.bf16.msra.mxu0 0
        %2445 = vmatprep.subr.bf16.mxu0 0
        %2446 = vmatpush2.bf16.msra.mxu0 0
        %2447 = vmatprep.subr.bf16.mxu0 0
        %2448 = vmatpush2.bf16.msra.mxu0 0
        %2449 = vmatprep.subr.bf16.mxu0 0
        %2450 = vmatpush2.bf16.msra.mxu0 0
        %2451 = vmatprep.subr.bf16.mxu0 0
        %2452 = vmatpush2.bf16.msra.mxu0 0
        %2453 = vmatprep.mubr.bf16.mxu0 0
        %2454 = vmatmul.mubr.bf16.gmra.mxu0 %v962
        %v2455 = vpop.f32.mrf.mxu0
        %v2456 = vadd.f32 %v2295, %v2455
        %v2457 = vpop.f32.mrf.mxu0
        %v2458 = vpop.f32.mrf.mxu0
        %v2459 = vadd.f32 %v2298, %v2458
        %v2460 = vpop.f32.mrf.mxu0
        %2461 = vmatprep.mubr.bf16.mxu0 0
        %2462 = vmatmul.mubr.bf16.gmra.mxu0 %v965
        %v2463 = vpop.f32.mrf.mxu0
        %v2464 = vadd.f32 %v2303, %v2463
        %v2465 = vpop.f32.mrf.mxu0
        %v2466 = vpop.f32.mrf.mxu0
        %v2467 = vadd.f32 %v2306, %v2466
        %v2468 = vpop.f32.mrf.mxu0
        %2469 = vmatprep.mubr.bf16.mxu0 0
        %2470 = vmatmul.mubr.bf16.gmra.mxu0 %v968
        %v2471 = vpop.f32.mrf.mxu0
        %v2472 = vadd.f32 %v2311, %v2471
        %v2473 = vpop.f32.mrf.mxu0
        %v2474 = vpop.f32.mrf.mxu0
        %v2475 = vadd.f32 %v2314, %v2474
        %v2476 = vpop.f32.mrf.mxu0
        %2477 = vmatprep.mubr.bf16.mxu0 0
        %2478 = vmatmul.mubr.bf16.gmra.mxu0 %v971
        %v2479 = vpop.f32.mrf.mxu0
        %v2480 = vadd.f32 %v2319, %v2479
        %v2481 = vpop.f32.mrf.mxu0
        %v2482 = vpop.f32.mrf.mxu0
        %v2483 = vadd.f32 %v2322, %v2482
        %v2484 = vpop.f32.mrf.mxu0
        %2485 = vmatprep.mubr.bf16.mxu0 0
        %2486 = vmatmul.mubr.bf16.gmra.mxu0 %v974
        %v2487 = vpop.f32.mrf.mxu0
        %v2488 = vadd.f32 %v2327, %v2487
        %v2489 = vpop.f32.mrf.mxu0
        %v2490 = vpop.f32.mrf.mxu0
        %v2491 = vadd.f32 %v2330, %v2490
        %v2492 = vpop.f32.mrf.mxu0
        %2493 = vmatprep.mubr.bf16.mxu0 0
        %2494 = vmatmul.mubr.bf16.gmra.mxu0 %v977
        %v2495 = vpop.f32.mrf.mxu0
        %v2496 = vadd.f32 %v2335, %v2495
        %v2497 = vpop.f32.mrf.mxu0
        %v2498 = vpop.f32.mrf.mxu0
        %v2499 = vadd.f32 %v2338, %v2498
        %v2500 = vpop.f32.mrf.mxu0
        %2501 = vmatprep.mubr.bf16.mxu0 0
        %2502 = vmatmul.mubr.bf16.gmra.mxu0 %v980
        %v2503 = vpop.f32.mrf.mxu0
        %v2504 = vadd.f32 %v2343, %v2503
        %v2505 = vpop.f32.mrf.mxu0
        %v2506 = vpop.f32.mrf.mxu0
        %v2507 = vadd.f32 %v2346, %v2506
        %v2508 = vpop.f32.mrf.mxu0
        %2509 = vmatprep.mubr.bf16.mxu0 0
        %2510 = vmatmul.mubr.bf16.gmra.mxu0 %v983
        %v2511 = vpop.f32.mrf.mxu0
        %v2512 = vadd.f32 %v2351, %v2511
        %v2513 = vpop.f32.mrf.mxu0
        %v2514 = vpop.f32.mrf.mxu0
        %v2515 = vadd.f32 %v2354, %v2514
        %v2516 = vpop.f32.mrf.mxu0
        %2517 = vmatprep.mubr.bf16.mxu0 0
        %2518 = vmatmul.mubr.bf16.gmra.mxu0 %v986
        %v2519 = vpop.f32.mrf.mxu0
        %v2520 = vadd.f32 %v2359, %v2519
        %v2521 = vpop.f32.mrf.mxu0
        %v2522 = vpop.f32.mrf.mxu0
        %v2523 = vadd.f32 %v2362, %v2522
        %v2524 = vpop.f32.mrf.mxu0
        %2525 = vmatprep.mubr.bf16.mxu0 0
        %2526 = vmatmul.mubr.bf16.gmra.mxu0 %v989
        %v2527 = vpop.f32.mrf.mxu0
        %v2528 = vadd.f32 %v2367, %v2527
        %v2529 = vpop.f32.mrf.mxu0
        %v2530 = vpop.f32.mrf.mxu0
        %v2531 = vadd.f32 %v2370, %v2530
        %v2532 = vpop.f32.mrf.mxu0
        %2533 = vmatprep.mubr.bf16.mxu0 0
        %2534 = vmatmul.mubr.bf16.gmra.mxu0 %v992
        %v2535 = vpop.f32.mrf.mxu0
        %v2536 = vadd.f32 %v2375, %v2535
        %v2537 = vpop.f32.mrf.mxu0
        %v2538 = vpop.f32.mrf.mxu0
        %v2539 = vadd.f32 %v2378, %v2538
        %v2540 = vpop.f32.mrf.mxu0
        %2541 = vmatprep.mubr.bf16.mxu0 0
        %2542 = vmatmul.mubr.bf16.gmra.mxu0 %v995
        %v2543 = vpop.f32.mrf.mxu0
        %v2544 = vadd.f32 %v2383, %v2543
        %v2545 = vpop.f32.mrf.mxu0
        %v2546 = vpop.f32.mrf.mxu0
        %v2547 = vadd.f32 %v2386, %v2546
        %v2548 = vpop.f32.mrf.mxu0
        %2549 = vmatprep.mubr.bf16.mxu0 0
        %2550 = vmatmul.mubr.bf16.gmra.mxu0 %v998
        %v2551 = vpop.f32.mrf.mxu0
        %v2552 = vadd.f32 %v2391, %v2551
        %v2553 = vpop.f32.mrf.mxu0
        %v2554 = vpop.f32.mrf.mxu0
        %v2555 = vadd.f32 %v2394, %v2554
        %v2556 = vpop.f32.mrf.mxu0
        %2557 = vmatprep.mubr.bf16.mxu0 0
        %2558 = vmatmul.mubr.bf16.gmra.mxu0 %v1001
        %v2559 = vpop.f32.mrf.mxu0
        %v2560 = vadd.f32 %v2399, %v2559
        %v2561 = vpop.f32.mrf.mxu0
        %v2562 = vpop.f32.mrf.mxu0
        %v2563 = vadd.f32 %v2402, %v2562
        %v2564 = vpop.f32.mrf.mxu0
        %2565 = vmatprep.mubr.bf16.mxu0 0
        %2566 = vmatmul.mubr.bf16.gmra.mxu0 %v1004
        %v2567 = vpop.f32.mrf.mxu0
        %v2568 = vadd.f32 %v2407, %v2567
        %v2569 = vpop.f32.mrf.mxu0
        %v2570 = vpop.f32.mrf.mxu0
        %v2571 = vadd.f32 %v2410, %v2570
        %v2572 = vpop.f32.mrf.mxu0
        %2573 = vmatprep.mubr.bf16.mxu0 0
        %2574 = vmatmul.mubr.bf16.gmra.mxu0 %v1007
        %v2575 = vpop.f32.mrf.mxu0
        %v2576 = vadd.f32 %v2415, %v2575
        %v2577 = vpop.f32.mrf.mxu0
        %v2578 = vpop.f32.mrf.mxu0
        %v2579 = vadd.f32 %v2418, %v2578
        %v2580 = vpop.f32.mrf.mxu0
        %2581 = vdwg.mxu0
        %s2582 = scalar_lea.vmem %s372, 24
        %v2583 = vld [vmem:[%s2582] sm:$0xf]
        %v2584 = vld [vmem:[%s2582 + $0x4] sm:$0xf]
        %v2585 = vld [vmem:[%s2582 + $0xc] sm:$0xf]
        %v2586 = vld [vmem:[%s2582 + $0x10] sm:$0xf]
        %v2587 = vld [vmem:[%s2582 + $0x18] sm:$0xf]
        %v2588 = vld [vmem:[%s2582 + $0x1c] sm:$0xf]
        %v2589 = vld [vmem:[%s2582 + $0x24] sm:$0xf]
        %v2590 = vld [vmem:[%s2582 + $0x28] sm:$0xf]
        %v2591 = vld [vmem:[%s2582 + $0x30] sm:$0xf]
        %v2592 = vld [vmem:[%s2582 + $0x34] sm:$0xf]
        %v2593 = vld [vmem:[%s2582 + $0x3c] sm:$0xf]
        %v2594 = vld [vmem:[%s2582 + $0x40] sm:$0xf]
        %v2595 = vld [vmem:[%s2582 + $0x48] sm:$0xf]
        %v2596 = vld [vmem:[%s2582 + $0x4c] sm:$0xf]
        %v2597 = vld [vmem:[%s2582 + $0x54] sm:$0xf]
        %v2598 = vld [vmem:[%s2582 + $0x58] sm:$0xf]
        %v2599 = vld [vmem:[%s2582 + $0x60] sm:$0xf]
        %v2600 = vld [vmem:[%s2582 + $0x64] sm:$0xf]
        %v2601 = vld [vmem:[%s2582 + $0x6c] sm:$0xf]
        %v2602 = vld [vmem:[%s2582 + $0x70] sm:$0xf]
        %v2603 = vld [vmem:[%s2582 + $0x78] sm:$0xf]
        %v2604 = vld [vmem:[%s2582 + $0x7c] sm:$0xf]
        %v2605 = vld [vmem:[%s2582 + $0x84] sm:$0xf]
        %v2606 = vld [vmem:[%s2582 + $0x88] sm:$0xf]
        %v2607 = vld [vmem:[%s2582 + $0x90] sm:$0xf]
        %v2608 = vld [vmem:[%s2582 + $0x94] sm:$0xf]
        %v2609 = vld [vmem:[%s2582 + $0x9c] sm:$0xf]
        %v2610 = vld [vmem:[%s2582 + $0xa0] sm:$0xf]
        %v2611 = vld [vmem:[%s2582 + $0xa8] sm:$0xf]
        %v2612 = vld [vmem:[%s2582 + $0xac] sm:$0xf]
        %v2613 = vld [vmem:[%s2582 + $0xb4] sm:$0xf]
        %v2614 = vld [vmem:[%s2582 + $0xb8] sm:$0xf]
        %v2615 = vld [vmem:[%s2582 + $0x8] sm:$0x1]
        %v2616 = vld [vmem:[%s2582 + $0x14] sm:$0x1]
        %v2617 = vld [vmem:[%s2582 + $0x20] sm:$0x1]
        %v2618 = vld [vmem:[%s2582 + $0x2c] sm:$0x1]
        %v2619 = vld [vmem:[%s2582 + $0x38] sm:$0x1]
        %v2620 = vld [vmem:[%s2582 + $0x44] sm:$0x1]
        %v2621 = vld [vmem:[%s2582 + $0x50] sm:$0x1]
        %v2622 = vld [vmem:[%s2582 + $0x5c] sm:$0x1]
        %v2623 = vld [vmem:[%s2582 + $0x68] sm:$0x1]
        %v2624 = vld [vmem:[%s2582 + $0x74] sm:$0x1]
        %v2625 = vld [vmem:[%s2582 + $0x80] sm:$0x1]
        %v2626 = vld [vmem:[%s2582 + $0x8c] sm:$0x1]
        %v2627 = vld [vmem:[%s2582 + $0x98] sm:$0x1]
        %v2628 = vld [vmem:[%s2582 + $0xa4] sm:$0x1]
        %v2629 = vld [vmem:[%s2582 + $0xb0] sm:$0x1]
        %v2630 = vld [vmem:[%s2582 + $0xbc] sm:$0x1]
        %v2631 = vld [vmem:[%s2582] sm:$0xe]
        %v2632 = vld [vmem:[%s2582 + $0xc] sm:$0xe]
        %v2633 = vld [vmem:[%s2582 + $0x18] sm:$0xe]
        %v2634 = vld [vmem:[%s2582 + $0x24] sm:$0xe]
        %v2635 = vld [vmem:[%s2582 + $0x30] sm:$0xe]
        %v2636 = vld [vmem:[%s2582 + $0x3c] sm:$0xe]
        %v2637 = vld [vmem:[%s2582 + $0x48] sm:$0xe]
        %v2638 = vld [vmem:[%s2582 + $0x54] sm:$0xe]
        %v2639 = vld [vmem:[%s2582 + $0x60] sm:$0xe]
        %v2640 = vld [vmem:[%s2582 + $0x6c] sm:$0xe]
        %v2641 = vld [vmem:[%s2582 + $0x78] sm:$0xe]
        %v2642 = vld [vmem:[%s2582 + $0x84] sm:$0xe]
        %v2643 = vld [vmem:[%s2582 + $0x90] sm:$0xe]
        %v2644 = vld [vmem:[%s2582 + $0x9c] sm:$0xe]
        %v2645 = vld [vmem:[%s2582 + $0xa8] sm:$0xe]
        %v2646 = vld [vmem:[%s2582 + $0xb4] sm:$0xe]
        %v2679 = vunpack.c.l.b16 %v2583
        %v2680 = vunpack.c.l.b16 %v2584
        %v2681 = vunpack.c.l.b16 %v2585
        %v2682 = vunpack.c.l.b16 %v2586
        %v2683 = vunpack.c.l.b16 %v2587
        %v2684 = vunpack.c.l.b16 %v2588
        %v2685 = vunpack.c.l.b16 %v2589
        %v2686 = vunpack.c.l.b16 %v2590
        %v2687 = vunpack.c.l.b16 %v2591
        %v2688 = vunpack.c.l.b16 %v2592
        %v2689 = vunpack.c.l.b16 %v2593
        %v2690 = vunpack.c.l.b16 %v2594
        %v2691 = vunpack.c.l.b16 %v2595
        %v2692 = vunpack.c.l.b16 %v2596
        %v2693 = vunpack.c.l.b16 %v2597
        %v2694 = vunpack.c.l.b16 %v2598
        %v2695 = vunpack.c.l.b16 %v2599
        %v2696 = vunpack.c.l.b16 %v2600
        %v2697 = vunpack.c.l.b16 %v2601
        %v2698 = vunpack.c.l.b16 %v2602
        %v2699 = vunpack.c.l.b16 %v2603
        %v2700 = vunpack.c.l.b16 %v2604
        %v2701 = vunpack.c.l.b16 %v2605
        %v2702 = vunpack.c.l.b16 %v2606
        %v2703 = vunpack.c.l.b16 %v2607
        %v2704 = vunpack.c.l.b16 %v2608
        %v2705 = vunpack.c.l.b16 %v2609
        %v2706 = vunpack.c.l.b16 %v2610
        %v2707 = vunpack.c.l.b16 %v2611
        %v2708 = vunpack.c.l.b16 %v2612
        %v2709 = vunpack.c.l.b16 %v2613
        %v2710 = vunpack.c.l.b16 %v2614
        %v2711 = vpack.c.b16 %v2680, %v2679
        %v2712 = vpack.c.b16 %v2682, %v2681
        %v2713 = vpack.c.b16 %v2684, %v2683
        %v2714 = vpack.c.b16 %v2686, %v2685
        %v2715 = vpack.c.b16 %v2688, %v2687
        %v2716 = vpack.c.b16 %v2690, %v2689
        %v2717 = vpack.c.b16 %v2692, %v2691
        %v2718 = vpack.c.b16 %v2694, %v2693
        %v2719 = vpack.c.b16 %v2696, %v2695
        %v2720 = vpack.c.b16 %v2698, %v2697
        %v2721 = vpack.c.b16 %v2700, %v2699
        %v2722 = vpack.c.b16 %v2702, %v2701
        %v2723 = vpack.c.b16 %v2704, %v2703
        %v2724 = vpack.c.b16 %v2706, %v2705
        %v2725 = vpack.c.b16 %v2708, %v2707
        %v2726 = vpack.c.b16 %v2710, %v2709
        %v2759 = vunpack.c.l.b16 %v2615
        %v2760 = vunpack.c.l.b16 %v2616
        %v2761 = vunpack.c.l.b16 %v2617
        %v2762 = vunpack.c.l.b16 %v2618
        %v2763 = vunpack.c.l.b16 %v2619
        %v2764 = vunpack.c.l.b16 %v2620
        %v2765 = vunpack.c.l.b16 %v2621
        %v2766 = vunpack.c.l.b16 %v2622
        %v2767 = vunpack.c.l.b16 %v2623
        %v2768 = vunpack.c.l.b16 %v2624
        %v2769 = vunpack.c.l.b16 %v2625
        %v2770 = vunpack.c.l.b16 %v2626
        %v2771 = vunpack.c.l.b16 %v2627
        %v2772 = vunpack.c.l.b16 %v2628
        %v2773 = vunpack.c.l.b16 %v2629
        %v2774 = vunpack.c.l.b16 %v2630
        %v2775 = vpack.c.b16 %v2759, %v2759
        %v2776 = vpack.c.b16 %v2760, %v2760
        %v2777 = vpack.c.b16 %v2761, %v2761
        %v2778 = vpack.c.b16 %v2762, %v2762
        %v2779 = vpack.c.b16 %v2763, %v2763
        %v2780 = vpack.c.b16 %v2764, %v2764
        %v2781 = vpack.c.b16 %v2765, %v2765
        %v2782 = vpack.c.b16 %v2766, %v2766
        %v2783 = vpack.c.b16 %v2767, %v2767
        %v2784 = vpack.c.b16 %v2768, %v2768
        %v2785 = vpack.c.b16 %v2769, %v2769
        %v2786 = vpack.c.b16 %v2770, %v2770
        %v2787 = vpack.c.b16 %v2771, %v2771
        %v2788 = vpack.c.b16 %v2772, %v2772
        %v2789 = vpack.c.b16 %v2773, %v2773
        %v2790 = vpack.c.b16 %v2774, %v2774
        %v2792 = vshrl.u32 %v2711, 16
        %v2794 = vshll.u32 %v2711, 16
        %v2796 = vrot.slane %v2794, 1
        %v2797 = vor.u32 %v2792, %v2796
        %v2799 = vshll.u32 %v2775, 16
        %v2801 = vrot.slane %v2799, 1
        %v2802 = vsel %vm702, %v2797, %v2801
        %v2804 = vshrl.u32 %v2712, 16
        %v2806 = vshll.u32 %v2712, 16
        %v2808 = vrot.slane %v2806, 1
        %v2809 = vor.u32 %v2804, %v2808
        %v2811 = vshll.u32 %v2776, 16
        %v2813 = vrot.slane %v2811, 1
        %v2814 = vsel %vm702, %v2809, %v2813
        %v2816 = vshrl.u32 %v2713, 16
        %v2818 = vshll.u32 %v2713, 16
        %v2820 = vrot.slane %v2818, 1
        %v2821 = vor.u32 %v2816, %v2820
        %v2823 = vshll.u32 %v2777, 16
        %v2825 = vrot.slane %v2823, 1
        %v2826 = vsel %vm702, %v2821, %v2825
        %v2828 = vshrl.u32 %v2714, 16
        %v2830 = vshll.u32 %v2714, 16
        %v2832 = vrot.slane %v2830, 1
        %v2833 = vor.u32 %v2828, %v2832
        %v2835 = vshll.u32 %v2778, 16
        %v2837 = vrot.slane %v2835, 1
        %v2838 = vsel %vm702, %v2833, %v2837
        %v2840 = vshrl.u32 %v2715, 16
        %v2842 = vshll.u32 %v2715, 16
        %v2844 = vrot.slane %v2842, 1
        %v2845 = vor.u32 %v2840, %v2844
        %v2847 = vshll.u32 %v2779, 16
        %v2849 = vrot.slane %v2847, 1
        %v2850 = vsel %vm702, %v2845, %v2849
        %v2852 = vshrl.u32 %v2716, 16
        %v2854 = vshll.u32 %v2716, 16
        %v2856 = vrot.slane %v2854, 1
        %v2857 = vor.u32 %v2852, %v2856
        %v2859 = vshll.u32 %v2780, 16
        %v2861 = vrot.slane %v2859, 1
        %v2862 = vsel %vm702, %v2857, %v2861
        %v2864 = vshrl.u32 %v2717, 16
        %v2866 = vshll.u32 %v2717, 16
        %v2868 = vrot.slane %v2866, 1
        %v2869 = vor.u32 %v2864, %v2868
        %v2871 = vshll.u32 %v2781, 16
        %v2873 = vrot.slane %v2871, 1
        %v2874 = vsel %vm702, %v2869, %v2873
        %v2876 = vshrl.u32 %v2718, 16
        %v2878 = vshll.u32 %v2718, 16
        %v2880 = vrot.slane %v2878, 1
        %v2881 = vor.u32 %v2876, %v2880
        %v2883 = vshll.u32 %v2782, 16
        %v2885 = vrot.slane %v2883, 1
        %v2886 = vsel %vm702, %v2881, %v2885
        %v2888 = vshrl.u32 %v2719, 16
        %v2890 = vshll.u32 %v2719, 16
        %v2892 = vrot.slane %v2890, 1
        %v2893 = vor.u32 %v2888, %v2892
        %v2895 = vshll.u32 %v2783, 16
        %v2897 = vrot.slane %v2895, 1
        %v2898 = vsel %vm702, %v2893, %v2897
        %v2900 = vshrl.u32 %v2720, 16
        %v2902 = vshll.u32 %v2720, 16
        %v2904 = vrot.slane %v2902, 1
        %v2905 = vor.u32 %v2900, %v2904
        %v2907 = vshll.u32 %v2784, 16
        %v2909 = vrot.slane %v2907, 1
        %v2910 = vsel %vm702, %v2905, %v2909
        %v2912 = vshrl.u32 %v2721, 16
        %v2914 = vshll.u32 %v2721, 16
        %v2916 = vrot.slane %v2914, 1
        %v2917 = vor.u32 %v2912, %v2916
        %v2919 = vshll.u32 %v2785, 16
        %v2921 = vrot.slane %v2919, 1
        %v2922 = vsel %vm702, %v2917, %v2921
        %v2924 = vshrl.u32 %v2722, 16
        %v2926 = vshll.u32 %v2722, 16
        %v2928 = vrot.slane %v2926, 1
        %v2929 = vor.u32 %v2924, %v2928
        %v2931 = vshll.u32 %v2786, 16
        %v2933 = vrot.slane %v2931, 1
        %v2934 = vsel %vm702, %v2929, %v2933
        %v2936 = vshrl.u32 %v2723, 16
        %v2938 = vshll.u32 %v2723, 16
        %v2940 = vrot.slane %v2938, 1
        %v2941 = vor.u32 %v2936, %v2940
        %v2943 = vshll.u32 %v2787, 16
        %v2945 = vrot.slane %v2943, 1
        %v2946 = vsel %vm702, %v2941, %v2945
        %v2948 = vshrl.u32 %v2724, 16
        %v2950 = vshll.u32 %v2724, 16
        %v2952 = vrot.slane %v2950, 1
        %v2953 = vor.u32 %v2948, %v2952
        %v2955 = vshll.u32 %v2788, 16
        %v2957 = vrot.slane %v2955, 1
        %v2958 = vsel %vm702, %v2953, %v2957
        %v2960 = vshrl.u32 %v2725, 16
        %v2962 = vshll.u32 %v2725, 16
        %v2964 = vrot.slane %v2962, 1
        %v2965 = vor.u32 %v2960, %v2964
        %v2967 = vshll.u32 %v2789, 16
        %v2969 = vrot.slane %v2967, 1
        %v2970 = vsel %vm702, %v2965, %v2969
        %v2972 = vshrl.u32 %v2726, 16
        %v2974 = vshll.u32 %v2726, 16
        %v2976 = vrot.slane %v2974, 1
        %v2977 = vor.u32 %v2972, %v2976
        %v2979 = vshll.u32 %v2790, 16
        %v2981 = vrot.slane %v2979, 1
        %v2982 = vsel %vm702, %v2977, %v2981
        %v3015 = vunpack.c.l.b16 %v2631
        %v3016 = vunpack.c.l.b16 %v2632
        %v3017 = vunpack.c.l.b16 %v2633
        %v3018 = vunpack.c.l.b16 %v2634
        %v3019 = vunpack.c.l.b16 %v2635
        %v3020 = vunpack.c.l.b16 %v2636
        %v3021 = vunpack.c.l.b16 %v2637
        %v3022 = vunpack.c.l.b16 %v2638
        %v3023 = vunpack.c.l.b16 %v2639
        %v3024 = vunpack.c.l.b16 %v2640
        %v3025 = vunpack.c.l.b16 %v2641
        %v3026 = vunpack.c.l.b16 %v2642
        %v3027 = vunpack.c.l.b16 %v2643
        %v3028 = vunpack.c.l.b16 %v2644
        %v3029 = vunpack.c.l.b16 %v2645
        %v3030 = vunpack.c.l.b16 %v2646
        %v3031 = vpack.c.b16 %v2680, %v3015
        %v3032 = vpack.c.b16 %v2682, %v3016
        %v3033 = vpack.c.b16 %v2684, %v3017
        %v3034 = vpack.c.b16 %v2686, %v3018
        %v3035 = vpack.c.b16 %v2688, %v3019
        %v3036 = vpack.c.b16 %v2690, %v3020
        %v3037 = vpack.c.b16 %v2692, %v3021
        %v3038 = vpack.c.b16 %v2694, %v3022
        %v3039 = vpack.c.b16 %v2696, %v3023
        %v3040 = vpack.c.b16 %v2698, %v3024
        %v3041 = vpack.c.b16 %v2700, %v3025
        %v3042 = vpack.c.b16 %v2702, %v3026
        %v3043 = vpack.c.b16 %v2704, %v3027
        %v3044 = vpack.c.b16 %v2706, %v3028
        %v3045 = vpack.c.b16 %v2708, %v3029
        %v3046 = vpack.c.b16 %v2710, %v3030
        %v3047 = vrot.slane %v3031, 1
        %v3048 = vrot.slane %v2775, 1
        %v3049 = vsel %vm959, %v3047, %v3048
        %v3050 = vrot.slane %v3032, 1
        %v3051 = vrot.slane %v2776, 1
        %v3052 = vsel %vm959, %v3050, %v3051
        %v3053 = vrot.slane %v3033, 1
        %v3054 = vrot.slane %v2777, 1
        %v3055 = vsel %vm959, %v3053, %v3054
        %v3056 = vrot.slane %v3034, 1
        %v3057 = vrot.slane %v2778, 1
        %v3058 = vsel %vm959, %v3056, %v3057
        %v3059 = vrot.slane %v3035, 1
        %v3060 = vrot.slane %v2779, 1
        %v3061 = vsel %vm959, %v3059, %v3060
        %v3062 = vrot.slane %v3036, 1
        %v3063 = vrot.slane %v2780, 1
        %v3064 = vsel %vm959, %v3062, %v3063
        %v3065 = vrot.slane %v3037, 1
        %v3066 = vrot.slane %v2781, 1
        %v3067 = vsel %vm959, %v3065, %v3066
        %v3068 = vrot.slane %v3038, 1
        %v3069 = vrot.slane %v2782, 1
        %v3070 = vsel %vm959, %v3068, %v3069
        %v3071 = vrot.slane %v3039, 1
        %v3072 = vrot.slane %v2783, 1
        %v3073 = vsel %vm959, %v3071, %v3072
        %v3074 = vrot.slane %v3040, 1
        %v3075 = vrot.slane %v2784, 1
        %v3076 = vsel %vm959, %v3074, %v3075
        %v3077 = vrot.slane %v3041, 1
        %v3078 = vrot.slane %v2785, 1
        %v3079 = vsel %vm959, %v3077, %v3078
        %v3080 = vrot.slane %v3042, 1
        %v3081 = vrot.slane %v2786, 1
        %v3082 = vsel %vm959, %v3080, %v3081
        %v3083 = vrot.slane %v3043, 1
        %v3084 = vrot.slane %v2787, 1
        %v3085 = vsel %vm959, %v3083, %v3084
        %v3086 = vrot.slane %v3044, 1
        %v3087 = vrot.slane %v2788, 1
        %v3088 = vsel %vm959, %v3086, %v3087
        %v3089 = vrot.slane %v3045, 1
        %v3090 = vrot.slane %v2789, 1
        %v3091 = vsel %vm959, %v3089, %v3090
        %v3092 = vrot.slane %v3046, 1
        %v3093 = vrot.slane %v2790, 1
        %v3094 = vsel %vm959, %v3092, %v3093
        %s3111 = scalar_lea.vmem %s1, 384
        %v3112 = vld [vmem:[%s3111] sm:$0xf]
        %v3113 = vld [vmem:[%s3111 + $0x4] sm:$0xf]
        %v3114 = vld [vmem:[%s3111 + $0x8] sm:$0xf]
        %v3115 = vld [vmem:[%s3111 + $0xc] sm:$0xf]
        %v3116 = vld [vmem:[%s3111 + $0x10] sm:$0xf]
        %v3117 = vld [vmem:[%s3111 + $0x14] sm:$0xf]
        %v3118 = vld [vmem:[%s3111 + $0x18] sm:$0xf]
        %v3119 = vld [vmem:[%s3111 + $0x1c] sm:$0xf]
        %v3120 = vld [vmem:[%s3111 + $0x20] sm:$0xf]
        %v3121 = vld [vmem:[%s3111 + $0x24] sm:$0xf]
        %v3122 = vld [vmem:[%s3111 + $0x28] sm:$0xf]
        %v3123 = vld [vmem:[%s3111 + $0x2c] sm:$0xf]
        %v3124 = vld [vmem:[%s3111 + $0x30] sm:$0xf]
        %v3125 = vld [vmem:[%s3111 + $0x34] sm:$0xf]
        %v3126 = vld [vmem:[%s3111 + $0x38] sm:$0xf]
        %v3127 = vld [vmem:[%s3111 + $0x3c] sm:$0xf]
        %v3128 = vld [vmem:[%s3111 + $0x40] sm:$0xf]
        %v3129 = vld [vmem:[%s3111 + $0x44] sm:$0xf]
        %v3130 = vld [vmem:[%s3111 + $0x48] sm:$0xf]
        %v3131 = vld [vmem:[%s3111 + $0x4c] sm:$0xf]
        %v3132 = vld [vmem:[%s3111 + $0x50] sm:$0xf]
        %v3133 = vld [vmem:[%s3111 + $0x54] sm:$0xf]
        %v3134 = vld [vmem:[%s3111 + $0x58] sm:$0xf]
        %v3135 = vld [vmem:[%s3111 + $0x5c] sm:$0xf]
        %v3136 = vld [vmem:[%s3111 + $0x60] sm:$0xf]
        %v3137 = vld [vmem:[%s3111 + $0x64] sm:$0xf]
        %v3138 = vld [vmem:[%s3111 + $0x68] sm:$0xf]
        %v3139 = vld [vmem:[%s3111 + $0x6c] sm:$0xf]
        %v3140 = vld [vmem:[%s3111 + $0x70] sm:$0xf]
        %v3141 = vld [vmem:[%s3111 + $0x74] sm:$0xf]
        %v3142 = vld [vmem:[%s3111 + $0x78] sm:$0xf]
        %v3143 = vld [vmem:[%s3111 + $0x7c] sm:$0xf]
        %v3144 = vld [vmem:[%s3111 + $0x80] sm:$0xf]
        %v3145 = vld [vmem:[%s3111 + $0x84] sm:$0xf]
        %v3146 = vld [vmem:[%s3111 + $0x88] sm:$0xf]
        %v3147 = vld [vmem:[%s3111 + $0x8c] sm:$0xf]
        %v3148 = vld [vmem:[%s3111 + $0x90] sm:$0xf]
        %v3149 = vld [vmem:[%s3111 + $0x94] sm:$0xf]
        %v3150 = vld [vmem:[%s3111 + $0x98] sm:$0xf]
        %v3151 = vld [vmem:[%s3111 + $0x9c] sm:$0xf]
        %v3152 = vld [vmem:[%s3111 + $0xa0] sm:$0xf]
        %v3153 = vld [vmem:[%s3111 + $0xa4] sm:$0xf]
        %v3154 = vld [vmem:[%s3111 + $0xa8] sm:$0xf]
        %v3155 = vld [vmem:[%s3111 + $0xac] sm:$0xf]
        %v3156 = vld [vmem:[%s3111 + $0xb0] sm:$0xf]
        %v3157 = vld [vmem:[%s3111 + $0xb4] sm:$0xf]
        %v3158 = vld [vmem:[%s3111 + $0xb8] sm:$0xf]
        %v3159 = vld [vmem:[%s3111 + $0xbc] sm:$0xf]
        %v3208 = vunpack.c.l.b16 %v3112
        %v3209 = vunpack.c.l.b16 %v3113
        %v3210 = vunpack.c.l.b16 %v3114
        %v3211 = vunpack.c.l.b16 %v3115
        %v3212 = vunpack.c.l.b16 %v3116
        %v3213 = vunpack.c.l.b16 %v3117
        %v3214 = vunpack.c.l.b16 %v3118
        %v3215 = vunpack.c.l.b16 %v3119
        %v3216 = vunpack.c.l.b16 %v3120
        %v3217 = vunpack.c.l.b16 %v3121
        %v3218 = vunpack.c.l.b16 %v3122
        %v3219 = vunpack.c.l.b16 %v3123
        %v3220 = vunpack.c.l.b16 %v3124
        %v3221 = vunpack.c.l.b16 %v3125
        %v3222 = vunpack.c.l.b16 %v3126
        %v3223 = vunpack.c.l.b16 %v3127
        %v3224 = vunpack.c.l.b16 %v3128
        %v3225 = vunpack.c.l.b16 %v3129
        %v3226 = vunpack.c.l.b16 %v3130
        %v3227 = vunpack.c.l.b16 %v3131
        %v3228 = vunpack.c.l.b16 %v3132
        %v3229 = vunpack.c.l.b16 %v3133
        %v3230 = vunpack.c.l.b16 %v3134
        %v3231 = vunpack.c.l.b16 %v3135
        %v3232 = vunpack.c.l.b16 %v3136
        %v3233 = vunpack.c.l.b16 %v3137
        %v3234 = vunpack.c.l.b16 %v3138
        %v3235 = vunpack.c.l.b16 %v3139
        %v3236 = vunpack.c.l.b16 %v3140
        %v3237 = vunpack.c.l.b16 %v3141
        %v3238 = vunpack.c.l.b16 %v3142
        %v3239 = vunpack.c.l.b16 %v3143
        %v3240 = vunpack.c.l.b16 %v3144
        %v3241 = vunpack.c.l.b16 %v3145
        %v3242 = vunpack.c.l.b16 %v3146
        %v3243 = vunpack.c.l.b16 %v3147
        %v3244 = vunpack.c.l.b16 %v3148
        %v3245 = vunpack.c.l.b16 %v3149
        %v3246 = vunpack.c.l.b16 %v3150
        %v3247 = vunpack.c.l.b16 %v3151
        %v3248 = vunpack.c.l.b16 %v3152
        %v3249 = vunpack.c.l.b16 %v3153
        %v3250 = vunpack.c.l.b16 %v3154
        %v3251 = vunpack.c.l.b16 %v3155
        %v3252 = vunpack.c.l.b16 %v3156
        %v3253 = vunpack.c.l.b16 %v3157
        %v3254 = vunpack.c.l.b16 %v3158
        %v3255 = vunpack.c.l.b16 %v3159
        %v3256 = vpack.c.b16 %v3209, %v3208
        %v3257 = vpack.c.b16 %v3211, %v3210
        %v3258 = vpack.c.b16 %v3213, %v3212
        %v3259 = vpack.c.b16 %v3215, %v3214
        %v3260 = vpack.c.b16 %v3217, %v3216
        %v3261 = vpack.c.b16 %v3219, %v3218
        %v3262 = vpack.c.b16 %v3221, %v3220
        %v3263 = vpack.c.b16 %v3223, %v3222
        %v3264 = vpack.c.b16 %v3225, %v3224
        %v3265 = vpack.c.b16 %v3227, %v3226
        %v3266 = vpack.c.b16 %v3229, %v3228
        %v3267 = vpack.c.b16 %v3231, %v3230
        %v3268 = vpack.c.b16 %v3233, %v3232
        %v3269 = vpack.c.b16 %v3235, %v3234
        %v3270 = vpack.c.b16 %v3237, %v3236
        %v3271 = vpack.c.b16 %v3239, %v3238
        %v3272 = vpack.c.b16 %v3241, %v3240
        %v3273 = vpack.c.b16 %v3243, %v3242
        %v3274 = vpack.c.b16 %v3245, %v3244
        %v3275 = vpack.c.b16 %v3247, %v3246
        %v3276 = vpack.c.b16 %v3249, %v3248
        %v3277 = vpack.c.b16 %v3251, %v3250
        %v3278 = vpack.c.b16 %v3253, %v3252
        %v3279 = vpack.c.b16 %v3255, %v3254
        %3304 = vmatprep.subr.bf16.mxu0 0
        %3305 = vmatpush1.bf16.msra.mxu0 %v3263
        %3306 = vmatprep.subr.bf16.mxu0 0
        %3307 = vmatpush1.bf16.msra.mxu0 %v3262
        %3308 = vmatprep.subr.bf16.mxu0 0
        %3309 = vmatpush1.bf16.msra.mxu0 %v3261
        %3310 = vmatprep.subr.bf16.mxu0 0
        %3311 = vmatpush1.bf16.msra.mxu0 %v3260
        %3312 = vmatprep.subr.bf16.mxu0 0
        %3313 = vmatpush1.bf16.msra.mxu0 %v3259
        %3314 = vmatprep.subr.bf16.mxu0 0
        %3315 = vmatpush1.bf16.msra.mxu0 %v3258
        %3316 = vmatprep.subr.bf16.mxu0 0
        %3317 = vmatpush1.bf16.msra.mxu0 %v3257
        %3318 = vmatprep.subr.bf16.mxu0 0
        %3319 = vmatpush1.bf16.msra.mxu0 %v3256
        %3320 = vmatprep.subr.bf16.mxu0 0
        %3321 = vmatpush2.bf16.msra.mxu0 %v3271
        %3322 = vmatprep.subr.bf16.mxu0 0
        %3323 = vmatpush2.bf16.msra.mxu0 %v3270
        %3324 = vmatprep.subr.bf16.mxu0 0
        %3325 = vmatpush2.bf16.msra.mxu0 %v3269
        %3326 = vmatprep.subr.bf16.mxu0 0
        %3327 = vmatpush2.bf16.msra.mxu0 %v3268
        %3328 = vmatprep.subr.bf16.mxu0 0
        %3329 = vmatpush2.bf16.msra.mxu0 %v3267
        %3330 = vmatprep.subr.bf16.mxu0 0
        %3331 = vmatpush2.bf16.msra.mxu0 %v3266
        %3332 = vmatprep.subr.bf16.mxu0 0
        %3333 = vmatpush2.bf16.msra.mxu0 %v3265
        %3334 = vmatprep.subr.bf16.mxu0 0
        %3335 = vmatpush2.bf16.msra.mxu0 %v3264
        %3336 = vmatprep.mubr.bf16.mxu0 %v2802
        %3337 = vmatmul.mubr.bf16.gmra.mxu0 %v2711
        %v3338 = vpop.f32.mrf.mxu0
        %v3339 = vadd.f32 0.0, %v3338
        %v3340 = vpop.f32.mrf.mxu0
        %v3341 = vpop.f32.mrf.mxu0
        %v3342 = vadd.f32 0.0, %v3341
        %v3343 = vpop.f32.mrf.mxu0
        %3344 = vmatprep.mubr.bf16.mxu0 %v2814
        %3345 = vmatmul.mubr.bf16.gmra.mxu0 %v2712
        %v3346 = vpop.f32.mrf.mxu0
        %v3347 = vadd.f32 0.0, %v3346
        %v3348 = vpop.f32.mrf.mxu0
        %v3349 = vpop.f32.mrf.mxu0
        %v3350 = vadd.f32 0.0, %v3349
        %v3351 = vpop.f32.mrf.mxu0
        %3352 = vmatprep.mubr.bf16.mxu0 %v2826
        %3353 = vmatmul.mubr.bf16.gmra.mxu0 %v2713
        %v3354 = vpop.f32.mrf.mxu0
        %v3355 = vadd.f32 0.0, %v3354
        %v3356 = vpop.f32.mrf.mxu0
        %v3357 = vpop.f32.mrf.mxu0
        %v3358 = vadd.f32 0.0, %v3357
        %v3359 = vpop.f32.mrf.mxu0
        %3360 = vmatprep.mubr.bf16.mxu0 %v2838
        %3361 = vmatmul.mubr.bf16.gmra.mxu0 %v2714
        %v3362 = vpop.f32.mrf.mxu0
        %v3363 = vadd.f32 0.0, %v3362
        %v3364 = vpop.f32.mrf.mxu0
        %v3365 = vpop.f32.mrf.mxu0
        %v3366 = vadd.f32 0.0, %v3365
        %v3367 = vpop.f32.mrf.mxu0
        %3368 = vmatprep.mubr.bf16.mxu0 %v2850
        %3369 = vmatmul.mubr.bf16.gmra.mxu0 %v2715
        %v3370 = vpop.f32.mrf.mxu0
        %v3371 = vadd.f32 0.0, %v3370
        %v3372 = vpop.f32.mrf.mxu0
        %v3373 = vpop.f32.mrf.mxu0
        %v3374 = vadd.f32 0.0, %v3373
        %v3375 = vpop.f32.mrf.mxu0
        %3376 = vmatprep.mubr.bf16.mxu0 %v2862
        %3377 = vmatmul.mubr.bf16.gmra.mxu0 %v2716
        %v3378 = vpop.f32.mrf.mxu0
        %v3379 = vadd.f32 0.0, %v3378
        %v3380 = vpop.f32.mrf.mxu0
        %v3381 = vpop.f32.mrf.mxu0
        %v3382 = vadd.f32 0.0, %v3381
        %v3383 = vpop.f32.mrf.mxu0
        %3384 = vmatprep.mubr.bf16.mxu0 %v2874
        %3385 = vmatmul.mubr.bf16.gmra.mxu0 %v2717
        %v3386 = vpop.f32.mrf.mxu0
        %v3387 = vadd.f32 0.0, %v3386
        %v3388 = vpop.f32.mrf.mxu0
        %v3389 = vpop.f32.mrf.mxu0
        %v3390 = vadd.f32 0.0, %v3389
        %v3391 = vpop.f32.mrf.mxu0
        %3392 = vmatprep.mubr.bf16.mxu0 %v2886
        %3393 = vmatmul.mubr.bf16.gmra.mxu0 %v2718
        %v3394 = vpop.f32.mrf.mxu0
        %v3395 = vadd.f32 0.0, %v3394
        %v3396 = vpop.f32.mrf.mxu0
        %v3397 = vpop.f32.mrf.mxu0
        %v3398 = vadd.f32 0.0, %v3397
        %v3399 = vpop.f32.mrf.mxu0
        %3400 = vmatprep.mubr.bf16.mxu0 %v2898
        %3401 = vmatmul.mubr.bf16.gmra.mxu0 %v2719
        %v3402 = vpop.f32.mrf.mxu0
        %v3403 = vadd.f32 0.0, %v3402
        %v3404 = vpop.f32.mrf.mxu0
        %v3405 = vpop.f32.mrf.mxu0
        %v3406 = vadd.f32 0.0, %v3405
        %v3407 = vpop.f32.mrf.mxu0
        %3408 = vmatprep.mubr.bf16.mxu0 %v2910
        %3409 = vmatmul.mubr.bf16.gmra.mxu0 %v2720
        %v3410 = vpop.f32.mrf.mxu0
        %v3411 = vadd.f32 0.0, %v3410
        %v3412 = vpop.f32.mrf.mxu0
        %v3413 = vpop.f32.mrf.mxu0
        %v3414 = vadd.f32 0.0, %v3413
        %v3415 = vpop.f32.mrf.mxu0
        %3416 = vmatprep.mubr.bf16.mxu0 %v2922
        %3417 = vmatmul.mubr.bf16.gmra.mxu0 %v2721
        %v3418 = vpop.f32.mrf.mxu0
        %v3419 = vadd.f32 0.0, %v3418
        %v3420 = vpop.f32.mrf.mxu0
        %v3421 = vpop.f32.mrf.mxu0
        %v3422 = vadd.f32 0.0, %v3421
        %v3423 = vpop.f32.mrf.mxu0
        %3424 = vmatprep.mubr.bf16.mxu0 %v2934
        %3425 = vmatmul.mubr.bf16.gmra.mxu0 %v2722
        %v3426 = vpop.f32.mrf.mxu0
        %v3427 = vadd.f32 0.0, %v3426
        %v3428 = vpop.f32.mrf.mxu0
        %v3429 = vpop.f32.mrf.mxu0
        %v3430 = vadd.f32 0.0, %v3429
        %v3431 = vpop.f32.mrf.mxu0
        %3432 = vmatprep.mubr.bf16.mxu0 %v2946
        %3433 = vmatmul.mubr.bf16.gmra.mxu0 %v2723
        %v3434 = vpop.f32.mrf.mxu0
        %v3435 = vadd.f32 0.0, %v3434
        %v3436 = vpop.f32.mrf.mxu0
        %v3437 = vpop.f32.mrf.mxu0
        %v3438 = vadd.f32 0.0, %v3437
        %v3439 = vpop.f32.mrf.mxu0
        %3440 = vmatprep.mubr.bf16.mxu0 %v2958
        %3441 = vmatmul.mubr.bf16.gmra.mxu0 %v2724
        %v3442 = vpop.f32.mrf.mxu0
        %v3443 = vadd.f32 0.0, %v3442
        %v3444 = vpop.f32.mrf.mxu0
        %v3445 = vpop.f32.mrf.mxu0
        %v3446 = vadd.f32 0.0, %v3445
        %v3447 = vpop.f32.mrf.mxu0
        %3448 = vmatprep.mubr.bf16.mxu0 %v2970
        %3449 = vmatmul.mubr.bf16.gmra.mxu0 %v2725
        %v3450 = vpop.f32.mrf.mxu0
        %v3451 = vadd.f32 0.0, %v3450
        %v3452 = vpop.f32.mrf.mxu0
        %v3453 = vpop.f32.mrf.mxu0
        %v3454 = vadd.f32 0.0, %v3453
        %v3455 = vpop.f32.mrf.mxu0
        %3456 = vmatprep.mubr.bf16.mxu0 %v2982
        %3457 = vmatmul.mubr.bf16.gmra.mxu0 %v2726
        %v3458 = vpop.f32.mrf.mxu0
        %v3459 = vadd.f32 0.0, %v3458
        %v3460 = vpop.f32.mrf.mxu0
        %v3461 = vpop.f32.mrf.mxu0
        %v3462 = vadd.f32 0.0, %v3461
        %v3463 = vpop.f32.mrf.mxu0
        %3464 = vdwg.mxu0
        %3465 = vmatprep.subr.bf16.mxu0 0
        %3466 = vmatpush1.bf16.msra.mxu0 %v3279
        %3467 = vmatprep.subr.bf16.mxu0 0
        %3468 = vmatpush1.bf16.msra.mxu0 %v3278
        %3469 = vmatprep.subr.bf16.mxu0 0
        %3470 = vmatpush1.bf16.msra.mxu0 %v3277
        %3471 = vmatprep.subr.bf16.mxu0 0
        %3472 = vmatpush1.bf16.msra.mxu0 %v3276
        %3473 = vmatprep.subr.bf16.mxu0 0
        %3474 = vmatpush1.bf16.msra.mxu0 %v3275
        %3475 = vmatprep.subr.bf16.mxu0 0
        %3476 = vmatpush1.bf16.msra.mxu0 %v3274
        %3477 = vmatprep.subr.bf16.mxu0 0
        %3478 = vmatpush1.bf16.msra.mxu0 %v3273
        %3479 = vmatprep.subr.bf16.mxu0 0
        %3480 = vmatpush1.bf16.msra.mxu0 %v3272
        %3481 = vmatprep.subr.bf16.mxu0 0
        %3482 = vmatpush2.bf16.msra.mxu0 0
        %3483 = vmatprep.subr.bf16.mxu0 0
        %3484 = vmatpush2.bf16.msra.mxu0 0
        %3485 = vmatprep.subr.bf16.mxu0 0
        %3486 = vmatpush2.bf16.msra.mxu0 0
        %3487 = vmatprep.subr.bf16.mxu0 0
        %3488 = vmatpush2.bf16.msra.mxu0 0
        %3489 = vmatprep.subr.bf16.mxu0 0
        %3490 = vmatpush2.bf16.msra.mxu0 0
        %3491 = vmatprep.subr.bf16.mxu0 0
        %3492 = vmatpush2.bf16.msra.mxu0 0
        %3493 = vmatprep.subr.bf16.mxu0 0
        %3494 = vmatpush2.bf16.msra.mxu0 0
        %3495 = vmatprep.subr.bf16.mxu0 0
        %3496 = vmatpush2.bf16.msra.mxu0 0
        %3497 = vmatprep.mubr.bf16.mxu0 0
        %3498 = vmatmul.mubr.bf16.gmra.mxu0 %v3049
        %v3499 = vpop.f32.mrf.mxu0
        %v3500 = vadd.f32 %v3339, %v3499
        %v3501 = vpop.f32.mrf.mxu0
        %v3502 = vpop.f32.mrf.mxu0
        %v3503 = vadd.f32 %v3342, %v3502
        %v3504 = vpop.f32.mrf.mxu0
        %3505 = vmatprep.mubr.bf16.mxu0 0
        %3506 = vmatmul.mubr.bf16.gmra.mxu0 %v3052
        %v3507 = vpop.f32.mrf.mxu0
        %v3508 = vadd.f32 %v3347, %v3507
        %v3509 = vpop.f32.mrf.mxu0
        %v3510 = vpop.f32.mrf.mxu0
        %v3511 = vadd.f32 %v3350, %v3510
        %v3512 = vpop.f32.mrf.mxu0
        %3513 = vmatprep.mubr.bf16.mxu0 0
        %3514 = vmatmul.mubr.bf16.gmra.mxu0 %v3055
        %v3515 = vpop.f32.mrf.mxu0
        %v3516 = vadd.f32 %v3355, %v3515
        %v3517 = vpop.f32.mrf.mxu0
        %v3518 = vpop.f32.mrf.mxu0
        %v3519 = vadd.f32 %v3358, %v3518
        %v3520 = vpop.f32.mrf.mxu0
        %3521 = vmatprep.mubr.bf16.mxu0 0
        %3522 = vmatmul.mubr.bf16.gmra.mxu0 %v3058
        %v3523 = vpop.f32.mrf.mxu0
        %v3524 = vadd.f32 %v3363, %v3523
        %v3525 = vpop.f32.mrf.mxu0
        %v3526 = vpop.f32.mrf.mxu0
        %v3527 = vadd.f32 %v3366, %v3526
        %v3528 = vpop.f32.mrf.mxu0
        %3529 = vmatprep.mubr.bf16.mxu0 0
        %3530 = vmatmul.mubr.bf16.gmra.mxu0 %v3061
        %v3531 = vpop.f32.mrf.mxu0
        %v3532 = vadd.f32 %v3371, %v3531
        %v3533 = vpop.f32.mrf.mxu0
        %v3534 = vpop.f32.mrf.mxu0
        %v3535 = vadd.f32 %v3374, %v3534
        %v3536 = vpop.f32.mrf.mxu0
        %3537 = vmatprep.mubr.bf16.mxu0 0
        %3538 = vmatmul.mubr.bf16.gmra.mxu0 %v3064
        %v3539 = vpop.f32.mrf.mxu0
        %v3540 = vadd.f32 %v3379, %v3539
        %v3541 = vpop.f32.mrf.mxu0
        %v3542 = vpop.f32.mrf.mxu0
        %v3543 = vadd.f32 %v3382, %v3542
        %v3544 = vpop.f32.mrf.mxu0
        %3545 = vmatprep.mubr.bf16.mxu0 0
        %3546 = vmatmul.mubr.bf16.gmra.mxu0 %v3067
        %v3547 = vpop.f32.mrf.mxu0
        %v3548 = vadd.f32 %v3387, %v3547
        %v3549 = vpop.f32.mrf.mxu0
        %v3550 = vpop.f32.mrf.mxu0
        %v3551 = vadd.f32 %v3390, %v3550
        %v3552 = vpop.f32.mrf.mxu0
        %3553 = vmatprep.mubr.bf16.mxu0 0
        %3554 = vmatmul.mubr.bf16.gmra.mxu0 %v3070
        %v3555 = vpop.f32.mrf.mxu0
        %v3556 = vadd.f32 %v3395, %v3555
        %v3557 = vpop.f32.mrf.mxu0
        %v3558 = vpop.f32.mrf.mxu0
        %v3559 = vadd.f32 %v3398, %v3558
        %v3560 = vpop.f32.mrf.mxu0
        %3561 = vmatprep.mubr.bf16.mxu0 0
        %3562 = vmatmul.mubr.bf16.gmra.mxu0 %v3073
        %v3563 = vpop.f32.mrf.mxu0
        %v3564 = vadd.f32 %v3403, %v3563
        %v3565 = vpop.f32.mrf.mxu0
        %v3566 = vpop.f32.mrf.mxu0
        %v3567 = vadd.f32 %v3406, %v3566
        %v3568 = vpop.f32.mrf.mxu0
        %3569 = vmatprep.mubr.bf16.mxu0 0
        %3570 = vmatmul.mubr.bf16.gmra.mxu0 %v3076
        %v3571 = vpop.f32.mrf.mxu0
        %v3572 = vadd.f32 %v3411, %v3571
        %v3573 = vpop.f32.mrf.mxu0
        %v3574 = vpop.f32.mrf.mxu0
        %v3575 = vadd.f32 %v3414, %v3574
        %v3576 = vpop.f32.mrf.mxu0
        %3577 = vmatprep.mubr.bf16.mxu0 0
        %3578 = vmatmul.mubr.bf16.gmra.mxu0 %v3079
        %v3579 = vpop.f32.mrf.mxu0
        %v3580 = vadd.f32 %v3419, %v3579
        %v3581 = vpop.f32.mrf.mxu0
        %v3582 = vpop.f32.mrf.mxu0
        %v3583 = vadd.f32 %v3422, %v3582
        %v3584 = vpop.f32.mrf.mxu0
        %3585 = vmatprep.mubr.bf16.mxu0 0
        %3586 = vmatmul.mubr.bf16.gmra.mxu0 %v3082
        %v3587 = vpop.f32.mrf.mxu0
        %v3588 = vadd.f32 %v3427, %v3587
        %v3589 = vpop.f32.mrf.mxu0
        %v3590 = vpop.f32.mrf.mxu0
        %v3591 = vadd.f32 %v3430, %v3590
        %v3592 = vpop.f32.mrf.mxu0
        %3593 = vmatprep.mubr.bf16.mxu0 0
        %3594 = vmatmul.mubr.bf16.gmra.mxu0 %v3085
        %v3595 = vpop.f32.mrf.mxu0
        %v3596 = vadd.f32 %v3435, %v3595
        %v3597 = vpop.f32.mrf.mxu0
        %v3598 = vpop.f32.mrf.mxu0
        %v3599 = vadd.f32 %v3438, %v3598
        %v3600 = vpop.f32.mrf.mxu0
        %3601 = vmatprep.mubr.bf16.mxu0 0
        %3602 = vmatmul.mubr.bf16.gmra.mxu0 %v3088
        %v3603 = vpop.f32.mrf.mxu0
        %v3604 = vadd.f32 %v3443, %v3603
        %v3605 = vpop.f32.mrf.mxu0
        %v3606 = vpop.f32.mrf.mxu0
        %v3607 = vadd.f32 %v3446, %v3606
        %v3608 = vpop.f32.mrf.mxu0
        %3609 = vmatprep.mubr.bf16.mxu0 0
        %3610 = vmatmul.mubr.bf16.gmra.mxu0 %v3091
        %v3611 = vpop.f32.mrf.mxu0
        %v3612 = vadd.f32 %v3451, %v3611
        %v3613 = vpop.f32.mrf.mxu0
        %v3614 = vpop.f32.mrf.mxu0
        %v3615 = vadd.f32 %v3454, %v3614
        %v3616 = vpop.f32.mrf.mxu0
        %3617 = vmatprep.mubr.bf16.mxu0 0
        %3618 = vmatmul.mubr.bf16.gmra.mxu0 %v3094
        %v3619 = vpop.f32.mrf.mxu0
        %v3620 = vadd.f32 %v3459, %v3619
        %v3621 = vpop.f32.mrf.mxu0
        %v3622 = vpop.f32.mrf.mxu0
        %v3623 = vadd.f32 %v3462, %v3622
        %v3624 = vpop.f32.mrf.mxu0
        %3625 = vdwg.mxu0
        %v3626 = vadd.f32 %v2456, %v3500
        %v3627 = vadd.f32 %v2459, %v3503
        %v3628 = vadd.f32 %v2464, %v3508
        %v3629 = vadd.f32 %v2467, %v3511
        %v3630 = vadd.f32 %v2472, %v3516
        %v3631 = vadd.f32 %v2475, %v3519
        %v3632 = vadd.f32 %v2480, %v3524
        %v3633 = vadd.f32 %v2483, %v3527
        %v3634 = vadd.f32 %v2488, %v3532
        %v3635 = vadd.f32 %v2491, %v3535
        %v3636 = vadd.f32 %v2496, %v3540
        %v3637 = vadd.f32 %v2499, %v3543
        %v3638 = vadd.f32 %v2504, %v3548
        %v3639 = vadd.f32 %v2507, %v3551
        %v3640 = vadd.f32 %v2512, %v3556
        %v3641 = vadd.f32 %v2515, %v3559
        %v3642 = vadd.f32 %v2520, %v3564
        %v3643 = vadd.f32 %v2523, %v3567
        %v3644 = vadd.f32 %v2528, %v3572
        %v3645 = vadd.f32 %v2531, %v3575
        %v3646 = vadd.f32 %v2536, %v3580
        %v3647 = vadd.f32 %v2539, %v3583
        %v3648 = vadd.f32 %v2544, %v3588
        %v3649 = vadd.f32 %v2547, %v3591
        %v3650 = vadd.f32 %v2552, %v3596
        %v3651 = vadd.f32 %v2555, %v3599
        %v3652 = vadd.f32 %v2560, %v3604
        %v3653 = vadd.f32 %v2563, %v3607
        %v3654 = vadd.f32 %v2568, %v3612
        %v3655 = vadd.f32 %v2571, %v3615
        %v3656 = vadd.f32 %v2576, %v3620
        %v3657 = vadd.f32 %v2579, %v3623
        %v3658 = vld [vmem:[%s2] sm:$0x1]
        %v3660 = vlaneseq
        %v3661 = vshrl.u32 %v3660, 7
        %v3662 = vsub.s32 0, %v3661
        %v3663 = vrot.slane %v3658, %v3662
        %v3665 = vmul.f32 %v3626, %v3663
        %v3666 = vmul.f32 %v3627, %v3663
        %v3667 = vmul.f32 %v3628, %v3663
        %v3668 = vmul.f32 %v3629, %v3663
        %v3669 = vmul.f32 %v3630, %v3663
        %v3670 = vmul.f32 %v3631, %v3663
        %v3671 = vmul.f32 %v3632, %v3663
        %v3672 = vmul.f32 %v3633, %v3663
        %v3673 = vmul.f32 %v3634, %v3663
        %v3674 = vmul.f32 %v3635, %v3663
        %v3675 = vmul.f32 %v3636, %v3663
        %v3676 = vmul.f32 %v3637, %v3663
        %v3677 = vmul.f32 %v3638, %v3663
        %v3678 = vmul.f32 %v3639, %v3663
        %v3679 = vmul.f32 %v3640, %v3663
        %v3680 = vmul.f32 %v3641, %v3663
        %v3681 = vmul.f32 %v3642, %v3663
        %v3682 = vmul.f32 %v3643, %v3663
        %v3683 = vmul.f32 %v3644, %v3663
        %v3684 = vmul.f32 %v3645, %v3663
        %v3685 = vmul.f32 %v3646, %v3663
        %v3686 = vmul.f32 %v3647, %v3663
        %v3687 = vmul.f32 %v3648, %v3663
        %v3688 = vmul.f32 %v3649, %v3663
        %v3689 = vmul.f32 %v3650, %v3663
        %v3690 = vmul.f32 %v3651, %v3663
        %v3691 = vmul.f32 %v3652, %v3663
        %v3692 = vmul.f32 %v3653, %v3663
        %v3693 = vmul.f32 %v3654, %v3663
        %v3694 = vmul.f32 %v3655, %v3663
        %v3695 = vmul.f32 %v3656, %v3663
        %v3696 = vmul.f32 %v3657, %v3663
        %v3697 = vld [vmem:[%s3] sm:$0x1]
        %v3699 = vlaneseq
        %v3700 = vshrl.u32 %v3699, 7
        %v3701 = vsub.s32 0, %v3700
        %v3702 = vrot.slane %v3697, %v3701
        %v3704 = vadd.f32 %v3665, %v3702
        %v3705 = vadd.f32 %v3666, %v3702
        %v3706 = vadd.f32 %v3667, %v3702
        %v3707 = vadd.f32 %v3668, %v3702
        %v3708 = vadd.f32 %v3669, %v3702
        %v3709 = vadd.f32 %v3670, %v3702
        %v3710 = vadd.f32 %v3671, %v3702
        %v3711 = vadd.f32 %v3672, %v3702
        %v3712 = vadd.f32 %v3673, %v3702
        %v3713 = vadd.f32 %v3674, %v3702
        %v3714 = vadd.f32 %v3675, %v3702
        %v3715 = vadd.f32 %v3676, %v3702
        %v3716 = vadd.f32 %v3677, %v3702
        %v3717 = vadd.f32 %v3678, %v3702
        %v3718 = vadd.f32 %v3679, %v3702
        %v3719 = vadd.f32 %v3680, %v3702
        %v3720 = vadd.f32 %v3681, %v3702
        %v3721 = vadd.f32 %v3682, %v3702
        %v3722 = vadd.f32 %v3683, %v3702
        %v3723 = vadd.f32 %v3684, %v3702
        %v3724 = vadd.f32 %v3685, %v3702
        %v3725 = vadd.f32 %v3686, %v3702
        %v3726 = vadd.f32 %v3687, %v3702
        %v3727 = vadd.f32 %v3688, %v3702
        %v3728 = vadd.f32 %v3689, %v3702
        %v3729 = vadd.f32 %v3690, %v3702
        %v3730 = vadd.f32 %v3691, %v3702
        %v3731 = vadd.f32 %v3692, %v3702
        %v3732 = vadd.f32 %v3693, %v3702
        %v3733 = vadd.f32 %v3694, %v3702
        %v3734 = vadd.f32 %v3695, %v3702
        %v3735 = vadd.f32 %v3696, %v3702
        %v3736 = vmax.f32 %v3704, 0.0
        %v3737 = vmax.f32 %v3705, 0.0
        %v3738 = vmax.f32 %v3706, 0.0
        %v3739 = vmax.f32 %v3707, 0.0
        %v3740 = vmax.f32 %v3708, 0.0
        %v3741 = vmax.f32 %v3709, 0.0
        %v3742 = vmax.f32 %v3710, 0.0
        %v3743 = vmax.f32 %v3711, 0.0
        %v3744 = vmax.f32 %v3712, 0.0
        %v3745 = vmax.f32 %v3713, 0.0
        %v3746 = vmax.f32 %v3714, 0.0
        %v3747 = vmax.f32 %v3715, 0.0
        %v3748 = vmax.f32 %v3716, 0.0
        %v3749 = vmax.f32 %v3717, 0.0
        %v3750 = vmax.f32 %v3718, 0.0
        %v3751 = vmax.f32 %v3719, 0.0
        %v3752 = vmax.f32 %v3720, 0.0
        %v3753 = vmax.f32 %v3721, 0.0
        %v3754 = vmax.f32 %v3722, 0.0
        %v3755 = vmax.f32 %v3723, 0.0
        %v3756 = vmax.f32 %v3724, 0.0
        %v3757 = vmax.f32 %v3725, 0.0
        %v3758 = vmax.f32 %v3726, 0.0
        %v3759 = vmax.f32 %v3727, 0.0
        %v3760 = vmax.f32 %v3728, 0.0
        %v3761 = vmax.f32 %v3729, 0.0
        %v3762 = vmax.f32 %v3730, 0.0
        %v3763 = vmax.f32 %v3731, 0.0
        %v3764 = vmax.f32 %v3732, 0.0
        %v3765 = vmax.f32 %v3733, 0.0
        %v3766 = vmax.f32 %v3734, 0.0
        %v3767 = vmax.f32 %v3735, 0.0
        %v3768 = vpack.c.bf16 %v3737, %v3736
        %v3769 = vpack.c.bf16 %v3739, %v3738
        %v3770 = vpack.c.bf16 %v3741, %v3740
        %v3771 = vpack.c.bf16 %v3743, %v3742
        %v3772 = vpack.c.bf16 %v3745, %v3744
        %v3773 = vpack.c.bf16 %v3747, %v3746
        %v3774 = vpack.c.bf16 %v3749, %v3748
        %v3775 = vpack.c.bf16 %v3751, %v3750
        %v3776 = vpack.c.bf16 %v3753, %v3752
        %v3777 = vpack.c.bf16 %v3755, %v3754
        %v3778 = vpack.c.bf16 %v3757, %v3756
        %v3779 = vpack.c.bf16 %v3759, %v3758
        %v3780 = vpack.c.bf16 %v3761, %v3760
        %v3781 = vpack.c.bf16 %v3763, %v3762
        %v3782 = vpack.c.bf16 %v3765, %v3764
        %v3783 = vpack.c.bf16 %v3767, %v3766
        %v3800 = vunpack.c.l.b16 %v3768
        %v3801 = vunpack.c.h.b16 %v3768
        %v3802 = vunpack.c.l.b16 %v3769
        %v3803 = vunpack.c.h.b16 %v3769
        %v3804 = vunpack.c.l.b16 %v3770
        %v3805 = vunpack.c.h.b16 %v3770
        %v3806 = vunpack.c.l.b16 %v3771
        %v3807 = vunpack.c.h.b16 %v3771
        %v3808 = vunpack.c.l.b16 %v3772
        %v3809 = vunpack.c.h.b16 %v3772
        %v3810 = vunpack.c.l.b16 %v3773
        %v3811 = vunpack.c.h.b16 %v3773
        %v3812 = vunpack.c.l.b16 %v3774
        %v3813 = vunpack.c.h.b16 %v3774
        %v3814 = vunpack.c.l.b16 %v3775
        %v3815 = vunpack.c.h.b16 %v3775
        %v3816 = vunpack.c.l.b16 %v3776
        %v3817 = vunpack.c.h.b16 %v3776
        %v3818 = vunpack.c.l.b16 %v3777
        %v3819 = vunpack.c.h.b16 %v3777
        %v3820 = vunpack.c.l.b16 %v3778
        %v3821 = vunpack.c.h.b16 %v3778
        %v3822 = vunpack.c.l.b16 %v3779
        %v3823 = vunpack.c.h.b16 %v3779
        %v3824 = vunpack.c.l.b16 %v3780
        %v3825 = vunpack.c.h.b16 %v3780
        %v3826 = vunpack.c.l.b16 %v3781
        %v3827 = vunpack.c.h.b16 %v3781
        %v3828 = vunpack.c.l.b16 %v3782
        %v3829 = vunpack.c.h.b16 %v3782
        %v3830 = vunpack.c.l.b16 %v3783
        %v3831 = vunpack.c.h.b16 %v3783
        %v3832 = vpack.c.b16 %v3800, %v3800
        %v3833 = vpack.c.b16 %v3801, %v3801
        %v3834 = vpack.c.b16 %v3802, %v3802
        %v3835 = vpack.c.b16 %v3803, %v3803
        %v3836 = vpack.c.b16 %v3804, %v3804
        %v3837 = vpack.c.b16 %v3805, %v3805
        %v3838 = vpack.c.b16 %v3806, %v3806
        %v3839 = vpack.c.b16 %v3807, %v3807
        %v3840 = vpack.c.b16 %v3808, %v3808
        %v3841 = vpack.c.b16 %v3809, %v3809
        %v3842 = vpack.c.b16 %v3810, %v3810
        %v3843 = vpack.c.b16 %v3811, %v3811
        %v3844 = vpack.c.b16 %v3812, %v3812
        %v3845 = vpack.c.b16 %v3813, %v3813
        %v3846 = vpack.c.b16 %v3814, %v3814
        %v3847 = vpack.c.b16 %v3815, %v3815
        %v3848 = vpack.c.b16 %v3816, %v3816
        %v3849 = vpack.c.b16 %v3817, %v3817
        %v3850 = vpack.c.b16 %v3818, %v3818
        %v3851 = vpack.c.b16 %v3819, %v3819
        %v3852 = vpack.c.b16 %v3820, %v3820
        %v3853 = vpack.c.b16 %v3821, %v3821
        %v3854 = vpack.c.b16 %v3822, %v3822
        %v3855 = vpack.c.b16 %v3823, %v3823
        %v3856 = vpack.c.b16 %v3824, %v3824
        %v3857 = vpack.c.b16 %v3825, %v3825
        %v3858 = vpack.c.b16 %v3826, %v3826
        %v3859 = vpack.c.b16 %v3827, %v3827
        %v3860 = vpack.c.b16 %v3828, %v3828
        %v3861 = vpack.c.b16 %v3829, %v3829
        %v3862 = vpack.c.b16 %v3830, %v3830
        %v3863 = vpack.c.b16 %v3831, %v3831
        %vm3864 = vsmask.f32 4368
        %vm3865 = vmor %vm382, %vm3864
        %v3867 = vshrl.u32 %v3832, 16
        %v3869 = vrot.slane %v3867, 7
        %v3870 = vshll.u32 %v3832, 16
        %v3872 = vor.u32 %v3869, %v3870
        %v3873 = vrot.slane %v3869, 4
        %v3875 = vshrl.u32 %v3833, 16
        %v3877 = vrot.slane %v3875, 7
        %v3878 = vshll.u32 %v3833, 16
        %v3880 = vor.u32 %v3877, %v3878
        %v3881 = vsel %vm3865, %v3873, %v3880
        %v3882 = vrot.slane %v3877, 4
        %v3884 = vshrl.u32 %v3834, 16
        %v3886 = vrot.slane %v3884, 7
        %v3887 = vshll.u32 %v3834, 16
        %v3889 = vor.u32 %v3886, %v3887
        %v3890 = vrot.slane %v3886, 4
        %v3892 = vshrl.u32 %v3835, 16
        %v3894 = vrot.slane %v3892, 7
        %v3895 = vshll.u32 %v3835, 16
        %v3897 = vor.u32 %v3894, %v3895
        %v3898 = vsel %vm3865, %v3890, %v3897
        %v3899 = vrot.slane %v3894, 4
        %v3901 = vshrl.u32 %v3836, 16
        %v3903 = vrot.slane %v3901, 7
        %v3904 = vshll.u32 %v3836, 16
        %v3906 = vor.u32 %v3903, %v3904
        %v3907 = vrot.slane %v3903, 4
        %v3909 = vshrl.u32 %v3837, 16
        %v3911 = vrot.slane %v3909, 7
        %v3912 = vshll.u32 %v3837, 16
        %v3914 = vor.u32 %v3911, %v3912
        %v3915 = vsel %vm3865, %v3907, %v3914
        %v3916 = vrot.slane %v3911, 4
        %v3918 = vshrl.u32 %v3838, 16
        %v3920 = vrot.slane %v3918, 7
        %v3921 = vshll.u32 %v3838, 16
        %v3923 = vor.u32 %v3920, %v3921
        %v3924 = vrot.slane %v3920, 4
        %v3926 = vshrl.u32 %v3839, 16
        %v3928 = vrot.slane %v3926, 7
        %v3929 = vshll.u32 %v3839, 16
        %v3931 = vor.u32 %v3928, %v3929
        %v3932 = vsel %vm3865, %v3924, %v3931
        %v3933 = vrot.slane %v3928, 4
        %v3935 = vshrl.u32 %v3840, 16
        %v3937 = vrot.slane %v3935, 7
        %v3938 = vshll.u32 %v3840, 16
        %v3940 = vor.u32 %v3937, %v3938
        %v3941 = vrot.slane %v3937, 4
        %v3943 = vshrl.u32 %v3841, 16
        %v3945 = vrot.slane %v3943, 7
        %v3946 = vshll.u32 %v3841, 16
        %v3948 = vor.u32 %v3945, %v3946
        %v3949 = vsel %vm3865, %v3941, %v3948
        %v3950 = vrot.slane %v3945, 4
        %v3952 = vshrl.u32 %v3842, 16
        %v3954 = vrot.slane %v3952, 7
        %v3955 = vshll.u32 %v3842, 16
        %v3957 = vor.u32 %v3954, %v3955
        %v3958 = vrot.slane %v3954, 4
        %v3960 = vshrl.u32 %v3843, 16
        %v3962 = vrot.slane %v3960, 7
        %v3963 = vshll.u32 %v3843, 16
        %v3965 = vor.u32 %v3962, %v3963
        %v3966 = vsel %vm3865, %v3958, %v3965
        %v3967 = vrot.slane %v3962, 4
        %v3969 = vshrl.u32 %v3844, 16
        %v3971 = vrot.slane %v3969, 7
        %v3972 = vshll.u32 %v3844, 16
        %v3974 = vor.u32 %v3971, %v3972
        %v3975 = vrot.slane %v3971, 4
        %v3977 = vshrl.u32 %v3845, 16
        %v3979 = vrot.slane %v3977, 7
        %v3980 = vshll.u32 %v3845, 16
        %v3982 = vor.u32 %v3979, %v3980
        %v3983 = vsel %vm3865, %v3975, %v3982
        %v3984 = vrot.slane %v3979, 4
        %v3986 = vshrl.u32 %v3846, 16
        %v3988 = vrot.slane %v3986, 7
        %v3989 = vshll.u32 %v3846, 16
        %v3991 = vor.u32 %v3988, %v3989
        %v3992 = vrot.slane %v3988, 4
        %v3994 = vshrl.u32 %v3847, 16
        %v3996 = vrot.slane %v3994, 7
        %v3997 = vshll.u32 %v3847, 16
        %v3999 = vor.u32 %v3996, %v3997
        %v4000 = vsel %vm3865, %v3992, %v3999
        %v4001 = vrot.slane %v3996, 4
        %v4003 = vshrl.u32 %v3848, 16
        %v4005 = vrot.slane %v4003, 7
        %v4006 = vshll.u32 %v3848, 16
        %v4008 = vor.u32 %v4005, %v4006
        %v4009 = vrot.slane %v4005, 4
        %v4011 = vshrl.u32 %v3849, 16
        %v4013 = vrot.slane %v4011, 7
        %v4014 = vshll.u32 %v3849, 16
        %v4016 = vor.u32 %v4013, %v4014
        %v4017 = vsel %vm3865, %v4009, %v4016
        %v4018 = vrot.slane %v4013, 4
        %v4020 = vshrl.u32 %v3850, 16
        %v4022 = vrot.slane %v4020, 7
        %v4023 = vshll.u32 %v3850, 16
        %v4025 = vor.u32 %v4022, %v4023
        %v4026 = vrot.slane %v4022, 4
        %v4028 = vshrl.u32 %v3851, 16
        %v4030 = vrot.slane %v4028, 7
        %v4031 = vshll.u32 %v3851, 16
        %v4033 = vor.u32 %v4030, %v4031
        %v4034 = vsel %vm3865, %v4026, %v4033
        %v4035 = vrot.slane %v4030, 4
        %v4037 = vshrl.u32 %v3852, 16
        %v4039 = vrot.slane %v4037, 7
        %v4040 = vshll.u32 %v3852, 16
        %v4042 = vor.u32 %v4039, %v4040
        %v4043 = vrot.slane %v4039, 4
        %v4045 = vshrl.u32 %v3853, 16
        %v4047 = vrot.slane %v4045, 7
        %v4048 = vshll.u32 %v3853, 16
        %v4050 = vor.u32 %v4047, %v4048
        %v4051 = vsel %vm3865, %v4043, %v4050
        %v4052 = vrot.slane %v4047, 4
        %v4054 = vshrl.u32 %v3854, 16
        %v4056 = vrot.slane %v4054, 7
        %v4057 = vshll.u32 %v3854, 16
        %v4059 = vor.u32 %v4056, %v4057
        %v4060 = vrot.slane %v4056, 4
        %v4062 = vshrl.u32 %v3855, 16
        %v4064 = vrot.slane %v4062, 7
        %v4065 = vshll.u32 %v3855, 16
        %v4067 = vor.u32 %v4064, %v4065
        %v4068 = vsel %vm3865, %v4060, %v4067
        %v4069 = vrot.slane %v4064, 4
        %v4071 = vshrl.u32 %v3856, 16
        %v4073 = vrot.slane %v4071, 7
        %v4074 = vshll.u32 %v3856, 16
        %v4076 = vor.u32 %v4073, %v4074
        %v4077 = vrot.slane %v4073, 4
        %v4079 = vshrl.u32 %v3857, 16
        %v4081 = vrot.slane %v4079, 7
        %v4082 = vshll.u32 %v3857, 16
        %v4084 = vor.u32 %v4081, %v4082
        %v4085 = vsel %vm3865, %v4077, %v4084
        %v4086 = vrot.slane %v4081, 4
        %v4088 = vshrl.u32 %v3858, 16
        %v4090 = vrot.slane %v4088, 7
        %v4091 = vshll.u32 %v3858, 16
        %v4093 = vor.u32 %v4090, %v4091
        %v4094 = vrot.slane %v4090, 4
        %v4096 = vshrl.u32 %v3859, 16
        %v4098 = vrot.slane %v4096, 7
        %v4099 = vshll.u32 %v3859, 16
        %v4101 = vor.u32 %v4098, %v4099
        %v4102 = vsel %vm3865, %v4094, %v4101
        %v4103 = vrot.slane %v4098, 4
        %v4105 = vshrl.u32 %v3860, 16
        %v4107 = vrot.slane %v4105, 7
        %v4108 = vshll.u32 %v3860, 16
        %v4110 = vor.u32 %v4107, %v4108
        %v4111 = vrot.slane %v4107, 4
        %v4113 = vshrl.u32 %v3861, 16
        %v4115 = vrot.slane %v4113, 7
        %v4116 = vshll.u32 %v3861, 16
        %v4118 = vor.u32 %v4115, %v4116
        %v4119 = vsel %vm3865, %v4111, %v4118
        %v4120 = vrot.slane %v4115, 4
        %v4122 = vshrl.u32 %v3862, 16
        %v4124 = vrot.slane %v4122, 7
        %v4125 = vshll.u32 %v3862, 16
        %v4127 = vor.u32 %v4124, %v4125
        %v4128 = vrot.slane %v4124, 4
        %v4130 = vshrl.u32 %v3863, 16
        %v4132 = vrot.slane %v4130, 7
        %v4133 = vshll.u32 %v3863, 16
        %v4135 = vor.u32 %v4132, %v4133
        %v4136 = vsel %vm3865, %v4128, %v4135
        %v4137 = vrot.slane %v4132, 4
        %s4186 = scalar_lea.vmem [#allocation2], 12
        %vm4187 = vcmask 1043456
        %vm4188 = vmand %vm4187, %vm438
        %v4189 = vld [vmem:[%s4186] sm:$0xf]
        %v4190 = vsel %vm4188, %v3872, %v4189
        %4191 = vst [vmem:[%s4186] sm:$0xf] %v4190
        %4192 = vst [vmem:[%s4186 + $0x4] sm:$0xf] %v3881
        %v4193 = vld [vmem:[%s4186 + $0x8] sm:$0x1]
        %v4194 = vsel %vm383, %v3882, %v4193
        %4195 = vst [vmem:[%s4186 + $0x8] sm:$0x1] %v4194
        %v4196 = vld [vmem:[%s4186 + $0xc] sm:$0xf]
        %v4197 = vsel %vm4188, %v3889, %v4196
        %4198 = vst [vmem:[%s4186 + $0xc] sm:$0xf] %v4197
        %4199 = vst [vmem:[%s4186 + $0x10] sm:$0xf] %v3898
        %v4200 = vld [vmem:[%s4186 + $0x14] sm:$0x1]
        %v4201 = vsel %vm383, %v3899, %v4200
        %4202 = vst [vmem:[%s4186 + $0x14] sm:$0x1] %v4201
        %v4203 = vld [vmem:[%s4186 + $0x18] sm:$0xf]
        %v4204 = vsel %vm4188, %v3906, %v4203
        %4205 = vst [vmem:[%s4186 + $0x18] sm:$0xf] %v4204
        %4206 = vst [vmem:[%s4186 + $0x1c] sm:$0xf] %v3915
        %v4207 = vld [vmem:[%s4186 + $0x20] sm:$0x1]
        %v4208 = vsel %vm383, %v3916, %v4207
        %4209 = vst [vmem:[%s4186 + $0x20] sm:$0x1] %v4208
        %v4210 = vld [vmem:[%s4186 + $0x24] sm:$0xf]
        %v4211 = vsel %vm4188, %v3923, %v4210
        %4212 = vst [vmem:[%s4186 + $0x24] sm:$0xf] %v4211
        %4213 = vst [vmem:[%s4186 + $0x28] sm:$0xf] %v3932
        %v4214 = vld [vmem:[%s4186 + $0x2c] sm:$0x1]
        %v4215 = vsel %vm383, %v3933, %v4214
        %4216 = vst [vmem:[%s4186 + $0x2c] sm:$0x1] %v4215
        %v4217 = vld [vmem:[%s4186 + $0x30] sm:$0xf]
        %v4218 = vsel %vm4188, %v3940, %v4217
        %4219 = vst [vmem:[%s4186 + $0x30] sm:$0xf] %v4218
        %4220 = vst [vmem:[%s4186 + $0x34] sm:$0xf] %v3949
        %v4221 = vld [vmem:[%s4186 + $0x38] sm:$0x1]
        %v4222 = vsel %vm383, %v3950, %v4221
        %4223 = vst [vmem:[%s4186 + $0x38] sm:$0x1] %v4222
        %v4224 = vld [vmem:[%s4186 + $0x3c] sm:$0xf]
        %v4225 = vsel %vm4188, %v3957, %v4224
        %4226 = vst [vmem:[%s4186 + $0x3c] sm:$0xf] %v4225
        %4227 = vst [vmem:[%s4186 + $0x40] sm:$0xf] %v3966
        %v4228 = vld [vmem:[%s4186 + $0x44] sm:$0x1]
        %v4229 = vsel %vm383, %v3967, %v4228
        %4230 = vst [vmem:[%s4186 + $0x44] sm:$0x1] %v4229
        %v4231 = vld [vmem:[%s4186 + $0x48] sm:$0xf]
        %v4232 = vsel %vm4188, %v3974, %v4231
        %4233 = vst [vmem:[%s4186 + $0x48] sm:$0xf] %v4232
        %4234 = vst [vmem:[%s4186 + $0x4c] sm:$0xf] %v3983
        %v4235 = vld [vmem:[%s4186 + $0x50] sm:$0x1]
        %v4236 = vsel %vm383, %v3984, %v4235
        %4237 = vst [vmem:[%s4186 + $0x50] sm:$0x1] %v4236
        %v4238 = vld [vmem:[%s4186 + $0x54] sm:$0xf]
        %v4239 = vsel %vm4188, %v3991, %v4238
        %4240 = vst [vmem:[%s4186 + $0x54] sm:$0xf] %v4239
        %4241 = vst [vmem:[%s4186 + $0x58] sm:$0xf] %v4000
        %v4242 = vld [vmem:[%s4186 + $0x5c] sm:$0x1]
        %v4243 = vsel %vm383, %v4001, %v4242
        %4244 = vst [vmem:[%s4186 + $0x5c] sm:$0x1] %v4243
        %v4245 = vld [vmem:[%s4186 + $0x60] sm:$0xf]
        %v4246 = vsel %vm4188, %v4008, %v4245
        %4247 = vst [vmem:[%s4186 + $0x60] sm:$0xf] %v4246
        %4248 = vst [vmem:[%s4186 + $0x64] sm:$0xf] %v4017
        %v4249 = vld [vmem:[%s4186 + $0x68] sm:$0x1]
        %v4250 = vsel %vm383, %v4018, %v4249
        %4251 = vst [vmem:[%s4186 + $0x68] sm:$0x1] %v4250
        %v4252 = vld [vmem:[%s4186 + $0x6c] sm:$0xf]
        %v4253 = vsel %vm4188, %v4025, %v4252
        %4254 = vst [vmem:[%s4186 + $0x6c] sm:$0xf] %v4253
        %4255 = vst [vmem:[%s4186 + $0x70] sm:$0xf] %v4034
        %v4256 = vld [vmem:[%s4186 + $0x74] sm:$0x1]
        %v4257 = vsel %vm383, %v4035, %v4256
        %4258 = vst [vmem:[%s4186 + $0x74] sm:$0x1] %v4257
        %v4259 = vld [vmem:[%s4186 + $0x78] sm:$0xf]
        %v4260 = vsel %vm4188, %v4042, %v4259
        %4261 = vst [vmem:[%s4186 + $0x78] sm:$0xf] %v4260
        %4262 = vst [vmem:[%s4186 + $0x7c] sm:$0xf] %v4051
        %v4263 = vld [vmem:[%s4186 + $0x80] sm:$0x1]
        %v4264 = vsel %vm383, %v4052, %v4263
        %4265 = vst [vmem:[%s4186 + $0x80] sm:$0x1] %v4264
        %v4266 = vld [vmem:[%s4186 + $0x84] sm:$0xf]
        %v4267 = vsel %vm4188, %v4059, %v4266
        %4268 = vst [vmem:[%s4186 + $0x84] sm:$0xf] %v4267
        %4269 = vst [vmem:[%s4186 + $0x88] sm:$0xf] %v4068
        %v4270 = vld [vmem:[%s4186 + $0x8c] sm:$0x1]
        %v4271 = vsel %vm383, %v4069, %v4270
        %4272 = vst [vmem:[%s4186 + $0x8c] sm:$0x1] %v4271
        %v4273 = vld [vmem:[%s4186 + $0x90] sm:$0xf]
        %v4274 = vsel %vm4188, %v4076, %v4273
        %4275 = vst [vmem:[%s4186 + $0x90] sm:$0xf] %v4274
        %4276 = vst [vmem:[%s4186 + $0x94] sm:$0xf] %v4085
        %v4277 = vld [vmem:[%s4186 + $0x98] sm:$0x1]
        %v4278 = vsel %vm383, %v4086, %v4277
        %4279 = vst [vmem:[%s4186 + $0x98] sm:$0x1] %v4278
        %v4280 = vld [vmem:[%s4186 + $0x9c] sm:$0xf]
        %v4281 = vsel %vm4188, %v4093, %v4280
        %4282 = vst [vmem:[%s4186 + $0x9c] sm:$0xf] %v4281
        %4283 = vst [vmem:[%s4186 + $0xa0] sm:$0xf] %v4102
        %v4284 = vld [vmem:[%s4186 + $0xa4] sm:$0x1]
        %v4285 = vsel %vm383, %v4103, %v4284
        %4286 = vst [vmem:[%s4186 + $0xa4] sm:$0x1] %v4285
        %v4287 = vld [vmem:[%s4186 + $0xa8] sm:$0xf]
        %v4288 = vsel %vm4188, %v4110, %v4287
        %4289 = vst [vmem:[%s4186 + $0xa8] sm:$0xf] %v4288
        %4290 = vst [vmem:[%s4186 + $0xac] sm:$0xf] %v4119
        %v4291 = vld [vmem:[%s4186 + $0xb0] sm:$0x1]
        %v4292 = vsel %vm383, %v4120, %v4291
        %4293 = vst [vmem:[%s4186 + $0xb0] sm:$0x1] %v4292
        %v4294 = vld [vmem:[%s4186 + $0xb4] sm:$0xf]
        %v4295 = vsel %vm4188, %v4127, %v4294
        %4296 = vst [vmem:[%s4186 + $0xb4] sm:$0xf] %v4295
        %4297 = vst [vmem:[%s4186 + $0xb8] sm:$0xf] %v4136
        %v4298 = vld [vmem:[%s4186 + $0xbc] sm:$0x1]
        %v4299 = vsel %vm383, %v4137, %v4298
        %4300 = vst [vmem:[%s4186 + $0xbc] sm:$0x1] %v4299
        %v4301 = vld [vmem:[#allocation2] sm:$0xf]
        %v4302 = vld [vmem:[#allocation2 + $0x4] sm:$0xf]
        %v4303 = vld [vmem:[#allocation2 + $0xc] sm:$0xf]
        %v4304 = vld [vmem:[#allocation2 + $0x10] sm:$0xf]
        %v4305 = vld [vmem:[#allocation2 + $0x18] sm:$0xf]
        %v4306 = vld [vmem:[#allocation2 + $0x1c] sm:$0xf]
        %v4307 = vld [vmem:[#allocation2 + $0x24] sm:$0xf]
        %v4308 = vld [vmem:[#allocation2 + $0x28] sm:$0xf]
        %v4309 = vld [vmem:[#allocation2 + $0x30] sm:$0xf]
        %v4310 = vld [vmem:[#allocation2 + $0x34] sm:$0xf]
        %v4311 = vld [vmem:[#allocation2 + $0x3c] sm:$0xf]
        %v4312 = vld [vmem:[#allocation2 + $0x40] sm:$0xf]
        %v4313 = vld [vmem:[#allocation2 + $0x48] sm:$0xf]
        %v4314 = vld [vmem:[#allocation2 + $0x4c] sm:$0xf]
        %v4315 = vld [vmem:[#allocation2 + $0x54] sm:$0xf]
        %v4316 = vld [vmem:[#allocation2 + $0x58] sm:$0xf]
        %v4317 = vld [vmem:[#allocation2 + $0x60] sm:$0xf]
        %v4318 = vld [vmem:[#allocation2 + $0x64] sm:$0xf]
        %v4319 = vld [vmem:[#allocation2 + $0x6c] sm:$0xf]
        %v4320 = vld [vmem:[#allocation2 + $0x70] sm:$0xf]
        %v4321 = vld [vmem:[#allocation2 + $0x78] sm:$0xf]
        %v4322 = vld [vmem:[#allocation2 + $0x7c] sm:$0xf]
        %v4323 = vld [vmem:[#allocation2 + $0x84] sm:$0xf]
        %v4324 = vld [vmem:[#allocation2 + $0x88] sm:$0xf]
        %v4325 = vld [vmem:[#allocation2 + $0x90] sm:$0xf]
        %v4326 = vld [vmem:[#allocation2 + $0x94] sm:$0xf]
        %v4327 = vld [vmem:[#allocation2 + $0x9c] sm:$0xf]
        %v4328 = vld [vmem:[#allocation2 + $0xa0] sm:$0xf]
        %v4329 = vld [vmem:[#allocation2 + $0xa8] sm:$0xf]
        %v4330 = vld [vmem:[#allocation2 + $0xac] sm:$0xf]
        %v4331 = vld [vmem:[#allocation2 + $0xb4] sm:$0xf]
        %v4332 = vld [vmem:[#allocation2 + $0xb8] sm:$0xf]
        %v4333 = vld [vmem:[#allocation2 + $0x8] sm:$0x1]
        %v4334 = vld [vmem:[#allocation2 + $0x14] sm:$0x1]
        %v4335 = vld [vmem:[#allocation2 + $0x20] sm:$0x1]
        %v4336 = vld [vmem:[#allocation2 + $0x2c] sm:$0x1]
        %v4337 = vld [vmem:[#allocation2 + $0x38] sm:$0x1]
        %v4338 = vld [vmem:[#allocation2 + $0x44] sm:$0x1]
        %v4339 = vld [vmem:[#allocation2 + $0x50] sm:$0x1]
        %v4340 = vld [vmem:[#allocation2 + $0x5c] sm:$0x1]
        %v4341 = vld [vmem:[#allocation2 + $0x68] sm:$0x1]
        %v4342 = vld [vmem:[#allocation2 + $0x74] sm:$0x1]
        %v4343 = vld [vmem:[#allocation2 + $0x80] sm:$0x1]
        %v4344 = vld [vmem:[#allocation2 + $0x8c] sm:$0x1]
        %v4345 = vld [vmem:[#allocation2 + $0x98] sm:$0x1]
        %v4346 = vld [vmem:[#allocation2 + $0xa4] sm:$0x1]
        %v4347 = vld [vmem:[#allocation2 + $0xb0] sm:$0x1]
        %v4348 = vld [vmem:[#allocation2 + $0xbc] sm:$0x1]
        %v4349 = vld [vmem:[#allocation2] sm:$0xe]
        %v4350 = vld [vmem:[#allocation2 + $0xc] sm:$0xe]
        %v4351 = vld [vmem:[#allocation2 + $0x18] sm:$0xe]
        %v4352 = vld [vmem:[#allocation2 + $0x24] sm:$0xe]
        %v4353 = vld [vmem:[#allocation2 + $0x30] sm:$0xe]
        %v4354 = vld [vmem:[#allocation2 + $0x3c] sm:$0xe]
        %v4355 = vld [vmem:[#allocation2 + $0x48] sm:$0xe]
        %v4356 = vld [vmem:[#allocation2 + $0x54] sm:$0xe]
        %v4357 = vld [vmem:[#allocation2 + $0x60] sm:$0xe]
        %v4358 = vld [vmem:[#allocation2 + $0x6c] sm:$0xe]
        %v4359 = vld [vmem:[#allocation2 + $0x78] sm:$0xe]
        %v4360 = vld [vmem:[#allocation2 + $0x84] sm:$0xe]
        %v4361 = vld [vmem:[#allocation2 + $0x90] sm:$0xe]
        %v4362 = vld [vmem:[#allocation2 + $0x9c] sm:$0xe]
        %v4363 = vld [vmem:[#allocation2 + $0xa8] sm:$0xe]
        %v4364 = vld [vmem:[#allocation2 + $0xb4] sm:$0xe]
        %v4397 = vunpack.c.l.b16 %v4301
        %v4398 = vunpack.c.l.b16 %v4302
        %v4399 = vunpack.c.l.b16 %v4303
        %v4400 = vunpack.c.l.b16 %v4304
        %v4401 = vunpack.c.l.b16 %v4305
        %v4402 = vunpack.c.l.b16 %v4306
        %v4403 = vunpack.c.l.b16 %v4307
        %v4404 = vunpack.c.l.b16 %v4308
        %v4405 = vunpack.c.l.b16 %v4309
        %v4406 = vunpack.c.l.b16 %v4310
        %v4407 = vunpack.c.l.b16 %v4311
        %v4408 = vunpack.c.l.b16 %v4312
        %v4409 = vunpack.c.l.b16 %v4313
        %v4410 = vunpack.c.l.b16 %v4314
        %v4411 = vunpack.c.l.b16 %v4315
        %v4412 = vunpack.c.l.b16 %v4316
        %v4413 = vunpack.c.l.b16 %v4317
        %v4414 = vunpack.c.l.b16 %v4318
        %v4415 = vunpack.c.l.b16 %v4319
        %v4416 = vunpack.c.l.b16 %v4320
        %v4417 = vunpack.c.l.b16 %v4321
        %v4418 = vunpack.c.l.b16 %v4322
        %v4419 = vunpack.c.l.b16 %v4323
        %v4420 = vunpack.c.l.b16 %v4324
        %v4421 = vunpack.c.l.b16 %v4325
        %v4422 = vunpack.c.l.b16 %v4326
        %v4423 = vunpack.c.l.b16 %v4327
        %v4424 = vunpack.c.l.b16 %v4328
        %v4425 = vunpack.c.l.b16 %v4329
        %v4426 = vunpack.c.l.b16 %v4330
        %v4427 = vunpack.c.l.b16 %v4331
        %v4428 = vunpack.c.l.b16 %v4332
        %v4429 = vpack.c.b16 %v4398, %v4397
        %v4430 = vpack.c.b16 %v4400, %v4399
        %v4431 = vpack.c.b16 %v4402, %v4401
        %v4432 = vpack.c.b16 %v4404, %v4403
        %v4433 = vpack.c.b16 %v4406, %v4405
        %v4434 = vpack.c.b16 %v4408, %v4407
        %v4435 = vpack.c.b16 %v4410, %v4409
        %v4436 = vpack.c.b16 %v4412, %v4411
        %v4437 = vpack.c.b16 %v4414, %v4413
        %v4438 = vpack.c.b16 %v4416, %v4415
        %v4439 = vpack.c.b16 %v4418, %v4417
        %v4440 = vpack.c.b16 %v4420, %v4419
        %v4441 = vpack.c.b16 %v4422, %v4421
        %v4442 = vpack.c.b16 %v4424, %v4423
        %v4443 = vpack.c.b16 %v4426, %v4425
        %v4444 = vpack.c.b16 %v4428, %v4427
        %v4477 = vunpack.c.l.b16 %v4333
        %v4478 = vunpack.c.l.b16 %v4334
        %v4479 = vunpack.c.l.b16 %v4335
        %v4480 = vunpack.c.l.b16 %v4336
        %v4481 = vunpack.c.l.b16 %v4337
        %v4482 = vunpack.c.l.b16 %v4338
        %v4483 = vunpack.c.l.b16 %v4339
        %v4484 = vunpack.c.l.b16 %v4340
        %v4485 = vunpack.c.l.b16 %v4341
        %v4486 = vunpack.c.l.b16 %v4342
        %v4487 = vunpack.c.l.b16 %v4343
        %v4488 = vunpack.c.l.b16 %v4344
        %v4489 = vunpack.c.l.b16 %v4345
        %v4490 = vunpack.c.l.b16 %v4346
        %v4491 = vunpack.c.l.b16 %v4347
        %v4492 = vunpack.c.l.b16 %v4348
        %v4493 = vpack.c.b16 %v4477, %v4477
        %v4494 = vpack.c.b16 %v4478, %v4478
        %v4495 = vpack.c.b16 %v4479, %v4479
        %v4496 = vpack.c.b16 %v4480, %v4480
        %v4497 = vpack.c.b16 %v4481, %v4481
        %v4498 = vpack.c.b16 %v4482, %v4482
        %v4499 = vpack.c.b16 %v4483, %v4483
        %v4500 = vpack.c.b16 %v4484, %v4484
        %v4501 = vpack.c.b16 %v4485, %v4485
        %v4502 = vpack.c.b16 %v4486, %v4486
        %v4503 = vpack.c.b16 %v4487, %v4487
        %v4504 = vpack.c.b16 %v4488, %v4488
        %v4505 = vpack.c.b16 %v4489, %v4489
        %v4506 = vpack.c.b16 %v4490, %v4490
        %v4507 = vpack.c.b16 %v4491, %v4491
        %v4508 = vpack.c.b16 %v4492, %v4492
        %v4510 = vshrl.u32 %v4429, 16
        %v4512 = vshll.u32 %v4429, 16
        %v4514 = vrot.slane %v4512, 1
        %v4515 = vor.u32 %v4510, %v4514
        %v4517 = vshll.u32 %v4493, 16
        %v4519 = vrot.slane %v4517, 1
        %v4520 = vsel %vm702, %v4515, %v4519
        %v4522 = vshrl.u32 %v4430, 16
        %v4524 = vshll.u32 %v4430, 16
        %v4526 = vrot.slane %v4524, 1
        %v4527 = vor.u32 %v4522, %v4526
        %v4529 = vshll.u32 %v4494, 16
        %v4531 = vrot.slane %v4529, 1
        %v4532 = vsel %vm702, %v4527, %v4531
        %v4534 = vshrl.u32 %v4431, 16
        %v4536 = vshll.u32 %v4431, 16
        %v4538 = vrot.slane %v4536, 1
        %v4539 = vor.u32 %v4534, %v4538
        %v4541 = vshll.u32 %v4495, 16
        %v4543 = vrot.slane %v4541, 1
        %v4544 = vsel %vm702, %v4539, %v4543
        %v4546 = vshrl.u32 %v4432, 16
        %v4548 = vshll.u32 %v4432, 16
        %v4550 = vrot.slane %v4548, 1
        %v4551 = vor.u32 %v4546, %v4550
        %v4553 = vshll.u32 %v4496, 16
        %v4555 = vrot.slane %v4553, 1
        %v4556 = vsel %vm702, %v4551, %v4555
        %v4558 = vshrl.u32 %v4433, 16
        %v4560 = vshll.u32 %v4433, 16
        %v4562 = vrot.slane %v4560, 1
        %v4563 = vor.u32 %v4558, %v4562
        %v4565 = vshll.u32 %v4497, 16
        %v4567 = vrot.slane %v4565, 1
        %v4568 = vsel %vm702, %v4563, %v4567
        %v4570 = vshrl.u32 %v4434, 16
        %v4572 = vshll.u32 %v4434, 16
        %v4574 = vrot.slane %v4572, 1
        %v4575 = vor.u32 %v4570, %v4574
        %v4577 = vshll.u32 %v4498, 16
        %v4579 = vrot.slane %v4577, 1
        %v4580 = vsel %vm702, %v4575, %v4579
        %v4582 = vshrl.u32 %v4435, 16
        %v4584 = vshll.u32 %v4435, 16
        %v4586 = vrot.slane %v4584, 1
        %v4587 = vor.u32 %v4582, %v4586
        %v4589 = vshll.u32 %v4499, 16
        %v4591 = vrot.slane %v4589, 1
        %v4592 = vsel %vm702, %v4587, %v4591
        %v4594 = vshrl.u32 %v4436, 16
        %v4596 = vshll.u32 %v4436, 16
        %v4598 = vrot.slane %v4596, 1
        %v4599 = vor.u32 %v4594, %v4598
        %v4601 = vshll.u32 %v4500, 16
        %v4603 = vrot.slane %v4601, 1
        %v4604 = vsel %vm702, %v4599, %v4603
        %v4606 = vshrl.u32 %v4437, 16
        %v4608 = vshll.u32 %v4437, 16
        %v4610 = vrot.slane %v4608, 1
        %v4611 = vor.u32 %v4606, %v4610
        %v4613 = vshll.u32 %v4501, 16
        %v4615 = vrot.slane %v4613, 1
        %v4616 = vsel %vm702, %v4611, %v4615
        %v4618 = vshrl.u32 %v4438, 16
        %v4620 = vshll.u32 %v4438, 16
        %v4622 = vrot.slane %v4620, 1
        %v4623 = vor.u32 %v4618, %v4622
        %v4625 = vshll.u32 %v4502, 16
        %v4627 = vrot.slane %v4625, 1
        %v4628 = vsel %vm702, %v4623, %v4627
        %v4630 = vshrl.u32 %v4439, 16
        %v4632 = vshll.u32 %v4439, 16
        %v4634 = vrot.slane %v4632, 1
        %v4635 = vor.u32 %v4630, %v4634
        %v4637 = vshll.u32 %v4503, 16
        %v4639 = vrot.slane %v4637, 1
        %v4640 = vsel %vm702, %v4635, %v4639
        %v4642 = vshrl.u32 %v4440, 16
        %v4644 = vshll.u32 %v4440, 16
        %v4646 = vrot.slane %v4644, 1
        %v4647 = vor.u32 %v4642, %v4646
        %v4649 = vshll.u32 %v4504, 16
        %v4651 = vrot.slane %v4649, 1
        %v4652 = vsel %vm702, %v4647, %v4651
        %v4654 = vshrl.u32 %v4441, 16
        %v4656 = vshll.u32 %v4441, 16
        %v4658 = vrot.slane %v4656, 1
        %v4659 = vor.u32 %v4654, %v4658
        %v4661 = vshll.u32 %v4505, 16
        %v4663 = vrot.slane %v4661, 1
        %v4664 = vsel %vm702, %v4659, %v4663
        %v4666 = vshrl.u32 %v4442, 16
        %v4668 = vshll.u32 %v4442, 16
        %v4670 = vrot.slane %v4668, 1
        %v4671 = vor.u32 %v4666, %v4670
        %v4673 = vshll.u32 %v4506, 16
        %v4675 = vrot.slane %v4673, 1
        %v4676 = vsel %vm702, %v4671, %v4675
        %v4678 = vshrl.u32 %v4443, 16
        %v4680 = vshll.u32 %v4443, 16
        %v4682 = vrot.slane %v4680, 1
        %v4683 = vor.u32 %v4678, %v4682
        %v4685 = vshll.u32 %v4507, 16
        %v4687 = vrot.slane %v4685, 1
        %v4688 = vsel %vm702, %v4683, %v4687
        %v4690 = vshrl.u32 %v4444, 16
        %v4692 = vshll.u32 %v4444, 16
        %v4694 = vrot.slane %v4692, 1
        %v4695 = vor.u32 %v4690, %v4694
        %v4697 = vshll.u32 %v4508, 16
        %v4699 = vrot.slane %v4697, 1
        %v4700 = vsel %vm702, %v4695, %v4699
        %v4733 = vunpack.c.l.b16 %v4349
        %v4734 = vunpack.c.l.b16 %v4350
        %v4735 = vunpack.c.l.b16 %v4351
        %v4736 = vunpack.c.l.b16 %v4352
        %v4737 = vunpack.c.l.b16 %v4353
        %v4738 = vunpack.c.l.b16 %v4354
        %v4739 = vunpack.c.l.b16 %v4355
        %v4740 = vunpack.c.l.b16 %v4356
        %v4741 = vunpack.c.l.b16 %v4357
        %v4742 = vunpack.c.l.b16 %v4358
        %v4743 = vunpack.c.l.b16 %v4359
        %v4744 = vunpack.c.l.b16 %v4360
        %v4745 = vunpack.c.l.b16 %v4361
        %v4746 = vunpack.c.l.b16 %v4362
        %v4747 = vunpack.c.l.b16 %v4363
        %v4748 = vunpack.c.l.b16 %v4364
        %v4749 = vpack.c.b16 %v4398, %v4733
        %v4750 = vpack.c.b16 %v4400, %v4734
        %v4751 = vpack.c.b16 %v4402, %v4735
        %v4752 = vpack.c.b16 %v4404, %v4736
        %v4753 = vpack.c.b16 %v4406, %v4737
        %v4754 = vpack.c.b16 %v4408, %v4738
        %v4755 = vpack.c.b16 %v4410, %v4739
        %v4756 = vpack.c.b16 %v4412, %v4740
        %v4757 = vpack.c.b16 %v4414, %v4741
        %v4758 = vpack.c.b16 %v4416, %v4742
        %v4759 = vpack.c.b16 %v4418, %v4743
        %v4760 = vpack.c.b16 %v4420, %v4744
        %v4761 = vpack.c.b16 %v4422, %v4745
        %v4762 = vpack.c.b16 %v4424, %v4746
        %v4763 = vpack.c.b16 %v4426, %v4747
        %v4764 = vpack.c.b16 %v4428, %v4748
        %v4765 = vrot.slane %v4749, 1
        %v4766 = vrot.slane %v4493, 1
        %v4767 = vsel %vm959, %v4765, %v4766
        %v4768 = vrot.slane %v4750, 1
        %v4769 = vrot.slane %v4494, 1
        %v4770 = vsel %vm959, %v4768, %v4769
        %v4771 = vrot.slane %v4751, 1
        %v4772 = vrot.slane %v4495, 1
        %v4773 = vsel %vm959, %v4771, %v4772
        %v4774 = vrot.slane %v4752, 1
        %v4775 = vrot.slane %v4496, 1
        %v4776 = vsel %vm959, %v4774, %v4775
        %v4777 = vrot.slane %v4753, 1
        %v4778 = vrot.slane %v4497, 1
        %v4779 = vsel %vm959, %v4777, %v4778
        %v4780 = vrot.slane %v4754, 1
        %v4781 = vrot.slane %v4498, 1
        %v4782 = vsel %vm959, %v4780, %v4781
        %v4783 = vrot.slane %v4755, 1
        %v4784 = vrot.slane %v4499, 1
        %v4785 = vsel %vm959, %v4783, %v4784
        %v4786 = vrot.slane %v4756, 1
        %v4787 = vrot.slane %v4500, 1
        %v4788 = vsel %vm959, %v4786, %v4787
        %v4789 = vrot.slane %v4757, 1
        %v4790 = vrot.slane %v4501, 1
        %v4791 = vsel %vm959, %v4789, %v4790
        %v4792 = vrot.slane %v4758, 1
        %v4793 = vrot.slane %v4502, 1
        %v4794 = vsel %vm959, %v4792, %v4793
        %v4795 = vrot.slane %v4759, 1
        %v4796 = vrot.slane %v4503, 1
        %v4797 = vsel %vm959, %v4795, %v4796
        %v4798 = vrot.slane %v4760, 1
        %v4799 = vrot.slane %v4504, 1
        %v4800 = vsel %vm959, %v4798, %v4799
        %v4801 = vrot.slane %v4761, 1
        %v4802 = vrot.slane %v4505, 1
        %v4803 = vsel %vm959, %v4801, %v4802
        %v4804 = vrot.slane %v4762, 1
        %v4805 = vrot.slane %v4506, 1
        %v4806 = vsel %vm959, %v4804, %v4805
        %v4807 = vrot.slane %v4763, 1
        %v4808 = vrot.slane %v4507, 1
        %v4809 = vsel %vm959, %v4807, %v4808
        %v4810 = vrot.slane %v4764, 1
        %v4811 = vrot.slane %v4508, 1
        %v4812 = vsel %vm959, %v4810, %v4811
        %v4829 = vld [vmem:[#allocation3] sm:$0xf]
        %v4830 = vld [vmem:[#allocation3 + $0x4] sm:$0xf]
        %v4831 = vld [vmem:[#allocation3 + $0x8] sm:$0xf]
        %v4832 = vld [vmem:[#allocation3 + $0xc] sm:$0xf]
        %v4833 = vld [vmem:[#allocation3 + $0x10] sm:$0xf]
        %v4834 = vld [vmem:[#allocation3 + $0x14] sm:$0xf]
        %v4835 = vld [vmem:[#allocation3 + $0x18] sm:$0xf]
        %v4836 = vld [vmem:[#allocation3 + $0x1c] sm:$0xf]
        %v4837 = vld [vmem:[#allocation3 + $0x20] sm:$0xf]
        %v4838 = vld [vmem:[#allocation3 + $0x24] sm:$0xf]
        %v4839 = vld [vmem:[#allocation3 + $0x28] sm:$0xf]
        %v4840 = vld [vmem:[#allocation3 + $0x2c] sm:$0xf]
        %v4841 = vld [vmem:[#allocation3 + $0x30] sm:$0xf]
        %v4842 = vld [vmem:[#allocation3 + $0x34] sm:$0xf]
        %v4843 = vld [vmem:[#allocation3 + $0x38] sm:$0xf]
        %v4844 = vld [vmem:[#allocation3 + $0x3c] sm:$0xf]
        %v4845 = vld [vmem:[#allocation3 + $0x40] sm:$0xf]
        %v4846 = vld [vmem:[#allocation3 + $0x44] sm:$0xf]
        %v4847 = vld [vmem:[#allocation3 + $0x48] sm:$0xf]
        %v4848 = vld [vmem:[#allocation3 + $0x4c] sm:$0xf]
        %v4849 = vld [vmem:[#allocation3 + $0x50] sm:$0xf]
        %v4850 = vld [vmem:[#allocation3 + $0x54] sm:$0xf]
        %v4851 = vld [vmem:[#allocation3 + $0x58] sm:$0xf]
        %v4852 = vld [vmem:[#allocation3 + $0x5c] sm:$0xf]
        %v4853 = vld [vmem:[#allocation3 + $0x60] sm:$0xf]
        %v4854 = vld [vmem:[#allocation3 + $0x64] sm:$0xf]
        %v4855 = vld [vmem:[#allocation3 + $0x68] sm:$0xf]
        %v4856 = vld [vmem:[#allocation3 + $0x6c] sm:$0xf]
        %v4857 = vld [vmem:[#allocation3 + $0x70] sm:$0xf]
        %v4858 = vld [vmem:[#allocation3 + $0x74] sm:$0xf]
        %v4859 = vld [vmem:[#allocation3 + $0x78] sm:$0xf]
        %v4860 = vld [vmem:[#allocation3 + $0x7c] sm:$0xf]
        %v4861 = vld [vmem:[#allocation3 + $0x80] sm:$0xf]
        %v4862 = vld [vmem:[#allocation3 + $0x84] sm:$0xf]
        %v4863 = vld [vmem:[#allocation3 + $0x88] sm:$0xf]
        %v4864 = vld [vmem:[#allocation3 + $0x8c] sm:$0xf]
        %v4865 = vld [vmem:[#allocation3 + $0x90] sm:$0xf]
        %v4866 = vld [vmem:[#allocation3 + $0x94] sm:$0xf]
        %v4867 = vld [vmem:[#allocation3 + $0x98] sm:$0xf]
        %v4868 = vld [vmem:[#allocation3 + $0x9c] sm:$0xf]
        %v4869 = vld [vmem:[#allocation3 + $0xa0] sm:$0xf]
        %v4870 = vld [vmem:[#allocation3 + $0xa4] sm:$0xf]
        %v4871 = vld [vmem:[#allocation3 + $0xa8] sm:$0xf]
        %v4872 = vld [vmem:[#allocation3 + $0xac] sm:$0xf]
        %v4873 = vld [vmem:[#allocation3 + $0xb0] sm:$0xf]
        %v4874 = vld [vmem:[#allocation3 + $0xb4] sm:$0xf]
        %v4875 = vld [vmem:[#allocation3 + $0xb8] sm:$0xf]
        %v4876 = vld [vmem:[#allocation3 + $0xbc] sm:$0xf]
        %v4877 = vld [vmem:[%s4186] sm:$0xf]
        %v4878 = vld [vmem:[%s4186 + $0x4] sm:$0xf]
        %v4879 = vld [vmem:[%s4186 + $0xc] sm:$0xf]
        %v4880 = vld [vmem:[%s4186 + $0x10] sm:$0xf]
        %v4881 = vld [vmem:[%s4186 + $0x18] sm:$0xf]
        %v4882 = vld [vmem:[%s4186 + $0x1c] sm:$0xf]
        %v4883 = vld [vmem:[%s4186 + $0x24] sm:$0xf]
        %v4884 = vld [vmem:[%s4186 + $0x28] sm:$0xf]
        %v4885 = vld [vmem:[%s4186 + $0x30] sm:$0xf]
        %v4886 = vld [vmem:[%s4186 + $0x34] sm:$0xf]
        %v4887 = vld [vmem:[%s4186 + $0x3c] sm:$0xf]
        %v4888 = vld [vmem:[%s4186 + $0x40] sm:$0xf]
        %v4889 = vld [vmem:[%s4186 + $0x48] sm:$0xf]
        %v4890 = vld [vmem:[%s4186 + $0x4c] sm:$0xf]
        %v4891 = vld [vmem:[%s4186 + $0x54] sm:$0xf]
        %v4892 = vld [vmem:[%s4186 + $0x58] sm:$0xf]
        %v4893 = vld [vmem:[%s4186 + $0x60] sm:$0xf]
        %v4894 = vld [vmem:[%s4186 + $0x64] sm:$0xf]
        %v4895 = vld [vmem:[%s4186 + $0x6c] sm:$0xf]
        %v4896 = vld [vmem:[%s4186 + $0x70] sm:$0xf]
        %v4897 = vld [vmem:[%s4186 + $0x78] sm:$0xf]
        %v4898 = vld [vmem:[%s4186 + $0x7c] sm:$0xf]
        %v4899 = vld [vmem:[%s4186 + $0x84] sm:$0xf]
        %v4900 = vld [vmem:[%s4186 + $0x88] sm:$0xf]
        %v4901 = vld [vmem:[%s4186 + $0x90] sm:$0xf]
        %v4902 = vld [vmem:[%s4186 + $0x94] sm:$0xf]
        %v4903 = vld [vmem:[%s4186 + $0x9c] sm:$0xf]
        %v4904 = vld [vmem:[%s4186 + $0xa0] sm:$0xf]
        %v4905 = vld [vmem:[%s4186 + $0xa8] sm:$0xf]
        %v4906 = vld [vmem:[%s4186 + $0xac] sm:$0xf]
        %v4907 = vld [vmem:[%s4186 + $0xb4] sm:$0xf]
        %v4908 = vld [vmem:[%s4186 + $0xb8] sm:$0xf]
        %v4909 = vld [vmem:[%s4186 + $0x8] sm:$0x1]
        %v4910 = vld [vmem:[%s4186 + $0x14] sm:$0x1]
        %v4911 = vld [vmem:[%s4186 + $0x20] sm:$0x1]
        %v4912 = vld [vmem:[%s4186 + $0x2c] sm:$0x1]
        %v4913 = vld [vmem:[%s4186 + $0x38] sm:$0x1]
        %v4914 = vld [vmem:[%s4186 + $0x44] sm:$0x1]
        %v4915 = vld [vmem:[%s4186 + $0x50] sm:$0x1]
        %v4916 = vld [vmem:[%s4186 + $0x5c] sm:$0x1]
        %v4917 = vld [vmem:[%s4186 + $0x68] sm:$0x1]
        %v4918 = vld [vmem:[%s4186 + $0x74] sm:$0x1]
        %v4919 = vld [vmem:[%s4186 + $0x80] sm:$0x1]
        %v4920 = vld [vmem:[%s4186 + $0x8c] sm:$0x1]
        %v4921 = vld [vmem:[%s4186 + $0x98] sm:$0x1]
        %v4922 = vld [vmem:[%s4186 + $0xa4] sm:$0x1]
        %v4923 = vld [vmem:[%s4186 + $0xb0] sm:$0x1]
        %v4924 = vld [vmem:[%s4186 + $0xbc] sm:$0x1]
        %v4925 = vld [vmem:[%s4186] sm:$0xe]
        %v4926 = vld [vmem:[%s4186 + $0xc] sm:$0xe]
        %v4927 = vld [vmem:[%s4186 + $0x18] sm:$0xe]
        %v4928 = vld [vmem:[%s4186 + $0x24] sm:$0xe]
        %v4929 = vld [vmem:[%s4186 + $0x30] sm:$0xe]
        %v4930 = vld [vmem:[%s4186 + $0x3c] sm:$0xe]
        %v4931 = vld [vmem:[%s4186 + $0x48] sm:$0xe]
        %v4932 = vld [vmem:[%s4186 + $0x54] sm:$0xe]
        %v4933 = vld [vmem:[%s4186 + $0x60] sm:$0xe]
        %v4934 = vld [vmem:[%s4186 + $0x6c] sm:$0xe]
        %v4935 = vld [vmem:[%s4186 + $0x78] sm:$0xe]
        %v4936 = vld [vmem:[%s4186 + $0x84] sm:$0xe]
        %v4937 = vld [vmem:[%s4186 + $0x90] sm:$0xe]
        %v4938 = vld [vmem:[%s4186 + $0x9c] sm:$0xe]
        %v4939 = vld [vmem:[%s4186 + $0xa8] sm:$0xe]
        %v4940 = vld [vmem:[%s4186 + $0xb4] sm:$0xe]
        %v4973 = vunpack.c.l.b16 %v4877
        %v4974 = vunpack.c.l.b16 %v4878
        %v4975 = vunpack.c.l.b16 %v4879
        %v4976 = vunpack.c.l.b16 %v4880
        %v4977 = vunpack.c.l.b16 %v4881
        %v4978 = vunpack.c.l.b16 %v4882
        %v4979 = vunpack.c.l.b16 %v4883
        %v4980 = vunpack.c.l.b16 %v4884
        %v4981 = vunpack.c.l.b16 %v4885
        %v4982 = vunpack.c.l.b16 %v4886
        %v4983 = vunpack.c.l.b16 %v4887
        %v4984 = vunpack.c.l.b16 %v4888
        %v4985 = vunpack.c.l.b16 %v4889
        %v4986 = vunpack.c.l.b16 %v4890
        %v4987 = vunpack.c.l.b16 %v4891
        %v4988 = vunpack.c.l.b16 %v4892
        %v4989 = vunpack.c.l.b16 %v4893
        %v4990 = vunpack.c.l.b16 %v4894
        %v4991 = vunpack.c.l.b16 %v4895
        %v4992 = vunpack.c.l.b16 %v4896
        %v4993 = vunpack.c.l.b16 %v4897
        %v4994 = vunpack.c.l.b16 %v4898
        %v4995 = vunpack.c.l.b16 %v4899
        %v4996 = vunpack.c.l.b16 %v4900
        %v4997 = vunpack.c.l.b16 %v4901
        %v4998 = vunpack.c.l.b16 %v4902
        %v4999 = vunpack.c.l.b16 %v4903
        %v5000 = vunpack.c.l.b16 %v4904
        %v5001 = vunpack.c.l.b16 %v4905
        %v5002 = vunpack.c.l.b16 %v4906
        %v5003 = vunpack.c.l.b16 %v4907
        %v5004 = vunpack.c.l.b16 %v4908
        %v5005 = vpack.c.b16 %v4974, %v4973
        %v5006 = vpack.c.b16 %v4976, %v4975
        %v5007 = vpack.c.b16 %v4978, %v4977
        %v5008 = vpack.c.b16 %v4980, %v4979
        %v5009 = vpack.c.b16 %v4982, %v4981
        %v5010 = vpack.c.b16 %v4984, %v4983
        %v5011 = vpack.c.b16 %v4986, %v4985
        %v5012 = vpack.c.b16 %v4988, %v4987
        %v5013 = vpack.c.b16 %v4990, %v4989
        %v5014 = vpack.c.b16 %v4992, %v4991
        %v5015 = vpack.c.b16 %v4994, %v4993
        %v5016 = vpack.c.b16 %v4996, %v4995
        %v5017 = vpack.c.b16 %v4998, %v4997
        %v5018 = vpack.c.b16 %v5000, %v4999
        %v5019 = vpack.c.b16 %v5002, %v5001
        %v5020 = vpack.c.b16 %v5004, %v5003
        %v5053 = vunpack.c.l.b16 %v4909
        %v5054 = vunpack.c.l.b16 %v4910
        %v5055 = vunpack.c.l.b16 %v4911
        %v5056 = vunpack.c.l.b16 %v4912
        %v5057 = vunpack.c.l.b16 %v4913
        %v5058 = vunpack.c.l.b16 %v4914
        %v5059 = vunpack.c.l.b16 %v4915
        %v5060 = vunpack.c.l.b16 %v4916
        %v5061 = vunpack.c.l.b16 %v4917
        %v5062 = vunpack.c.l.b16 %v4918
        %v5063 = vunpack.c.l.b16 %v4919
        %v5064 = vunpack.c.l.b16 %v4920
        %v5065 = vunpack.c.l.b16 %v4921
        %v5066 = vunpack.c.l.b16 %v4922
        %v5067 = vunpack.c.l.b16 %v4923
        %v5068 = vunpack.c.l.b16 %v4924
        %v5069 = vpack.c.b16 %v5053, %v5053
        %v5070 = vpack.c.b16 %v5054, %v5054
        %v5071 = vpack.c.b16 %v5055, %v5055
        %v5072 = vpack.c.b16 %v5056, %v5056
        %v5073 = vpack.c.b16 %v5057, %v5057
        %v5074 = vpack.c.b16 %v5058, %v5058
        %v5075 = vpack.c.b16 %v5059, %v5059
        %v5076 = vpack.c.b16 %v5060, %v5060
        %v5077 = vpack.c.b16 %v5061, %v5061
        %v5078 = vpack.c.b16 %v5062, %v5062
        %v5079 = vpack.c.b16 %v5063, %v5063
        %v5080 = vpack.c.b16 %v5064, %v5064
        %v5081 = vpack.c.b16 %v5065, %v5065
        %v5082 = vpack.c.b16 %v5066, %v5066
        %v5083 = vpack.c.b16 %v5067, %v5067
        %v5084 = vpack.c.b16 %v5068, %v5068
        %v5086 = vshrl.u32 %v5005, 16
        %v5088 = vshll.u32 %v5005, 16
        %v5090 = vrot.slane %v5088, 1
        %v5091 = vor.u32 %v5086, %v5090
        %v5093 = vshll.u32 %v5069, 16
        %v5095 = vrot.slane %v5093, 1
        %v5096 = vsel %vm702, %v5091, %v5095
        %v5098 = vshrl.u32 %v5006, 16
        %v5100 = vshll.u32 %v5006, 16
        %v5102 = vrot.slane %v5100, 1
        %v5103 = vor.u32 %v5098, %v5102
        %v5105 = vshll.u32 %v5070, 16
        %v5107 = vrot.slane %v5105, 1
        %v5108 = vsel %vm702, %v5103, %v5107
        %v5110 = vshrl.u32 %v5007, 16
        %v5112 = vshll.u32 %v5007, 16
        %v5114 = vrot.slane %v5112, 1
        %v5115 = vor.u32 %v5110, %v5114
        %v5117 = vshll.u32 %v5071, 16
        %v5119 = vrot.slane %v5117, 1
        %v5120 = vsel %vm702, %v5115, %v5119
        %v5122 = vshrl.u32 %v5008, 16
        %v5124 = vshll.u32 %v5008, 16
        %v5126 = vrot.slane %v5124, 1
        %v5127 = vor.u32 %v5122, %v5126
        %v5129 = vshll.u32 %v5072, 16
        %v5131 = vrot.slane %v5129, 1
        %v5132 = vsel %vm702, %v5127, %v5131
        %v5134 = vshrl.u32 %v5009, 16
        %v5136 = vshll.u32 %v5009, 16
        %v5138 = vrot.slane %v5136, 1
        %v5139 = vor.u32 %v5134, %v5138
        %v5141 = vshll.u32 %v5073, 16
        %v5143 = vrot.slane %v5141, 1
        %v5144 = vsel %vm702, %v5139, %v5143
        %v5146 = vshrl.u32 %v5010, 16
        %v5148 = vshll.u32 %v5010, 16
        %v5150 = vrot.slane %v5148, 1
        %v5151 = vor.u32 %v5146, %v5150
        %v5153 = vshll.u32 %v5074, 16
        %v5155 = vrot.slane %v5153, 1
        %v5156 = vsel %vm702, %v5151, %v5155
        %v5158 = vshrl.u32 %v5011, 16
        %v5160 = vshll.u32 %v5011, 16
        %v5162 = vrot.slane %v5160, 1
        %v5163 = vor.u32 %v5158, %v5162
        %v5165 = vshll.u32 %v5075, 16
        %v5167 = vrot.slane %v5165, 1
        %v5168 = vsel %vm702, %v5163, %v5167
        %v5170 = vshrl.u32 %v5012, 16
        %v5172 = vshll.u32 %v5012, 16
        %v5174 = vrot.slane %v5172, 1
        %v5175 = vor.u32 %v5170, %v5174
        %v5177 = vshll.u32 %v5076, 16
        %v5179 = vrot.slane %v5177, 1
        %v5180 = vsel %vm702, %v5175, %v5179
        %v5182 = vshrl.u32 %v5013, 16
        %v5184 = vshll.u32 %v5013, 16
        %v5186 = vrot.slane %v5184, 1
        %v5187 = vor.u32 %v5182, %v5186
        %v5189 = vshll.u32 %v5077, 16
        %v5191 = vrot.slane %v5189, 1
        %v5192 = vsel %vm702, %v5187, %v5191
        %v5194 = vshrl.u32 %v5014, 16
        %v5196 = vshll.u32 %v5014, 16
        %v5198 = vrot.slane %v5196, 1
        %v5199 = vor.u32 %v5194, %v5198
        %v5201 = vshll.u32 %v5078, 16
        %v5203 = vrot.slane %v5201, 1
        %v5204 = vsel %vm702, %v5199, %v5203
        %v5206 = vshrl.u32 %v5015, 16
        %v5208 = vshll.u32 %v5015, 16
        %v5210 = vrot.slane %v5208, 1
        %v5211 = vor.u32 %v5206, %v5210
        %v5213 = vshll.u32 %v5079, 16
        %v5215 = vrot.slane %v5213, 1
        %v5216 = vsel %vm702, %v5211, %v5215
        %v5218 = vshrl.u32 %v5016, 16
        %v5220 = vshll.u32 %v5016, 16
        %v5222 = vrot.slane %v5220, 1
        %v5223 = vor.u32 %v5218, %v5222
        %v5225 = vshll.u32 %v5080, 16
        %v5227 = vrot.slane %v5225, 1
        %v5228 = vsel %vm702, %v5223, %v5227
        %v5230 = vshrl.u32 %v5017, 16
        %v5232 = vshll.u32 %v5017, 16
        %v5234 = vrot.slane %v5232, 1
        %v5235 = vor.u32 %v5230, %v5234
        %v5237 = vshll.u32 %v5081, 16
        %v5239 = vrot.slane %v5237, 1
        %v5240 = vsel %vm702, %v5235, %v5239
        %v5242 = vshrl.u32 %v5018, 16
        %v5244 = vshll.u32 %v5018, 16
        %v5246 = vrot.slane %v5244, 1
        %v5247 = vor.u32 %v5242, %v5246
        %v5249 = vshll.u32 %v5082, 16
        %v5251 = vrot.slane %v5249, 1
        %v5252 = vsel %vm702, %v5247, %v5251
        %v5254 = vshrl.u32 %v5019, 16
        %v5256 = vshll.u32 %v5019, 16
        %v5258 = vrot.slane %v5256, 1
        %v5259 = vor.u32 %v5254, %v5258
        %v5261 = vshll.u32 %v5083, 16
        %v5263 = vrot.slane %v5261, 1
        %v5264 = vsel %vm702, %v5259, %v5263
        %v5266 = vshrl.u32 %v5020, 16
        %v5268 = vshll.u32 %v5020, 16
        %v5270 = vrot.slane %v5268, 1
        %v5271 = vor.u32 %v5266, %v5270
        %v5273 = vshll.u32 %v5084, 16
        %v5275 = vrot.slane %v5273, 1
        %v5276 = vsel %vm702, %v5271, %v5275
        %v5309 = vunpack.c.l.b16 %v4925
        %v5310 = vunpack.c.l.b16 %v4926
        %v5311 = vunpack.c.l.b16 %v4927
        %v5312 = vunpack.c.l.b16 %v4928
        %v5313 = vunpack.c.l.b16 %v4929
        %v5314 = vunpack.c.l.b16 %v4930
        %v5315 = vunpack.c.l.b16 %v4931
        %v5316 = vunpack.c.l.b16 %v4932
        %v5317 = vunpack.c.l.b16 %v4933
        %v5318 = vunpack.c.l.b16 %v4934
        %v5319 = vunpack.c.l.b16 %v4935
        %v5320 = vunpack.c.l.b16 %v4936
        %v5321 = vunpack.c.l.b16 %v4937
        %v5322 = vunpack.c.l.b16 %v4938
        %v5323 = vunpack.c.l.b16 %v4939
        %v5324 = vunpack.c.l.b16 %v4940
        %v5325 = vpack.c.b16 %v4974, %v5309
        %v5326 = vpack.c.b16 %v4976, %v5310
        %v5327 = vpack.c.b16 %v4978, %v5311
        %v5328 = vpack.c.b16 %v4980, %v5312
        %v5329 = vpack.c.b16 %v4982, %v5313
        %v5330 = vpack.c.b16 %v4984, %v5314
        %v5331 = vpack.c.b16 %v4986, %v5315
        %v5332 = vpack.c.b16 %v4988, %v5316
        %v5333 = vpack.c.b16 %v4990, %v5317
        %v5334 = vpack.c.b16 %v4992, %v5318
        %v5335 = vpack.c.b16 %v4994, %v5319
        %v5336 = vpack.c.b16 %v4996, %v5320
        %v5337 = vpack.c.b16 %v4998, %v5321
        %v5338 = vpack.c.b16 %v5000, %v5322
        %v5339 = vpack.c.b16 %v5002, %v5323
        %v5340 = vpack.c.b16 %v5004, %v5324
        %v5341 = vrot.slane %v5325, 1
        %v5342 = vrot.slane %v5069, 1
        %v5343 = vsel %vm959, %v5341, %v5342
        %v5344 = vrot.slane %v5326, 1
        %v5345 = vrot.slane %v5070, 1
        %v5346 = vsel %vm959, %v5344, %v5345
        %v5347 = vrot.slane %v5327, 1
        %v5348 = vrot.slane %v5071, 1
        %v5349 = vsel %vm959, %v5347, %v5348
        %v5350 = vrot.slane %v5328, 1
        %v5351 = vrot.slane %v5072, 1
        %v5352 = vsel %vm959, %v5350, %v5351
        %v5353 = vrot.slane %v5329, 1
        %v5354 = vrot.slane %v5073, 1
        %v5355 = vsel %vm959, %v5353, %v5354
        %v5356 = vrot.slane %v5330, 1
        %v5357 = vrot.slane %v5074, 1
        %v5358 = vsel %vm959, %v5356, %v5357
        %v5359 = vrot.slane %v5331, 1
        %v5360 = vrot.slane %v5075, 1
        %v5361 = vsel %vm959, %v5359, %v5360
        %v5362 = vrot.slane %v5332, 1
        %v5363 = vrot.slane %v5076, 1
        %v5364 = vsel %vm959, %v5362, %v5363
        %v5365 = vrot.slane %v5333, 1
        %v5366 = vrot.slane %v5077, 1
        %v5367 = vsel %vm959, %v5365, %v5366
        %v5368 = vrot.slane %v5334, 1
        %v5369 = vrot.slane %v5078, 1
        %v5370 = vsel %vm959, %v5368, %v5369
        %v5371 = vrot.slane %v5335, 1
        %v5372 = vrot.slane %v5079, 1
        %v5373 = vsel %vm959, %v5371, %v5372
        %v5374 = vrot.slane %v5336, 1
        %v5375 = vrot.slane %v5080, 1
        %v5376 = vsel %vm959, %v5374, %v5375
        %v5377 = vrot.slane %v5337, 1
        %v5378 = vrot.slane %v5081, 1
        %v5379 = vsel %vm959, %v5377, %v5378
        %v5380 = vrot.slane %v5338, 1
        %v5381 = vrot.slane %v5082, 1
        %v5382 = vsel %vm959, %v5380, %v5381
        %v5383 = vrot.slane %v5339, 1
        %v5384 = vrot.slane %v5083, 1
        %v5385 = vsel %vm959, %v5383, %v5384
        %v5386 = vrot.slane %v5340, 1
        %v5387 = vrot.slane %v5084, 1
        %v5388 = vsel %vm959, %v5386, %v5387
        %s5405 = scalar_lea.vmem [#allocation3], 192
        %v5406 = vld [vmem:[%s5405] sm:$0xf]
        %v5407 = vld [vmem:[%s5405 + $0x4] sm:$0xf]
        %v5408 = vld [vmem:[%s5405 + $0x8] sm:$0xf]
        %v5409 = vld [vmem:[%s5405 + $0xc] sm:$0xf]
        %v5410 = vld [vmem:[%s5405 + $0x10] sm:$0xf]
        %v5411 = vld [vmem:[%s5405 + $0x14] sm:$0xf]
        %v5412 = vld [vmem:[%s5405 + $0x18] sm:$0xf]
        %v5413 = vld [vmem:[%s5405 + $0x1c] sm:$0xf]
        %v5414 = vld [vmem:[%s5405 + $0x20] sm:$0xf]
        %v5415 = vld [vmem:[%s5405 + $0x24] sm:$0xf]
        %v5416 = vld [vmem:[%s5405 + $0x28] sm:$0xf]
        %v5417 = vld [vmem:[%s5405 + $0x2c] sm:$0xf]
        %v5418 = vld [vmem:[%s5405 + $0x30] sm:$0xf]
        %v5419 = vld [vmem:[%s5405 + $0x34] sm:$0xf]
        %v5420 = vld [vmem:[%s5405 + $0x38] sm:$0xf]
        %v5421 = vld [vmem:[%s5405 + $0x3c] sm:$0xf]
        %v5422 = vld [vmem:[%s5405 + $0x40] sm:$0xf]
        %v5423 = vld [vmem:[%s5405 + $0x44] sm:$0xf]
        %v5424 = vld [vmem:[%s5405 + $0x48] sm:$0xf]
        %v5425 = vld [vmem:[%s5405 + $0x4c] sm:$0xf]
        %v5426 = vld [vmem:[%s5405 + $0x50] sm:$0xf]
        %v5427 = vld [vmem:[%s5405 + $0x54] sm:$0xf]
        %v5428 = vld [vmem:[%s5405 + $0x58] sm:$0xf]
        %v5429 = vld [vmem:[%s5405 + $0x5c] sm:$0xf]
        %v5430 = vld [vmem:[%s5405 + $0x60] sm:$0xf]
        %v5431 = vld [vmem:[%s5405 + $0x64] sm:$0xf]
        %v5432 = vld [vmem:[%s5405 + $0x68] sm:$0xf]
        %v5433 = vld [vmem:[%s5405 + $0x6c] sm:$0xf]
        %v5434 = vld [vmem:[%s5405 + $0x70] sm:$0xf]
        %v5435 = vld [vmem:[%s5405 + $0x74] sm:$0xf]
        %v5436 = vld [vmem:[%s5405 + $0x78] sm:$0xf]
        %v5437 = vld [vmem:[%s5405 + $0x7c] sm:$0xf]
        %v5438 = vld [vmem:[%s5405 + $0x80] sm:$0xf]
        %v5439 = vld [vmem:[%s5405 + $0x84] sm:$0xf]
        %v5440 = vld [vmem:[%s5405 + $0x88] sm:$0xf]
        %v5441 = vld [vmem:[%s5405 + $0x8c] sm:$0xf]
        %v5442 = vld [vmem:[%s5405 + $0x90] sm:$0xf]
        %v5443 = vld [vmem:[%s5405 + $0x94] sm:$0xf]
        %v5444 = vld [vmem:[%s5405 + $0x98] sm:$0xf]
        %v5445 = vld [vmem:[%s5405 + $0x9c] sm:$0xf]
        %v5446 = vld [vmem:[%s5405 + $0xa0] sm:$0xf]
        %v5447 = vld [vmem:[%s5405 + $0xa4] sm:$0xf]
        %v5448 = vld [vmem:[%s5405 + $0xa8] sm:$0xf]
        %v5449 = vld [vmem:[%s5405 + $0xac] sm:$0xf]
        %v5450 = vld [vmem:[%s5405 + $0xb0] sm:$0xf]
        %v5451 = vld [vmem:[%s5405 + $0xb4] sm:$0xf]
        %v5452 = vld [vmem:[%s5405 + $0xb8] sm:$0xf]
        %v5453 = vld [vmem:[%s5405 + $0xbc] sm:$0xf]
        %v5502 = vunpack.c.l.b16 %v5406
        %v5503 = vunpack.c.l.b16 %v5407
        %v5504 = vunpack.c.l.b16 %v5408
        %v5505 = vunpack.c.l.b16 %v5409
        %v5506 = vunpack.c.l.b16 %v5410
        %v5507 = vunpack.c.l.b16 %v5411
        %v5508 = vunpack.c.l.b16 %v5412
        %v5509 = vunpack.c.l.b16 %v5413
        %v5510 = vunpack.c.l.b16 %v5414
        %v5511 = vunpack.c.l.b16 %v5415
        %v5512 = vunpack.c.l.b16 %v5416
        %v5513 = vunpack.c.l.b16 %v5417
        %v5514 = vunpack.c.l.b16 %v5418
        %v5515 = vunpack.c.l.b16 %v5419
        %v5516 = vunpack.c.l.b16 %v5420
        %v5517 = vunpack.c.l.b16 %v5421
        %v5518 = vunpack.c.l.b16 %v5422
        %v5519 = vunpack.c.l.b16 %v5423
        %v5520 = vunpack.c.l.b16 %v5424
        %v5521 = vunpack.c.l.b16 %v5425
        %v5522 = vunpack.c.l.b16 %v5426
        %v5523 = vunpack.c.l.b16 %v5427
        %v5524 = vunpack.c.l.b16 %v5428
        %v5525 = vunpack.c.l.b16 %v5429
        %v5526 = vunpack.c.l.b16 %v5430
        %v5527 = vunpack.c.l.b16 %v5431
        %v5528 = vunpack.c.l.b16 %v5432
        %v5529 = vunpack.c.l.b16 %v5433
        %v5530 = vunpack.c.l.b16 %v5434
        %v5531 = vunpack.c.l.b16 %v5435
        %v5532 = vunpack.c.l.b16 %v5436
        %v5533 = vunpack.c.l.b16 %v5437
        %v5534 = vunpack.c.l.b16 %v5438
        %v5535 = vunpack.c.l.b16 %v5439
        %v5536 = vunpack.c.l.b16 %v5440
        %v5537 = vunpack.c.l.b16 %v5441
        %v5538 = vunpack.c.l.b16 %v5442
        %v5539 = vunpack.c.l.b16 %v5443
        %v5540 = vunpack.c.l.b16 %v5444
        %v5541 = vunpack.c.l.b16 %v5445
        %v5542 = vunpack.c.l.b16 %v5446
        %v5543 = vunpack.c.l.b16 %v5447
        %v5544 = vunpack.c.l.b16 %v5448
        %v5545 = vunpack.c.l.b16 %v5449
        %v5546 = vunpack.c.l.b16 %v5450
        %v5547 = vunpack.c.l.b16 %v5451
        %v5548 = vunpack.c.l.b16 %v5452
        %v5549 = vunpack.c.l.b16 %v5453
        %v5550 = vpack.c.b16 %v5503, %v5502
        %v5551 = vpack.c.b16 %v5505, %v5504
        %v5552 = vpack.c.b16 %v5507, %v5506
        %v5553 = vpack.c.b16 %v5509, %v5508
        %v5554 = vpack.c.b16 %v5511, %v5510
        %v5555 = vpack.c.b16 %v5513, %v5512
        %v5556 = vpack.c.b16 %v5515, %v5514
        %v5557 = vpack.c.b16 %v5517, %v5516
        %v5558 = vpack.c.b16 %v5519, %v5518
        %v5559 = vpack.c.b16 %v5521, %v5520
        %v5560 = vpack.c.b16 %v5523, %v5522
        %v5561 = vpack.c.b16 %v5525, %v5524
        %v5562 = vpack.c.b16 %v5527, %v5526
        %v5563 = vpack.c.b16 %v5529, %v5528
        %v5564 = vpack.c.b16 %v5531, %v5530
        %v5565 = vpack.c.b16 %v5533, %v5532
        %v5566 = vpack.c.b16 %v5535, %v5534
        %v5567 = vpack.c.b16 %v5537, %v5536
        %v5568 = vpack.c.b16 %v5539, %v5538
        %v5569 = vpack.c.b16 %v5541, %v5540
        %v5570 = vpack.c.b16 %v5543, %v5542
        %v5571 = vpack.c.b16 %v5545, %v5544
        %v5572 = vpack.c.b16 %v5547, %v5546
        %v5573 = vpack.c.b16 %v5549, %v5548
        %5598 = vmatprep.subr.bf16.mxu0 0
        %5599 = vmatpush1.bf16.msra.mxu0 %v5557
        %5600 = vmatprep.subr.bf16.mxu0 0
        %5601 = vmatpush1.bf16.msra.mxu0 %v5556
        %5602 = vmatprep.subr.bf16.mxu0 0
        %5603 = vmatpush1.bf16.msra.mxu0 %v5555
        %5604 = vmatprep.subr.bf16.mxu0 0
        %5605 = vmatpush1.bf16.msra.mxu0 %v5554
        %5606 = vmatprep.subr.bf16.mxu0 0
        %5607 = vmatpush1.bf16.msra.mxu0 %v5553
        %5608 = vmatprep.subr.bf16.mxu0 0
        %5609 = vmatpush1.bf16.msra.mxu0 %v5552
        %5610 = vmatprep.subr.bf16.mxu0 0
        %5611 = vmatpush1.bf16.msra.mxu0 %v5551
        %5612 = vmatprep.subr.bf16.mxu0 0
        %5613 = vmatpush1.bf16.msra.mxu0 %v5550
        %5614 = vmatprep.subr.bf16.mxu0 0
        %5615 = vmatpush2.bf16.msra.mxu0 %v5565
        %5616 = vmatprep.subr.bf16.mxu0 0
        %5617 = vmatpush2.bf16.msra.mxu0 %v5564
        %5618 = vmatprep.subr.bf16.mxu0 0
        %5619 = vmatpush2.bf16.msra.mxu0 %v5563
        %5620 = vmatprep.subr.bf16.mxu0 0
        %5621 = vmatpush2.bf16.msra.mxu0 %v5562
        %5622 = vmatprep.subr.bf16.mxu0 0
        %5623 = vmatpush2.bf16.msra.mxu0 %v5561
        %5624 = vmatprep.subr.bf16.mxu0 0
        %5625 = vmatpush2.bf16.msra.mxu0 %v5560
        %5626 = vmatprep.subr.bf16.mxu0 0
        %5627 = vmatpush2.bf16.msra.mxu0 %v5559
        %5628 = vmatprep.subr.bf16.mxu0 0
        %5629 = vmatpush2.bf16.msra.mxu0 %v5558
        %5630 = vmatprep.mubr.bf16.mxu0 %v5096
        %5631 = vmatmul.mubr.bf16.gmra.mxu0 %v5005
        %v5632 = vpop.f32.mrf.mxu0
        %v5633 = vadd.f32 0.0, %v5632
        %v5634 = vpop.f32.mrf.mxu0
        %v5635 = vpop.f32.mrf.mxu0
        %v5636 = vadd.f32 0.0, %v5635
        %v5637 = vpop.f32.mrf.mxu0
        %5638 = vmatprep.mubr.bf16.mxu0 %v5108
        %5639 = vmatmul.mubr.bf16.gmra.mxu0 %v5006
        %v5640 = vpop.f32.mrf.mxu0
        %v5641 = vadd.f32 0.0, %v5640
        %v5642 = vpop.f32.mrf.mxu0
        %v5643 = vpop.f32.mrf.mxu0
        %v5644 = vadd.f32 0.0, %v5643
        %v5645 = vpop.f32.mrf.mxu0
        %5646 = vmatprep.mubr.bf16.mxu0 %v5120
        %5647 = vmatmul.mubr.bf16.gmra.mxu0 %v5007
        %v5648 = vpop.f32.mrf.mxu0
        %v5649 = vadd.f32 0.0, %v5648
        %v5650 = vpop.f32.mrf.mxu0
        %v5651 = vpop.f32.mrf.mxu0
        %v5652 = vadd.f32 0.0, %v5651
        %v5653 = vpop.f32.mrf.mxu0
        %5654 = vmatprep.mubr.bf16.mxu0 %v5132
        %5655 = vmatmul.mubr.bf16.gmra.mxu0 %v5008
        %v5656 = vpop.f32.mrf.mxu0
        %v5657 = vadd.f32 0.0, %v5656
        %v5658 = vpop.f32.mrf.mxu0
        %v5659 = vpop.f32.mrf.mxu0
        %v5660 = vadd.f32 0.0, %v5659
        %v5661 = vpop.f32.mrf.mxu0
        %5662 = vmatprep.mubr.bf16.mxu0 %v5144
        %5663 = vmatmul.mubr.bf16.gmra.mxu0 %v5009
        %v5664 = vpop.f32.mrf.mxu0
        %v5665 = vadd.f32 0.0, %v5664
        %v5666 = vpop.f32.mrf.mxu0
        %v5667 = vpop.f32.mrf.mxu0
        %v5668 = vadd.f32 0.0, %v5667
        %v5669 = vpop.f32.mrf.mxu0
        %5670 = vmatprep.mubr.bf16.mxu0 %v5156
        %5671 = vmatmul.mubr.bf16.gmra.mxu0 %v5010
        %v5672 = vpop.f32.mrf.mxu0
        %v5673 = vadd.f32 0.0, %v5672
        %v5674 = vpop.f32.mrf.mxu0
        %v5675 = vpop.f32.mrf.mxu0
        %v5676 = vadd.f32 0.0, %v5675
        %v5677 = vpop.f32.mrf.mxu0
        %5678 = vmatprep.mubr.bf16.mxu0 %v5168
        %5679 = vmatmul.mubr.bf16.gmra.mxu0 %v5011
        %v5680 = vpop.f32.mrf.mxu0
        %v5681 = vadd.f32 0.0, %v5680
        %v5682 = vpop.f32.mrf.mxu0
        %v5683 = vpop.f32.mrf.mxu0
        %v5684 = vadd.f32 0.0, %v5683
        %v5685 = vpop.f32.mrf.mxu0
        %5686 = vmatprep.mubr.bf16.mxu0 %v5180
        %5687 = vmatmul.mubr.bf16.gmra.mxu0 %v5012
        %v5688 = vpop.f32.mrf.mxu0
        %v5689 = vadd.f32 0.0, %v5688
        %v5690 = vpop.f32.mrf.mxu0
        %v5691 = vpop.f32.mrf.mxu0
        %v5692 = vadd.f32 0.0, %v5691
        %v5693 = vpop.f32.mrf.mxu0
        %5694 = vmatprep.mubr.bf16.mxu0 %v5192
        %5695 = vmatmul.mubr.bf16.gmra.mxu0 %v5013
        %v5696 = vpop.f32.mrf.mxu0
        %v5697 = vadd.f32 0.0, %v5696
        %v5698 = vpop.f32.mrf.mxu0
        %v5699 = vpop.f32.mrf.mxu0
        %v5700 = vadd.f32 0.0, %v5699
        %v5701 = vpop.f32.mrf.mxu0
        %5702 = vmatprep.mubr.bf16.mxu0 %v5204
        %5703 = vmatmul.mubr.bf16.gmra.mxu0 %v5014
        %v5704 = vpop.f32.mrf.mxu0
        %v5705 = vadd.f32 0.0, %v5704
        %v5706 = vpop.f32.mrf.mxu0
        %v5707 = vpop.f32.mrf.mxu0
        %v5708 = vadd.f32 0.0, %v5707
        %v5709 = vpop.f32.mrf.mxu0
        %5710 = vmatprep.mubr.bf16.mxu0 %v5216
        %5711 = vmatmul.mubr.bf16.gmra.mxu0 %v5015
        %v5712 = vpop.f32.mrf.mxu0
        %v5713 = vadd.f32 0.0, %v5712
        %v5714 = vpop.f32.mrf.mxu0
        %v5715 = vpop.f32.mrf.mxu0
        %v5716 = vadd.f32 0.0, %v5715
        %v5717 = vpop.f32.mrf.mxu0
        %5718 = vmatprep.mubr.bf16.mxu0 %v5228
        %5719 = vmatmul.mubr.bf16.gmra.mxu0 %v5016
        %v5720 = vpop.f32.mrf.mxu0
        %v5721 = vadd.f32 0.0, %v5720
        %v5722 = vpop.f32.mrf.mxu0
        %v5723 = vpop.f32.mrf.mxu0
        %v5724 = vadd.f32 0.0, %v5723
        %v5725 = vpop.f32.mrf.mxu0
        %5726 = vmatprep.mubr.bf16.mxu0 %v5240
        %5727 = vmatmul.mubr.bf16.gmra.mxu0 %v5017
        %v5728 = vpop.f32.mrf.mxu0
        %v5729 = vadd.f32 0.0, %v5728
        %v5730 = vpop.f32.mrf.mxu0
        %v5731 = vpop.f32.mrf.mxu0
        %v5732 = vadd.f32 0.0, %v5731
        %v5733 = vpop.f32.mrf.mxu0
        %5734 = vmatprep.mubr.bf16.mxu0 %v5252
        %5735 = vmatmul.mubr.bf16.gmra.mxu0 %v5018
        %v5736 = vpop.f32.mrf.mxu0
        %v5737 = vadd.f32 0.0, %v5736
        %v5738 = vpop.f32.mrf.mxu0
        %v5739 = vpop.f32.mrf.mxu0
        %v5740 = vadd.f32 0.0, %v5739
        %v5741 = vpop.f32.mrf.mxu0
        %5742 = vmatprep.mubr.bf16.mxu0 %v5264
        %5743 = vmatmul.mubr.bf16.gmra.mxu0 %v5019
        %v5744 = vpop.f32.mrf.mxu0
        %v5745 = vadd.f32 0.0, %v5744
        %v5746 = vpop.f32.mrf.mxu0
        %v5747 = vpop.f32.mrf.mxu0
        %v5748 = vadd.f32 0.0, %v5747
        %v5749 = vpop.f32.mrf.mxu0
        %5750 = vmatprep.mubr.bf16.mxu0 %v5276
        %5751 = vmatmul.mubr.bf16.gmra.mxu0 %v5020
        %v5752 = vpop.f32.mrf.mxu0
        %v5753 = vadd.f32 0.0, %v5752
        %v5754 = vpop.f32.mrf.mxu0
        %v5755 = vpop.f32.mrf.mxu0
        %v5756 = vadd.f32 0.0, %v5755
        %v5757 = vpop.f32.mrf.mxu0
        %5758 = vdwg.mxu0
        %5759 = vmatprep.subr.bf16.mxu0 0
        %5760 = vmatpush1.bf16.msra.mxu0 %v5573
        %5761 = vmatprep.subr.bf16.mxu0 0
        %5762 = vmatpush1.bf16.msra.mxu0 %v5572
        %5763 = vmatprep.subr.bf16.mxu0 0
        %5764 = vmatpush1.bf16.msra.mxu0 %v5571
        %5765 = vmatprep.subr.bf16.mxu0 0
        %5766 = vmatpush1.bf16.msra.mxu0 %v5570
        %5767 = vmatprep.subr.bf16.mxu0 0
        %5768 = vmatpush1.bf16.msra.mxu0 %v5569
        %5769 = vmatprep.subr.bf16.mxu0 0
        %5770 = vmatpush1.bf16.msra.mxu0 %v5568
        %5771 = vmatprep.subr.bf16.mxu0 0
        %5772 = vmatpush1.bf16.msra.mxu0 %v5567
        %5773 = vmatprep.subr.bf16.mxu0 0
        %5774 = vmatpush1.bf16.msra.mxu0 %v5566
        %5775 = vmatprep.subr.bf16.mxu0 0
        %5776 = vmatpush2.bf16.msra.mxu0 0
        %5777 = vmatprep.subr.bf16.mxu0 0
        %5778 = vmatpush2.bf16.msra.mxu0 0
        %5779 = vmatprep.subr.bf16.mxu0 0
        %5780 = vmatpush2.bf16.msra.mxu0 0
        %5781 = vmatprep.subr.bf16.mxu0 0
        %5782 = vmatpush2.bf16.msra.mxu0 0
        %5783 = vmatprep.subr.bf16.mxu0 0
        %5784 = vmatpush2.bf16.msra.mxu0 0
        %5785 = vmatprep.subr.bf16.mxu0 0
        %5786 = vmatpush2.bf16.msra.mxu0 0
        %5787 = vmatprep.subr.bf16.mxu0 0
        %5788 = vmatpush2.bf16.msra.mxu0 0
        %5789 = vmatprep.subr.bf16.mxu0 0
        %5790 = vmatpush2.bf16.msra.mxu0 0
        %5791 = vmatprep.mubr.bf16.mxu0 0
        %5792 = vmatmul.mubr.bf16.gmra.mxu0 %v5343
        %v5793 = vpop.f32.mrf.mxu0
        %v5794 = vadd.f32 %v5633, %v5793
        %v5795 = vpop.f32.mrf.mxu0
        %v5796 = vpop.f32.mrf.mxu0
        %v5797 = vadd.f32 %v5636, %v5796
        %v5798 = vpop.f32.mrf.mxu0
        %5799 = vmatprep.mubr.bf16.mxu0 0
        %5800 = vmatmul.mubr.bf16.gmra.mxu0 %v5346
        %v5801 = vpop.f32.mrf.mxu0
        %v5802 = vadd.f32 %v5641, %v5801
        %v5803 = vpop.f32.mrf.mxu0
        %v5804 = vpop.f32.mrf.mxu0
        %v5805 = vadd.f32 %v5644, %v5804
        %v5806 = vpop.f32.mrf.mxu0
        %5807 = vmatprep.mubr.bf16.mxu0 0
        %5808 = vmatmul.mubr.bf16.gmra.mxu0 %v5349
        %v5809 = vpop.f32.mrf.mxu0
        %v5810 = vadd.f32 %v5649, %v5809
        %v5811 = vpop.f32.mrf.mxu0
        %v5812 = vpop.f32.mrf.mxu0
        %v5813 = vadd.f32 %v5652, %v5812
        %v5814 = vpop.f32.mrf.mxu0
        %5815 = vmatprep.mubr.bf16.mxu0 0
        %5816 = vmatmul.mubr.bf16.gmra.mxu0 %v5352
        %v5817 = vpop.f32.mrf.mxu0
        %v5818 = vadd.f32 %v5657, %v5817
        %v5819 = vpop.f32.mrf.mxu0
        %v5820 = vpop.f32.mrf.mxu0
        %v5821 = vadd.f32 %v5660, %v5820
        %v5822 = vpop.f32.mrf.mxu0
        %5823 = vmatprep.mubr.bf16.mxu0 0
        %5824 = vmatmul.mubr.bf16.gmra.mxu0 %v5355
        %v5825 = vpop.f32.mrf.mxu0
        %v5826 = vadd.f32 %v5665, %v5825
        %v5827 = vpop.f32.mrf.mxu0
        %v5828 = vpop.f32.mrf.mxu0
        %v5829 = vadd.f32 %v5668, %v5828
        %v5830 = vpop.f32.mrf.mxu0
        %5831 = vmatprep.mubr.bf16.mxu0 0
        %5832 = vmatmul.mubr.bf16.gmra.mxu0 %v5358
        %v5833 = vpop.f32.mrf.mxu0
        %v5834 = vadd.f32 %v5673, %v5833
        %v5835 = vpop.f32.mrf.mxu0
        %v5836 = vpop.f32.mrf.mxu0
        %v5837 = vadd.f32 %v5676, %v5836
        %v5838 = vpop.f32.mrf.mxu0
        %5839 = vmatprep.mubr.bf16.mxu0 0
        %5840 = vmatmul.mubr.bf16.gmra.mxu0 %v5361
        %v5841 = vpop.f32.mrf.mxu0
        %v5842 = vadd.f32 %v5681, %v5841
        %v5843 = vpop.f32.mrf.mxu0
        %v5844 = vpop.f32.mrf.mxu0
        %v5845 = vadd.f32 %v5684, %v5844
        %v5846 = vpop.f32.mrf.mxu0
        %5847 = vmatprep.mubr.bf16.mxu0 0
        %5848 = vmatmul.mubr.bf16.gmra.mxu0 %v5364
        %v5849 = vpop.f32.mrf.mxu0
        %v5850 = vadd.f32 %v5689, %v5849
        %v5851 = vpop.f32.mrf.mxu0
        %v5852 = vpop.f32.mrf.mxu0
        %v5853 = vadd.f32 %v5692, %v5852
        %v5854 = vpop.f32.mrf.mxu0
        %5855 = vmatprep.mubr.bf16.mxu0 0
        %5856 = vmatmul.mubr.bf16.gmra.mxu0 %v5367
        %v5857 = vpop.f32.mrf.mxu0
        %v5858 = vadd.f32 %v5697, %v5857
        %v5859 = vpop.f32.mrf.mxu0
        %v5860 = vpop.f32.mrf.mxu0
        %v5861 = vadd.f32 %v5700, %v5860
        %v5862 = vpop.f32.mrf.mxu0
        %5863 = vmatprep.mubr.bf16.mxu0 0
        %5864 = vmatmul.mubr.bf16.gmra.mxu0 %v5370
        %v5865 = vpop.f32.mrf.mxu0
        %v5866 = vadd.f32 %v5705, %v5865
        %v5867 = vpop.f32.mrf.mxu0
        %v5868 = vpop.f32.mrf.mxu0
        %v5869 = vadd.f32 %v5708, %v5868
        %v5870 = vpop.f32.mrf.mxu0
        %5871 = vmatprep.mubr.bf16.mxu0 0
        %5872 = vmatmul.mubr.bf16.gmra.mxu0 %v5373
        %v5873 = vpop.f32.mrf.mxu0
        %v5874 = vadd.f32 %v5713, %v5873
        %v5875 = vpop.f32.mrf.mxu0
        %v5876 = vpop.f32.mrf.mxu0
        %v5877 = vadd.f32 %v5716, %v5876
        %v5878 = vpop.f32.mrf.mxu0
        %5879 = vmatprep.mubr.bf16.mxu0 0
        %5880 = vmatmul.mubr.bf16.gmra.mxu0 %v5376
        %v5881 = vpop.f32.mrf.mxu0
        %v5882 = vadd.f32 %v5721, %v5881
        %v5883 = vpop.f32.mrf.mxu0
        %v5884 = vpop.f32.mrf.mxu0
        %v5885 = vadd.f32 %v5724, %v5884
        %v5886 = vpop.f32.mrf.mxu0
        %5887 = vmatprep.mubr.bf16.mxu0 0
        %5888 = vmatmul.mubr.bf16.gmra.mxu0 %v5379
        %v5889 = vpop.f32.mrf.mxu0
        %v5890 = vadd.f32 %v5729, %v5889
        %v5891 = vpop.f32.mrf.mxu0
        %v5892 = vpop.f32.mrf.mxu0
        %v5893 = vadd.f32 %v5732, %v5892
        %v5894 = vpop.f32.mrf.mxu0
        %5895 = vmatprep.mubr.bf16.mxu0 0
        %5896 = vmatmul.mubr.bf16.gmra.mxu0 %v5382
        %v5897 = vpop.f32.mrf.mxu0
        %v5898 = vadd.f32 %v5737, %v5897
        %v5899 = vpop.f32.mrf.mxu0
        %v5900 = vpop.f32.mrf.mxu0
        %v5901 = vadd.f32 %v5740, %v5900
        %v5902 = vpop.f32.mrf.mxu0
        %5903 = vmatprep.mubr.bf16.mxu0 0
        %5904 = vmatmul.mubr.bf16.gmra.mxu0 %v5385
        %v5905 = vpop.f32.mrf.mxu0
        %v5906 = vadd.f32 %v5745, %v5905
        %v5907 = vpop.f32.mrf.mxu0
        %v5908 = vpop.f32.mrf.mxu0
        %v5909 = vadd.f32 %v5748, %v5908
        %v5910 = vpop.f32.mrf.mxu0
        %5911 = vmatprep.mubr.bf16.mxu0 0
        %5912 = vmatmul.mubr.bf16.gmra.mxu0 %v5388
        %v5913 = vpop.f32.mrf.mxu0
        %v5914 = vadd.f32 %v5753, %v5913
        %v5915 = vpop.f32.mrf.mxu0
        %v5916 = vpop.f32.mrf.mxu0
        %v5917 = vadd.f32 %v5756, %v5916
        %v5918 = vpop.f32.mrf.mxu0
        %5919 = vdwg.mxu0
        %v5968 = vunpack.c.l.b16 %v4829
        %v5969 = vunpack.c.l.b16 %v4830
        %v5970 = vunpack.c.l.b16 %v4831
        %v5971 = vunpack.c.l.b16 %v4832
        %v5972 = vunpack.c.l.b16 %v4833
        %v5973 = vunpack.c.l.b16 %v4834
        %v5974 = vunpack.c.l.b16 %v4835
        %v5975 = vunpack.c.l.b16 %v4836
        %v5976 = vunpack.c.l.b16 %v4837
        %v5977 = vunpack.c.l.b16 %v4838
        %v5978 = vunpack.c.l.b16 %v4839
        %v5979 = vunpack.c.l.b16 %v4840
        %v5980 = vunpack.c.l.b16 %v4841
        %v5981 = vunpack.c.l.b16 %v4842
        %v5982 = vunpack.c.l.b16 %v4843
        %v5983 = vunpack.c.l.b16 %v4844
        %v5984 = vunpack.c.l.b16 %v4845
        %v5985 = vunpack.c.l.b16 %v4846
        %v5986 = vunpack.c.l.b16 %v4847
        %v5987 = vunpack.c.l.b16 %v4848
        %v5988 = vunpack.c.l.b16 %v4849
        %v5989 = vunpack.c.l.b16 %v4850
        %v5990 = vunpack.c.l.b16 %v4851
        %v5991 = vunpack.c.l.b16 %v4852
        %v5992 = vunpack.c.l.b16 %v4853
        %v5993 = vunpack.c.l.b16 %v4854
        %v5994 = vunpack.c.l.b16 %v4855
        %v5995 = vunpack.c.l.b16 %v4856
        %v5996 = vunpack.c.l.b16 %v4857
        %v5997 = vunpack.c.l.b16 %v4858
        %v5998 = vunpack.c.l.b16 %v4859
        %v5999 = vunpack.c.l.b16 %v4860
        %v6000 = vunpack.c.l.b16 %v4861
        %v6001 = vunpack.c.l.b16 %v4862
        %v6002 = vunpack.c.l.b16 %v4863
        %v6003 = vunpack.c.l.b16 %v4864
        %v6004 = vunpack.c.l.b16 %v4865
        %v6005 = vunpack.c.l.b16 %v4866
        %v6006 = vunpack.c.l.b16 %v4867
        %v6007 = vunpack.c.l.b16 %v4868
        %v6008 = vunpack.c.l.b16 %v4869
        %v6009 = vunpack.c.l.b16 %v4870
        %v6010 = vunpack.c.l.b16 %v4871
        %v6011 = vunpack.c.l.b16 %v4872
        %v6012 = vunpack.c.l.b16 %v4873
        %v6013 = vunpack.c.l.b16 %v4874
        %v6014 = vunpack.c.l.b16 %v4875
        %v6015 = vunpack.c.l.b16 %v4876
        %v6016 = vpack.c.b16 %v5969, %v5968
        %v6017 = vpack.c.b16 %v5971, %v5970
        %v6018 = vpack.c.b16 %v5973, %v5972
        %v6019 = vpack.c.b16 %v5975, %v5974
        %v6020 = vpack.c.b16 %v5977, %v5976
        %v6021 = vpack.c.b16 %v5979, %v5978
        %v6022 = vpack.c.b16 %v5981, %v5980
        %v6023 = vpack.c.b16 %v5983, %v5982
        %v6024 = vpack.c.b16 %v5985, %v5984
        %v6025 = vpack.c.b16 %v5987, %v5986
        %v6026 = vpack.c.b16 %v5989, %v5988
        %v6027 = vpack.c.b16 %v5991, %v5990
        %v6028 = vpack.c.b16 %v5993, %v5992
        %v6029 = vpack.c.b16 %v5995, %v5994
        %v6030 = vpack.c.b16 %v5997, %v5996
        %v6031 = vpack.c.b16 %v5999, %v5998
        %v6032 = vpack.c.b16 %v6001, %v6000
        %v6033 = vpack.c.b16 %v6003, %v6002
        %v6034 = vpack.c.b16 %v6005, %v6004
        %v6035 = vpack.c.b16 %v6007, %v6006
        %v6036 = vpack.c.b16 %v6009, %v6008
        %v6037 = vpack.c.b16 %v6011, %v6010
        %v6038 = vpack.c.b16 %v6013, %v6012
        %v6039 = vpack.c.b16 %v6015, %v6014
        %6064 = vmatprep.subr.bf16.mxu0 0
        %6065 = vmatpush1.bf16.msra.mxu0 %v6023
        %6066 = vmatprep.subr.bf16.mxu0 0
        %6067 = vmatpush1.bf16.msra.mxu0 %v6022
        %6068 = vmatprep.subr.bf16.mxu0 0
        %6069 = vmatpush1.bf16.msra.mxu0 %v6021
        %6070 = vmatprep.subr.bf16.mxu0 0
        %6071 = vmatpush1.bf16.msra.mxu0 %v6020
        %6072 = vmatprep.subr.bf16.mxu0 0
        %6073 = vmatpush1.bf16.msra.mxu0 %v6019
        %6074 = vmatprep.subr.bf16.mxu0 0
        %6075 = vmatpush1.bf16.msra.mxu0 %v6018
        %6076 = vmatprep.subr.bf16.mxu0 0
        %6077 = vmatpush1.bf16.msra.mxu0 %v6017
        %6078 = vmatprep.subr.bf16.mxu0 0
        %6079 = vmatpush1.bf16.msra.mxu0 %v6016
        %6080 = vmatprep.subr.bf16.mxu0 0
        %6081 = vmatpush2.bf16.msra.mxu0 %v6031
        %6082 = vmatprep.subr.bf16.mxu0 0
        %6083 = vmatpush2.bf16.msra.mxu0 %v6030
        %6084 = vmatprep.subr.bf16.mxu0 0
        %6085 = vmatpush2.bf16.msra.mxu0 %v6029
        %6086 = vmatprep.subr.bf16.mxu0 0
        %6087 = vmatpush2.bf16.msra.mxu0 %v6028
        %6088 = vmatprep.subr.bf16.mxu0 0
        %6089 = vmatpush2.bf16.msra.mxu0 %v6027
        %6090 = vmatprep.subr.bf16.mxu0 0
        %6091 = vmatpush2.bf16.msra.mxu0 %v6026
        %6092 = vmatprep.subr.bf16.mxu0 0
        %6093 = vmatpush2.bf16.msra.mxu0 %v6025
        %6094 = vmatprep.subr.bf16.mxu0 0
        %6095 = vmatpush2.bf16.msra.mxu0 %v6024
        %6096 = vmatprep.mubr.bf16.mxu0 %v4520
        %6097 = vmatmul.mubr.bf16.gmra.mxu0 %v4429
        %v6098 = vpop.f32.mrf.mxu0
        %v6099 = vadd.f32 %v5794, %v6098
        %v6100 = vpop.f32.mrf.mxu0
        %v6101 = vpop.f32.mrf.mxu0
        %v6102 = vadd.f32 %v5797, %v6101
        %v6103 = vpop.f32.mrf.mxu0
        %6104 = vmatprep.mubr.bf16.mxu0 %v4532
        %6105 = vmatmul.mubr.bf16.gmra.mxu0 %v4430
        %v6106 = vpop.f32.mrf.mxu0
        %v6107 = vadd.f32 %v5802, %v6106
        %v6108 = vpop.f32.mrf.mxu0
        %v6109 = vpop.f32.mrf.mxu0
        %v6110 = vadd.f32 %v5805, %v6109
        %v6111 = vpop.f32.mrf.mxu0
        %6112 = vmatprep.mubr.bf16.mxu0 %v4544
        %6113 = vmatmul.mubr.bf16.gmra.mxu0 %v4431
        %v6114 = vpop.f32.mrf.mxu0
        %v6115 = vadd.f32 %v5810, %v6114
        %v6116 = vpop.f32.mrf.mxu0
        %v6117 = vpop.f32.mrf.mxu0
        %v6118 = vadd.f32 %v5813, %v6117
        %v6119 = vpop.f32.mrf.mxu0
        %6120 = vmatprep.mubr.bf16.mxu0 %v4556
        %6121 = vmatmul.mubr.bf16.gmra.mxu0 %v4432
        %v6122 = vpop.f32.mrf.mxu0
        %v6123 = vadd.f32 %v5818, %v6122
        %v6124 = vpop.f32.mrf.mxu0
        %v6125 = vpop.f32.mrf.mxu0
        %v6126 = vadd.f32 %v5821, %v6125
        %v6127 = vpop.f32.mrf.mxu0
        %6128 = vmatprep.mubr.bf16.mxu0 %v4568
        %6129 = vmatmul.mubr.bf16.gmra.mxu0 %v4433
        %v6130 = vpop.f32.mrf.mxu0
        %v6131 = vadd.f32 %v5826, %v6130
        %v6132 = vpop.f32.mrf.mxu0
        %v6133 = vpop.f32.mrf.mxu0
        %v6134 = vadd.f32 %v5829, %v6133
        %v6135 = vpop.f32.mrf.mxu0
        %6136 = vmatprep.mubr.bf16.mxu0 %v4580
        %6137 = vmatmul.mubr.bf16.gmra.mxu0 %v4434
        %v6138 = vpop.f32.mrf.mxu0
        %v6139 = vadd.f32 %v5834, %v6138
        %v6140 = vpop.f32.mrf.mxu0
        %v6141 = vpop.f32.mrf.mxu0
        %v6142 = vadd.f32 %v5837, %v6141
        %v6143 = vpop.f32.mrf.mxu0
        %6144 = vmatprep.mubr.bf16.mxu0 %v4592
        %6145 = vmatmul.mubr.bf16.gmra.mxu0 %v4435
        %v6146 = vpop.f32.mrf.mxu0
        %v6147 = vadd.f32 %v5842, %v6146
        %v6148 = vpop.f32.mrf.mxu0
        %v6149 = vpop.f32.mrf.mxu0
        %v6150 = vadd.f32 %v5845, %v6149
        %v6151 = vpop.f32.mrf.mxu0
        %6152 = vmatprep.mubr.bf16.mxu0 %v4604
        %6153 = vmatmul.mubr.bf16.gmra.mxu0 %v4436
        %v6154 = vpop.f32.mrf.mxu0
        %v6155 = vadd.f32 %v5850, %v6154
        %v6156 = vpop.f32.mrf.mxu0
        %v6157 = vpop.f32.mrf.mxu0
        %v6158 = vadd.f32 %v5853, %v6157
        %v6159 = vpop.f32.mrf.mxu0
        %6160 = vmatprep.mubr.bf16.mxu0 %v4616
        %6161 = vmatmul.mubr.bf16.gmra.mxu0 %v4437
        %v6162 = vpop.f32.mrf.mxu0
        %v6163 = vadd.f32 %v5858, %v6162
        %v6164 = vpop.f32.mrf.mxu0
        %v6165 = vpop.f32.mrf.mxu0
        %v6166 = vadd.f32 %v5861, %v6165
        %v6167 = vpop.f32.mrf.mxu0
        %6168 = vmatprep.mubr.bf16.mxu0 %v4628
        %6169 = vmatmul.mubr.bf16.gmra.mxu0 %v4438
        %v6170 = vpop.f32.mrf.mxu0
        %v6171 = vadd.f32 %v5866, %v6170
        %v6172 = vpop.f32.mrf.mxu0
        %v6173 = vpop.f32.mrf.mxu0
        %v6174 = vadd.f32 %v5869, %v6173
        %v6175 = vpop.f32.mrf.mxu0
        %6176 = vmatprep.mubr.bf16.mxu0 %v4640
        %6177 = vmatmul.mubr.bf16.gmra.mxu0 %v4439
        %v6178 = vpop.f32.mrf.mxu0
        %v6179 = vadd.f32 %v5874, %v6178
        %v6180 = vpop.f32.mrf.mxu0
        %v6181 = vpop.f32.mrf.mxu0
        %v6182 = vadd.f32 %v5877, %v6181
        %v6183 = vpop.f32.mrf.mxu0
        %6184 = vmatprep.mubr.bf16.mxu0 %v4652
        %6185 = vmatmul.mubr.bf16.gmra.mxu0 %v4440
        %v6186 = vpop.f32.mrf.mxu0
        %v6187 = vadd.f32 %v5882, %v6186
        %v6188 = vpop.f32.mrf.mxu0
        %v6189 = vpop.f32.mrf.mxu0
        %v6190 = vadd.f32 %v5885, %v6189
        %v6191 = vpop.f32.mrf.mxu0
        %6192 = vmatprep.mubr.bf16.mxu0 %v4664
        %6193 = vmatmul.mubr.bf16.gmra.mxu0 %v4441
        %v6194 = vpop.f32.mrf.mxu0
        %v6195 = vadd.f32 %v5890, %v6194
        %v6196 = vpop.f32.mrf.mxu0
        %v6197 = vpop.f32.mrf.mxu0
        %v6198 = vadd.f32 %v5893, %v6197
        %v6199 = vpop.f32.mrf.mxu0
        %6200 = vmatprep.mubr.bf16.mxu0 %v4676
        %6201 = vmatmul.mubr.bf16.gmra.mxu0 %v4442
        %v6202 = vpop.f32.mrf.mxu0
        %v6203 = vadd.f32 %v5898, %v6202
        %v6204 = vpop.f32.mrf.mxu0
        %v6205 = vpop.f32.mrf.mxu0
        %v6206 = vadd.f32 %v5901, %v6205
        %v6207 = vpop.f32.mrf.mxu0
        %6208 = vmatprep.mubr.bf16.mxu0 %v4688
        %6209 = vmatmul.mubr.bf16.gmra.mxu0 %v4443
        %v6210 = vpop.f32.mrf.mxu0
        %v6211 = vadd.f32 %v5906, %v6210
        %v6212 = vpop.f32.mrf.mxu0
        %v6213 = vpop.f32.mrf.mxu0
        %v6214 = vadd.f32 %v5909, %v6213
        %v6215 = vpop.f32.mrf.mxu0
        %6216 = vmatprep.mubr.bf16.mxu0 %v4700
        %6217 = vmatmul.mubr.bf16.gmra.mxu0 %v4444
        %v6218 = vpop.f32.mrf.mxu0
        %v6219 = vadd.f32 %v5914, %v6218
        %v6220 = vpop.f32.mrf.mxu0
        %v6221 = vpop.f32.mrf.mxu0
        %v6222 = vadd.f32 %v5917, %v6221
        %v6223 = vpop.f32.mrf.mxu0
        %6224 = vdwg.mxu0
        %6225 = vmatprep.subr.bf16.mxu0 0
        %6226 = vmatpush1.bf16.msra.mxu0 %v6039
        %6227 = vmatprep.subr.bf16.mxu0 0
        %6228 = vmatpush1.bf16.msra.mxu0 %v6038
        %6229 = vmatprep.subr.bf16.mxu0 0
        %6230 = vmatpush1.bf16.msra.mxu0 %v6037
        %6231 = vmatprep.subr.bf16.mxu0 0
        %6232 = vmatpush1.bf16.msra.mxu0 %v6036
        %6233 = vmatprep.subr.bf16.mxu0 0
        %6234 = vmatpush1.bf16.msra.mxu0 %v6035
        %6235 = vmatprep.subr.bf16.mxu0 0
        %6236 = vmatpush1.bf16.msra.mxu0 %v6034
        %6237 = vmatprep.subr.bf16.mxu0 0
        %6238 = vmatpush1.bf16.msra.mxu0 %v6033
        %6239 = vmatprep.subr.bf16.mxu0 0
        %6240 = vmatpush1.bf16.msra.mxu0 %v6032
        %6241 = vmatprep.subr.bf16.mxu0 0
        %6242 = vmatpush2.bf16.msra.mxu0 0
        %6243 = vmatprep.subr.bf16.mxu0 0
        %6244 = vmatpush2.bf16.msra.mxu0 0
        %6245 = vmatprep.subr.bf16.mxu0 0
        %6246 = vmatpush2.bf16.msra.mxu0 0
        %6247 = vmatprep.subr.bf16.mxu0 0
        %6248 = vmatpush2.bf16.msra.mxu0 0
        %6249 = vmatprep.subr.bf16.mxu0 0
        %6250 = vmatpush2.bf16.msra.mxu0 0
        %6251 = vmatprep.subr.bf16.mxu0 0
        %6252 = vmatpush2.bf16.msra.mxu0 0
        %6253 = vmatprep.subr.bf16.mxu0 0
        %6254 = vmatpush2.bf16.msra.mxu0 0
        %6255 = vmatprep.subr.bf16.mxu0 0
        %6256 = vmatpush2.bf16.msra.mxu0 0
        %6257 = vmatprep.mubr.bf16.mxu0 0
        %6258 = vmatmul.mubr.bf16.gmra.mxu0 %v4767
        %v6259 = vpop.f32.mrf.mxu0
        %v6260 = vadd.f32 %v6099, %v6259
        %v6261 = vpop.f32.mrf.mxu0
        %v6262 = vpop.f32.mrf.mxu0
        %v6263 = vadd.f32 %v6102, %v6262
        %v6264 = vpop.f32.mrf.mxu0
        %6265 = vmatprep.mubr.bf16.mxu0 0
        %6266 = vmatmul.mubr.bf16.gmra.mxu0 %v4770
        %v6267 = vpop.f32.mrf.mxu0
        %v6268 = vadd.f32 %v6107, %v6267
        %v6269 = vpop.f32.mrf.mxu0
        %v6270 = vpop.f32.mrf.mxu0
        %v6271 = vadd.f32 %v6110, %v6270
        %v6272 = vpop.f32.mrf.mxu0
        %6273 = vmatprep.mubr.bf16.mxu0 0
        %6274 = vmatmul.mubr.bf16.gmra.mxu0 %v4773
        %v6275 = vpop.f32.mrf.mxu0
        %v6276 = vadd.f32 %v6115, %v6275
        %v6277 = vpop.f32.mrf.mxu0
        %v6278 = vpop.f32.mrf.mxu0
        %v6279 = vadd.f32 %v6118, %v6278
        %v6280 = vpop.f32.mrf.mxu0
        %6281 = vmatprep.mubr.bf16.mxu0 0
        %6282 = vmatmul.mubr.bf16.gmra.mxu0 %v4776
        %v6283 = vpop.f32.mrf.mxu0
        %v6284 = vadd.f32 %v6123, %v6283
        %v6285 = vpop.f32.mrf.mxu0
        %v6286 = vpop.f32.mrf.mxu0
        %v6287 = vadd.f32 %v6126, %v6286
        %v6288 = vpop.f32.mrf.mxu0
        %6289 = vmatprep.mubr.bf16.mxu0 0
        %6290 = vmatmul.mubr.bf16.gmra.mxu0 %v4779
        %v6291 = vpop.f32.mrf.mxu0
        %v6292 = vadd.f32 %v6131, %v6291
        %v6293 = vpop.f32.mrf.mxu0
        %v6294 = vpop.f32.mrf.mxu0
        %v6295 = vadd.f32 %v6134, %v6294
        %v6296 = vpop.f32.mrf.mxu0
        %6297 = vmatprep.mubr.bf16.mxu0 0
        %6298 = vmatmul.mubr.bf16.gmra.mxu0 %v4782
        %v6299 = vpop.f32.mrf.mxu0
        %v6300 = vadd.f32 %v6139, %v6299
        %v6301 = vpop.f32.mrf.mxu0
        %v6302 = vpop.f32.mrf.mxu0
        %v6303 = vadd.f32 %v6142, %v6302
        %v6304 = vpop.f32.mrf.mxu0
        %6305 = vmatprep.mubr.bf16.mxu0 0
        %6306 = vmatmul.mubr.bf16.gmra.mxu0 %v4785
        %v6307 = vpop.f32.mrf.mxu0
        %v6308 = vadd.f32 %v6147, %v6307
        %v6309 = vpop.f32.mrf.mxu0
        %v6310 = vpop.f32.mrf.mxu0
        %v6311 = vadd.f32 %v6150, %v6310
        %v6312 = vpop.f32.mrf.mxu0
        %6313 = vmatprep.mubr.bf16.mxu0 0
        %6314 = vmatmul.mubr.bf16.gmra.mxu0 %v4788
        %v6315 = vpop.f32.mrf.mxu0
        %v6316 = vadd.f32 %v6155, %v6315
        %v6317 = vpop.f32.mrf.mxu0
        %v6318 = vpop.f32.mrf.mxu0
        %v6319 = vadd.f32 %v6158, %v6318
        %v6320 = vpop.f32.mrf.mxu0
        %6321 = vmatprep.mubr.bf16.mxu0 0
        %6322 = vmatmul.mubr.bf16.gmra.mxu0 %v4791
        %v6323 = vpop.f32.mrf.mxu0
        %v6324 = vadd.f32 %v6163, %v6323
        %v6325 = vpop.f32.mrf.mxu0
        %v6326 = vpop.f32.mrf.mxu0
        %v6327 = vadd.f32 %v6166, %v6326
        %v6328 = vpop.f32.mrf.mxu0
        %6329 = vmatprep.mubr.bf16.mxu0 0
        %6330 = vmatmul.mubr.bf16.gmra.mxu0 %v4794
        %v6331 = vpop.f32.mrf.mxu0
        %v6332 = vadd.f32 %v6171, %v6331
        %v6333 = vpop.f32.mrf.mxu0
        %v6334 = vpop.f32.mrf.mxu0
        %v6335 = vadd.f32 %v6174, %v6334
        %v6336 = vpop.f32.mrf.mxu0
        %6337 = vmatprep.mubr.bf16.mxu0 0
        %6338 = vmatmul.mubr.bf16.gmra.mxu0 %v4797
        %v6339 = vpop.f32.mrf.mxu0
        %v6340 = vadd.f32 %v6179, %v6339
        %v6341 = vpop.f32.mrf.mxu0
        %v6342 = vpop.f32.mrf.mxu0
        %v6343 = vadd.f32 %v6182, %v6342
        %v6344 = vpop.f32.mrf.mxu0
        %6345 = vmatprep.mubr.bf16.mxu0 0
        %6346 = vmatmul.mubr.bf16.gmra.mxu0 %v4800
        %v6347 = vpop.f32.mrf.mxu0
        %v6348 = vadd.f32 %v6187, %v6347
        %v6349 = vpop.f32.mrf.mxu0
        %v6350 = vpop.f32.mrf.mxu0
        %v6351 = vadd.f32 %v6190, %v6350
        %v6352 = vpop.f32.mrf.mxu0
        %6353 = vmatprep.mubr.bf16.mxu0 0
        %6354 = vmatmul.mubr.bf16.gmra.mxu0 %v4803
        %v6355 = vpop.f32.mrf.mxu0
        %v6356 = vadd.f32 %v6195, %v6355
        %v6357 = vpop.f32.mrf.mxu0
        %v6358 = vpop.f32.mrf.mxu0
        %v6359 = vadd.f32 %v6198, %v6358
        %v6360 = vpop.f32.mrf.mxu0
        %6361 = vmatprep.mubr.bf16.mxu0 0
        %6362 = vmatmul.mubr.bf16.gmra.mxu0 %v4806
        %v6363 = vpop.f32.mrf.mxu0
        %v6364 = vadd.f32 %v6203, %v6363
        %v6365 = vpop.f32.mrf.mxu0
        %v6366 = vpop.f32.mrf.mxu0
        %v6367 = vadd.f32 %v6206, %v6366
        %v6368 = vpop.f32.mrf.mxu0
        %6369 = vmatprep.mubr.bf16.mxu0 0
        %6370 = vmatmul.mubr.bf16.gmra.mxu0 %v4809
        %v6371 = vpop.f32.mrf.mxu0
        %v6372 = vadd.f32 %v6211, %v6371
        %v6373 = vpop.f32.mrf.mxu0
        %v6374 = vpop.f32.mrf.mxu0
        %v6375 = vadd.f32 %v6214, %v6374
        %v6376 = vpop.f32.mrf.mxu0
        %6377 = vmatprep.mubr.bf16.mxu0 0
        %6378 = vmatmul.mubr.bf16.gmra.mxu0 %v4812
        %v6379 = vpop.f32.mrf.mxu0
        %v6380 = vadd.f32 %v6219, %v6379
        %v6381 = vpop.f32.mrf.mxu0
        %v6382 = vpop.f32.mrf.mxu0
        %v6383 = vadd.f32 %v6222, %v6382
        %v6384 = vpop.f32.mrf.mxu0
        %6385 = vdwg.mxu0
        %s6386 = scalar_lea.vmem [#allocation2], 24
        %v6387 = vld [vmem:[%s6386] sm:$0xf]
        %v6388 = vld [vmem:[%s6386 + $0x4] sm:$0xf]
        %v6389 = vld [vmem:[%s6386 + $0xc] sm:$0xf]
        %v6390 = vld [vmem:[%s6386 + $0x10] sm:$0xf]
        %v6391 = vld [vmem:[%s6386 + $0x18] sm:$0xf]
        %v6392 = vld [vmem:[%s6386 + $0x1c] sm:$0xf]
        %v6393 = vld [vmem:[%s6386 + $0x24] sm:$0xf]
        %v6394 = vld [vmem:[%s6386 + $0x28] sm:$0xf]
        %v6395 = vld [vmem:[%s6386 + $0x30] sm:$0xf]
        %v6396 = vld [vmem:[%s6386 + $0x34] sm:$0xf]
        %v6397 = vld [vmem:[%s6386 + $0x3c] sm:$0xf]
        %v6398 = vld [vmem:[%s6386 + $0x40] sm:$0xf]
        %v6399 = vld [vmem:[%s6386 + $0x48] sm:$0xf]
        %v6400 = vld [vmem:[%s6386 + $0x4c] sm:$0xf]
        %v6401 = vld [vmem:[%s6386 + $0x54] sm:$0xf]
        %v6402 = vld [vmem:[%s6386 + $0x58] sm:$0xf]
        %v6403 = vld [vmem:[%s6386 + $0x60] sm:$0xf]
        %v6404 = vld [vmem:[%s6386 + $0x64] sm:$0xf]
        %v6405 = vld [vmem:[%s6386 + $0x6c] sm:$0xf]
        %v6406 = vld [vmem:[%s6386 + $0x70] sm:$0xf]
        %v6407 = vld [vmem:[%s6386 + $0x78] sm:$0xf]
        %v6408 = vld [vmem:[%s6386 + $0x7c] sm:$0xf]
        %v6409 = vld [vmem:[%s6386 + $0x84] sm:$0xf]
        %v6410 = vld [vmem:[%s6386 + $0x88] sm:$0xf]
        %v6411 = vld [vmem:[%s6386 + $0x90] sm:$0xf]
        %v6412 = vld [vmem:[%s6386 + $0x94] sm:$0xf]
        %v6413 = vld [vmem:[%s6386 + $0x9c] sm:$0xf]
        %v6414 = vld [vmem:[%s6386 + $0xa0] sm:$0xf]
        %v6415 = vld [vmem:[%s6386 + $0xa8] sm:$0xf]
        %v6416 = vld [vmem:[%s6386 + $0xac] sm:$0xf]
        %v6417 = vld [vmem:[%s6386 + $0xb4] sm:$0xf]
        %v6418 = vld [vmem:[%s6386 + $0xb8] sm:$0xf]
        %v6419 = vld [vmem:[%s6386 + $0x8] sm:$0x1]
        %v6420 = vld [vmem:[%s6386 + $0x14] sm:$0x1]
        %v6421 = vld [vmem:[%s6386 + $0x20] sm:$0x1]
        %v6422 = vld [vmem:[%s6386 + $0x2c] sm:$0x1]
        %v6423 = vld [vmem:[%s6386 + $0x38] sm:$0x1]
        %v6424 = vld [vmem:[%s6386 + $0x44] sm:$0x1]
        %v6425 = vld [vmem:[%s6386 + $0x50] sm:$0x1]
        %v6426 = vld [vmem:[%s6386 + $0x5c] sm:$0x1]
        %v6427 = vld [vmem:[%s6386 + $0x68] sm:$0x1]
        %v6428 = vld [vmem:[%s6386 + $0x74] sm:$0x1]
        %v6429 = vld [vmem:[%s6386 + $0x80] sm:$0x1]
        %v6430 = vld [vmem:[%s6386 + $0x8c] sm:$0x1]
        %v6431 = vld [vmem:[%s6386 + $0x98] sm:$0x1]
        %v6432 = vld [vmem:[%s6386 + $0xa4] sm:$0x1]
        %v6433 = vld [vmem:[%s6386 + $0xb0] sm:$0x1]
        %v6434 = vld [vmem:[%s6386 + $0xbc] sm:$0x1]
        %v6435 = vld [vmem:[%s6386] sm:$0xe]
        %v6436 = vld [vmem:[%s6386 + $0xc] sm:$0xe]
        %v6437 = vld [vmem:[%s6386 + $0x18] sm:$0xe]
        %v6438 = vld [vmem:[%s6386 + $0x24] sm:$0xe]
        %v6439 = vld [vmem:[%s6386 + $0x30] sm:$0xe]
        %v6440 = vld [vmem:[%s6386 + $0x3c] sm:$0xe]
        %v6441 = vld [vmem:[%s6386 + $0x48] sm:$0xe]
        %v6442 = vld [vmem:[%s6386 + $0x54] sm:$0xe]
        %v6443 = vld [vmem:[%s6386 + $0x60] sm:$0xe]
        %v6444 = vld [vmem:[%s6386 + $0x6c] sm:$0xe]
        %v6445 = vld [vmem:[%s6386 + $0x78] sm:$0xe]
        %v6446 = vld [vmem:[%s6386 + $0x84] sm:$0xe]
        %v6447 = vld [vmem:[%s6386 + $0x90] sm:$0xe]
        %v6448 = vld [vmem:[%s6386 + $0x9c] sm:$0xe]
        %v6449 = vld [vmem:[%s6386 + $0xa8] sm:$0xe]
        %v6450 = vld [vmem:[%s6386 + $0xb4] sm:$0xe]
        %v6483 = vunpack.c.l.b16 %v6387
        %v6484 = vunpack.c.l.b16 %v6388
        %v6485 = vunpack.c.l.b16 %v6389
        %v6486 = vunpack.c.l.b16 %v6390
        %v6487 = vunpack.c.l.b16 %v6391
        %v6488 = vunpack.c.l.b16 %v6392
        %v6489 = vunpack.c.l.b16 %v6393
        %v6490 = vunpack.c.l.b16 %v6394
        %v6491 = vunpack.c.l.b16 %v6395
        %v6492 = vunpack.c.l.b16 %v6396
        %v6493 = vunpack.c.l.b16 %v6397
        %v6494 = vunpack.c.l.b16 %v6398
        %v6495 = vunpack.c.l.b16 %v6399
        %v6496 = vunpack.c.l.b16 %v6400
        %v6497 = vunpack.c.l.b16 %v6401
        %v6498 = vunpack.c.l.b16 %v6402
        %v6499 = vunpack.c.l.b16 %v6403
        %v6500 = vunpack.c.l.b16 %v6404
        %v6501 = vunpack.c.l.b16 %v6405
        %v6502 = vunpack.c.l.b16 %v6406
        %v6503 = vunpack.c.l.b16 %v6407
        %v6504 = vunpack.c.l.b16 %v6408
        %v6505 = vunpack.c.l.b16 %v6409
        %v6506 = vunpack.c.l.b16 %v6410
        %v6507 = vunpack.c.l.b16 %v6411
        %v6508 = vunpack.c.l.b16 %v6412
        %v6509 = vunpack.c.l.b16 %v6413
        %v6510 = vunpack.c.l.b16 %v6414
        %v6511 = vunpack.c.l.b16 %v6415
        %v6512 = vunpack.c.l.b16 %v6416
        %v6513 = vunpack.c.l.b16 %v6417
        %v6514 = vunpack.c.l.b16 %v6418
        %v6515 = vpack.c.b16 %v6484, %v6483
        %v6516 = vpack.c.b16 %v6486, %v6485
        %v6517 = vpack.c.b16 %v6488, %v6487
        %v6518 = vpack.c.b16 %v6490, %v6489
        %v6519 = vpack.c.b16 %v6492, %v6491
        %v6520 = vpack.c.b16 %v6494, %v6493
        %v6521 = vpack.c.b16 %v6496, %v6495
        %v6522 = vpack.c.b16 %v6498, %v6497
        %v6523 = vpack.c.b16 %v6500, %v6499
        %v6524 = vpack.c.b16 %v6502, %v6501
        %v6525 = vpack.c.b16 %v6504, %v6503
        %v6526 = vpack.c.b16 %v6506, %v6505
        %v6527 = vpack.c.b16 %v6508, %v6507
        %v6528 = vpack.c.b16 %v6510, %v6509
        %v6529 = vpack.c.b16 %v6512, %v6511
        %v6530 = vpack.c.b16 %v6514, %v6513
        %v6563 = vunpack.c.l.b16 %v6419
        %v6564 = vunpack.c.l.b16 %v6420
        %v6565 = vunpack.c.l.b16 %v6421
        %v6566 = vunpack.c.l.b16 %v6422
        %v6567 = vunpack.c.l.b16 %v6423
        %v6568 = vunpack.c.l.b16 %v6424
        %v6569 = vunpack.c.l.b16 %v6425
        %v6570 = vunpack.c.l.b16 %v6426
        %v6571 = vunpack.c.l.b16 %v6427
        %v6572 = vunpack.c.l.b16 %v6428
        %v6573 = vunpack.c.l.b16 %v6429
        %v6574 = vunpack.c.l.b16 %v6430
        %v6575 = vunpack.c.l.b16 %v6431
        %v6576 = vunpack.c.l.b16 %v6432
        %v6577 = vunpack.c.l.b16 %v6433
        %v6578 = vunpack.c.l.b16 %v6434
        %v6579 = vpack.c.b16 %v6563, %v6563
        %v6580 = vpack.c.b16 %v6564, %v6564
        %v6581 = vpack.c.b16 %v6565, %v6565
        %v6582 = vpack.c.b16 %v6566, %v6566
        %v6583 = vpack.c.b16 %v6567, %v6567
        %v6584 = vpack.c.b16 %v6568, %v6568
        %v6585 = vpack.c.b16 %v6569, %v6569
        %v6586 = vpack.c.b16 %v6570, %v6570
        %v6587 = vpack.c.b16 %v6571, %v6571
        %v6588 = vpack.c.b16 %v6572, %v6572
        %v6589 = vpack.c.b16 %v6573, %v6573
        %v6590 = vpack.c.b16 %v6574, %v6574
        %v6591 = vpack.c.b16 %v6575, %v6575
        %v6592 = vpack.c.b16 %v6576, %v6576
        %v6593 = vpack.c.b16 %v6577, %v6577
        %v6594 = vpack.c.b16 %v6578, %v6578
        %v6596 = vshrl.u32 %v6515, 16
        %v6598 = vshll.u32 %v6515, 16
        %v6600 = vrot.slane %v6598, 1
        %v6601 = vor.u32 %v6596, %v6600
        %v6603 = vshll.u32 %v6579, 16
        %v6605 = vrot.slane %v6603, 1
        %v6606 = vsel %vm702, %v6601, %v6605
        %v6608 = vshrl.u32 %v6516, 16
        %v6610 = vshll.u32 %v6516, 16
        %v6612 = vrot.slane %v6610, 1
        %v6613 = vor.u32 %v6608, %v6612
        %v6615 = vshll.u32 %v6580, 16
        %v6617 = vrot.slane %v6615, 1
        %v6618 = vsel %vm702, %v6613, %v6617
        %v6620 = vshrl.u32 %v6517, 16
        %v6622 = vshll.u32 %v6517, 16
        %v6624 = vrot.slane %v6622, 1
        %v6625 = vor.u32 %v6620, %v6624
        %v6627 = vshll.u32 %v6581, 16
        %v6629 = vrot.slane %v6627, 1
        %v6630 = vsel %vm702, %v6625, %v6629
        %v6632 = vshrl.u32 %v6518, 16
        %v6634 = vshll.u32 %v6518, 16
        %v6636 = vrot.slane %v6634, 1
        %v6637 = vor.u32 %v6632, %v6636
        %v6639 = vshll.u32 %v6582, 16
        %v6641 = vrot.slane %v6639, 1
        %v6642 = vsel %vm702, %v6637, %v6641
        %v6644 = vshrl.u32 %v6519, 16
        %v6646 = vshll.u32 %v6519, 16
        %v6648 = vrot.slane %v6646, 1
        %v6649 = vor.u32 %v6644, %v6648
        %v6651 = vshll.u32 %v6583, 16
        %v6653 = vrot.slane %v6651, 1
        %v6654 = vsel %vm702, %v6649, %v6653
        %v6656 = vshrl.u32 %v6520, 16
        %v6658 = vshll.u32 %v6520, 16
        %v6660 = vrot.slane %v6658, 1
        %v6661 = vor.u32 %v6656, %v6660
        %v6663 = vshll.u32 %v6584, 16
        %v6665 = vrot.slane %v6663, 1
        %v6666 = vsel %vm702, %v6661, %v6665
        %v6668 = vshrl.u32 %v6521, 16
        %v6670 = vshll.u32 %v6521, 16
        %v6672 = vrot.slane %v6670, 1
        %v6673 = vor.u32 %v6668, %v6672
        %v6675 = vshll.u32 %v6585, 16
        %v6677 = vrot.slane %v6675, 1
        %v6678 = vsel %vm702, %v6673, %v6677
        %v6680 = vshrl.u32 %v6522, 16
        %v6682 = vshll.u32 %v6522, 16
        %v6684 = vrot.slane %v6682, 1
        %v6685 = vor.u32 %v6680, %v6684
        %v6687 = vshll.u32 %v6586, 16
        %v6689 = vrot.slane %v6687, 1
        %v6690 = vsel %vm702, %v6685, %v6689
        %v6692 = vshrl.u32 %v6523, 16
        %v6694 = vshll.u32 %v6523, 16
        %v6696 = vrot.slane %v6694, 1
        %v6697 = vor.u32 %v6692, %v6696
        %v6699 = vshll.u32 %v6587, 16
        %v6701 = vrot.slane %v6699, 1
        %v6702 = vsel %vm702, %v6697, %v6701
        %v6704 = vshrl.u32 %v6524, 16
        %v6706 = vshll.u32 %v6524, 16
        %v6708 = vrot.slane %v6706, 1
        %v6709 = vor.u32 %v6704, %v6708
        %v6711 = vshll.u32 %v6588, 16
        %v6713 = vrot.slane %v6711, 1
        %v6714 = vsel %vm702, %v6709, %v6713
        %v6716 = vshrl.u32 %v6525, 16
        %v6718 = vshll.u32 %v6525, 16
        %v6720 = vrot.slane %v6718, 1
        %v6721 = vor.u32 %v6716, %v6720
        %v6723 = vshll.u32 %v6589, 16
        %v6725 = vrot.slane %v6723, 1
        %v6726 = vsel %vm702, %v6721, %v6725
        %v6728 = vshrl.u32 %v6526, 16
        %v6730 = vshll.u32 %v6526, 16
        %v6732 = vrot.slane %v6730, 1
        %v6733 = vor.u32 %v6728, %v6732
        %v6735 = vshll.u32 %v6590, 16
        %v6737 = vrot.slane %v6735, 1
        %v6738 = vsel %vm702, %v6733, %v6737
        %v6740 = vshrl.u32 %v6527, 16
        %v6742 = vshll.u32 %v6527, 16
        %v6744 = vrot.slane %v6742, 1
        %v6745 = vor.u32 %v6740, %v6744
        %v6747 = vshll.u32 %v6591, 16
        %v6749 = vrot.slane %v6747, 1
        %v6750 = vsel %vm702, %v6745, %v6749
        %v6752 = vshrl.u32 %v6528, 16
        %v6754 = vshll.u32 %v6528, 16
        %v6756 = vrot.slane %v6754, 1
        %v6757 = vor.u32 %v6752, %v6756
        %v6759 = vshll.u32 %v6592, 16
        %v6761 = vrot.slane %v6759, 1
        %v6762 = vsel %vm702, %v6757, %v6761
        %v6764 = vshrl.u32 %v6529, 16
        %v6766 = vshll.u32 %v6529, 16
        %v6768 = vrot.slane %v6766, 1
        %v6769 = vor.u32 %v6764, %v6768
        %v6771 = vshll.u32 %v6593, 16
        %v6773 = vrot.slane %v6771, 1
        %v6774 = vsel %vm702, %v6769, %v6773
        %v6776 = vshrl.u32 %v6530, 16
        %v6778 = vshll.u32 %v6530, 16
        %v6780 = vrot.slane %v6778, 1
        %v6781 = vor.u32 %v6776, %v6780
        %v6783 = vshll.u32 %v6594, 16
        %v6785 = vrot.slane %v6783, 1
        %v6786 = vsel %vm702, %v6781, %v6785
        %v6819 = vunpack.c.l.b16 %v6435
        %v6820 = vunpack.c.l.b16 %v6436
        %v6821 = vunpack.c.l.b16 %v6437
        %v6822 = vunpack.c.l.b16 %v6438
        %v6823 = vunpack.c.l.b16 %v6439
        %v6824 = vunpack.c.l.b16 %v6440
        %v6825 = vunpack.c.l.b16 %v6441
        %v6826 = vunpack.c.l.b16 %v6442
        %v6827 = vunpack.c.l.b16 %v6443
        %v6828 = vunpack.c.l.b16 %v6444
        %v6829 = vunpack.c.l.b16 %v6445
        %v6830 = vunpack.c.l.b16 %v6446
        %v6831 = vunpack.c.l.b16 %v6447
        %v6832 = vunpack.c.l.b16 %v6448
        %v6833 = vunpack.c.l.b16 %v6449
        %v6834 = vunpack.c.l.b16 %v6450
        %v6835 = vpack.c.b16 %v6484, %v6819
        %v6836 = vpack.c.b16 %v6486, %v6820
        %v6837 = vpack.c.b16 %v6488, %v6821
        %v6838 = vpack.c.b16 %v6490, %v6822
        %v6839 = vpack.c.b16 %v6492, %v6823
        %v6840 = vpack.c.b16 %v6494, %v6824
        %v6841 = vpack.c.b16 %v6496, %v6825
        %v6842 = vpack.c.b16 %v6498, %v6826
        %v6843 = vpack.c.b16 %v6500, %v6827
        %v6844 = vpack.c.b16 %v6502, %v6828
        %v6845 = vpack.c.b16 %v6504, %v6829
        %v6846 = vpack.c.b16 %v6506, %v6830
        %v6847 = vpack.c.b16 %v6508, %v6831
        %v6848 = vpack.c.b16 %v6510, %v6832
        %v6849 = vpack.c.b16 %v6512, %v6833
        %v6850 = vpack.c.b16 %v6514, %v6834
        %v6851 = vrot.slane %v6835, 1
        %v6852 = vrot.slane %v6579, 1
        %v6853 = vsel %vm959, %v6851, %v6852
        %v6854 = vrot.slane %v6836, 1
        %v6855 = vrot.slane %v6580, 1
        %v6856 = vsel %vm959, %v6854, %v6855
        %v6857 = vrot.slane %v6837, 1
        %v6858 = vrot.slane %v6581, 1
        %v6859 = vsel %vm959, %v6857, %v6858
        %v6860 = vrot.slane %v6838, 1
        %v6861 = vrot.slane %v6582, 1
        %v6862 = vsel %vm959, %v6860, %v6861
        %v6863 = vrot.slane %v6839, 1
        %v6864 = vrot.slane %v6583, 1
        %v6865 = vsel %vm959, %v6863, %v6864
        %v6866 = vrot.slane %v6840, 1
        %v6867 = vrot.slane %v6584, 1
        %v6868 = vsel %vm959, %v6866, %v6867
        %v6869 = vrot.slane %v6841, 1
        %v6870 = vrot.slane %v6585, 1
        %v6871 = vsel %vm959, %v6869, %v6870
        %v6872 = vrot.slane %v6842, 1
        %v6873 = vrot.slane %v6586, 1
        %v6874 = vsel %vm959, %v6872, %v6873
        %v6875 = vrot.slane %v6843, 1
        %v6876 = vrot.slane %v6587, 1
        %v6877 = vsel %vm959, %v6875, %v6876
        %v6878 = vrot.slane %v6844, 1
        %v6879 = vrot.slane %v6588, 1
        %v6880 = vsel %vm959, %v6878, %v6879
        %v6881 = vrot.slane %v6845, 1
        %v6882 = vrot.slane %v6589, 1
        %v6883 = vsel %vm959, %v6881, %v6882
        %v6884 = vrot.slane %v6846, 1
        %v6885 = vrot.slane %v6590, 1
        %v6886 = vsel %vm959, %v6884, %v6885
        %v6887 = vrot.slane %v6847, 1
        %v6888 = vrot.slane %v6591, 1
        %v6889 = vsel %vm959, %v6887, %v6888
        %v6890 = vrot.slane %v6848, 1
        %v6891 = vrot.slane %v6592, 1
        %v6892 = vsel %vm959, %v6890, %v6891
        %v6893 = vrot.slane %v6849, 1
        %v6894 = vrot.slane %v6593, 1
        %v6895 = vsel %vm959, %v6893, %v6894
        %v6896 = vrot.slane %v6850, 1
        %v6897 = vrot.slane %v6594, 1
        %v6898 = vsel %vm959, %v6896, %v6897
        %s6915 = scalar_lea.vmem [#allocation3], 384
        %v6916 = vld [vmem:[%s6915] sm:$0xf]
        %v6917 = vld [vmem:[%s6915 + $0x4] sm:$0xf]
        %v6918 = vld [vmem:[%s6915 + $0x8] sm:$0xf]
        %v6919 = vld [vmem:[%s6915 + $0xc] sm:$0xf]
        %v6920 = vld [vmem:[%s6915 + $0x10] sm:$0xf]
        %v6921 = vld [vmem:[%s6915 + $0x14] sm:$0xf]
        %v6922 = vld [vmem:[%s6915 + $0x18] sm:$0xf]
        %v6923 = vld [vmem:[%s6915 + $0x1c] sm:$0xf]
        %v6924 = vld [vmem:[%s6915 + $0x20] sm:$0xf]
        %v6925 = vld [vmem:[%s6915 + $0x24] sm:$0xf]
        %v6926 = vld [vmem:[%s6915 + $0x28] sm:$0xf]
        %v6927 = vld [vmem:[%s6915 + $0x2c] sm:$0xf]
        %v6928 = vld [vmem:[%s6915 + $0x30] sm:$0xf]
        %v6929 = vld [vmem:[%s6915 + $0x34] sm:$0xf]
        %v6930 = vld [vmem:[%s6915 + $0x38] sm:$0xf]
        %v6931 = vld [vmem:[%s6915 + $0x3c] sm:$0xf]
        %v6932 = vld [vmem:[%s6915 + $0x40] sm:$0xf]
        %v6933 = vld [vmem:[%s6915 + $0x44] sm:$0xf]
        %v6934 = vld [vmem:[%s6915 + $0x48] sm:$0xf]
        %v6935 = vld [vmem:[%s6915 + $0x4c] sm:$0xf]
        %v6936 = vld [vmem:[%s6915 + $0x50] sm:$0xf]
        %v6937 = vld [vmem:[%s6915 + $0x54] sm:$0xf]
        %v6938 = vld [vmem:[%s6915 + $0x58] sm:$0xf]
        %v6939 = vld [vmem:[%s6915 + $0x5c] sm:$0xf]
        %v6940 = vld [vmem:[%s6915 + $0x60] sm:$0xf]
        %v6941 = vld [vmem:[%s6915 + $0x64] sm:$0xf]
        %v6942 = vld [vmem:[%s6915 + $0x68] sm:$0xf]
        %v6943 = vld [vmem:[%s6915 + $0x6c] sm:$0xf]
        %v6944 = vld [vmem:[%s6915 + $0x70] sm:$0xf]
        %v6945 = vld [vmem:[%s6915 + $0x74] sm:$0xf]
        %v6946 = vld [vmem:[%s6915 + $0x78] sm:$0xf]
        %v6947 = vld [vmem:[%s6915 + $0x7c] sm:$0xf]
        %v6948 = vld [vmem:[%s6915 + $0x80] sm:$0xf]
        %v6949 = vld [vmem:[%s6915 + $0x84] sm:$0xf]
        %v6950 = vld [vmem:[%s6915 + $0x88] sm:$0xf]
        %v6951 = vld [vmem:[%s6915 + $0x8c] sm:$0xf]
        %v6952 = vld [vmem:[%s6915 + $0x90] sm:$0xf]
        %v6953 = vld [vmem:[%s6915 + $0x94] sm:$0xf]
        %v6954 = vld [vmem:[%s6915 + $0x98] sm:$0xf]
        %v6955 = vld [vmem:[%s6915 + $0x9c] sm:$0xf]
        %v6956 = vld [vmem:[%s6915 + $0xa0] sm:$0xf]
        %v6957 = vld [vmem:[%s6915 + $0xa4] sm:$0xf]
        %v6958 = vld [vmem:[%s6915 + $0xa8] sm:$0xf]
        %v6959 = vld [vmem:[%s6915 + $0xac] sm:$0xf]
        %v6960 = vld [vmem:[%s6915 + $0xb0] sm:$0xf]
        %v6961 = vld [vmem:[%s6915 + $0xb4] sm:$0xf]
        %v6962 = vld [vmem:[%s6915 + $0xb8] sm:$0xf]
        %v6963 = vld [vmem:[%s6915 + $0xbc] sm:$0xf]
        %v7012 = vunpack.c.l.b16 %v6916
        %v7013 = vunpack.c.l.b16 %v6917
        %v7014 = vunpack.c.l.b16 %v6918
        %v7015 = vunpack.c.l.b16 %v6919
        %v7016 = vunpack.c.l.b16 %v6920
        %v7017 = vunpack.c.l.b16 %v6921
        %v7018 = vunpack.c.l.b16 %v6922
        %v7019 = vunpack.c.l.b16 %v6923
        %v7020 = vunpack.c.l.b16 %v6924
        %v7021 = vunpack.c.l.b16 %v6925
        %v7022 = vunpack.c.l.b16 %v6926
        %v7023 = vunpack.c.l.b16 %v6927
        %v7024 = vunpack.c.l.b16 %v6928
        %v7025 = vunpack.c.l.b16 %v6929
        %v7026 = vunpack.c.l.b16 %v6930
        %v7027 = vunpack.c.l.b16 %v6931
        %v7028 = vunpack.c.l.b16 %v6932
        %v7029 = vunpack.c.l.b16 %v6933
        %v7030 = vunpack.c.l.b16 %v6934
        %v7031 = vunpack.c.l.b16 %v6935
        %v7032 = vunpack.c.l.b16 %v6936
        %v7033 = vunpack.c.l.b16 %v6937
        %v7034 = vunpack.c.l.b16 %v6938
        %v7035 = vunpack.c.l.b16 %v6939
        %v7036 = vunpack.c.l.b16 %v6940
        %v7037 = vunpack.c.l.b16 %v6941
        %v7038 = vunpack.c.l.b16 %v6942
        %v7039 = vunpack.c.l.b16 %v6943
        %v7040 = vunpack.c.l.b16 %v6944
        %v7041 = vunpack.c.l.b16 %v6945
        %v7042 = vunpack.c.l.b16 %v6946
        %v7043 = vunpack.c.l.b16 %v6947
        %v7044 = vunpack.c.l.b16 %v6948
        %v7045 = vunpack.c.l.b16 %v6949
        %v7046 = vunpack.c.l.b16 %v6950
        %v7047 = vunpack.c.l.b16 %v6951
        %v7048 = vunpack.c.l.b16 %v6952
        %v7049 = vunpack.c.l.b16 %v6953
        %v7050 = vunpack.c.l.b16 %v6954
        %v7051 = vunpack.c.l.b16 %v6955
        %v7052 = vunpack.c.l.b16 %v6956
        %v7053 = vunpack.c.l.b16 %v6957
        %v7054 = vunpack.c.l.b16 %v6958
        %v7055 = vunpack.c.l.b16 %v6959
        %v7056 = vunpack.c.l.b16 %v6960
        %v7057 = vunpack.c.l.b16 %v6961
        %v7058 = vunpack.c.l.b16 %v6962
        %v7059 = vunpack.c.l.b16 %v6963
        %v7060 = vpack.c.b16 %v7013, %v7012
        %v7061 = vpack.c.b16 %v7015, %v7014
        %v7062 = vpack.c.b16 %v7017, %v7016
        %v7063 = vpack.c.b16 %v7019, %v7018
        %v7064 = vpack.c.b16 %v7021, %v7020
        %v7065 = vpack.c.b16 %v7023, %v7022
        %v7066 = vpack.c.b16 %v7025, %v7024
        %v7067 = vpack.c.b16 %v7027, %v7026
        %v7068 = vpack.c.b16 %v7029, %v7028
        %v7069 = vpack.c.b16 %v7031, %v7030
        %v7070 = vpack.c.b16 %v7033, %v7032
        %v7071 = vpack.c.b16 %v7035, %v7034
        %v7072 = vpack.c.b16 %v7037, %v7036
        %v7073 = vpack.c.b16 %v7039, %v7038
        %v7074 = vpack.c.b16 %v7041, %v7040
        %v7075 = vpack.c.b16 %v7043, %v7042
        %v7076 = vpack.c.b16 %v7045, %v7044
        %v7077 = vpack.c.b16 %v7047, %v7046
        %v7078 = vpack.c.b16 %v7049, %v7048
        %v7079 = vpack.c.b16 %v7051, %v7050
        %v7080 = vpack.c.b16 %v7053, %v7052
        %v7081 = vpack.c.b16 %v7055, %v7054
        %v7082 = vpack.c.b16 %v7057, %v7056
        %v7083 = vpack.c.b16 %v7059, %v7058
        %7108 = vmatprep.subr.bf16.mxu0 0
        %7109 = vmatpush1.bf16.msra.mxu0 %v7067
        %7110 = vmatprep.subr.bf16.mxu0 0
        %7111 = vmatpush1.bf16.msra.mxu0 %v7066
        %7112 = vmatprep.subr.bf16.mxu0 0
        %7113 = vmatpush1.bf16.msra.mxu0 %v7065
        %7114 = vmatprep.subr.bf16.mxu0 0
        %7115 = vmatpush1.bf16.msra.mxu0 %v7064
        %7116 = vmatprep.subr.bf16.mxu0 0
        %7117 = vmatpush1.bf16.msra.mxu0 %v7063
        %7118 = vmatprep.subr.bf16.mxu0 0
        %7119 = vmatpush1.bf16.msra.mxu0 %v7062
        %7120 = vmatprep.subr.bf16.mxu0 0
        %7121 = vmatpush1.bf16.msra.mxu0 %v7061
        %7122 = vmatprep.subr.bf16.mxu0 0
        %7123 = vmatpush1.bf16.msra.mxu0 %v7060
        %7124 = vmatprep.subr.bf16.mxu0 0
        %7125 = vmatpush2.bf16.msra.mxu0 %v7075
        %7126 = vmatprep.subr.bf16.mxu0 0
        %7127 = vmatpush2.bf16.msra.mxu0 %v7074
        %7128 = vmatprep.subr.bf16.mxu0 0
        %7129 = vmatpush2.bf16.msra.mxu0 %v7073
        %7130 = vmatprep.subr.bf16.mxu0 0
        %7131 = vmatpush2.bf16.msra.mxu0 %v7072
        %7132 = vmatprep.subr.bf16.mxu0 0
        %7133 = vmatpush2.bf16.msra.mxu0 %v7071
        %7134 = vmatprep.subr.bf16.mxu0 0
        %7135 = vmatpush2.bf16.msra.mxu0 %v7070
        %7136 = vmatprep.subr.bf16.mxu0 0
        %7137 = vmatpush2.bf16.msra.mxu0 %v7069
        %7138 = vmatprep.subr.bf16.mxu0 0
        %7139 = vmatpush2.bf16.msra.mxu0 %v7068
        %7140 = vmatprep.mubr.bf16.mxu0 %v6606
        %7141 = vmatmul.mubr.bf16.gmra.mxu0 %v6515
        %v7142 = vpop.f32.mrf.mxu0
        %v7143 = vadd.f32 0.0, %v7142
        %v7144 = vpop.f32.mrf.mxu0
        %v7145 = vpop.f32.mrf.mxu0
        %v7146 = vadd.f32 0.0, %v7145
        %v7147 = vpop.f32.mrf.mxu0
        %7148 = vmatprep.mubr.bf16.mxu0 %v6618
        %7149 = vmatmul.mubr.bf16.gmra.mxu0 %v6516
        %v7150 = vpop.f32.mrf.mxu0
        %v7151 = vadd.f32 0.0, %v7150
        %v7152 = vpop.f32.mrf.mxu0
        %v7153 = vpop.f32.mrf.mxu0
        %v7154 = vadd.f32 0.0, %v7153
        %v7155 = vpop.f32.mrf.mxu0
        %7156 = vmatprep.mubr.bf16.mxu0 %v6630
        %7157 = vmatmul.mubr.bf16.gmra.mxu0 %v6517
        %v7158 = vpop.f32.mrf.mxu0
        %v7159 = vadd.f32 0.0, %v7158
        %v7160 = vpop.f32.mrf.mxu0
        %v7161 = vpop.f32.mrf.mxu0
        %v7162 = vadd.f32 0.0, %v7161
        %v7163 = vpop.f32.mrf.mxu0
        %7164 = vmatprep.mubr.bf16.mxu0 %v6642
        %7165 = vmatmul.mubr.bf16.gmra.mxu0 %v6518
        %v7166 = vpop.f32.mrf.mxu0
        %v7167 = vadd.f32 0.0, %v7166
        %v7168 = vpop.f32.mrf.mxu0
        %v7169 = vpop.f32.mrf.mxu0
        %v7170 = vadd.f32 0.0, %v7169
        %v7171 = vpop.f32.mrf.mxu0
        %7172 = vmatprep.mubr.bf16.mxu0 %v6654
        %7173 = vmatmul.mubr.bf16.gmra.mxu0 %v6519
        %v7174 = vpop.f32.mrf.mxu0
        %v7175 = vadd.f32 0.0, %v7174
        %v7176 = vpop.f32.mrf.mxu0
        %v7177 = vpop.f32.mrf.mxu0
        %v7178 = vadd.f32 0.0, %v7177
        %v7179 = vpop.f32.mrf.mxu0
        %7180 = vmatprep.mubr.bf16.mxu0 %v6666
        %7181 = vmatmul.mubr.bf16.gmra.mxu0 %v6520
        %v7182 = vpop.f32.mrf.mxu0
        %v7183 = vadd.f32 0.0, %v7182
        %v7184 = vpop.f32.mrf.mxu0
        %v7185 = vpop.f32.mrf.mxu0
        %v7186 = vadd.f32 0.0, %v7185
        %v7187 = vpop.f32.mrf.mxu0
        %7188 = vmatprep.mubr.bf16.mxu0 %v6678
        %7189 = vmatmul.mubr.bf16.gmra.mxu0 %v6521
        %v7190 = vpop.f32.mrf.mxu0
        %v7191 = vadd.f32 0.0, %v7190
        %v7192 = vpop.f32.mrf.mxu0
        %v7193 = vpop.f32.mrf.mxu0
        %v7194 = vadd.f32 0.0, %v7193
        %v7195 = vpop.f32.mrf.mxu0
        %7196 = vmatprep.mubr.bf16.mxu0 %v6690
        %7197 = vmatmul.mubr.bf16.gmra.mxu0 %v6522
        %v7198 = vpop.f32.mrf.mxu0
        %v7199 = vadd.f32 0.0, %v7198
        %v7200 = vpop.f32.mrf.mxu0
        %v7201 = vpop.f32.mrf.mxu0
        %v7202 = vadd.f32 0.0, %v7201
        %v7203 = vpop.f32.mrf.mxu0
        %7204 = vmatprep.mubr.bf16.mxu0 %v6702
        %7205 = vmatmul.mubr.bf16.gmra.mxu0 %v6523
        %v7206 = vpop.f32.mrf.mxu0
        %v7207 = vadd.f32 0.0, %v7206
        %v7208 = vpop.f32.mrf.mxu0
        %v7209 = vpop.f32.mrf.mxu0
        %v7210 = vadd.f32 0.0, %v7209
        %v7211 = vpop.f32.mrf.mxu0
        %7212 = vmatprep.mubr.bf16.mxu0 %v6714
        %7213 = vmatmul.mubr.bf16.gmra.mxu0 %v6524
        %v7214 = vpop.f32.mrf.mxu0
        %v7215 = vadd.f32 0.0, %v7214
        %v7216 = vpop.f32.mrf.mxu0
        %v7217 = vpop.f32.mrf.mxu0
        %v7218 = vadd.f32 0.0, %v7217
        %v7219 = vpop.f32.mrf.mxu0
        %7220 = vmatprep.mubr.bf16.mxu0 %v6726
        %7221 = vmatmul.mubr.bf16.gmra.mxu0 %v6525
        %v7222 = vpop.f32.mrf.mxu0
        %v7223 = vadd.f32 0.0, %v7222
        %v7224 = vpop.f32.mrf.mxu0
        %v7225 = vpop.f32.mrf.mxu0
        %v7226 = vadd.f32 0.0, %v7225
        %v7227 = vpop.f32.mrf.mxu0
        %7228 = vmatprep.mubr.bf16.mxu0 %v6738
        %7229 = vmatmul.mubr.bf16.gmra.mxu0 %v6526
        %v7230 = vpop.f32.mrf.mxu0
        %v7231 = vadd.f32 0.0, %v7230
        %v7232 = vpop.f32.mrf.mxu0
        %v7233 = vpop.f32.mrf.mxu0
        %v7234 = vadd.f32 0.0, %v7233
        %v7235 = vpop.f32.mrf.mxu0
        %7236 = vmatprep.mubr.bf16.mxu0 %v6750
        %7237 = vmatmul.mubr.bf16.gmra.mxu0 %v6527
        %v7238 = vpop.f32.mrf.mxu0
        %v7239 = vadd.f32 0.0, %v7238
        %v7240 = vpop.f32.mrf.mxu0
        %v7241 = vpop.f32.mrf.mxu0
        %v7242 = vadd.f32 0.0, %v7241
        %v7243 = vpop.f32.mrf.mxu0
        %7244 = vmatprep.mubr.bf16.mxu0 %v6762
        %7245 = vmatmul.mubr.bf16.gmra.mxu0 %v6528
        %v7246 = vpop.f32.mrf.mxu0
        %v7247 = vadd.f32 0.0, %v7246
        %v7248 = vpop.f32.mrf.mxu0
        %v7249 = vpop.f32.mrf.mxu0
        %v7250 = vadd.f32 0.0, %v7249
        %v7251 = vpop.f32.mrf.mxu0
        %7252 = vmatprep.mubr.bf16.mxu0 %v6774
        %7253 = vmatmul.mubr.bf16.gmra.mxu0 %v6529
        %v7254 = vpop.f32.mrf.mxu0
        %v7255 = vadd.f32 0.0, %v7254
        %v7256 = vpop.f32.mrf.mxu0
        %v7257 = vpop.f32.mrf.mxu0
        %v7258 = vadd.f32 0.0, %v7257
        %v7259 = vpop.f32.mrf.mxu0
        %7260 = vmatprep.mubr.bf16.mxu0 %v6786
        %7261 = vmatmul.mubr.bf16.gmra.mxu0 %v6530
        %v7262 = vpop.f32.mrf.mxu0
        %v7263 = vadd.f32 0.0, %v7262
        %v7264 = vpop.f32.mrf.mxu0
        %v7265 = vpop.f32.mrf.mxu0
        %v7266 = vadd.f32 0.0, %v7265
        %v7267 = vpop.f32.mrf.mxu0
        %7268 = vdwg.mxu0
        %7269 = vmatprep.subr.bf16.mxu0 0
        %7270 = vmatpush1.bf16.msra.mxu0 %v7083
        %7271 = vmatprep.subr.bf16.mxu0 0
        %7272 = vmatpush1.bf16.msra.mxu0 %v7082
        %7273 = vmatprep.subr.bf16.mxu0 0
        %7274 = vmatpush1.bf16.msra.mxu0 %v7081
        %7275 = vmatprep.subr.bf16.mxu0 0
        %7276 = vmatpush1.bf16.msra.mxu0 %v7080
        %7277 = vmatprep.subr.bf16.mxu0 0
        %7278 = vmatpush1.bf16.msra.mxu0 %v7079
        %7279 = vmatprep.subr.bf16.mxu0 0
        %7280 = vmatpush1.bf16.msra.mxu0 %v7078
        %7281 = vmatprep.subr.bf16.mxu0 0
        %7282 = vmatpush1.bf16.msra.mxu0 %v7077
        %7283 = vmatprep.subr.bf16.mxu0 0
        %7284 = vmatpush1.bf16.msra.mxu0 %v7076
        %7285 = vmatprep.subr.bf16.mxu0 0
        %7286 = vmatpush2.bf16.msra.mxu0 0
        %7287 = vmatprep.subr.bf16.mxu0 0
        %7288 = vmatpush2.bf16.msra.mxu0 0
        %7289 = vmatprep.subr.bf16.mxu0 0
        %7290 = vmatpush2.bf16.msra.mxu0 0
        %7291 = vmatprep.subr.bf16.mxu0 0
        %7292 = vmatpush2.bf16.msra.mxu0 0
        %7293 = vmatprep.subr.bf16.mxu0 0
        %7294 = vmatpush2.bf16.msra.mxu0 0
        %7295 = vmatprep.subr.bf16.mxu0 0
        %7296 = vmatpush2.bf16.msra.mxu0 0
        %7297 = vmatprep.subr.bf16.mxu0 0
        %7298 = vmatpush2.bf16.msra.mxu0 0
        %7299 = vmatprep.subr.bf16.mxu0 0
        %7300 = vmatpush2.bf16.msra.mxu0 0
        %7301 = vmatprep.mubr.bf16.mxu0 0
        %7302 = vmatmul.mubr.bf16.gmra.mxu0 %v6853
        %v7303 = vpop.f32.mrf.mxu0
        %v7304 = vadd.f32 %v7143, %v7303
        %v7305 = vpop.f32.mrf.mxu0
        %v7306 = vpop.f32.mrf.mxu0
        %v7307 = vadd.f32 %v7146, %v7306
        %v7308 = vpop.f32.mrf.mxu0
        %7309 = vmatprep.mubr.bf16.mxu0 0
        %7310 = vmatmul.mubr.bf16.gmra.mxu0 %v6856
        %v7311 = vpop.f32.mrf.mxu0
        %v7312 = vadd.f32 %v7151, %v7311
        %v7313 = vpop.f32.mrf.mxu0
        %v7314 = vpop.f32.mrf.mxu0
        %v7315 = vadd.f32 %v7154, %v7314
        %v7316 = vpop.f32.mrf.mxu0
        %7317 = vmatprep.mubr.bf16.mxu0 0
        %7318 = vmatmul.mubr.bf16.gmra.mxu0 %v6859
        %v7319 = vpop.f32.mrf.mxu0
        %v7320 = vadd.f32 %v7159, %v7319
        %v7321 = vpop.f32.mrf.mxu0
        %v7322 = vpop.f32.mrf.mxu0
        %v7323 = vadd.f32 %v7162, %v7322
        %v7324 = vpop.f32.mrf.mxu0
        %7325 = vmatprep.mubr.bf16.mxu0 0
        %7326 = vmatmul.mubr.bf16.gmra.mxu0 %v6862
        %v7327 = vpop.f32.mrf.mxu0
        %v7328 = vadd.f32 %v7167, %v7327
        %v7329 = vpop.f32.mrf.mxu0
        %v7330 = vpop.f32.mrf.mxu0
        %v7331 = vadd.f32 %v7170, %v7330
        %v7332 = vpop.f32.mrf.mxu0
        %7333 = vmatprep.mubr.bf16.mxu0 0
        %7334 = vmatmul.mubr.bf16.gmra.mxu0 %v6865
        %v7335 = vpop.f32.mrf.mxu0
        %v7336 = vadd.f32 %v7175, %v7335
        %v7337 = vpop.f32.mrf.mxu0
        %v7338 = vpop.f32.mrf.mxu0
        %v7339 = vadd.f32 %v7178, %v7338
        %v7340 = vpop.f32.mrf.mxu0
        %7341 = vmatprep.mubr.bf16.mxu0 0
        %7342 = vmatmul.mubr.bf16.gmra.mxu0 %v6868
        %v7343 = vpop.f32.mrf.mxu0
        %v7344 = vadd.f32 %v7183, %v7343
        %v7345 = vpop.f32.mrf.mxu0
        %v7346 = vpop.f32.mrf.mxu0
        %v7347 = vadd.f32 %v7186, %v7346
        %v7348 = vpop.f32.mrf.mxu0
        %7349 = vmatprep.mubr.bf16.mxu0 0
        %7350 = vmatmul.mubr.bf16.gmra.mxu0 %v6871
        %v7351 = vpop.f32.mrf.mxu0
        %v7352 = vadd.f32 %v7191, %v7351
        %v7353 = vpop.f32.mrf.mxu0
        %v7354 = vpop.f32.mrf.mxu0
        %v7355 = vadd.f32 %v7194, %v7354
        %v7356 = vpop.f32.mrf.mxu0
        %7357 = vmatprep.mubr.bf16.mxu0 0
        %7358 = vmatmul.mubr.bf16.gmra.mxu0 %v6874
        %v7359 = vpop.f32.mrf.mxu0
        %v7360 = vadd.f32 %v7199, %v7359
        %v7361 = vpop.f32.mrf.mxu0
        %v7362 = vpop.f32.mrf.mxu0
        %v7363 = vadd.f32 %v7202, %v7362
        %v7364 = vpop.f32.mrf.mxu0
        %7365 = vmatprep.mubr.bf16.mxu0 0
        %7366 = vmatmul.mubr.bf16.gmra.mxu0 %v6877
        %v7367 = vpop.f32.mrf.mxu0
        %v7368 = vadd.f32 %v7207, %v7367
        %v7369 = vpop.f32.mrf.mxu0
        %v7370 = vpop.f32.mrf.mxu0
        %v7371 = vadd.f32 %v7210, %v7370
        %v7372 = vpop.f32.mrf.mxu0
        %7373 = vmatprep.mubr.bf16.mxu0 0
        %7374 = vmatmul.mubr.bf16.gmra.mxu0 %v6880
        %v7375 = vpop.f32.mrf.mxu0
        %v7376 = vadd.f32 %v7215, %v7375
        %v7377 = vpop.f32.mrf.mxu0
        %v7378 = vpop.f32.mrf.mxu0
        %v7379 = vadd.f32 %v7218, %v7378
        %v7380 = vpop.f32.mrf.mxu0
        %7381 = vmatprep.mubr.bf16.mxu0 0
        %7382 = vmatmul.mubr.bf16.gmra.mxu0 %v6883
        %v7383 = vpop.f32.mrf.mxu0
        %v7384 = vadd.f32 %v7223, %v7383
        %v7385 = vpop.f32.mrf.mxu0
        %v7386 = vpop.f32.mrf.mxu0
        %v7387 = vadd.f32 %v7226, %v7386
        %v7388 = vpop.f32.mrf.mxu0
        %7389 = vmatprep.mubr.bf16.mxu0 0
        %7390 = vmatmul.mubr.bf16.gmra.mxu0 %v6886
        %v7391 = vpop.f32.mrf.mxu0
        %v7392 = vadd.f32 %v7231, %v7391
        %v7393 = vpop.f32.mrf.mxu0
        %v7394 = vpop.f32.mrf.mxu0
        %v7395 = vadd.f32 %v7234, %v7394
        %v7396 = vpop.f32.mrf.mxu0
        %7397 = vmatprep.mubr.bf16.mxu0 0
        %7398 = vmatmul.mubr.bf16.gmra.mxu0 %v6889
        %v7399 = vpop.f32.mrf.mxu0
        %v7400 = vadd.f32 %v7239, %v7399
        %v7401 = vpop.f32.mrf.mxu0
        %v7402 = vpop.f32.mrf.mxu0
        %v7403 = vadd.f32 %v7242, %v7402
        %v7404 = vpop.f32.mrf.mxu0
        %7405 = vmatprep.mubr.bf16.mxu0 0
        %7406 = vmatmul.mubr.bf16.gmra.mxu0 %v6892
        %v7407 = vpop.f32.mrf.mxu0
        %v7408 = vadd.f32 %v7247, %v7407
        %v7409 = vpop.f32.mrf.mxu0
        %v7410 = vpop.f32.mrf.mxu0
        %v7411 = vadd.f32 %v7250, %v7410
        %v7412 = vpop.f32.mrf.mxu0
        %7413 = vmatprep.mubr.bf16.mxu0 0
        %7414 = vmatmul.mubr.bf16.gmra.mxu0 %v6895
        %v7415 = vpop.f32.mrf.mxu0
        %v7416 = vadd.f32 %v7255, %v7415
        %v7417 = vpop.f32.mrf.mxu0
        %v7418 = vpop.f32.mrf.mxu0
        %v7419 = vadd.f32 %v7258, %v7418
        %v7420 = vpop.f32.mrf.mxu0
        %7421 = vmatprep.mubr.bf16.mxu0 0
        %7422 = vmatmul.mubr.bf16.gmra.mxu0 %v6898
        %v7423 = vpop.f32.mrf.mxu0
        %v7424 = vadd.f32 %v7263, %v7423
        %v7425 = vpop.f32.mrf.mxu0
        %v7426 = vpop.f32.mrf.mxu0
        %v7427 = vadd.f32 %v7266, %v7426
        %v7428 = vpop.f32.mrf.mxu0
        %7429 = vdwg.mxu0
        %v7430 = vadd.f32 %v6260, %v7304
        %v7431 = vadd.f32 %v6263, %v7307
        %v7432 = vadd.f32 %v6268, %v7312
        %v7433 = vadd.f32 %v6271, %v7315
        %v7434 = vadd.f32 %v6276, %v7320
        %v7435 = vadd.f32 %v6279, %v7323
        %v7436 = vadd.f32 %v6284, %v7328
        %v7437 = vadd.f32 %v6287, %v7331
        %v7438 = vadd.f32 %v6292, %v7336
        %v7439 = vadd.f32 %v6295, %v7339
        %v7440 = vadd.f32 %v6300, %v7344
        %v7441 = vadd.f32 %v6303, %v7347
        %v7442 = vadd.f32 %v6308, %v7352
        %v7443 = vadd.f32 %v6311, %v7355
        %v7444 = vadd.f32 %v6316, %v7360
        %v7445 = vadd.f32 %v6319, %v7363
        %v7446 = vadd.f32 %v6324, %v7368
        %v7447 = vadd.f32 %v6327, %v7371
        %v7448 = vadd.f32 %v6332, %v7376
        %v7449 = vadd.f32 %v6335, %v7379
        %v7450 = vadd.f32 %v6340, %v7384
        %v7451 = vadd.f32 %v6343, %v7387
        %v7452 = vadd.f32 %v6348, %v7392
        %v7453 = vadd.f32 %v6351, %v7395
        %v7454 = vadd.f32 %v6356, %v7400
        %v7455 = vadd.f32 %v6359, %v7403
        %v7456 = vadd.f32 %v6364, %v7408
        %v7457 = vadd.f32 %v6367, %v7411
        %v7458 = vadd.f32 %v6372, %v7416
        %v7459 = vadd.f32 %v6375, %v7419
        %v7460 = vadd.f32 %v6380, %v7424
        %v7461 = vadd.f32 %v6383, %v7427
        %v7462 = vld [vmem:[%s5] sm:$0x1]
        %v7464 = vlaneseq
        %v7465 = vshrl.u32 %v7464, 7
        %v7466 = vsub.s32 0, %v7465
        %v7467 = vrot.slane %v7462, %v7466
        %v7469 = vmul.f32 %v7430, %v7467
        %v7470 = vmul.f32 %v7431, %v7467
        %v7471 = vmul.f32 %v7432, %v7467
        %v7472 = vmul.f32 %v7433, %v7467
        %v7473 = vmul.f32 %v7434, %v7467
        %v7474 = vmul.f32 %v7435, %v7467
        %v7475 = vmul.f32 %v7436, %v7467
        %v7476 = vmul.f32 %v7437, %v7467
        %v7477 = vmul.f32 %v7438, %v7467
        %v7478 = vmul.f32 %v7439, %v7467
        %v7479 = vmul.f32 %v7440, %v7467
        %v7480 = vmul.f32 %v7441, %v7467
        %v7481 = vmul.f32 %v7442, %v7467
        %v7482 = vmul.f32 %v7443, %v7467
        %v7483 = vmul.f32 %v7444, %v7467
        %v7484 = vmul.f32 %v7445, %v7467
        %v7485 = vmul.f32 %v7446, %v7467
        %v7486 = vmul.f32 %v7447, %v7467
        %v7487 = vmul.f32 %v7448, %v7467
        %v7488 = vmul.f32 %v7449, %v7467
        %v7489 = vmul.f32 %v7450, %v7467
        %v7490 = vmul.f32 %v7451, %v7467
        %v7491 = vmul.f32 %v7452, %v7467
        %v7492 = vmul.f32 %v7453, %v7467
        %v7493 = vmul.f32 %v7454, %v7467
        %v7494 = vmul.f32 %v7455, %v7467
        %v7495 = vmul.f32 %v7456, %v7467
        %v7496 = vmul.f32 %v7457, %v7467
        %v7497 = vmul.f32 %v7458, %v7467
        %v7498 = vmul.f32 %v7459, %v7467
        %v7499 = vmul.f32 %v7460, %v7467
        %v7500 = vmul.f32 %v7461, %v7467
        %v7501 = vld [vmem:[%s6] sm:$0x1]
        %v7503 = vlaneseq
        %v7504 = vshrl.u32 %v7503, 7
        %v7505 = vsub.s32 0, %v7504
        %v7506 = vrot.slane %v7501, %v7505
        %v7508 = vadd.f32 %v7469, %v7506
        %v7509 = vadd.f32 %v7470, %v7506
        %v7510 = vadd.f32 %v7471, %v7506
        %v7511 = vadd.f32 %v7472, %v7506
        %v7512 = vadd.f32 %v7473, %v7506
        %v7513 = vadd.f32 %v7474, %v7506
        %v7514 = vadd.f32 %v7475, %v7506
        %v7515 = vadd.f32 %v7476, %v7506
        %v7516 = vadd.f32 %v7477, %v7506
        %v7517 = vadd.f32 %v7478, %v7506
        %v7518 = vadd.f32 %v7479, %v7506
        %v7519 = vadd.f32 %v7480, %v7506
        %v7520 = vadd.f32 %v7481, %v7506
        %v7521 = vadd.f32 %v7482, %v7506
        %v7522 = vadd.f32 %v7483, %v7506
        %v7523 = vadd.f32 %v7484, %v7506
        %v7524 = vadd.f32 %v7485, %v7506
        %v7525 = vadd.f32 %v7486, %v7506
        %v7526 = vadd.f32 %v7487, %v7506
        %v7527 = vadd.f32 %v7488, %v7506
        %v7528 = vadd.f32 %v7489, %v7506
        %v7529 = vadd.f32 %v7490, %v7506
        %v7530 = vadd.f32 %v7491, %v7506
        %v7531 = vadd.f32 %v7492, %v7506
        %v7532 = vadd.f32 %v7493, %v7506
        %v7533 = vadd.f32 %v7494, %v7506
        %v7534 = vadd.f32 %v7495, %v7506
        %v7535 = vadd.f32 %v7496, %v7506
        %v7536 = vadd.f32 %v7497, %v7506
        %v7537 = vadd.f32 %v7498, %v7506
        %v7538 = vadd.f32 %v7499, %v7506
        %v7539 = vadd.f32 %v7500, %v7506
        %v7540 = vld [vmem:[%s1072] sm:$0xf]
        %v7541 = vld [vmem:[%s1072 + $0x4] sm:$0xf]
        %v7542 = vld [vmem:[%s1072 + $0x8] sm:$0x1]
        %v7543 = vld [vmem:[%s1072 + $0xc] sm:$0xf]
        %v7544 = vld [vmem:[%s1072 + $0x10] sm:$0xf]
        %v7545 = vld [vmem:[%s1072 + $0x14] sm:$0x1]
        %v7546 = vld [vmem:[%s1072 + $0x18] sm:$0xf]
        %v7547 = vld [vmem:[%s1072 + $0x1c] sm:$0xf]
        %v7548 = vld [vmem:[%s1072 + $0x20] sm:$0x1]
        %v7549 = vld [vmem:[%s1072 + $0x24] sm:$0xf]
        %v7550 = vld [vmem:[%s1072 + $0x28] sm:$0xf]
        %v7551 = vld [vmem:[%s1072 + $0x2c] sm:$0x1]
        %v7552 = vld [vmem:[%s1072 + $0x30] sm:$0xf]
        %v7553 = vld [vmem:[%s1072 + $0x34] sm:$0xf]
        %v7554 = vld [vmem:[%s1072 + $0x38] sm:$0x1]
        %v7555 = vld [vmem:[%s1072 + $0x3c] sm:$0xf]
        %v7556 = vld [vmem:[%s1072 + $0x40] sm:$0xf]
        %v7557 = vld [vmem:[%s1072 + $0x44] sm:$0x1]
        %v7558 = vld [vmem:[%s1072 + $0x48] sm:$0xf]
        %v7559 = vld [vmem:[%s1072 + $0x4c] sm:$0xf]
        %v7560 = vld [vmem:[%s1072 + $0x50] sm:$0x1]
        %v7561 = vld [vmem:[%s1072 + $0x54] sm:$0xf]
        %v7562 = vld [vmem:[%s1072 + $0x58] sm:$0xf]
        %v7563 = vld [vmem:[%s1072 + $0x5c] sm:$0x1]
        %v7564 = vld [vmem:[%s1072 + $0x60] sm:$0xf]
        %v7565 = vld [vmem:[%s1072 + $0x64] sm:$0xf]
        %v7566 = vld [vmem:[%s1072 + $0x68] sm:$0x1]
        %v7567 = vld [vmem:[%s1072 + $0x6c] sm:$0xf]
        %v7568 = vld [vmem:[%s1072 + $0x70] sm:$0xf]
        %v7569 = vld [vmem:[%s1072 + $0x74] sm:$0x1]
        %v7570 = vld [vmem:[%s1072 + $0x78] sm:$0xf]
        %v7571 = vld [vmem:[%s1072 + $0x7c] sm:$0xf]
        %v7572 = vld [vmem:[%s1072 + $0x80] sm:$0x1]
        %v7573 = vld [vmem:[%s1072 + $0x84] sm:$0xf]
        %v7574 = vld [vmem:[%s1072 + $0x88] sm:$0xf]
        %v7575 = vld [vmem:[%s1072 + $0x8c] sm:$0x1]
        %v7576 = vld [vmem:[%s1072 + $0x90] sm:$0xf]
        %v7577 = vld [vmem:[%s1072 + $0x94] sm:$0xf]
        %v7578 = vld [vmem:[%s1072 + $0x98] sm:$0x1]
        %v7579 = vld [vmem:[%s1072 + $0x9c] sm:$0xf]
        %v7580 = vld [vmem:[%s1072 + $0xa0] sm:$0xf]
        %v7581 = vld [vmem:[%s1072 + $0xa4] sm:$0x1]
        %v7582 = vld [vmem:[%s1072 + $0xa8] sm:$0xf]
        %v7583 = vld [vmem:[%s1072 + $0xac] sm:$0xf]
        %v7584 = vld [vmem:[%s1072 + $0xb0] sm:$0x1]
        %v7585 = vld [vmem:[%s1072 + $0xb4] sm:$0xf]
        %v7586 = vld [vmem:[%s1072 + $0xb8] sm:$0xf]
        %v7587 = vld [vmem:[%s1072 + $0xbc] sm:$0x1]
        %vm7588 = vsmask.f32 3328
        %vm7589 = vsmask.f32 7440
        %vm7590 = vmor %vm7588, %vm7589
        %v7592 = vshrl.u32 %v7540, 16
        %v7594 = vrot.slane %v7592, 4
        %v7595 = vshll.u32 %v7540, 16
        %v7597 = vrot.slane %v7595, 5
        %v7598 = vor.u32 %v7594, %v7597
        %v7599 = vrot.slane %v7598, 4
        %v7601 = vshll.u32 %v7541, 16
        %v7603 = vrot.slane %v7601, 5
        %v7604 = vsel %vm7590, %v7599, %v7603
        %v7605 = vshrl.u32 %v7541, 16
        %v7607 = vrot.slane %v7605, 4
        %v7608 = vor.u32 %v7607, %v7603
        %v7609 = vrot.slane %v7608, 4
        %v7611 = vshll.u32 %v7542, 16
        %v7613 = vrot.slane %v7611, 5
        %v7614 = vsel %vm7590, %v7609, %v7613
        %v7616 = vshrl.u32 %v7543, 16
        %v7618 = vrot.slane %v7616, 4
        %v7619 = vshll.u32 %v7543, 16
        %v7621 = vrot.slane %v7619, 5
        %v7622 = vor.u32 %v7618, %v7621
        %v7623 = vrot.slane %v7622, 4
        %v7625 = vshll.u32 %v7544, 16
        %v7627 = vrot.slane %v7625, 5
        %v7628 = vsel %vm7590, %v7623, %v7627
        %v7629 = vshrl.u32 %v7544, 16
        %v7631 = vrot.slane %v7629, 4
        %v7632 = vor.u32 %v7631, %v7627
        %v7633 = vrot.slane %v7632, 4
        %v7635 = vshll.u32 %v7545, 16
        %v7637 = vrot.slane %v7635, 5
        %v7638 = vsel %vm7590, %v7633, %v7637
        %v7640 = vshrl.u32 %v7546, 16
        %v7642 = vrot.slane %v7640, 4
        %v7643 = vshll.u32 %v7546, 16
        %v7645 = vrot.slane %v7643, 5
        %v7646 = vor.u32 %v7642, %v7645
        %v7647 = vrot.slane %v7646, 4
        %v7649 = vshll.u32 %v7547, 16
        %v7651 = vrot.slane %v7649, 5
        %v7652 = vsel %vm7590, %v7647, %v7651
        %v7653 = vshrl.u32 %v7547, 16
        %v7655 = vrot.slane %v7653, 4
        %v7656 = vor.u32 %v7655, %v7651
        %v7657 = vrot.slane %v7656, 4
        %v7659 = vshll.u32 %v7548, 16
        %v7661 = vrot.slane %v7659, 5
        %v7662 = vsel %vm7590, %v7657, %v7661
        %v7664 = vshrl.u32 %v7549, 16
        %v7666 = vrot.slane %v7664, 4
        %v7667 = vshll.u32 %v7549, 16
        %v7669 = vrot.slane %v7667, 5
        %v7670 = vor.u32 %v7666, %v7669
        %v7671 = vrot.slane %v7670, 4
        %v7673 = vshll.u32 %v7550, 16
        %v7675 = vrot.slane %v7673, 5
        %v7676 = vsel %vm7590, %v7671, %v7675
        %v7677 = vshrl.u32 %v7550, 16
        %v7679 = vrot.slane %v7677, 4
        %v7680 = vor.u32 %v7679, %v7675
        %v7681 = vrot.slane %v7680, 4
        %v7683 = vshll.u32 %v7551, 16
        %v7685 = vrot.slane %v7683, 5
        %v7686 = vsel %vm7590, %v7681, %v7685
        %v7688 = vshrl.u32 %v7552, 16
        %v7690 = vrot.slane %v7688, 4
        %v7691 = vshll.u32 %v7552, 16
        %v7693 = vrot.slane %v7691, 5
        %v7694 = vor.u32 %v7690, %v7693
        %v7695 = vrot.slane %v7694, 4
        %v7697 = vshll.u32 %v7553, 16
        %v7699 = vrot.slane %v7697, 5
        %v7700 = vsel %vm7590, %v7695, %v7699
        %v7701 = vshrl.u32 %v7553, 16
        %v7703 = vrot.slane %v7701, 4
        %v7704 = vor.u32 %v7703, %v7699
        %v7705 = vrot.slane %v7704, 4
        %v7707 = vshll.u32 %v7554, 16
        %v7709 = vrot.slane %v7707, 5
        %v7710 = vsel %vm7590, %v7705, %v7709
        %v7712 = vshrl.u32 %v7555, 16
        %v7714 = vrot.slane %v7712, 4
        %v7715 = vshll.u32 %v7555, 16
        %v7717 = vrot.slane %v7715, 5
        %v7718 = vor.u32 %v7714, %v7717
        %v7719 = vrot.slane %v7718, 4
        %v7721 = vshll.u32 %v7556, 16
        %v7723 = vrot.slane %v7721, 5
        %v7724 = vsel %vm7590, %v7719, %v7723
        %v7725 = vshrl.u32 %v7556, 16
        %v7727 = vrot.slane %v7725, 4
        %v7728 = vor.u32 %v7727, %v7723
        %v7729 = vrot.slane %v7728, 4
        %v7731 = vshll.u32 %v7557, 16
        %v7733 = vrot.slane %v7731, 5
        %v7734 = vsel %vm7590, %v7729, %v7733
        %v7736 = vshrl.u32 %v7558, 16
        %v7738 = vrot.slane %v7736, 4
        %v7739 = vshll.u32 %v7558, 16
        %v7741 = vrot.slane %v7739, 5
        %v7742 = vor.u32 %v7738, %v7741
        %v7743 = vrot.slane %v7742, 4
        %v7745 = vshll.u32 %v7559, 16
        %v7747 = vrot.slane %v7745, 5
        %v7748 = vsel %vm7590, %v7743, %v7747
        %v7749 = vshrl.u32 %v7559, 16
        %v7751 = vrot.slane %v7749, 4
        %v7752 = vor.u32 %v7751, %v7747
        %v7753 = vrot.slane %v7752, 4
        %v7755 = vshll.u32 %v7560, 16
        %v7757 = vrot.slane %v7755, 5
        %v7758 = vsel %vm7590, %v7753, %v7757
        %v7760 = vshrl.u32 %v7561, 16
        %v7762 = vrot.slane %v7760, 4
        %v7763 = vshll.u32 %v7561, 16
        %v7765 = vrot.slane %v7763, 5
        %v7766 = vor.u32 %v7762, %v7765
        %v7767 = vrot.slane %v7766, 4
        %v7769 = vshll.u32 %v7562, 16
        %v7771 = vrot.slane %v7769, 5
        %v7772 = vsel %vm7590, %v7767, %v7771
        %v7773 = vshrl.u32 %v7562, 16
        %v7775 = vrot.slane %v7773, 4
        %v7776 = vor.u32 %v7775, %v7771
        %v7777 = vrot.slane %v7776, 4
        %v7779 = vshll.u32 %v7563, 16
        %v7781 = vrot.slane %v7779, 5
        %v7782 = vsel %vm7590, %v7777, %v7781
        %v7784 = vshrl.u32 %v7564, 16
        %v7786 = vrot.slane %v7784, 4
        %v7787 = vshll.u32 %v7564, 16
        %v7789 = vrot.slane %v7787, 5
        %v7790 = vor.u32 %v7786, %v7789
        %v7791 = vrot.slane %v7790, 4
        %v7793 = vshll.u32 %v7565, 16
        %v7795 = vrot.slane %v7793, 5
        %v7796 = vsel %vm7590, %v7791, %v7795
        %v7797 = vshrl.u32 %v7565, 16
        %v7799 = vrot.slane %v7797, 4
        %v7800 = vor.u32 %v7799, %v7795
        %v7801 = vrot.slane %v7800, 4
        %v7803 = vshll.u32 %v7566, 16
        %v7805 = vrot.slane %v7803, 5
        %v7806 = vsel %vm7590, %v7801, %v7805
        %v7808 = vshrl.u32 %v7567, 16
        %v7810 = vrot.slane %v7808, 4
        %v7811 = vshll.u32 %v7567, 16
        %v7813 = vrot.slane %v7811, 5
        %v7814 = vor.u32 %v7810, %v7813
        %v7815 = vrot.slane %v7814, 4
        %v7817 = vshll.u32 %v7568, 16
        %v7819 = vrot.slane %v7817, 5
        %v7820 = vsel %vm7590, %v7815, %v7819
        %v7821 = vshrl.u32 %v7568, 16
        %v7823 = vrot.slane %v7821, 4
        %v7824 = vor.u32 %v7823, %v7819
        %v7825 = vrot.slane %v7824, 4
        %v7827 = vshll.u32 %v7569, 16
        %v7829 = vrot.slane %v7827, 5
        %v7830 = vsel %vm7590, %v7825, %v7829
        %v7832 = vshrl.u32 %v7570, 16
        %v7834 = vrot.slane %v7832, 4
        %v7835 = vshll.u32 %v7570, 16
        %v7837 = vrot.slane %v7835, 5
        %v7838 = vor.u32 %v7834, %v7837
        %v7839 = vrot.slane %v7838, 4
        %v7841 = vshll.u32 %v7571, 16
        %v7843 = vrot.slane %v7841, 5
        %v7844 = vsel %vm7590, %v7839, %v7843
        %v7845 = vshrl.u32 %v7571, 16
        %v7847 = vrot.slane %v7845, 4
        %v7848 = vor.u32 %v7847, %v7843
        %v7849 = vrot.slane %v7848, 4
        %v7851 = vshll.u32 %v7572, 16
        %v7853 = vrot.slane %v7851, 5
        %v7854 = vsel %vm7590, %v7849, %v7853
        %v7856 = vshrl.u32 %v7573, 16
        %v7858 = vrot.slane %v7856, 4
        %v7859 = vshll.u32 %v7573, 16
        %v7861 = vrot.slane %v7859, 5
        %v7862 = vor.u32 %v7858, %v7861
        %v7863 = vrot.slane %v7862, 4
        %v7865 = vshll.u32 %v7574, 16
        %v7867 = vrot.slane %v7865, 5
        %v7868 = vsel %vm7590, %v7863, %v7867
        %v7869 = vshrl.u32 %v7574, 16
        %v7871 = vrot.slane %v7869, 4
        %v7872 = vor.u32 %v7871, %v7867
        %v7873 = vrot.slane %v7872, 4
        %v7875 = vshll.u32 %v7575, 16
        %v7877 = vrot.slane %v7875, 5
        %v7878 = vsel %vm7590, %v7873, %v7877
        %v7880 = vshrl.u32 %v7576, 16
        %v7882 = vrot.slane %v7880, 4
        %v7883 = vshll.u32 %v7576, 16
        %v7885 = vrot.slane %v7883, 5
        %v7886 = vor.u32 %v7882, %v7885
        %v7887 = vrot.slane %v7886, 4
        %v7889 = vshll.u32 %v7577, 16
        %v7891 = vrot.slane %v7889, 5
        %v7892 = vsel %vm7590, %v7887, %v7891
        %v7893 = vshrl.u32 %v7577, 16
        %v7895 = vrot.slane %v7893, 4
        %v7896 = vor.u32 %v7895, %v7891
        %v7897 = vrot.slane %v7896, 4
        %v7899 = vshll.u32 %v7578, 16
        %v7901 = vrot.slane %v7899, 5
        %v7902 = vsel %vm7590, %v7897, %v7901
        %v7904 = vshrl.u32 %v7579, 16
        %v7906 = vrot.slane %v7904, 4
        %v7907 = vshll.u32 %v7579, 16
        %v7909 = vrot.slane %v7907, 5
        %v7910 = vor.u32 %v7906, %v7909
        %v7911 = vrot.slane %v7910, 4
        %v7913 = vshll.u32 %v7580, 16
        %v7915 = vrot.slane %v7913, 5
        %v7916 = vsel %vm7590, %v7911, %v7915
        %v7917 = vshrl.u32 %v7580, 16
        %v7919 = vrot.slane %v7917, 4
        %v7920 = vor.u32 %v7919, %v7915
        %v7921 = vrot.slane %v7920, 4
        %v7923 = vshll.u32 %v7581, 16
        %v7925 = vrot.slane %v7923, 5
        %v7926 = vsel %vm7590, %v7921, %v7925
        %v7928 = vshrl.u32 %v7582, 16
        %v7930 = vrot.slane %v7928, 4
        %v7931 = vshll.u32 %v7582, 16
        %v7933 = vrot.slane %v7931, 5
        %v7934 = vor.u32 %v7930, %v7933
        %v7935 = vrot.slane %v7934, 4
        %v7937 = vshll.u32 %v7583, 16
        %v7939 = vrot.slane %v7937, 5
        %v7940 = vsel %vm7590, %v7935, %v7939
        %v7941 = vshrl.u32 %v7583, 16
        %v7943 = vrot.slane %v7941, 4
        %v7944 = vor.u32 %v7943, %v7939
        %v7945 = vrot.slane %v7944, 4
        %v7947 = vshll.u32 %v7584, 16
        %v7949 = vrot.slane %v7947, 5
        %v7950 = vsel %vm7590, %v7945, %v7949
        %v7952 = vshrl.u32 %v7585, 16
        %v7954 = vrot.slane %v7952, 4
        %v7955 = vshll.u32 %v7585, 16
        %v7957 = vrot.slane %v7955, 5
        %v7958 = vor.u32 %v7954, %v7957
        %v7959 = vrot.slane %v7958, 4
        %v7961 = vshll.u32 %v7586, 16
        %v7963 = vrot.slane %v7961, 5
        %v7964 = vsel %vm7590, %v7959, %v7963
        %v7965 = vshrl.u32 %v7586, 16
        %v7967 = vrot.slane %v7965, 4
        %v7968 = vor.u32 %v7967, %v7963
        %v7969 = vrot.slane %v7968, 4
        %v7971 = vshll.u32 %v7587, 16
        %v7973 = vrot.slane %v7971, 5
        %v7974 = vsel %vm7590, %v7969, %v7973
        %v7975 = vld [vmem:[%s7] sm:$0xf]
        %v7976 = vld [vmem:[%s7 + $0x4] sm:$0xf]
        %v7977 = vld [vmem:[%s7 + $0x8] sm:$0xf]
        %v7978 = vld [vmem:[%s7 + $0xc] sm:$0xf]
        %v7979 = vld [vmem:[%s7 + $0x10] sm:$0xf]
        %v7980 = vld [vmem:[%s7 + $0x14] sm:$0xf]
        %v7981 = vld [vmem:[%s7 + $0x18] sm:$0xf]
        %v7982 = vld [vmem:[%s7 + $0x1c] sm:$0xf]
        %v7983 = vld [vmem:[%s7 + $0x20] sm:$0xf]
        %v7984 = vld [vmem:[%s7 + $0x24] sm:$0xf]
        %v7985 = vld [vmem:[%s7 + $0x28] sm:$0xf]
        %v7986 = vld [vmem:[%s7 + $0x2c] sm:$0xf]
        %v7987 = vld [vmem:[%s7 + $0x30] sm:$0xf]
        %v7988 = vld [vmem:[%s7 + $0x34] sm:$0xf]
        %v7989 = vld [vmem:[%s7 + $0x38] sm:$0xf]
        %v7990 = vld [vmem:[%s7 + $0x3c] sm:$0xf]
        %v7991 = vunpack.c.l.b16 %v7604
        %v7992 = vunpack.c.l.b16 %v7614
        %v7993 = vunpack.c.l.b16 %v7628
        %v7994 = vunpack.c.l.b16 %v7638
        %v7995 = vunpack.c.l.b16 %v7652
        %v7996 = vunpack.c.l.b16 %v7662
        %v7997 = vunpack.c.l.b16 %v7676
        %v7998 = vunpack.c.l.b16 %v7686
        %v7999 = vunpack.c.l.b16 %v7700
        %v8000 = vunpack.c.l.b16 %v7710
        %v8001 = vunpack.c.l.b16 %v7724
        %v8002 = vunpack.c.l.b16 %v7734
        %v8003 = vunpack.c.l.b16 %v7748
        %v8004 = vunpack.c.l.b16 %v7758
        %v8005 = vunpack.c.l.b16 %v7772
        %v8006 = vunpack.c.l.b16 %v7782
        %v8007 = vunpack.c.l.b16 %v7796
        %v8008 = vunpack.c.l.b16 %v7806
        %v8009 = vunpack.c.l.b16 %v7820
        %v8010 = vunpack.c.l.b16 %v7830
        %v8011 = vunpack.c.l.b16 %v7844
        %v8012 = vunpack.c.l.b16 %v7854
        %v8013 = vunpack.c.l.b16 %v7868
        %v8014 = vunpack.c.l.b16 %v7878
        %v8015 = vunpack.c.l.b16 %v7892
        %v8016 = vunpack.c.l.b16 %v7902
        %v8017 = vunpack.c.l.b16 %v7916
        %v8018 = vunpack.c.l.b16 %v7926
        %v8019 = vunpack.c.l.b16 %v7940
        %v8020 = vunpack.c.l.b16 %v7950
        %v8021 = vunpack.c.l.b16 %v7964
        %v8022 = vunpack.c.l.b16 %v7974
        %v8023 = vpack.c.b16 %v7992, %v7991
        %v8024 = vpack.c.b16 %v7994, %v7993
        %v8025 = vpack.c.b16 %v7996, %v7995
        %v8026 = vpack.c.b16 %v7998, %v7997
        %v8027 = vpack.c.b16 %v8000, %v7999
        %v8028 = vpack.c.b16 %v8002, %v8001
        %v8029 = vpack.c.b16 %v8004, %v8003
        %v8030 = vpack.c.b16 %v8006, %v8005
        %v8031 = vpack.c.b16 %v8008, %v8007
        %v8032 = vpack.c.b16 %v8010, %v8009
        %v8033 = vpack.c.b16 %v8012, %v8011
        %v8034 = vpack.c.b16 %v8014, %v8013
        %v8035 = vpack.c.b16 %v8016, %v8015
        %v8036 = vpack.c.b16 %v8018, %v8017
        %v8037 = vpack.c.b16 %v8020, %v8019
        %v8038 = vpack.c.b16 %v8022, %v8021
        %v8071 = vunpack.c.l.b16 %v7975
        %v8072 = vunpack.c.l.b16 %v7976
        %v8073 = vunpack.c.l.b16 %v7977
        %v8074 = vunpack.c.l.b16 %v7978
        %v8075 = vunpack.c.l.b16 %v7979
        %v8076 = vunpack.c.l.b16 %v7980
        %v8077 = vunpack.c.l.b16 %v7981
        %v8078 = vunpack.c.l.b16 %v7982
        %v8079 = vunpack.c.l.b16 %v7983
        %v8080 = vunpack.c.l.b16 %v7984
        %v8081 = vunpack.c.l.b16 %v7985
        %v8082 = vunpack.c.l.b16 %v7986
        %v8083 = vunpack.c.l.b16 %v7987
        %v8084 = vunpack.c.l.b16 %v7988
        %v8085 = vunpack.c.l.b16 %v7989
        %v8086 = vunpack.c.l.b16 %v7990
        %v8087 = vpack.c.b16 %v8072, %v8071
        %v8088 = vpack.c.b16 %v8074, %v8073
        %v8089 = vpack.c.b16 %v8076, %v8075
        %v8090 = vpack.c.b16 %v8078, %v8077
        %v8091 = vpack.c.b16 %v8080, %v8079
        %v8092 = vpack.c.b16 %v8082, %v8081
        %v8093 = vpack.c.b16 %v8084, %v8083
        %v8094 = vpack.c.b16 %v8086, %v8085
        %8103 = vmatprep.subr.bf16.mxu0 0
        %8104 = vmatpush1.bf16.msra.mxu0 %v8094
        %8105 = vmatprep.subr.bf16.mxu0 0
        %8106 = vmatpush1.bf16.msra.mxu0 %v8093
        %8107 = vmatprep.subr.bf16.mxu0 0
        %8108 = vmatpush1.bf16.msra.mxu0 %v8092
        %8109 = vmatprep.subr.bf16.mxu0 0
        %8110 = vmatpush1.bf16.msra.mxu0 %v8091
        %8111 = vmatprep.subr.bf16.mxu0 0
        %8112 = vmatpush1.bf16.msra.mxu0 %v8090
        %8113 = vmatprep.subr.bf16.mxu0 0
        %8114 = vmatpush1.bf16.msra.mxu0 %v8089
        %8115 = vmatprep.subr.bf16.mxu0 0
        %8116 = vmatpush1.bf16.msra.mxu0 %v8088
        %8117 = vmatprep.subr.bf16.mxu0 0
        %8118 = vmatpush1.bf16.msra.mxu0 %v8087
        %8119 = vmatprep.subr.bf16.mxu0 0
        %8120 = vmatpush2.bf16.msra.mxu0 0
        %8121 = vmatprep.subr.bf16.mxu0 0
        %8122 = vmatpush2.bf16.msra.mxu0 0
        %8123 = vmatprep.subr.bf16.mxu0 0
        %8124 = vmatpush2.bf16.msra.mxu0 0
        %8125 = vmatprep.subr.bf16.mxu0 0
        %8126 = vmatpush2.bf16.msra.mxu0 0
        %8127 = vmatprep.subr.bf16.mxu0 0
        %8128 = vmatpush2.bf16.msra.mxu0 0
        %8129 = vmatprep.subr.bf16.mxu0 0
        %8130 = vmatpush2.bf16.msra.mxu0 0
        %8131 = vmatprep.subr.bf16.mxu0 0
        %8132 = vmatpush2.bf16.msra.mxu0 0
        %8133 = vmatprep.subr.bf16.mxu0 0
        %8134 = vmatpush2.bf16.msra.mxu0 0
        %8135 = vmatprep.mubr.bf16.mxu0 0
        %8136 = vmatmul.mubr.bf16.gmra.mxu0 %v8023
        %v8137 = vpop.f32.mrf.mxu0
        %v8138 = vadd.f32 0.0, %v8137
        %v8139 = vpop.f32.mrf.mxu0
        %v8140 = vpop.f32.mrf.mxu0
        %v8141 = vadd.f32 0.0, %v8140
        %v8142 = vpop.f32.mrf.mxu0
        %8143 = vmatprep.mubr.bf16.mxu0 0
        %8144 = vmatmul.mubr.bf16.gmra.mxu0 %v8024
        %v8145 = vpop.f32.mrf.mxu0
        %v8146 = vadd.f32 0.0, %v8145
        %v8147 = vpop.f32.mrf.mxu0
        %v8148 = vpop.f32.mrf.mxu0
        %v8149 = vadd.f32 0.0, %v8148
        %v8150 = vpop.f32.mrf.mxu0
        %8151 = vmatprep.mubr.bf16.mxu0 0
        %8152 = vmatmul.mubr.bf16.gmra.mxu0 %v8025
        %v8153 = vpop.f32.mrf.mxu0
        %v8154 = vadd.f32 0.0, %v8153
        %v8155 = vpop.f32.mrf.mxu0
        %v8156 = vpop.f32.mrf.mxu0
        %v8157 = vadd.f32 0.0, %v8156
        %v8158 = vpop.f32.mrf.mxu0
        %8159 = vmatprep.mubr.bf16.mxu0 0
        %8160 = vmatmul.mubr.bf16.gmra.mxu0 %v8026
        %v8161 = vpop.f32.mrf.mxu0
        %v8162 = vadd.f32 0.0, %v8161
        %v8163 = vpop.f32.mrf.mxu0
        %v8164 = vpop.f32.mrf.mxu0
        %v8165 = vadd.f32 0.0, %v8164
        %v8166 = vpop.f32.mrf.mxu0
        %8167 = vmatprep.mubr.bf16.mxu0 0
        %8168 = vmatmul.mubr.bf16.gmra.mxu0 %v8027
        %v8169 = vpop.f32.mrf.mxu0
        %v8170 = vadd.f32 0.0, %v8169
        %v8171 = vpop.f32.mrf.mxu0
        %v8172 = vpop.f32.mrf.mxu0
        %v8173 = vadd.f32 0.0, %v8172
        %v8174 = vpop.f32.mrf.mxu0
        %8175 = vmatprep.mubr.bf16.mxu0 0
        %8176 = vmatmul.mubr.bf16.gmra.mxu0 %v8028
        %v8177 = vpop.f32.mrf.mxu0
        %v8178 = vadd.f32 0.0, %v8177
        %v8179 = vpop.f32.mrf.mxu0
        %v8180 = vpop.f32.mrf.mxu0
        %v8181 = vadd.f32 0.0, %v8180
        %v8182 = vpop.f32.mrf.mxu0
        %8183 = vmatprep.mubr.bf16.mxu0 0
        %8184 = vmatmul.mubr.bf16.gmra.mxu0 %v8029
        %v8185 = vpop.f32.mrf.mxu0
        %v8186 = vadd.f32 0.0, %v8185
        %v8187 = vpop.f32.mrf.mxu0
        %v8188 = vpop.f32.mrf.mxu0
        %v8189 = vadd.f32 0.0, %v8188
        %v8190 = vpop.f32.mrf.mxu0
        %8191 = vmatprep.mubr.bf16.mxu0 0
        %8192 = vmatmul.mubr.bf16.gmra.mxu0 %v8030
        %v8193 = vpop.f32.mrf.mxu0
        %v8194 = vadd.f32 0.0, %v8193
        %v8195 = vpop.f32.mrf.mxu0
        %v8196 = vpop.f32.mrf.mxu0
        %v8197 = vadd.f32 0.0, %v8196
        %v8198 = vpop.f32.mrf.mxu0
        %8199 = vmatprep.mubr.bf16.mxu0 0
        %8200 = vmatmul.mubr.bf16.gmra.mxu0 %v8031
        %v8201 = vpop.f32.mrf.mxu0
        %v8202 = vadd.f32 0.0, %v8201
        %v8203 = vpop.f32.mrf.mxu0
        %v8204 = vpop.f32.mrf.mxu0
        %v8205 = vadd.f32 0.0, %v8204
        %v8206 = vpop.f32.mrf.mxu0
        %8207 = vmatprep.mubr.bf16.mxu0 0
        %8208 = vmatmul.mubr.bf16.gmra.mxu0 %v8032
        %v8209 = vpop.f32.mrf.mxu0
        %v8210 = vadd.f32 0.0, %v8209
        %v8211 = vpop.f32.mrf.mxu0
        %v8212 = vpop.f32.mrf.mxu0
        %v8213 = vadd.f32 0.0, %v8212
        %v8214 = vpop.f32.mrf.mxu0
        %8215 = vmatprep.mubr.bf16.mxu0 0
        %8216 = vmatmul.mubr.bf16.gmra.mxu0 %v8033
        %v8217 = vpop.f32.mrf.mxu0
        %v8218 = vadd.f32 0.0, %v8217
        %v8219 = vpop.f32.mrf.mxu0
        %v8220 = vpop.f32.mrf.mxu0
        %v8221 = vadd.f32 0.0, %v8220
        %v8222 = vpop.f32.mrf.mxu0
        %8223 = vmatprep.mubr.bf16.mxu0 0
        %8224 = vmatmul.mubr.bf16.gmra.mxu0 %v8034
        %v8225 = vpop.f32.mrf.mxu0
        %v8226 = vadd.f32 0.0, %v8225
        %v8227 = vpop.f32.mrf.mxu0
        %v8228 = vpop.f32.mrf.mxu0
        %v8229 = vadd.f32 0.0, %v8228
        %v8230 = vpop.f32.mrf.mxu0
        %8231 = vmatprep.mubr.bf16.mxu0 0
        %8232 = vmatmul.mubr.bf16.gmra.mxu0 %v8035
        %v8233 = vpop.f32.mrf.mxu0
        %v8234 = vadd.f32 0.0, %v8233
        %v8235 = vpop.f32.mrf.mxu0
        %v8236 = vpop.f32.mrf.mxu0
        %v8237 = vadd.f32 0.0, %v8236
        %v8238 = vpop.f32.mrf.mxu0
        %8239 = vmatprep.mubr.bf16.mxu0 0
        %8240 = vmatmul.mubr.bf16.gmra.mxu0 %v8036
        %v8241 = vpop.f32.mrf.mxu0
        %v8242 = vadd.f32 0.0, %v8241
        %v8243 = vpop.f32.mrf.mxu0
        %v8244 = vpop.f32.mrf.mxu0
        %v8245 = vadd.f32 0.0, %v8244
        %v8246 = vpop.f32.mrf.mxu0
        %8247 = vmatprep.mubr.bf16.mxu0 0
        %8248 = vmatmul.mubr.bf16.gmra.mxu0 %v8037
        %v8249 = vpop.f32.mrf.mxu0
        %v8250 = vadd.f32 0.0, %v8249
        %v8251 = vpop.f32.mrf.mxu0
        %v8252 = vpop.f32.mrf.mxu0
        %v8253 = vadd.f32 0.0, %v8252
        %v8254 = vpop.f32.mrf.mxu0
        %8255 = vmatprep.mubr.bf16.mxu0 0
        %8256 = vmatmul.mubr.bf16.gmra.mxu0 %v8038
        %v8257 = vpop.f32.mrf.mxu0
        %v8258 = vadd.f32 0.0, %v8257
        %v8259 = vpop.f32.mrf.mxu0
        %v8260 = vpop.f32.mrf.mxu0
        %v8261 = vadd.f32 0.0, %v8260
        %v8262 = vpop.f32.mrf.mxu0
        %8263 = vdwg.mxu0
        %v8264 = vld [vmem:[%s8] sm:$0x1]
        %v8266 = vlaneseq
        %v8267 = vshrl.u32 %v8266, 7
        %v8268 = vsub.s32 0, %v8267
        %v8269 = vrot.slane %v8264, %v8268
        %v8271 = vmul.f32 %v8138, %v8269
        %v8272 = vmul.f32 %v8141, %v8269
        %v8273 = vmul.f32 %v8146, %v8269
        %v8274 = vmul.f32 %v8149, %v8269
        %v8275 = vmul.f32 %v8154, %v8269
        %v8276 = vmul.f32 %v8157, %v8269
        %v8277 = vmul.f32 %v8162, %v8269
        %v8278 = vmul.f32 %v8165, %v8269
        %v8279 = vmul.f32 %v8170, %v8269
        %v8280 = vmul.f32 %v8173, %v8269
        %v8281 = vmul.f32 %v8178, %v8269
        %v8282 = vmul.f32 %v8181, %v8269
        %v8283 = vmul.f32 %v8186, %v8269
        %v8284 = vmul.f32 %v8189, %v8269
        %v8285 = vmul.f32 %v8194, %v8269
        %v8286 = vmul.f32 %v8197, %v8269
        %v8287 = vmul.f32 %v8202, %v8269
        %v8288 = vmul.f32 %v8205, %v8269
        %v8289 = vmul.f32 %v8210, %v8269
        %v8290 = vmul.f32 %v8213, %v8269
        %v8291 = vmul.f32 %v8218, %v8269
        %v8292 = vmul.f32 %v8221, %v8269
        %v8293 = vmul.f32 %v8226, %v8269
        %v8294 = vmul.f32 %v8229, %v8269
        %v8295 = vmul.f32 %v8234, %v8269
        %v8296 = vmul.f32 %v8237, %v8269
        %v8297 = vmul.f32 %v8242, %v8269
        %v8298 = vmul.f32 %v8245, %v8269
        %v8299 = vmul.f32 %v8250, %v8269
        %v8300 = vmul.f32 %v8253, %v8269
        %v8301 = vmul.f32 %v8258, %v8269
        %v8302 = vmul.f32 %v8261, %v8269
        %v8303 = vld [vmem:[%s9] sm:$0x1]
        %v8305 = vlaneseq
        %v8306 = vshrl.u32 %v8305, 7
        %v8307 = vsub.s32 0, %v8306
        %v8308 = vrot.slane %v8303, %v8307
        %v8310 = vadd.f32 %v8271, %v8308
        %v8311 = vadd.f32 %v8272, %v8308
        %v8312 = vadd.f32 %v8273, %v8308
        %v8313 = vadd.f32 %v8274, %v8308
        %v8314 = vadd.f32 %v8275, %v8308
        %v8315 = vadd.f32 %v8276, %v8308
        %v8316 = vadd.f32 %v8277, %v8308
        %v8317 = vadd.f32 %v8278, %v8308
        %v8318 = vadd.f32 %v8279, %v8308
        %v8319 = vadd.f32 %v8280, %v8308
        %v8320 = vadd.f32 %v8281, %v8308
        %v8321 = vadd.f32 %v8282, %v8308
        %v8322 = vadd.f32 %v8283, %v8308
        %v8323 = vadd.f32 %v8284, %v8308
        %v8324 = vadd.f32 %v8285, %v8308
        %v8325 = vadd.f32 %v8286, %v8308
        %v8326 = vadd.f32 %v8287, %v8308
        %v8327 = vadd.f32 %v8288, %v8308
        %v8328 = vadd.f32 %v8289, %v8308
        %v8329 = vadd.f32 %v8290, %v8308
        %v8330 = vadd.f32 %v8291, %v8308
        %v8331 = vadd.f32 %v8292, %v8308
        %v8332 = vadd.f32 %v8293, %v8308
        %v8333 = vadd.f32 %v8294, %v8308
        %v8334 = vadd.f32 %v8295, %v8308
        %v8335 = vadd.f32 %v8296, %v8308
        %v8336 = vadd.f32 %v8297, %v8308
        %v8337 = vadd.f32 %v8298, %v8308
        %v8338 = vadd.f32 %v8299, %v8308
        %v8339 = vadd.f32 %v8300, %v8308
        %v8340 = vadd.f32 %v8301, %v8308
        %v8341 = vadd.f32 %v8302, %v8308
        %v8342 = vadd.f32 %v7508, %v8310
        %v8343 = vadd.f32 %v7509, %v8311
        %v8344 = vadd.f32 %v7510, %v8312
        %v8345 = vadd.f32 %v7511, %v8313
        %v8346 = vadd.f32 %v7512, %v8314
        %v8347 = vadd.f32 %v7513, %v8315
        %v8348 = vadd.f32 %v7514, %v8316
        %v8349 = vadd.f32 %v7515, %v8317
        %v8350 = vadd.f32 %v7516, %v8318
        %v8351 = vadd.f32 %v7517, %v8319
        %v8352 = vadd.f32 %v7518, %v8320
        %v8353 = vadd.f32 %v7519, %v8321
        %v8354 = vadd.f32 %v7520, %v8322
        %v8355 = vadd.f32 %v7521, %v8323
        %v8356 = vadd.f32 %v7522, %v8324
        %v8357 = vadd.f32 %v7523, %v8325
        %v8358 = vadd.f32 %v7524, %v8326
        %v8359 = vadd.f32 %v7525, %v8327
        %v8360 = vadd.f32 %v7526, %v8328
        %v8361 = vadd.f32 %v7527, %v8329
        %v8362 = vadd.f32 %v7528, %v8330
        %v8363 = vadd.f32 %v7529, %v8331
        %v8364 = vadd.f32 %v7530, %v8332
        %v8365 = vadd.f32 %v7531, %v8333
        %v8366 = vadd.f32 %v7532, %v8334
        %v8367 = vadd.f32 %v7533, %v8335
        %v8368 = vadd.f32 %v7534, %v8336
        %v8369 = vadd.f32 %v7535, %v8337
        %v8370 = vadd.f32 %v7536, %v8338
        %v8371 = vadd.f32 %v7537, %v8339
        %v8372 = vadd.f32 %v7538, %v8340
        %v8373 = vadd.f32 %v7539, %v8341
        %v8374 = vmax.f32 %v8342, 0.0
        %v8375 = vmax.f32 %v8343, 0.0
        %v8376 = vmax.f32 %v8344, 0.0
        %v8377 = vmax.f32 %v8345, 0.0
        %v8378 = vmax.f32 %v8346, 0.0
        %v8379 = vmax.f32 %v8347, 0.0
        %v8380 = vmax.f32 %v8348, 0.0
        %v8381 = vmax.f32 %v8349, 0.0
        %v8382 = vmax.f32 %v8350, 0.0
        %v8383 = vmax.f32 %v8351, 0.0
        %v8384 = vmax.f32 %v8352, 0.0
        %v8385 = vmax.f32 %v8353, 0.0
        %v8386 = vmax.f32 %v8354, 0.0
        %v8387 = vmax.f32 %v8355, 0.0
        %v8388 = vmax.f32 %v8356, 0.0
        %v8389 = vmax.f32 %v8357, 0.0
        %v8390 = vmax.f32 %v8358, 0.0
        %v8391 = vmax.f32 %v8359, 0.0
        %v8392 = vmax.f32 %v8360, 0.0
        %v8393 = vmax.f32 %v8361, 0.0
        %v8394 = vmax.f32 %v8362, 0.0
        %v8395 = vmax.f32 %v8363, 0.0
        %v8396 = vmax.f32 %v8364, 0.0
        %v8397 = vmax.f32 %v8365, 0.0
        %v8398 = vmax.f32 %v8366, 0.0
        %v8399 = vmax.f32 %v8367, 0.0
        %v8400 = vmax.f32 %v8368, 0.0
        %v8401 = vmax.f32 %v8369, 0.0
        %v8402 = vmax.f32 %v8370, 0.0
        %v8403 = vmax.f32 %v8371, 0.0
        %v8404 = vmax.f32 %v8372, 0.0
        %v8405 = vmax.f32 %v8373, 0.0
        %8406 = vst [vmem:[%s367] sm:$0xff] %v8374
        %8407 = vst [vmem:[%s367 + $0x8] sm:$0xff] %v8375
        %8408 = vst [vmem:[%s367 + $0x10] sm:$0xff] %v8376
        %8409 = vst [vmem:[%s367 + $0x18] sm:$0xff] %v8377
        %8410 = vst [vmem:[%s367 + $0x20] sm:$0xff] %v8378
        %8411 = vst [vmem:[%s367 + $0x28] sm:$0xff] %v8379
        %8412 = vst [vmem:[%s367 + $0x30] sm:$0xff] %v8380
        %8413 = vst [vmem:[%s367 + $0x38] sm:$0xff] %v8381
        %8414 = vst [vmem:[%s367 + $0x40] sm:$0xff] %v8382
        %8415 = vst [vmem:[%s367 + $0x48] sm:$0xff] %v8383
        %8416 = vst [vmem:[%s367 + $0x50] sm:$0xff] %v8384
        %8417 = vst [vmem:[%s367 + $0x58] sm:$0xff] %v8385
        %8418 = vst [vmem:[%s367 + $0x60] sm:$0xff] %v8386
        %8419 = vst [vmem:[%s367 + $0x68] sm:$0xff] %v8387
        %8420 = vst [vmem:[%s367 + $0x70] sm:$0xff] %v8388
        %8421 = vst [vmem:[%s367 + $0x78] sm:$0xff] %v8389
        %8422 = vst [vmem:[%s367 + $0x80] sm:$0xff] %v8390
        %8423 = vst [vmem:[%s367 + $0x88] sm:$0xff] %v8391
        %8424 = vst [vmem:[%s367 + $0x90] sm:$0xff] %v8392
        %8425 = vst [vmem:[%s367 + $0x98] sm:$0xff] %v8393
        %8426 = vst [vmem:[%s367 + $0xa0] sm:$0xff] %v8394
        %8427 = vst [vmem:[%s367 + $0xa8] sm:$0xff] %v8395
        %8428 = vst [vmem:[%s367 + $0xb0] sm:$0xff] %v8396
        %8429 = vst [vmem:[%s367 + $0xb8] sm:$0xff] %v8397
        %8430 = vst [vmem:[%s367 + $0xc0] sm:$0xff] %v8398
        %8431 = vst [vmem:[%s367 + $0xc8] sm:$0xff] %v8399
        %8432 = vst [vmem:[%s367 + $0xd0] sm:$0xff] %v8400
        %8433 = vst [vmem:[%s367 + $0xd8] sm:$0xff] %v8401
        %8434 = vst [vmem:[%s367 + $0xe0] sm:$0xff] %v8402
        %8435 = vst [vmem:[%s367 + $0xe8] sm:$0xff] %v8403
        %8436 = vst [vmem:[%s367 + $0xf0] sm:$0xff] %v8404
        %8437 = vst [vmem:[%s367 + $0xf8] sm:$0xff] %v8405
        %s8438 = sand.u32 %s248, 1
        %s8439 = scalar_lea.sflag [#allocation5], %s8438
        %s8440 = sand.u32 %s248, 1
        %s8441 = smul.addr %s8440, 256
        %s8442 = scalar_lea.vmem [#allocation6], %s8441
        // Predicated region
        $region65: #{tpu_custom_call.1} parent=59 // pred_check
          %p8443 = pneg %p258
        $region66: #{tpu_custom_call.1} parent=59 // pred_check_branch
          %8445 = sbr.rel (%p8443) target = $region68
        $region67: #{tpu_custom_call.1} parent=59 // pred_region
          %s8447 = ssub.s32 4096, 4096
          %8448 = vsyncadd %s8439, %s8447
          %s8449 = smul.addr %s25, 32
          %s8450 = smul.addr %s8449, 128
          %s8451 = scalar_lea.hbm %s10, %s8450
          %s8452 = sshll.u32 %s8442, 4
          %s8453 = int_to_ptr.vmem [resolvable:$true] %s8452
          %8458 = dma.vmem_to_hbm [thread:$0]  %s8453, 4096, %s8451, %s8439, 128, 128, 8
        $region68: #{tpu_custom_call.1} parent=59 // pred_fallthru
          _
      $region60: #{tpu_custom_call.1} parent=5 // pred_fallthru
        _
      %p8459 = scmp.le.s32.totalorder 2, %s20
      // Predicated region
      $region69: #{tpu_custom_call.1} parent=5 // pred_check
        %p8460 = pneg %p8459
      $region70: #{tpu_custom_call.1} parent=5 // pred_check_branch
        %8462 = sbr.rel (%p8460) target = $region72
      $region71: #{tpu_custom_call.1} parent=5 // pred_region
        %s8463 = ssub.s32 %s20, 2
        // Predicated region
        $region73: #{tpu_custom_call.1} parent=71 // pred_check
          %p8464 = pneg %p264
        $region74: #{tpu_custom_call.1} parent=71 // pred_check_branch
          %8466 = sbr.rel (%p8464) target = $region76
        $region75: #{tpu_custom_call.1} parent=71 // pred_region
          %s8467 = sand.u32 %s249, 1
          %s8468 = scalar_lea.sflag [#allocation5], %s8467
          %s8469 = sand.u32 %s249, 1
          %s8470 = smul.addr %s8469, 256
          %s8471 = scalar_lea.vmem [#allocation6], %s8470
          %8472 = dma.done %s8468, 4096
        $region76: #{tpu_custom_call.1} parent=71 // pred_fallthru
          _
      $region72: #{tpu_custom_call.1} parent=5 // pred_fallthru
        _
    $region6: #{tpu_custom_call.1} parent=1 // loop_footer
      %s24 = sadd.s32 1, %s20
    $region7: #{tpu_custom_call.1} parent=1 // loop_footer_branch
      %19 = sbr.rel target = $region3
    $region8: #{tpu_custom_call.1} parent=1 // loop_exit
      _
    %8473 = vsyncpa [#allocation4], 1
    %s8474 = scalar_lea.sflag [#allocation4], 1
    %8475 = vsyncpa %s8474, 1
    %8476 = vsyncpa [#allocation5], 1
    %s8477 = scalar_lea.sflag [#allocation5], 1
    %8478 = vsyncpa %s8477, 1

</llo_original>
